<compile_context>
chip_gen: v7x
topology: tpu7x:2x2x1
jax: 0.10.0
libtpu: 0.0.40
codegen_flags: <defaults>
</compile_context>

<pallas_src>
import math

import jax
import jax.numpy as jnp
import numpy as np
from jax import lax
from jax.experimental import pallas as pl
from jax.experimental.pallas import tpu as pltpu

C_EMB = 64                     # embedding channels per plane
RES = 32                       # plane resolution (H = W = 32)
HID = 128                      # MLP hidden width
OUT_DIM = 1                    # output_dim
CHUNK = 256                    # K-chunk of the RES*RES sampling contraction
NCHUNK = (RES * RES) // CHUNK  # 4
RPC = CHUNK // RES             # H-rows covered per chunk (8)
SCALE = (RES - 1) * 0.5        # align_corners=True index scaling


def _triplane_mlp_kernel(coords_ref, planes_ref,
                         w1_ref, b1_ref, w2_ref, b2_ref, w3_ref, b3_ref,
                         out_ref, xy_ref, yz_ref, xz_ref):
    tile = coords_ref.shape[1]

    # Continuous lattice indices; samples live on the lane axis.
    ix = (coords_ref[0:1, :] + 1.0) * SCALE          # (1, tile) f32
    iy = (coords_ref[1:2, :] + 1.0) * SCALE
    iz = (coords_ref[2:3, :] + 1.0) * SCALE

    # Per-axis tent tables T[h, s] = max(0, 1 - |idx_s - h|), h = 0..31.
    # (4 VALU ops on (32, tile) each -- built once per tile, review item 2.)
    lat = lax.broadcasted_iota(jnp.int32, (RES, 1), 0).astype(jnp.float32)
    tx = jnp.maximum(0.0, 1.0 - jnp.abs(ix - lat))   # (RES, tile) f32
    ty = jnp.maximum(0.0, 1.0 - jnp.abs(iy - lat))
    tz = jnp.maximum(0.0, 1.0 - jnp.abs(iz - lat))

    # Fast (W) lattice axis tents repeat with period RES inside a chunk and
    # are chunk-invariant: tile the table 8x along sublanes once, cast bf16.
    tx_tiled = jnp.concatenate([tx] * RPC, axis=0).astype(jnp.bfloat16)  # (CHUNK, tile)
    ty_tiled = jnp.concatenate([ty] * RPC, axis=0).astype(jnp.bfloat16)

    # K-chunked separable bilinear sampling; bf16 MXU dots, f32 accumulate.
    for c in range(NCHUNK):
        # Slow (H) lattice axis tents: the chunk's 8 table rows, each
        # sublane-broadcast 32x (data movement on XLU/load slots instead of
        # re-deriving dense (CHUNK, tile) tents on the VALU).
        ty_rep = jnp.concatenate(
            [jnp.broadcast_to(ty[c * RPC + r:c * RPC + r + 1, :], (RES, tile))
             for r in range(RPC)], axis=0).astype(jnp.bfloat16)          # (CHUNK, tile)
        tz_rep = jnp.concatenate(
            [jnp.broadcast_to(tz[c * RPC + r:c * RPC + r + 1, :], (RES, tile))
             for r in range(RPC)], axis=0).astype(jnp.bfloat16)

        wxy = ty_rep * tx_tiled        # sample(plane0, (x, y))
        wyz = tz_rep * ty_tiled        # sample(plane1, (y, z))
        wxz = tz_rep * tx_tiled        # sample(plane2, (x, z))

        lo = c * CHUNK
        pxy = jnp.dot(planes_ref[0, :, lo:lo + CHUNK], wxy,
                      preferred_element_type=jnp.float32)
        pyz = jnp.dot(planes_ref[1, :, lo:lo + CHUNK], wyz,
                      preferred_element_type=jnp.float32)
        pxz = jnp.dot(planes_ref[2, :, lo:lo + CHUNK], wxz,
                      preferred_element_type=jnp.float32)

        # Accumulate in VMEM scratch (bounded live ranges; frees vregs).
        if c == 0:
            xy_ref[...] = pxy
            yz_ref[...] = pyz
            xz_ref[...] = pxz
        else:
            xy_ref[...] += pxy
            yz_ref[...] += pyz
            xz_ref[...] += pxz

    feat = xy_ref[...] * yz_ref[...] * xz_ref[...]   # aggregate_fn == 'prod'

    # Small MLP kept in f32 (tiny share of the FLOPs; preserves accuracy).
    h1 = jnp.maximum(
        jnp.dot(w1_ref[...], feat, preferred_element_type=jnp.float32)
        + b1_ref[...], 0.0)                          # (HID, tile)
    h2 = jnp.maximum(
        jnp.dot(w2_ref[...], h1, preferred_element_type=jnp.float32)
        + b2_ref[...], 0.0)                          # (HID, tile)

    # Final 128 -> 1 layer as a VPU mul + XLU reduce -> lane-dense (1, tile).
    out = jnp.sum(h2 * w3_ref[...], axis=0, keepdims=True) + b3_ref[...]
    out_ref[...] = out.astype(out_ref.dtype)


def _pick_tile(m):
    # Big tiles amortize the ~0.35 us per-grid-step cost and the per-tile tent
    # table build, but keep >= 2 grid steps so both v7x TensorCores get work.
    for t in (1024, 512):
        if m >= 2 * t:
            return t
    return 256


def triplane_forward(coordinates, params, tile=None):
    B, N, _ = coordinates.shape
    M = B * N
    if tile is None:
        tile = _pick_tile(M)
    n_tiles = pl.cdiv(M, tile)
    Mp = n_tiles * tile

    coords_t = coordinates.reshape(M, 3).astype(jnp.float32).T     # (3, M)
    coords_t = jnp.pad(coords_t, ((0, 0), (0, Mp - M)))

    out = pl.pallas_call(
        _triplane_mlp_kernel,
        out_shape=jax.ShapeDtypeStruct((1, Mp), jnp.float32),
        grid_spec=pltpu.PrefetchScalarGridSpec(
            num_scalar_prefetch=0,
            grid=(n_tiles,),
            in_specs=[
                pl.BlockSpec((3, tile), lambda i: (0, i)),                 # coords
                pl.BlockSpec((3, C_EMB, RES * RES), lambda i: (0, 0, 0)),  # planes (bf16)
                pl.BlockSpec((HID, C_EMB), lambda i: (0, 0)),              # w1^T
                pl.BlockSpec((HID, 1), lambda i: (0, 0)),                  # b1
                pl.BlockSpec((HID, HID), lambda i: (0, 0)),                # w2^T
                pl.BlockSpec((HID, 1), lambda i: (0, 0)),                  # b2
                pl.BlockSpec((HID, 1), lambda i: (0, 0)),                  # w3
                pl.BlockSpec((1, 1), lambda i: (0, 0)),                    # b3
            ],
            out_specs=pl.BlockSpec((1, tile), lambda i: (0, i)),
            scratch_shapes=[pltpu.VMEM((C_EMB, tile), jnp.float32)] * 3,
        ),
        compiler_params=pltpu.CompilerParams(
            dimension_semantics=("parallel",)),
    )(coords_t, params["planes_k"],
      params["w1_k"], params["b1_k"],
      params["w2_k"], params["b2_k"],
      params["w3_k"], params["b3_k"])
    return out[0, :M].reshape(B, N, OUT_DIM)


def init_params(key):
    ks = jax.random.split(key, 7)
    # embeddings: 3 x torch.randn(1, 64, 32, 32) * 0.1 (stored NCHW)
    planes_nchw = jax.random.normal(ks[0], (3, C_EMB, RES, RES), jnp.float32) * 0.1

    def uniform(k, shape, bound):
        return jax.random.uniform(k, shape, jnp.float32, -bound, bound)

    freq = 30.0
    # first_layer_sine_init: U(-1/in, 1/in); other layers: frequency_init(30);
    # biases keep torch Linear default U(-1/sqrt(in), 1/sqrt(in)).
    w1 = uniform(ks[1], (C_EMB, HID), 1.0 / C_EMB)
    b1 = uniform(ks[2], (HID,), 1.0 / math.sqrt(C_EMB))
    w2 = uniform(ks[3], (HID, HID), math.sqrt(6.0 / HID) / freq)
    b2 = uniform(ks[4], (HID,), 1.0 / math.sqrt(HID))
    w3 = uniform(ks[5], (HID, OUT_DIM), math.sqrt(6.0 / HID) / freq)
    b3 = uniform(ks[6], (OUT_DIM,), 1.0 / math.sqrt(HID))

    return dict(
        # reference-layout params (f32)
        planes_nchw=planes_nchw, w1=w1, b1=b1, w2=w2, b2=b2, w3=w3, b3=b3,
        # kernel-ready layouts: plane^T slabs in bf16, transposed MLP weights,
        # column biases.
        planes_k=planes_nchw.reshape(3, C_EMB, RES * RES).astype(jnp.bfloat16),
        w1_k=w1.T, b1_k=b1.reshape(HID, 1),
        w2_k=w2.T, b2_k=b2.reshape(HID, 1),
        w3_k=w3.reshape(HID, 1), b3_k=b3.reshape(1, 1),
    )


# ----------------------- pure-JAX reference (for checking) -----------------
def _ref_grid_sample(plane, gx, gy):
    # plane: (C, H, W); gx, gy: (M,); bilinear, zeros padding, align_corners=True
    C, H, W = plane.shape
    ix = (gx + 1.0) * 0.5 * (W - 1)
    iy = (gy + 1.0) * 0.5 * (H - 1)
    x0 = jnp.floor(ix); x1 = x0 + 1.0
    y0 = jnp.floor(iy); y1 = y0 + 1.0
    wx1 = ix - x0; wx0 = 1.0 - wx1
    wy1 = iy - y0; wy0 = 1.0 - wy1

    def gather(xi, yi):
        valid = (xi >= 0) & (xi <= W - 1) & (yi >= 0) & (yi <= H - 1)
        xc = jnp.clip(xi, 0, W - 1).astype(jnp.int32)
        yc = jnp.clip(yi, 0, H - 1).astype(jnp.int32)
        v = plane[:, yc, xc]                          # (C, M)
        return jnp.where(valid[None, :], v, 0.0)

    out = (gather(x0, y0) * (wx0 * wy0) + gather(x1, y0) * (wx1 * wy0)
           + gather(x0, y1) * (wx0 * wy1) + gather(x1, y1) * (wx1 * wy1))
    return out.T                                      # (M, C)


def reference_forward(coordinates, params):
    B, N, _ = coordinates.shape
    c = coordinates.reshape(-1, 3)
    p = params["planes_nchw"]
    xy = _ref_grid_sample(p[0], c[:, 0], c[:, 1])
    yz = _ref_grid_sample(p[1], c[:, 1], c[:, 2])
    xz = _ref_grid_sample(p[2], c[:, 0], c[:, 2])
    feat = xy * yz * xz
    h1 = jax.nn.relu(feat @ params["w1"] + params["b1"])
    h2 = jax.nn.relu(h1 @ params["w2"] + params["b2"])
    return (h2 @ params["w3"] + params["b3"]).reshape(B, N, OUT_DIM)


if __name__ == "__main__":
    key = jax.random.PRNGKey(0)
    kp, kc = jax.random.split(key)
    params = init_params(kp)

    # M = 1200 -> tile = 512, 3 grid steps (also exercises the padding path).
    B, N = 2, 600
    # include coords slightly outside [-1,1] to exercise zeros padding
    coordinates = jax.random.uniform(kc, (B, N, 3), jnp.float32, -1.1, 1.1)

    out = jax.block_until_ready(triplane_forward(coordinates, params))
    assert out.shape == (B, N, OUT_DIM)

    ref = reference_forward(coordinates, params)
    # bf16 tent factors x bf16 planes give ~1e-5-scale absolute error on this
    # network (planes ~ N(0, 0.1)); tolerance has comfortable headroom.
    np.testing.assert_allclose(np.asarray(out), np.asarray(ref),
                               rtol=2e-3, atol=2e-4)
    print("KERNEL_OK")
</pallas_src>

<mosaic_0001>
module attributes {stable_mosaic.version = 11 : i64} {
  func.func @_triplane_mlp_kernel(%arg0: i32, %arg1: memref<3x512xf32, #tpu.memory_space<vmem>>, %arg2: memref<3x64x1024xbf16, #tpu.memory_space<vmem>>, %arg3: memref<128x64xf32, #tpu.memory_space<vmem>>, %arg4: memref<128x1xf32, #tpu.memory_space<vmem>>, %arg5: memref<128x128xf32, #tpu.memory_space<vmem>>, %arg6: memref<128x1xf32, #tpu.memory_space<vmem>>, %arg7: memref<128x1xf32, #tpu.memory_space<vmem>>, %arg8: memref<1x1xf32, #tpu.memory_space<vmem>>, %arg9: memref<1x512xf32, #tpu.memory_space<vmem>>, %arg10: memref<64x512xf32, #tpu.memory_space<vmem>>, %arg11: memref<64x512xf32, #tpu.memory_space<vmem>>, %arg12: memref<64x512xf32, #tpu.memory_space<vmem>>) attributes {dimension_semantics = [#tpu.dimension_semantics<parallel>], iteration_bounds = array<i64: 3>, scalar_prefetch = 0 : i64, scratch_operands = 3 : i64, tpu.core_type = #tpu.core_type<tc>, window_params = [{transform_indices = @transform_0, window_bounds = array<i64: 3, 512>}, {pipeline_mode = #tpu.pipeline_mode<synchronous>, transform_indices = @transform_1, window_bounds = array<i64: 3, 64, 1024>}, {pipeline_mode = #tpu.pipeline_mode<synchronous>, transform_indices = @transform_2, window_bounds = array<i64: 128, 64>}, {pipeline_mode = #tpu.pipeline_mode<synchronous>, transform_indices = @transform_3, window_bounds = array<i64: 128, 1>}, {pipeline_mode = #tpu.pipeline_mode<synchronous>, transform_indices = @transform_4, window_bounds = array<i64: 128, 128>}, {pipeline_mode = #tpu.pipeline_mode<synchronous>, transform_indices = @transform_5, window_bounds = array<i64: 128, 1>}, {pipeline_mode = #tpu.pipeline_mode<synchronous>, transform_indices = @transform_6, window_bounds = array<i64: 128, 1>}, {pipeline_mode = #tpu.pipeline_mode<synchronous>, transform_indices = @transform_7, window_bounds = array<i64: 1, 1>}, {transform_indices = @transform_8, window_bounds = array<i64: 1, 512>}]} {
    %c0 = arith.constant 0 : index
    %c0_0 = arith.constant 0 : index
    %0 = vector.load %arg1[%c0, %c0_0] : memref<3x512xf32, #tpu.memory_space<vmem>>, vector<1x512xf32>
    %cst = arith.constant 1.000000e+00 : f32
    %1 = vector.broadcast %cst : f32 to vector<1x512xf32>
    %2 = arith.addf %0, %1 : vector<1x512xf32>
    %cst_1 = arith.constant 1.550000e+01 : f32
    %3 = vector.broadcast %cst_1 : f32 to vector<1x512xf32>
    %4 = arith.mulf %2, %3 : vector<1x512xf32>
    %c1 = arith.constant 1 : index
    %c0_2 = arith.constant 0 : index
    %5 = vector.load %arg1[%c1, %c0_2] : memref<3x512xf32, #tpu.memory_space<vmem>>, vector<1x512xf32>
    %cst_3 = arith.constant 1.000000e+00 : f32
    %6 = vector.broadcast %cst_3 : f32 to vector<1x512xf32>
    %7 = arith.addf %5, %6 : vector<1x512xf32>
    %cst_4 = arith.constant 1.550000e+01 : f32
    %8 = vector.broadcast %cst_4 : f32 to vector<1x512xf32>
    %9 = arith.mulf %7, %8 : vector<1x512xf32>
    %c2 = arith.constant 2 : index
    %c0_5 = arith.constant 0 : index
    %10 = vector.load %arg1[%c2, %c0_5] : memref<3x512xf32, #tpu.memory_space<vmem>>, vector<1x512xf32>
    %cst_6 = arith.constant 1.000000e+00 : f32
    %11 = vector.broadcast %cst_6 : f32 to vector<1x512xf32>
    %12 = arith.addf %10, %11 : vector<1x512xf32>
    %cst_7 = arith.constant 1.550000e+01 : f32
    %13 = vector.broadcast %cst_7 : f32 to vector<1x512xf32>
    %14 = arith.mulf %12, %13 : vector<1x512xf32>
    %15 = tpu.iota {dimensions = array<i32: 0>} : vector<32x1xi32>
    %16 = arith.sitofp %15 : vector<32x1xi32> to vector<32x1xf32>
    %17 = vector.broadcast %4 : vector<1x512xf32> to vector<32x512xf32>
    %18 = vector.broadcast %16 : vector<32x1xf32> to vector<32x512xf32>
    %19 = arith.subf %17, %18 : vector<32x512xf32>
    %20 = math.absf %19 : vector<32x512xf32>
    %cst_8 = arith.constant 1.000000e+00 : f32
    %21 = vector.broadcast %cst_8 : f32 to vector<32x512xf32>
    %22 = arith.subf %21, %20 : vector<32x512xf32>
    %cst_9 = arith.constant 0.000000e+00 : f32
    %23 = vector.broadcast %cst_9 : f32 to vector<32x512xf32>
    %24 = arith.maximumf %23, %22 : vector<32x512xf32>
    %25 = vector.broadcast %9 : vector<1x512xf32> to vector<32x512xf32>
    %26 = vector.broadcast %16 : vector<32x1xf32> to vector<32x512xf32>
    %27 = arith.subf %25, %26 : vector<32x512xf32>
    %28 = math.absf %27 : vector<32x512xf32>
    %cst_10 = arith.constant 1.000000e+00 : f32
    %29 = vector.broadcast %cst_10 : f32 to vector<32x512xf32>
    %30 = arith.subf %29, %28 : vector<32x512xf32>
    %cst_11 = arith.constant 0.000000e+00 : f32
    %31 = vector.broadcast %cst_11 : f32 to vector<32x512xf32>
    %32 = arith.maximumf %31, %30 : vector<32x512xf32>
    %33 = vector.broadcast %14 : vector<1x512xf32> to vector<32x512xf32>
    %34 = vector.broadcast %16 : vector<32x1xf32> to vector<32x512xf32>
    %35 = arith.subf %33, %34 : vector<32x512xf32>
    %36 = math.absf %35 : vector<32x512xf32>
    %cst_12 = arith.constant 1.000000e+00 : f32
    %37 = vector.broadcast %cst_12 : f32 to vector<32x512xf32>
    %38 = arith.subf %37, %36 : vector<32x512xf32>
    %cst_13 = arith.constant 0.000000e+00 : f32
    %39 = vector.broadcast %cst_13 : f32 to vector<32x512xf32>
    %40 = arith.maximumf %39, %38 : vector<32x512xf32>
    %41 = tpu.concatenate %24, %24, %24, %24, %24, %24, %24, %24 in 0 : vector<32x512xf32>, vector<32x512xf32>, vector<32x512xf32>, vector<32x512xf32>, vector<32x512xf32>, vector<32x512xf32>, vector<32x512xf32>, vector<32x512xf32> -> vector<256x512xf32>
    %42 = arith.truncf %41 : vector<256x512xf32> to vector<256x512xbf16>
    %43 = tpu.concatenate %32, %32, %32, %32, %32, %32, %32, %32 in 0 : vector<32x512xf32>, vector<32x512xf32>, vector<32x512xf32>, vector<32x512xf32>, vector<32x512xf32>, vector<32x512xf32>, vector<32x512xf32>, vector<32x512xf32> -> vector<256x512xf32>
    %44 = arith.truncf %43 : vector<256x512xf32> to vector<256x512xbf16>
    %45 = vector.extract_strided_slice %32 {offsets = [0, 0], sizes = [1, 512], strides = [1, 1]} : vector<32x512xf32> to vector<1x512xf32>
    %46 = vector.shape_cast %45 : vector<1x512xf32> to vector<1x512xf32>
    %47 = vector.broadcast %46 : vector<1x512xf32> to vector<32x512xf32>
    %48 = vector.extract_strided_slice %32 {offsets = [1, 0], sizes = [1, 512], strides = [1, 1]} : vector<32x512xf32> to vector<1x512xf32>
    %49 = vector.shape_cast %48 : vector<1x512xf32> to vector<1x512xf32>
    %50 = vector.broadcast %49 : vector<1x512xf32> to vector<32x512xf32>
    %51 = vector.extract_strided_slice %32 {offsets = [2, 0], sizes = [1, 512], strides = [1, 1]} : vector<32x512xf32> to vector<1x512xf32>
    %52 = vector.shape_cast %51 : vector<1x512xf32> to vector<1x512xf32>
    %53 = vector.broadcast %52 : vector<1x512xf32> to vector<32x512xf32>
    %54 = vector.extract_strided_slice %32 {offsets = [3, 0], sizes = [1, 512], strides = [1, 1]} : vector<32x512xf32> to vector<1x512xf32>
    %55 = vector.shape_cast %54 : vector<1x512xf32> to vector<1x512xf32>
    %56 = vector.broadcast %55 : vector<1x512xf32> to vector<32x512xf32>
    %57 = vector.extract_strided_slice %32 {offsets = [4, 0], sizes = [1, 512], strides = [1, 1]} : vector<32x512xf32> to vector<1x512xf32>
    %58 = vector.shape_cast %57 : vector<1x512xf32> to vector<1x512xf32>
    %59 = vector.broadcast %58 : vector<1x512xf32> to vector<32x512xf32>
    %60 = vector.extract_strided_slice %32 {offsets = [5, 0], sizes = [1, 512], strides = [1, 1]} : vector<32x512xf32> to vector<1x512xf32>
    %61 = vector.shape_cast %60 : vector<1x512xf32> to vector<1x512xf32>
    %62 = vector.broadcast %61 : vector<1x512xf32> to vector<32x512xf32>
    %63 = vector.extract_strided_slice %32 {offsets = [6, 0], sizes = [1, 512], strides = [1, 1]} : vector<32x512xf32> to vector<1x512xf32>
    %64 = vector.shape_cast %63 : vector<1x512xf32> to vector<1x512xf32>
    %65 = vector.broadcast %64 : vector<1x512xf32> to vector<32x512xf32>
    %66 = vector.extract_strided_slice %32 {offsets = [7, 0], sizes = [1, 512], strides = [1, 1]} : vector<32x512xf32> to vector<1x512xf32>
    %67 = vector.shape_cast %66 : vector<1x512xf32> to vector<1x512xf32>
    %68 = vector.broadcast %67 : vector<1x512xf32> to vector<32x512xf32>
    %69 = tpu.concatenate %47, %50, %53, %56, %59, %62, %65, %68 in 0 : vector<32x512xf32>, vector<32x512xf32>, vector<32x512xf32>, vector<32x512xf32>, vector<32x512xf32>, vector<32x512xf32>, vector<32x512xf32>, vector<32x512xf32> -> vector<256x512xf32>
    %70 = arith.truncf %69 : vector<256x512xf32> to vector<256x512xbf16>
    %71 = vector.extract_strided_slice %40 {offsets = [0, 0], sizes = [1, 512], strides = [1, 1]} : vector<32x512xf32> to vector<1x512xf32>
    %72 = vector.shape_cast %71 : vector<1x512xf32> to vector<1x512xf32>
    %73 = vector.broadcast %72 : vector<1x512xf32> to vector<32x512xf32>
    %74 = vector.extract_strided_slice %40 {offsets = [1, 0], sizes = [1, 512], strides = [1, 1]} : vector<32x512xf32> to vector<1x512xf32>
    %75 = vector.shape_cast %74 : vector<1x512xf32> to vector<1x512xf32>
    %76 = vector.broadcast %75 : vector<1x512xf32> to vector<32x512xf32>
    %77 = vector.extract_strided_slice %40 {offsets = [2, 0], sizes = [1, 512], strides = [1, 1]} : vector<32x512xf32> to vector<1x512xf32>
    %78 = vector.shape_cast %77 : vector<1x512xf32> to vector<1x512xf32>
    %79 = vector.broadcast %78 : vector<1x512xf32> to vector<32x512xf32>
    %80 = vector.extract_strided_slice %40 {offsets = [3, 0], sizes = [1, 512], strides = [1, 1]} : vector<32x512xf32> to vector<1x512xf32>
    %81 = vector.shape_cast %80 : vector<1x512xf32> to vector<1x512xf32>
    %82 = vector.broadcast %81 : vector<1x512xf32> to vector<32x512xf32>
    %83 = vector.extract_strided_slice %40 {offsets = [4, 0], sizes = [1, 512], strides = [1, 1]} : vector<32x512xf32> to vector<1x512xf32>
    %84 = vector.shape_cast %83 : vector<1x512xf32> to vector<1x512xf32>
    %85 = vector.broadcast %84 : vector<1x512xf32> to vector<32x512xf32>
    %86 = vector.extract_strided_slice %40 {offsets = [5, 0], sizes = [1, 512], strides = [1, 1]} : vector<32x512xf32> to vector<1x512xf32>
    %87 = vector.shape_cast %86 : vector<1x512xf32> to vector<1x512xf32>
    %88 = vector.broadcast %87 : vector<1x512xf32> to vector<32x512xf32>
    %89 = vector.extract_strided_slice %40 {offsets = [6, 0], sizes = [1, 512], strides = [1, 1]} : vector<32x512xf32> to vector<1x512xf32>
    %90 = vector.shape_cast %89 : vector<1x512xf32> to vector<1x512xf32>
    %91 = vector.broadcast %90 : vector<1x512xf32> to vector<32x512xf32>
    %92 = vector.extract_strided_slice %40 {offsets = [7, 0], sizes = [1, 512], strides = [1, 1]} : vector<32x512xf32> to vector<1x512xf32>
    %93 = vector.shape_cast %92 : vector<1x512xf32> to vector<1x512xf32>
    %94 = vector.broadcast %93 : vector<1x512xf32> to vector<32x512xf32>
    %95 = tpu.concatenate %73, %76, %79, %82, %85, %88, %91, %94 in 0 : vector<32x512xf32>, vector<32x512xf32>, vector<32x512xf32>, vector<32x512xf32>, vector<32x512xf32>, vector<32x512xf32>, vector<32x512xf32>, vector<32x512xf32> -> vector<256x512xf32>
    %96 = arith.truncf %95 : vector<256x512xf32> to vector<256x512xbf16>
    %97 = arith.mulf %70, %42 : vector<256x512xbf16>
    %98 = arith.mulf %96, %44 : vector<256x512xbf16>
    %99 = arith.mulf %96, %42 : vector<256x512xbf16>
    %c0_14 = arith.constant 0 : index
    %c0_15 = arith.constant 0 : index
    %c0_16 = arith.constant 0 : index
    %100 = vector.load %arg2[%c0_14, %c0_15, %c0_16] : memref<3x64x1024xbf16, #tpu.memory_space<vmem>>, vector<1x64x256xbf16>
    %101 = vector.shape_cast %100 : vector<1x64x256xbf16> to vector<64x256xbf16>
    %cst_17 = arith.constant dense<0.000000e+00> : vector<64x512xf32>
    %102 = tpu.matmul %101, %97, %cst_17 {dimension_numbers = #tpu.dot_dimension_numbers<[1], [0], [0], [1], [0, 0, 1, 1], [], []>} : vector<64x256xbf16>, vector<256x512xbf16>, vector<64x512xf32> -> vector<64x512xf32>
    %c1_18 = arith.constant 1 : index
    %c0_19 = arith.constant 0 : index
    %c0_20 = arith.constant 0 : index
    %103 = vector.load %arg2[%c1_18, %c0_19, %c0_20] : memref<3x64x1024xbf16, #tpu.memory_space<vmem>>, vector<1x64x256xbf16>
    %104 = vector.shape_cast %103 : vector<1x64x256xbf16> to vector<64x256xbf16>
    %cst_21 = arith.constant dense<0.000000e+00> : vector<64x512xf32>
    %105 = tpu.matmul %104, %98, %cst_21 {dimension_numbers = #tpu.dot_dimension_numbers<[1], [0], [0], [1], [0, 0, 1, 1], [], []>} : vector<64x256xbf16>, vector<256x512xbf16>, vector<64x512xf32> -> vector<64x512xf32>
    %c2_22 = arith.constant 2 : index
    %c0_23 = arith.constant 0 : index
    %c0_24 = arith.constant 0 : index
    %106 = vector.load %arg2[%c2_22, %c0_23, %c0_24] : memref<3x64x1024xbf16, #tpu.memory_space<vmem>>, vector<1x64x256xbf16>
    %107 = vector.shape_cast %106 : vector<1x64x256xbf16> to vector<64x256xbf16>
    %cst_25 = arith.constant dense<0.000000e+00> : vector<64x512xf32>
    %108 = tpu.matmul %107, %99, %cst_25 {dimension_numbers = #tpu.dot_dimension_numbers<[1], [0], [0], [1], [0, 0, 1, 1], [], []>} : vector<64x256xbf16>, vector<256x512xbf16>, vector<64x512xf32> -> vector<64x512xf32>
    %c0_26 = arith.constant 0 : index
    %c0_27 = arith.constant 0 : index
    %109 = vector.load %arg10[%c0_26, %c0_27] : memref<64x512xf32, #tpu.memory_space<vmem>>, vector<64x512xf32>
    tpu.vector_store %arg10[%c0_26, %c0_27], %102 {strides = array<i32>} : memref<64x512xf32, #tpu.memory_space<vmem>>, vector<64x512xf32>,
    %c0_28 = arith.constant 0 : index
    %c0_29 = arith.constant 0 : index
    %110 = vector.load %arg11[%c0_28, %c0_29] : memref<64x512xf32, #tpu.memory_space<vmem>>, vector<64x512xf32>
    tpu.vector_store %arg11[%c0_28, %c0_29], %105 {strides = array<i32>} : memref<64x512xf32, #tpu.memory_space<vmem>>, vector<64x512xf32>,
    %c0_30 = arith.constant 0 : index
    %c0_31 = arith.constant 0 : index
    %111 = vector.load %arg12[%c0_30, %c0_31] : memref<64x512xf32, #tpu.memory_space<vmem>>, vector<64x512xf32>
    tpu.vector_store %arg12[%c0_30, %c0_31], %108 {strides = array<i32>} : memref<64x512xf32, #tpu.memory_space<vmem>>, vector<64x512xf32>,
    %112 = vector.extract_strided_slice %32 {offsets = [8, 0], sizes = [1, 512], strides = [1, 1]} : vector<32x512xf32> to vector<1x512xf32>
    %113 = vector.shape_cast %112 : vector<1x512xf32> to vector<1x512xf32>
    %114 = vector.broadcast %113 : vector<1x512xf32> to vector<32x512xf32>
    %115 = vector.extract_strided_slice %32 {offsets = [9, 0], sizes = [1, 512], strides = [1, 1]} : vector<32x512xf32> to vector<1x512xf32>
    %116 = vector.shape_cast %115 : vector<1x512xf32> to vector<1x512xf32>
    %117 = vector.broadcast %116 : vector<1x512xf32> to vector<32x512xf32>
    %118 = vector.extract_strided_slice %32 {offsets = [10, 0], sizes = [1, 512], strides = [1, 1]} : vector<32x512xf32> to vector<1x512xf32>
    %119 = vector.shape_cast %118 : vector<1x512xf32> to vector<1x512xf32>
    %120 = vector.broadcast %119 : vector<1x512xf32> to vector<32x512xf32>
    %121 = vector.extract_strided_slice %32 {offsets = [11, 0], sizes = [1, 512], strides = [1, 1]} : vector<32x512xf32> to vector<1x512xf32>
    %122 = vector.shape_cast %121 : vector<1x512xf32> to vector<1x512xf32>
    %123 = vector.broadcast %122 : vector<1x512xf32> to vector<32x512xf32>
    %124 = vector.extract_strided_slice %32 {offsets = [12, 0], sizes = [1, 512], strides = [1, 1]} : vector<32x512xf32> to vector<1x512xf32>
    %125 = vector.shape_cast %124 : vector<1x512xf32> to vector<1x512xf32>
    %126 = vector.broadcast %125 : vector<1x512xf32> to vector<32x512xf32>
    %127 = vector.extract_strided_slice %32 {offsets = [13, 0], sizes = [1, 512], strides = [1, 1]} : vector<32x512xf32> to vector<1x512xf32>
    %128 = vector.shape_cast %127 : vector<1x512xf32> to vector<1x512xf32>
    %129 = vector.broadcast %128 : vector<1x512xf32> to vector<32x512xf32>
    %130 = vector.extract_strided_slice %32 {offsets = [14, 0], sizes = [1, 512], strides = [1, 1]} : vector<32x512xf32> to vector<1x512xf32>
    %131 = vector.shape_cast %130 : vector<1x512xf32> to vector<1x512xf32>
    %132 = vector.broadcast %131 : vector<1x512xf32> to vector<32x512xf32>
    %133 = vector.extract_strided_slice %32 {offsets = [15, 0], sizes = [1, 512], strides = [1, 1]} : vector<32x512xf32> to vector<1x512xf32>
    %134 = vector.shape_cast %133 : vector<1x512xf32> to vector<1x512xf32>
    %135 = vector.broadcast %134 : vector<1x512xf32> to vector<32x512xf32>
    %136 = tpu.concatenate %114, %117, %120, %123, %126, %129, %132, %135 in 0 : vector<32x512xf32>, vector<32x512xf32>, vector<32x512xf32>, vector<32x512xf32>, vector<32x512xf32>, vector<32x512xf32>, vector<32x512xf32>, vector<32x512xf32> -> vector<256x512xf32>
    %137 = arith.truncf %136 : vector<256x512xf32> to vector<256x512xbf16>
    %138 = vector.extract_strided_slice %40 {offsets = [8, 0], sizes = [1, 512], strides = [1, 1]} : vector<32x512xf32> to vector<1x512xf32>
    %139 = vector.shape_cast %138 : vector<1x512xf32> to vector<1x512xf32>
    %140 = vector.broadcast %139 : vector<1x512xf32> to vector<32x512xf32>
    %141 = vector.extract_strided_slice %40 {offsets = [9, 0], sizes = [1, 512], strides = [1, 1]} : vector<32x512xf32> to vector<1x512xf32>
    %142 = vector.shape_cast %141 : vector<1x512xf32> to vector<1x512xf32>
    %143 = vector.broadcast %142 : vector<1x512xf32> to vector<32x512xf32>
    %144 = vector.extract_strided_slice %40 {offsets = [10, 0], sizes = [1, 512], strides = [1, 1]} : vector<32x512xf32> to vector<1x512xf32>
    %145 = vector.shape_cast %144 : vector<1x512xf32> to vector<1x512xf32>
    %146 = vector.broadcast %145 : vector<1x512xf32> to vector<32x512xf32>
    %147 = vector.extract_strided_slice %40 {offsets = [11, 0], sizes = [1, 512], strides = [1, 1]} : vector<32x512xf32> to vector<1x512xf32>
    %148 = vector.shape_cast %147 : vector<1x512xf32> to vector<1x512xf32>
    %149 = vector.broadcast %148 : vector<1x512xf32> to vector<32x512xf32>
    %150 = vector.extract_strided_slice %40 {offsets = [12, 0], sizes = [1, 512], strides = [1, 1]} : vector<32x512xf32> to vector<1x512xf32>
    %151 = vector.shape_cast %150 : vector<1x512xf32> to vector<1x512xf32>
    %152 = vector.broadcast %151 : vector<1x512xf32> to vector<32x512xf32>
    %153 = vector.extract_strided_slice %40 {offsets = [13, 0], sizes = [1, 512], strides = [1, 1]} : vector<32x512xf32> to vector<1x512xf32>
    %154 = vector.shape_cast %153 : vector<1x512xf32> to vector<1x512xf32>
    %155 = vector.broadcast %154 : vector<1x512xf32> to vector<32x512xf32>
    %156 = vector.extract_strided_slice %40 {offsets = [14, 0], sizes = [1, 512], strides = [1, 1]} : vector<32x512xf32> to vector<1x512xf32>
    %157 = vector.shape_cast %156 : vector<1x512xf32> to vector<1x512xf32>
    %158 = vector.broadcast %157 : vector<1x512xf32> to vector<32x512xf32>
    %159 = vector.extract_strided_slice %40 {offsets = [15, 0], sizes = [1, 512], strides = [1, 1]} : vector<32x512xf32> to vector<1x512xf32>
    %160 = vector.shape_cast %159 : vector<1x512xf32> to vector<1x512xf32>
    %161 = vector.broadcast %160 : vector<1x512xf32> to vector<32x512xf32>
    %162 = tpu.concatenate %140, %143, %146, %149, %152, %155, %158, %161 in 0 : vector<32x512xf32>, vector<32x512xf32>, vector<32x512xf32>, vector<32x512xf32>, vector<32x512xf32>, vector<32x512xf32>, vector<32x512xf32>, vector<32x512xf32> -> vector<256x512xf32>
    %163 = arith.truncf %162 : vector<256x512xf32> to vector<256x512xbf16>
    %164 = arith.mulf %137, %42 : vector<256x512xbf16>
    %165 = arith.mulf %163, %44 : vector<256x512xbf16>
    %166 = arith.mulf %163, %42 : vector<256x512xbf16>
    %c0_32 = arith.constant 0 : index
    %c0_33 = arith.constant 0 : index
    %c256 = arith.constant 256 : index
    %167 = vector.load %arg2[%c0_32, %c0_33, %c256] : memref<3x64x1024xbf16, #tpu.memory_space<vmem>>, vector<1x64x256xbf16>
    %168 = vector.shape_cast %167 : vector<1x64x256xbf16> to vector<64x256xbf16>
    %cst_34 = arith.constant dense<0.000000e+00> : vector<64x512xf32>
    %169 = tpu.matmul %168, %164, %cst_34 {dimension_numbers = #tpu.dot_dimension_numbers<[1], [0], [0], [1], [0, 0, 1, 1], [], []>} : vector<64x256xbf16>, vector<256x512xbf16>, vector<64x512xf32> -> vector<64x512xf32>
    %c1_35 = arith.constant 1 : index
    %c0_36 = arith.constant 0 : index
    %c256_37 = arith.constant 256 : index
    %170 = vector.load %arg2[%c1_35, %c0_36, %c256_37] : memref<3x64x1024xbf16, #tpu.memory_space<vmem>>, vector<1x64x256xbf16>
    %171 = vector.shape_cast %170 : vector<1x64x256xbf16> to vector<64x256xbf16>
    %cst_38 = arith.constant dense<0.000000e+00> : vector<64x512xf32>
    %172 = tpu.matmul %171, %165, %cst_38 {dimension_numbers = #tpu.dot_dimension_numbers<[1], [0], [0], [1], [0, 0, 1, 1], [], []>} : vector<64x256xbf16>, vector<256x512xbf16>, vector<64x512xf32> -> vector<64x512xf32>
    %c2_39 = arith.constant 2 : index
    %c0_40 = arith.constant 0 : index
    %c256_41 = arith.constant 256 : index
    %173 = vector.load %arg2[%c2_39, %c0_40, %c256_41] : memref<3x64x1024xbf16, #tpu.memory_space<vmem>>, vector<1x64x256xbf16>
    %174 = vector.shape_cast %173 : vector<1x64x256xbf16> to vector<64x256xbf16>
    %cst_42 = arith.constant dense<0.000000e+00> : vector<64x512xf32>
    %175 = tpu.matmul %174, %166, %cst_42 {dimension_numbers = #tpu.dot_dimension_numbers<[1], [0], [0], [1], [0, 0, 1, 1], [], []>} : vector<64x256xbf16>, vector<256x512xbf16>, vector<64x512xf32> -> vector<64x512xf32>
    %c0_43 = arith.constant 0 : index
    %c0_44 = arith.constant 0 : index
    %176 = vector.load %arg10[%c0_43, %c0_44] : memref<64x512xf32, #tpu.memory_space<vmem>>, vector<64x512xf32>
    %177 = arith.addf %176, %169 : vector<64x512xf32>
    %c0_45 = arith.constant 0 : index
    %c0_46 = arith.constant 0 : index
    %178 = vector.load %arg10[%c0_45, %c0_46] : memref<64x512xf32, #tpu.memory_space<vmem>>, vector<64x512xf32>
    tpu.vector_store %arg10[%c0_45, %c0_46], %177 {strides = array<i32>} : memref<64x512xf32, #tpu.memory_space<vmem>>, vector<64x512xf32>,
    %c0_47 = arith.constant 0 : index
    %c0_48 = arith.constant 0 : index
    %179 = vector.load %arg11[%c0_47, %c0_48] : memref<64x512xf32, #tpu.memory_space<vmem>>, vector<64x512xf32>
    %180 = arith.addf %179, %172 : vector<64x512xf32>
    %c0_49 = arith.constant 0 : index
    %c0_50 = arith.constant 0 : index
    %181 = vector.load %arg11[%c0_49, %c0_50] : memref<64x512xf32, #tpu.memory_space<vmem>>, vector<64x512xf32>
    tpu.vector_store %arg11[%c0_49, %c0_50], %180 {strides = array<i32>} : memref<64x512xf32, #tpu.memory_space<vmem>>, vector<64x512xf32>,
    %c0_51 = arith.constant 0 : index
    %c0_52 = arith.constant 0 : index
    %182 = vector.load %arg12[%c0_51, %c0_52] : memref<64x512xf32, #tpu.memory_space<vmem>>, vector<64x512xf32>
    %183 = arith.addf %182, %175 : vector<64x512xf32>
    %c0_53 = arith.constant 0 : index
    %c0_54 = arith.constant 0 : index
    %184 = vector.load %arg12[%c0_53, %c0_54] : memref<64x512xf32, #tpu.memory_space<vmem>>, vector<64x512xf32>
    tpu.vector_store %arg12[%c0_53, %c0_54], %183 {strides = array<i32>} : memref<64x512xf32, #tpu.memory_space<vmem>>, vector<64x512xf32>,
    %185 = vector.extract_strided_slice %32 {offsets = [16, 0], sizes = [1, 512], strides = [1, 1]} : vector<32x512xf32> to vector<1x512xf32>
    %186 = vector.shape_cast %185 : vector<1x512xf32> to vector<1x512xf32>
    %187 = vector.broadcast %186 : vector<1x512xf32> to vector<32x512xf32>
    %188 = vector.extract_strided_slice %32 {offsets = [17, 0], sizes = [1, 512], strides = [1, 1]} : vector<32x512xf32> to vector<1x512xf32>
    %189 = vector.shape_cast %188 : vector<1x512xf32> to vector<1x512xf32>
    %190 = vector.broadcast %189 : vector<1x512xf32> to vector<32x512xf32>
    %191 = vector.extract_strided_slice %32 {offsets = [18, 0], sizes = [1, 512], strides = [1, 1]} : vector<32x512xf32> to vector<1x512xf32>
    %192 = vector.shape_cast %191 : vector<1x512xf32> to vector<1x512xf32>
    %193 = vector.broadcast %192 : vector<1x512xf32> to vector<32x512xf32>
    %194 = vector.extract_strided_slice %32 {offsets = [19, 0], sizes = [1, 512], strides = [1, 1]} : vector<32x512xf32> to vector<1x512xf32>
    %195 = vector.shape_cast %194 : vector<1x512xf32> to vector<1x512xf32>
    %196 = vector.broadcast %195 : vector<1x512xf32> to vector<32x512xf32>
    %197 = vector.extract_strided_slice %32 {offsets = [20, 0], sizes = [1, 512], strides = [1, 1]} : vector<32x512xf32> to vector<1x512xf32>
    %198 = vector.shape_cast %197 : vector<1x512xf32> to vector<1x512xf32>
    %199 = vector.broadcast %198 : vector<1x512xf32> to vector<32x512xf32>
    %200 = vector.extract_strided_slice %32 {offsets = [21, 0], sizes = [1, 512], strides = [1, 1]} : vector<32x512xf32> to vector<1x512xf32>
    %201 = vector.shape_cast %200 : vector<1x512xf32> to vector<1x512xf32>
    %202 = vector.broadcast %201 : vector<1x512xf32> to vector<32x512xf32>
    %203 = vector.extract_strided_slice %32 {offsets = [22, 0], sizes = [1, 512], strides = [1, 1]} : vector<32x512xf32> to vector<1x512xf32>
    %204 = vector.shape_cast %203 : vector<1x512xf32> to vector<1x512xf32>
    %205 = vector.broadcast %204 : vector<1x512xf32> to vector<32x512xf32>
    %206 = vector.extract_strided_slice %32 {offsets = [23, 0], sizes = [1, 512], strides = [1, 1]} : vector<32x512xf32> to vector<1x512xf32>
    %207 = vector.shape_cast %206 : vector<1x512xf32> to vector<1x512xf32>
    %208 = vector.broadcast %207 : vector<1x512xf32> to vector<32x512xf32>
    %209 = tpu.concatenate %187, %190, %193, %196, %199, %202, %205, %208 in 0 : vector<32x512xf32>, vector<32x512xf32>, vector<32x512xf32>, vector<32x512xf32>, vector<32x512xf32>, vector<32x512xf32>, vector<32x512xf32>, vector<32x512xf32> -> vector<256x512xf32>
    %210 = arith.truncf %209 : vector<256x512xf32> to vector<256x512xbf16>
    %211 = vector.extract_strided_slice %40 {offsets = [16, 0], sizes = [1, 512], strides = [1, 1]} : vector<32x512xf32> to vector<1x512xf32>
    %212 = vector.shape_cast %211 : vector<1x512xf32> to vector<1x512xf32>
    %213 = vector.broadcast %212 : vector<1x512xf32> to vector<32x512xf32>
    %214 = vector.extract_strided_slice %40 {offsets = [17, 0], sizes = [1, 512], strides = [1, 1]} : vector<32x512xf32> to vector<1x512xf32>
    %215 = vector.shape_cast %214 : vector<1x512xf32> to vector<1x512xf32>
    %216 = vector.broadcast %215 : vector<1x512xf32> to vector<32x512xf32>
    %217 = vector.extract_strided_slice %40 {offsets = [18, 0], sizes = [1, 512], strides = [1, 1]} : vector<32x512xf32> to vector<1x512xf32>
    %218 = vector.shape_cast %217 : vector<1x512xf32> to vector<1x512xf32>
    %219 = vector.broadcast %218 : vector<1x512xf32> to vector<32x512xf32>
    %220 = vector.extract_strided_slice %40 {offsets = [19, 0], sizes = [1, 512], strides = [1, 1]} : vector<32x512xf32> to vector<1x512xf32>
    %221 = vector.shape_cast %220 : vector<1x512xf32> to vector<1x512xf32>
    %222 = vector.broadcast %221 : vector<1x512xf32> to vector<32x512xf32>
    %223 = vector.extract_strided_slice %40 {offsets = [20, 0], sizes = [1, 512], strides = [1, 1]} : vector<32x512xf32> to vector<1x512xf32>
    %224 = vector.shape_cast %223 : vector<1x512xf32> to vector<1x512xf32>
    %225 = vector.broadcast %224 : vector<1x512xf32> to vector<32x512xf32>
    %226 = vector.extract_strided_slice %40 {offsets = [21, 0], sizes = [1, 512], strides = [1, 1]} : vector<32x512xf32> to vector<1x512xf32>
    %227 = vector.shape_cast %226 : vector<1x512xf32> to vector<1x512xf32>
    %228 = vector.broadcast %227 : vector<1x512xf32> to vector<32x512xf32>
    %229 = vector.extract_strided_slice %40 {offsets = [22, 0], sizes = [1, 512], strides = [1, 1]} : vector<32x512xf32> to vector<1x512xf32>
    %230 = vector.shape_cast %229 : vector<1x512xf32> to vector<1x512xf32>
    %231 = vector.broadcast %230 : vector<1x512xf32> to vector<32x512xf32>
    %232 = vector.extract_strided_slice %40 {offsets = [23, 0], sizes = [1, 512], strides = [1, 1]} : vector<32x512xf32> to vector<1x512xf32>
    %233 = vector.shape_cast %232 : vector<1x512xf32> to vector<1x512xf32>
    %234 = vector.broadcast %233 : vector<1x512xf32> to vector<32x512xf32>
    %235 = tpu.concatenate %213, %216, %219, %222, %225, %228, %231, %234 in 0 : vector<32x512xf32>, vector<32x512xf32>, vector<32x512xf32>, vector<32x512xf32>, vector<32x512xf32>, vector<32x512xf32>, vector<32x512xf32>, vector<32x512xf32> -> vector<256x512xf32>
    %236 = arith.truncf %235 : vector<256x512xf32> to vector<256x512xbf16>
    %237 = arith.mulf %210, %42 : vector<256x512xbf16>
    %238 = arith.mulf %236, %44 : vector<256x512xbf16>
    %239 = arith.mulf %236, %42 : vector<256x512xbf16>
    %c0_55 = arith.constant 0 : index
    %c0_56 = arith.constant 0 : index
    %c512 = arith.constant 512 : index
    %240 = vector.load %arg2[%c0_55, %c0_56, %c512] : memref<3x64x1024xbf16, #tpu.memory_space<vmem>>, vector<1x64x256xbf16>
    %241 = vector.shape_cast %240 : vector<1x64x256xbf16> to vector<64x256xbf16>
    %cst_57 = arith.constant dense<0.000000e+00> : vector<64x512xf32>
    %242 = tpu.matmul %241, %237, %cst_57 {dimension_numbers = #tpu.dot_dimension_numbers<[1], [0], [0], [1], [0, 0, 1, 1], [], []>} : vector<64x256xbf16>, vector<256x512xbf16>, vector<64x512xf32> -> vector<64x512xf32>
    %c1_58 = arith.constant 1 : index
    %c0_59 = arith.constant 0 : index
    %c512_60 = arith.constant 512 : index
    %243 = vector.load %arg2[%c1_58, %c0_59, %c512_60] : memref<3x64x1024xbf16, #tpu.memory_space<vmem>>, vector<1x64x256xbf16>
    %244 = vector.shape_cast %243 : vector<1x64x256xbf16> to vector<64x256xbf16>
    %cst_61 = arith.constant dense<0.000000e+00> : vector<64x512xf32>
    %245 = tpu.matmul %244, %238, %cst_61 {dimension_numbers = #tpu.dot_dimension_numbers<[1], [0], [0], [1], [0, 0, 1, 1], [], []>} : vector<64x256xbf16>, vector<256x512xbf16>, vector<64x512xf32> -> vector<64x512xf32>
    %c2_62 = arith.constant 2 : index
    %c0_63 = arith.constant 0 : index
    %c512_64 = arith.constant 512 : index
    %246 = vector.load %arg2[%c2_62, %c0_63, %c512_64] : memref<3x64x1024xbf16, #tpu.memory_space<vmem>>, vector<1x64x256xbf16>
    %247 = vector.shape_cast %246 : vector<1x64x256xbf16> to vector<64x256xbf16>
    %cst_65 = arith.constant dense<0.000000e+00> : vector<64x512xf32>
    %248 = tpu.matmul %247, %239, %cst_65 {dimension_numbers = #tpu.dot_dimension_numbers<[1], [0], [0], [1], [0, 0, 1, 1], [], []>} : vector<64x256xbf16>, vector<256x512xbf16>, vector<64x512xf32> -> vector<64x512xf32>
    %c0_66 = arith.constant 0 : index
    %c0_67 = arith.constant 0 : index
    %249 = vector.load %arg10[%c0_66, %c0_67] : memref<64x512xf32, #tpu.memory_space<vmem>>, vector<64x512xf32>
    %250 = arith.addf %249, %242 : vector<64x512xf32>
    %c0_68 = arith.constant 0 : index
    %c0_69 = arith.constant 0 : index
    %251 = vector.load %arg10[%c0_68, %c0_69] : memref<64x512xf32, #tpu.memory_space<vmem>>, vector<64x512xf32>
    tpu.vector_store %arg10[%c0_68, %c0_69], %250 {strides = array<i32>} : memref<64x512xf32, #tpu.memory_space<vmem>>, vector<64x512xf32>,
    %c0_70 = arith.constant 0 : index
    %c0_71 = arith.constant 0 : index
    %252 = vector.load %arg11[%c0_70, %c0_71] : memref<64x512xf32, #tpu.memory_space<vmem>>, vector<64x512xf32>
    %253 = arith.addf %252, %245 : vector<64x512xf32>
    %c0_72 = arith.constant 0 : index
    %c0_73 = arith.constant 0 : index
    %254 = vector.load %arg11[%c0_72, %c0_73] : memref<64x512xf32, #tpu.memory_space<vmem>>, vector<64x512xf32>
    tpu.vector_store %arg11[%c0_72, %c0_73], %253 {strides = array<i32>} : memref<64x512xf32, #tpu.memory_space<vmem>>, vector<64x512xf32>,
    %c0_74 = arith.constant 0 : index
    %c0_75 = arith.constant 0 : index
    %255 = vector.load %arg12[%c0_74, %c0_75] : memref<64x512xf32, #tpu.memory_space<vmem>>, vector<64x512xf32>
    %256 = arith.addf %255, %248 : vector<64x512xf32>
    %c0_76 = arith.constant 0 : index
    %c0_77 = arith.constant 0 : index
    %257 = vector.load %arg12[%c0_76, %c0_77] : memref<64x512xf32, #tpu.memory_space<vmem>>, vector<64x512xf32>
    tpu.vector_store %arg12[%c0_76, %c0_77], %256 {strides = array<i32>} : memref<64x512xf32, #tpu.memory_space<vmem>>, vector<64x512xf32>,
    %258 = vector.extract_strided_slice %32 {offsets = [24, 0], sizes = [1, 512], strides = [1, 1]} : vector<32x512xf32> to vector<1x512xf32>
    %259 = vector.shape_cast %258 : vector<1x512xf32> to vector<1x512xf32>
    %260 = vector.broadcast %259 : vector<1x512xf32> to vector<32x512xf32>
    %261 = vector.extract_strided_slice %32 {offsets = [25, 0], sizes = [1, 512], strides = [1, 1]} : vector<32x512xf32> to vector<1x512xf32>
    %262 = vector.shape_cast %261 : vector<1x512xf32> to vector<1x512xf32>
    %263 = vector.broadcast %262 : vector<1x512xf32> to vector<32x512xf32>
    %264 = vector.extract_strided_slice %32 {offsets = [26, 0], sizes = [1, 512], strides = [1, 1]} : vector<32x512xf32> to vector<1x512xf32>
    %265 = vector.shape_cast %264 : vector<1x512xf32> to vector<1x512xf32>
    %266 = vector.broadcast %265 : vector<1x512xf32> to vector<32x512xf32>
    %267 = vector.extract_strided_slice %32 {offsets = [27, 0], sizes = [1, 512], strides = [1, 1]} : vector<32x512xf32> to vector<1x512xf32>
    %268 = vector.shape_cast %267 : vector<1x512xf32> to vector<1x512xf32>
    %269 = vector.broadcast %268 : vector<1x512xf32> to vector<32x512xf32>
    %270 = vector.extract_strided_slice %32 {offsets = [28, 0], sizes = [1, 512], strides = [1, 1]} : vector<32x512xf32> to vector<1x512xf32>
    %271 = vector.shape_cast %270 : vector<1x512xf32> to vector<1x512xf32>
    %272 = vector.broadcast %271 : vector<1x512xf32> to vector<32x512xf32>
    %273 = vector.extract_strided_slice %32 {offsets = [29, 0], sizes = [1, 512], strides = [1, 1]} : vector<32x512xf32> to vector<1x512xf32>
    %274 = vector.shape_cast %273 : vector<1x512xf32> to vector<1x512xf32>
    %275 = vector.broadcast %274 : vector<1x512xf32> to vector<32x512xf32>
    %276 = vector.extract_strided_slice %32 {offsets = [30, 0], sizes = [1, 512], strides = [1, 1]} : vector<32x512xf32> to vector<1x512xf32>
    %277 = vector.shape_cast %276 : vector<1x512xf32> to vector<1x512xf32>
    %278 = vector.broadcast %277 : vector<1x512xf32> to vector<32x512xf32>
    %279 = vector.extract_strided_slice %32 {offsets = [31, 0], sizes = [1, 512], strides = [1, 1]} : vector<32x512xf32> to vector<1x512xf32>
    %280 = vector.shape_cast %279 : vector<1x512xf32> to vector<1x512xf32>
    %281 = vector.broadcast %280 : vector<1x512xf32> to vector<32x512xf32>
    %282 = tpu.concatenate %260, %263, %266, %269, %272, %275, %278, %281 in 0 : vector<32x512xf32>, vector<32x512xf32>, vector<32x512xf32>, vector<32x512xf32>, vector<32x512xf32>, vector<32x512xf32>, vector<32x512xf32>, vector<32x512xf32> -> vector<256x512xf32>
    %283 = arith.truncf %282 : vector<256x512xf32> to vector<256x512xbf16>
    %284 = vector.extract_strided_slice %40 {offsets = [24, 0], sizes = [1, 512], strides = [1, 1]} : vector<32x512xf32> to vector<1x512xf32>
    %285 = vector.shape_cast %284 : vector<1x512xf32> to vector<1x512xf32>
    %286 = vector.broadcast %285 : vector<1x512xf32> to vector<32x512xf32>
    %287 = vector.extract_strided_slice %40 {offsets = [25, 0], sizes = [1, 512], strides = [1, 1]} : vector<32x512xf32> to vector<1x512xf32>
    %288 = vector.shape_cast %287 : vector<1x512xf32> to vector<1x512xf32>
    %289 = vector.broadcast %288 : vector<1x512xf32> to vector<32x512xf32>
    %290 = vector.extract_strided_slice %40 {offsets = [26, 0], sizes = [1, 512], strides = [1, 1]} : vector<32x512xf32> to vector<1x512xf32>
    %291 = vector.shape_cast %290 : vector<1x512xf32> to vector<1x512xf32>
    %292 = vector.broadcast %291 : vector<1x512xf32> to vector<32x512xf32>
    %293 = vector.extract_strided_slice %40 {offsets = [27, 0], sizes = [1, 512], strides = [1, 1]} : vector<32x512xf32> to vector<1x512xf32>
    %294 = vector.shape_cast %293 : vector<1x512xf32> to vector<1x512xf32>
    %295 = vector.broadcast %294 : vector<1x512xf32> to vector<32x512xf32>
    %296 = vector.extract_strided_slice %40 {offsets = [28, 0], sizes = [1, 512], strides = [1, 1]} : vector<32x512xf32> to vector<1x512xf32>
    %297 = vector.shape_cast %296 : vector<1x512xf32> to vector<1x512xf32>
    %298 = vector.broadcast %297 : vector<1x512xf32> to vector<32x512xf32>
    %299 = vector.extract_strided_slice %40 {offsets = [29, 0], sizes = [1, 512], strides = [1, 1]} : vector<32x512xf32> to vector<1x512xf32>
    %300 = vector.shape_cast %299 : vector<1x512xf32> to vector<1x512xf32>
    %301 = vector.broadcast %300 : vector<1x512xf32> to vector<32x512xf32>
    %302 = vector.extract_strided_slice %40 {offsets = [30, 0], sizes = [1, 512], strides = [1, 1]} : vector<32x512xf32> to vector<1x512xf32>
    %303 = vector.shape_cast %302 : vector<1x512xf32> to vector<1x512xf32>
    %304 = vector.broadcast %303 : vector<1x512xf32> to vector<32x512xf32>
    %305 = vector.extract_strided_slice %40 {offsets = [31, 0], sizes = [1, 512], strides = [1, 1]} : vector<32x512xf32> to vector<1x512xf32>
    %306 = vector.shape_cast %305 : vector<1x512xf32> to vector<1x512xf32>
    %307 = vector.broadcast %306 : vector<1x512xf32> to vector<32x512xf32>
    %308 = tpu.concatenate %286, %289, %292, %295, %298, %301, %304, %307 in 0 : vector<32x512xf32>, vector<32x512xf32>, vector<32x512xf32>, vector<32x512xf32>, vector<32x512xf32>, vector<32x512xf32>, vector<32x512xf32>, vector<32x512xf32> -> vector<256x512xf32>
    %309 = arith.truncf %308 : vector<256x512xf32> to vector<256x512xbf16>
    %310 = arith.mulf %283, %42 : vector<256x512xbf16>
    %311 = arith.mulf %309, %44 : vector<256x512xbf16>
    %312 = arith.mulf %309, %42 : vector<256x512xbf16>
    %c0_78 = arith.constant 0 : index
    %c0_79 = arith.constant 0 : index
    %c768 = arith.constant 768 : index
    %313 = vector.load %arg2[%c0_78, %c0_79, %c768] : memref<3x64x1024xbf16, #tpu.memory_space<vmem>>, vector<1x64x256xbf16>
    %314 = vector.shape_cast %313 : vector<1x64x256xbf16> to vector<64x256xbf16>
    %cst_80 = arith.constant dense<0.000000e+00> : vector<64x512xf32>
    %315 = tpu.matmul %314, %310, %cst_80 {dimension_numbers = #tpu.dot_dimension_numbers<[1], [0], [0], [1], [0, 0, 1, 1], [], []>} : vector<64x256xbf16>, vector<256x512xbf16>, vector<64x512xf32> -> vector<64x512xf32>
    %c1_81 = arith.constant 1 : index
    %c0_82 = arith.constant 0 : index
    %c768_83 = arith.constant 768 : index
    %316 = vector.load %arg2[%c1_81, %c0_82, %c768_83] : memref<3x64x1024xbf16, #tpu.memory_space<vmem>>, vector<1x64x256xbf16>
    %317 = vector.shape_cast %316 : vector<1x64x256xbf16> to vector<64x256xbf16>
    %cst_84 = arith.constant dense<0.000000e+00> : vector<64x512xf32>
    %318 = tpu.matmul %317, %311, %cst_84 {dimension_numbers = #tpu.dot_dimension_numbers<[1], [0], [0], [1], [0, 0, 1, 1], [], []>} : vector<64x256xbf16>, vector<256x512xbf16>, vector<64x512xf32> -> vector<64x512xf32>
    %c2_85 = arith.constant 2 : index
    %c0_86 = arith.constant 0 : index
    %c768_87 = arith.constant 768 : index
    %319 = vector.load %arg2[%c2_85, %c0_86, %c768_87] : memref<3x64x1024xbf16, #tpu.memory_space<vmem>>, vector<1x64x256xbf16>
    %320 = vector.shape_cast %319 : vector<1x64x256xbf16> to vector<64x256xbf16>
    %cst_88 = arith.constant dense<0.000000e+00> : vector<64x512xf32>
    %321 = tpu.matmul %320, %312, %cst_88 {dimension_numbers = #tpu.dot_dimension_numbers<[1], [0], [0], [1], [0, 0, 1, 1], [], []>} : vector<64x256xbf16>, vector<256x512xbf16>, vector<64x512xf32> -> vector<64x512xf32>
    %c0_89 = arith.constant 0 : index
    %c0_90 = arith.constant 0 : index
    %322 = vector.load %arg10[%c0_89, %c0_90] : memref<64x512xf32, #tpu.memory_space<vmem>>, vector<64x512xf32>
    %323 = arith.addf %322, %315 : vector<64x512xf32>
    %c0_91 = arith.constant 0 : index
    %c0_92 = arith.constant 0 : index
    %324 = vector.load %arg10[%c0_91, %c0_92] : memref<64x512xf32, #tpu.memory_space<vmem>>, vector<64x512xf32>
    tpu.vector_store %arg10[%c0_91, %c0_92], %323 {strides = array<i32>} : memref<64x512xf32, #tpu.memory_space<vmem>>, vector<64x512xf32>,
    %c0_93 = arith.constant 0 : index
    %c0_94 = arith.constant 0 : index
    %325 = vector.load %arg11[%c0_93, %c0_94] : memref<64x512xf32, #tpu.memory_space<vmem>>, vector<64x512xf32>
    %326 = arith.addf %325, %318 : vector<64x512xf32>
    %c0_95 = arith.constant 0 : index
    %c0_96 = arith.constant 0 : index
    %327 = vector.load %arg11[%c0_95, %c0_96] : memref<64x512xf32, #tpu.memory_space<vmem>>, vector<64x512xf32>
    tpu.vector_store %arg11[%c0_95, %c0_96], %326 {strides = array<i32>} : memref<64x512xf32, #tpu.memory_space<vmem>>, vector<64x512xf32>,
    %c0_97 = arith.constant 0 : index
    %c0_98 = arith.constant 0 : index
    %328 = vector.load %arg12[%c0_97, %c0_98] : memref<64x512xf32, #tpu.memory_space<vmem>>, vector<64x512xf32>
    %329 = arith.addf %328, %321 : vector<64x512xf32>
    %c0_99 = arith.constant 0 : index
    %c0_100 = arith.constant 0 : index
    %330 = vector.load %arg12[%c0_99, %c0_100] : memref<64x512xf32, #tpu.memory_space<vmem>>, vector<64x512xf32>
    tpu.vector_store %arg12[%c0_99, %c0_100], %329 {strides = array<i32>} : memref<64x512xf32, #tpu.memory_space<vmem>>, vector<64x512xf32>,
    %c0_101 = arith.constant 0 : index
    %c0_102 = arith.constant 0 : index
    %331 = vector.load %arg10[%c0_101, %c0_102] : memref<64x512xf32, #tpu.memory_space<vmem>>, vector<64x512xf32>
    %c0_103 = arith.constant 0 : index
    %c0_104 = arith.constant 0 : index
    %332 = vector.load %arg11[%c0_103, %c0_104] : memref<64x512xf32, #tpu.memory_space<vmem>>, vector<64x512xf32>
    %333 = arith.mulf %331, %332 : vector<64x512xf32>
    %c0_105 = arith.constant 0 : index
    %c0_106 = arith.constant 0 : index
    %334 = vector.load %arg12[%c0_105, %c0_106] : memref<64x512xf32, #tpu.memory_space<vmem>>, vector<64x512xf32>
    %335 = arith.mulf %333, %334 : vector<64x512xf32>
    %c0_107 = arith.constant 0 : index
    %c0_108 = arith.constant 0 : index
    %336 = vector.load %arg3[%c0_107, %c0_108] : memref<128x64xf32, #tpu.memory_space<vmem>>, vector<128x64xf32>
    %cst_109 = arith.constant dense<0.000000e+00> : vector<128x512xf32>
    %337 = tpu.matmul %336, %335, %cst_109 {dimension_numbers = #tpu.dot_dimension_numbers<[1], [0], [0], [1], [0, 0, 1, 1], [], []>} : vector<128x64xf32>, vector<64x512xf32>, vector<128x512xf32> -> vector<128x512xf32>
    %c0_110 = arith.constant 0 : index
    %c0_111 = arith.constant 0 : index
    %338 = vector.load %arg4[%c0_110, %c0_111] : memref<128x1xf32, #tpu.memory_space<vmem>>, vector<128x1xf32>
    %339 = vector.broadcast %338 : vector<128x1xf32> to vector<128x512xf32>
    %340 = arith.addf %337, %339 : vector<128x512xf32>
    %cst_112 = arith.constant 0.000000e+00 : f32
    %341 = vector.broadcast %cst_112 : f32 to vector<128x512xf32>
    %342 = arith.maximumf %340, %341 : vector<128x512xf32>
    %c0_113 = arith.constant 0 : index
    %c0_114 = arith.constant 0 : index
    %343 = vector.load %arg5[%c0_113, %c0_114] : memref<128x128xf32, #tpu.memory_space<vmem>>, vector<128x128xf32>
    %cst_115 = arith.constant dense<0.000000e+00> : vector<128x512xf32>
    %344 = tpu.matmul %343, %342, %cst_115 {dimension_numbers = #tpu.dot_dimension_numbers<[1], [0], [0], [1], [0, 0, 1, 1], [], []>} : vector<128x128xf32>, vector<128x512xf32>, vector<128x512xf32> -> vector<128x512xf32>
    %c0_116 = arith.constant 0 : index
    %c0_117 = arith.constant 0 : index
    %345 = vector.load %arg6[%c0_116, %c0_117] : memref<128x1xf32, #tpu.memory_space<vmem>>, vector<128x1xf32>
    %346 = vector.broadcast %345 : vector<128x1xf32> to vector<128x512xf32>
    %347 = arith.addf %344, %346 : vector<128x512xf32>
    %cst_118 = arith.constant 0.000000e+00 : f32
    %348 = vector.broadcast %cst_118 : f32 to vector<128x512xf32>
    %349 = arith.maximumf %347, %348 : vector<128x512xf32>
    %c0_119 = arith.constant 0 : index
    %c0_120 = arith.constant 0 : index
    %350 = vector.load %arg7[%c0_119, %c0_120] : memref<128x1xf32, #tpu.memory_space<vmem>>, vector<128x1xf32>
    %351 = vector.broadcast %350 : vector<128x1xf32> to vector<128x512xf32>
    %352 = arith.mulf %349, %351 : vector<128x512xf32>
    %cst_121 = arith.constant dense<0.000000e+00> : vector<512xf32>
    %353 = vector.multi_reduction <add>, %352, %cst_121 [0] : vector<128x512xf32> to vector<512xf32>
    %354 = vector.shape_cast %353 : vector<512xf32> to vector<1x512xf32>
    %c0_122 = arith.constant 0 : index
    %c0_123 = arith.constant 0 : index
    %355 = vector.load %arg8[%c0_122, %c0_123] : memref<1x1xf32, #tpu.memory_space<vmem>>, vector<1x1xf32>
    %356 = vector.broadcast %355 : vector<1x1xf32> to vector<1x512xf32>
    %357 = arith.addf %354, %356 : vector<1x512xf32>
    %c0_124 = arith.constant 0 : index
    %c0_125 = arith.constant 0 : index
    %358 = vector.load %arg9[%c0_124, %c0_125] : memref<1x512xf32, #tpu.memory_space<vmem>>, vector<1x512xf32>
    tpu.vector_store %arg9[%c0_124, %c0_125], %357 {strides = array<i32>} : memref<1x512xf32, #tpu.memory_space<vmem>>, vector<1x512xf32>,
    return
  }
  func.func @transform_0(%arg0: i32) -> (i32, i32) {
    %c0_i32 = arith.constant 0 : i32
    %c0_i32_0 = arith.constant 0 : i32
    return %c0_i32, %arg0 : i32, i32
  }
  func.func @transform_1(%arg0: i32) -> (i32, i32, i32) {
    %c0_i32 = arith.constant 0 : i32
    %c0_i32_0 = arith.constant 0 : i32
    %c0_i32_1 = arith.constant 0 : i32
    %c0_i32_2 = arith.constant 0 : i32
    return %c0_i32, %c0_i32_0, %c0_i32_1 : i32, i32, i32
  }
  func.func @transform_2(%arg0: i32) -> (i32, i32) {
    %c0_i32 = arith.constant 0 : i32
    %c0_i32_0 = arith.constant 0 : i32
    %c0_i32_1 = arith.constant 0 : i32
    return %c0_i32, %c0_i32_0 : i32, i32
  }
  func.func @transform_3(%arg0: i32) -> (i32, i32) {
    %c0_i32 = arith.constant 0 : i32
    %c0_i32_0 = arith.constant 0 : i32
    %c0_i32_1 = arith.constant 0 : i32
    return %c0_i32, %c0_i32_0 : i32, i32
  }
  func.func @transform_4(%arg0: i32) -> (i32, i32) {
    %c0_i32 = arith.constant 0 : i32
    %c0_i32_0 = arith.constant 0 : i32
    %c0_i32_1 = arith.constant 0 : i32
    return %c0_i32, %c0_i32_0 : i32, i32
  }
  func.func @transform_5(%arg0: i32) -> (i32, i32) {
    %c0_i32 = arith.constant 0 : i32
    %c0_i32_0 = arith.constant 0 : i32
    %c0_i32_1 = arith.constant 0 : i32
    return %c0_i32, %c0_i32_0 : i32, i32
  }
  func.func @transform_6(%arg0: i32) -> (i32, i32) {
    %c0_i32 = arith.constant 0 : i32
    %c0_i32_0 = arith.constant 0 : i32
    %c0_i32_1 = arith.constant 0 : i32
    return %c0_i32, %c0_i32_0 : i32, i32
  }
  func.func @transform_7(%arg0: i32) -> (i32, i32) {
    %c0_i32 = arith.constant 0 : i32
    %c0_i32_0 = arith.constant 0 : i32
    %c0_i32_1 = arith.constant 0 : i32
    return %c0_i32, %c0_i32_0 : i32, i32
  }
  func.func @transform_8(%arg0: i32) -> (i32, i32) {
    %c0_i32 = arith.constant 0 : i32
    %c0_i32_0 = arith.constant 0 : i32
    return %c0_i32, %arg0 : i32, i32
  }
}

</mosaic_0001>

<llo_original>
// kernel: tpu_custom_call.1
$region0: #{tpu_custom_call.1}
  #allocation0 [shape = 'u32[]', space=smem, size = 0x4, offset = 0x4, fixed_abs, tag = 'smem constant byte address 0x4 - core index']
  #allocation1 [shape = 'u32[144,128]{1,0:T(1,128)}', space=vmem, size = 0x12000, scoped, tag = 'internal scratch']
  #allocation2 [shape = 'f32[64,512]{1,0:T(8,128)}', space=vmem, size = 0x20000, scoped, tag = 'scratch operand']
  #allocation3 [shape = 'f32[64,512]{1,0:T(8,128)}', space=vmem, size = 0x20000, scoped, tag = 'scratch operand']
  #allocation4 [shape = 'f32[64,512]{1,0:T(8,128)}', space=vmem, size = 0x20000, scoped, tag = 'scratch operand']
  #allocation5 [shape = 'f32[1,1]{1,0:T(1,128)S(1)}', space=vmem, size = 0x200, scoped, tag = 'scoped memory for tpu_custom_call.1']
  %s0 = inlined_call_operand.vmem [shape: f32[3,1536], index: 0, kind: input, shape index: {}]
  %s1 = inlined_call_operand.hbm [shape: bf16[3,64,1024], index: 1, kind: input, shape index: {}]
  %s2 = inlined_call_operand.vmem [shape: f32[128,64], index: 2, kind: input, shape index: {}]
  %s3 = inlined_call_operand.vmem [shape: f32[128,1], index: 3, kind: input, shape index: {}]
  %s4 = inlined_call_operand.vmem [shape: f32[128,128], index: 4, kind: input, shape index: {}]
  %s5 = inlined_call_operand.vmem [shape: f32[128,1], index: 5, kind: input, shape index: {}]
  %s6 = inlined_call_operand.vmem [shape: f32[128,1], index: 6, kind: input, shape index: {}]
  %s7 = inlined_call_operand.<no memory space> [shape: f32[1,1], index: 7, kind: input, shape index: {}]
  %s8 = inlined_call_operand.hbm [shape: f32[1,1536], index: 8, kind: output, shape index: {}]
  %s9 = sld [smem:[#allocation0]]
  $region69: #{tpu_custom_call.1} parent=0
    _
  %s11 = ssub.s32 1, %s9
  %s12 = scalar_select 0, %s11, %s9
  %v13 = vstv %s7
  %14 = vst [vmem:[#allocation5] sm:$0x1] %v13
  $region1: #{tpu_custom_call.1} parent=0
    #allocation6 [shape = 'u8[393216]{0}', space=vmem, size = 0x60000, scoped, tag = 'input window, operand 1, single buffered']
    #allocation7 [shape = 's32[2]{0}', space=sflag, size = 0x8, scoped, tag = 'scoped memory for tpu_custom_call.1']
    #allocation8 [shape = 's32[2]{0}', space=sflag, size = 0x8, scoped, tag = 'scoped memory for tpu_custom_call.1']
    #allocation9 [shape = 'u8[4096]{0}', space=vmem, size = 0x1000, scoped, tag = 'output window, operand 0']
    %15 = vsyncpa [#allocation7], 0
    %16 = vsyncpa [#allocation8], 0
    %s17 = scalar_lea.sflag [#allocation8], 1
    %18 = vsyncpa %s17, 0
    loop: start=0, step=1, limit=5
    $region2: #{tpu_custom_call.1} parent=1 // loop_pre_header
      _
    $region3: #{tpu_custom_call.1} parent=1 // loop_header
      %s20 = sphi 0, %s24
      %p21 = scmp.ge.s32.totalorder %s20, 5
      %s30 = sphi 0, %s32
      %s33 = sphi 0, %s30
      %s34 = sphi 0, %s33
      %s50 = sphi 0, %s34
      %s54 = sphi 0, %s54
      %s56 = sphi 0, %s54
      %s57 = sphi 0, %s56
      %s71 = sphi 0, %s57
      %s75 = sphi 0, %s75
      %s77 = sphi 0, %s75
      %s78 = sphi 0, %s77
      %s92 = sphi 0, %s78
      %s96 = sphi 0, %s96
      %s98 = sphi 0, %s96
      %s99 = sphi 0, %s98
      %s113 = sphi 0, %s99
      %s117 = sphi 0, %s117
      %s119 = sphi 0, %s117
      %s120 = sphi 0, %s119
      %s134 = sphi 0, %s120
      %s138 = sphi 0, %s138
      %s140 = sphi 0, %s138
      %s141 = sphi 0, %s140
      %s155 = sphi 0, %s141
      %s159 = sphi 0, %s159
      %s161 = sphi 0, %s159
      %s162 = sphi 0, %s161
      %s176 = sphi 0, %s162
      %s180 = sphi 0, %s180
      %s182 = sphi 0, %s180
      %s183 = sphi 0, %s182
      %s197 = sphi 0, %s183
      %s203 = sphi 0, %s205
      %s206 = sphi 0, %s203
      %s207 = sphi 0, %s206
      %s223 = sphi 0, %s207
    $region4: #{tpu_custom_call.1} parent=1 // loop_header_branch
      %23 = sbr.rel (%p21) target = $region8
    $region5: #{tpu_custom_call.1} parent=1 // loop_body
      %s25 = ssub.s32 %s20, 1
      %s26 = ssub.s32 %s20, 2
      %s27 = sadd.s32 %s20, 1
      %s28 = ssub.s32 %s20, %s27
      %p29 = scmp.eq.s32.totalorder %s28, 0
      %s31 = sadd.s32 %s30, 1
      %s32 = scalar_select %p29, %s30, %s31
      %p35 = pneg %p29
      %p36 = scmp.eq.s32.totalorder %s20, 2
      %p37 = por %p35, %p36
      %p38 = scmp.ne.s32.totalorder %s30, %s33
      %p39 = scmp.eq.s32.totalorder %s20, 0
      %p40 = por %p38, %p39
      %p41 = scmp.ne.s32.totalorder %s30, %s33
      %p42 = scmp.eq.s32.totalorder %s25, 2
      %p43 = por %p41, %p42
      %p44 = scmp.ne.s32.totalorder %s33, %s34
      %p45 = scmp.eq.s32.totalorder %s25, 0
      %p46 = por %p44, %p45
      %p47 = scmp.ne.s32.totalorder %s33, %s34
      %p48 = scmp.eq.s32.totalorder %s26, 2
      %p49 = por %p47, %p48
      %p51 = scmp.ne.s32.totalorder %s34, %s50
      %p52 = scmp.eq.s32.totalorder %s26, 0
      %p53 = por %p51, %p52
      %s55 = sadd.s32 %s54, 1
      %p58 = scmp.eq.s32.totalorder %s20, 2
      %p59 = scmp.ne.s32.totalorder %s54, %s56
      %p60 = scmp.eq.s32.totalorder %s20, 0
      %p61 = por %p59, %p60
      %p62 = scmp.ne.s32.totalorder %s54, %s56
      %p63 = scmp.eq.s32.totalorder %s25, 2
      %p64 = por %p62, %p63
      %p65 = scmp.ne.s32.totalorder %s56, %s57
      %p66 = scmp.eq.s32.totalorder %s25, 0
      %p67 = por %p65, %p66
      %p68 = scmp.ne.s32.totalorder %s56, %s57
      %p69 = scmp.eq.s32.totalorder %s26, 2
      %p70 = por %p68, %p69
      %p72 = scmp.ne.s32.totalorder %s57, %s71
      %p73 = scmp.eq.s32.totalorder %s26, 0
      %p74 = por %p72, %p73
      %s76 = sadd.s32 %s75, 1
      %p79 = scmp.eq.s32.totalorder %s20, 2
      %p80 = scmp.ne.s32.totalorder %s75, %s77
      %p81 = scmp.eq.s32.totalorder %s20, 0
      %p82 = por %p80, %p81
      %p83 = scmp.ne.s32.totalorder %s75, %s77
      %p84 = scmp.eq.s32.totalorder %s25, 2
      %p85 = por %p83, %p84
      %p86 = scmp.ne.s32.totalorder %s77, %s78
      %p87 = scmp.eq.s32.totalorder %s25, 0
      %p88 = por %p86, %p87
      %p89 = scmp.ne.s32.totalorder %s77, %s78
      %p90 = scmp.eq.s32.totalorder %s26, 2
      %p91 = por %p89, %p90
      %p93 = scmp.ne.s32.totalorder %s78, %s92
      %p94 = scmp.eq.s32.totalorder %s26, 0
      %p95 = por %p93, %p94
      %s97 = sadd.s32 %s96, 1
      %p100 = scmp.eq.s32.totalorder %s20, 2
      %p101 = scmp.ne.s32.totalorder %s96, %s98
      %p102 = scmp.eq.s32.totalorder %s20, 0
      %p103 = por %p101, %p102
      %p104 = scmp.ne.s32.totalorder %s96, %s98
      %p105 = scmp.eq.s32.totalorder %s25, 2
      %p106 = por %p104, %p105
      %p107 = scmp.ne.s32.totalorder %s98, %s99
      %p108 = scmp.eq.s32.totalorder %s25, 0
      %p109 = por %p107, %p108
      %p110 = scmp.ne.s32.totalorder %s98, %s99
      %p111 = scmp.eq.s32.totalorder %s26, 2
      %p112 = por %p110, %p111
      %p114 = scmp.ne.s32.totalorder %s99, %s113
      %p115 = scmp.eq.s32.totalorder %s26, 0
      %p116 = por %p114, %p115
      %s118 = sadd.s32 %s117, 1
      %p121 = scmp.eq.s32.totalorder %s20, 2
      %p122 = scmp.ne.s32.totalorder %s117, %s119
      %p123 = scmp.eq.s32.totalorder %s20, 0
      %p124 = por %p122, %p123
      %p125 = scmp.ne.s32.totalorder %s117, %s119
      %p126 = scmp.eq.s32.totalorder %s25, 2
      %p127 = por %p125, %p126
      %p128 = scmp.ne.s32.totalorder %s119, %s120
      %p129 = scmp.eq.s32.totalorder %s25, 0
      %p130 = por %p128, %p129
      %p131 = scmp.ne.s32.totalorder %s119, %s120
      %p132 = scmp.eq.s32.totalorder %s26, 2
      %p133 = por %p131, %p132
      %p135 = scmp.ne.s32.totalorder %s120, %s134
      %p136 = scmp.eq.s32.totalorder %s26, 0
      %p137 = por %p135, %p136
      %s139 = sadd.s32 %s138, 1
      %p142 = scmp.eq.s32.totalorder %s20, 2
      %p143 = scmp.ne.s32.totalorder %s138, %s140
      %p144 = scmp.eq.s32.totalorder %s20, 0
      %p145 = por %p143, %p144
      %p146 = scmp.ne.s32.totalorder %s138, %s140
      %p147 = scmp.eq.s32.totalorder %s25, 2
      %p148 = por %p146, %p147
      %p149 = scmp.ne.s32.totalorder %s140, %s141
      %p150 = scmp.eq.s32.totalorder %s25, 0
      %p151 = por %p149, %p150
      %p152 = scmp.ne.s32.totalorder %s140, %s141
      %p153 = scmp.eq.s32.totalorder %s26, 2
      %p154 = por %p152, %p153
      %p156 = scmp.ne.s32.totalorder %s141, %s155
      %p157 = scmp.eq.s32.totalorder %s26, 0
      %p158 = por %p156, %p157
      %s160 = sadd.s32 %s159, 1
      %p163 = scmp.eq.s32.totalorder %s20, 2
      %p164 = scmp.ne.s32.totalorder %s159, %s161
      %p165 = scmp.eq.s32.totalorder %s20, 0
      %p166 = por %p164, %p165
      %p167 = scmp.ne.s32.totalorder %s159, %s161
      %p168 = scmp.eq.s32.totalorder %s25, 2
      %p169 = por %p167, %p168
      %p170 = scmp.ne.s32.totalorder %s161, %s162
      %p171 = scmp.eq.s32.totalorder %s25, 0
      %p172 = por %p170, %p171
      %p173 = scmp.ne.s32.totalorder %s161, %s162
      %p174 = scmp.eq.s32.totalorder %s26, 2
      %p175 = por %p173, %p174
      %p177 = scmp.ne.s32.totalorder %s162, %s176
      %p178 = scmp.eq.s32.totalorder %s26, 0
      %p179 = por %p177, %p178
      %s181 = sadd.s32 %s180, 1
      %p184 = scmp.eq.s32.totalorder %s20, 2
      %p185 = scmp.ne.s32.totalorder %s180, %s182
      %p186 = scmp.eq.s32.totalorder %s20, 0
      %p187 = por %p185, %p186
      %p188 = scmp.ne.s32.totalorder %s180, %s182
      %p189 = scmp.eq.s32.totalorder %s25, 2
      %p190 = por %p188, %p189
      %p191 = scmp.ne.s32.totalorder %s182, %s183
      %p192 = scmp.eq.s32.totalorder %s25, 0
      %p193 = por %p191, %p192
      %p194 = scmp.ne.s32.totalorder %s182, %s183
      %p195 = scmp.eq.s32.totalorder %s26, 2
      %p196 = por %p194, %p195
      %p198 = scmp.ne.s32.totalorder %s183, %s197
      %p199 = scmp.eq.s32.totalorder %s26, 0
      %p200 = por %p198, %p199
      %s201 = ssub.s32 %s20, %s27
      %p202 = scmp.eq.s32.totalorder %s201, 0
      %s204 = sadd.s32 %s203, 1
      %s205 = scalar_select %p202, %s203, %s204
      %p208 = pneg %p202
      %p209 = scmp.eq.s32.totalorder %s20, 2
      %p210 = por %p208, %p209
      %p211 = scmp.ne.s32.totalorder %s203, %s206
      %p212 = scmp.eq.s32.totalorder %s20, 0
      %p213 = por %p211, %p212
      %p214 = scmp.ne.s32.totalorder %s203, %s206
      %p215 = scmp.eq.s32.totalorder %s25, 2
      %p216 = por %p214, %p215
      %p217 = scmp.ne.s32.totalorder %s206, %s207
      %p218 = scmp.eq.s32.totalorder %s25, 0
      %p219 = por %p217, %p218
      %p220 = scmp.ne.s32.totalorder %s206, %s207
      %p221 = scmp.eq.s32.totalorder %s26, 2
      %p222 = por %p220, %p221
      %p224 = scmp.ne.s32.totalorder %s207, %s223
      %p225 = scmp.eq.s32.totalorder %s26, 0
      %p226 = por %p224, %p225
      %p227 = scmp.le.s32.totalorder 1, %s20
      %p228 = scmp.lt.s32.totalorder %s20, 4
      %p229 = pnand %p227, %p228
      %p230 = pneg %p229
      // Predicated region
      $region9: #{tpu_custom_call.1} parent=5 // pred_check
        _
      $region10: #{tpu_custom_call.1} parent=5 // pred_check_branch
        %232 = sbr.rel (%p229) target = $region12
      $region11: #{tpu_custom_call.1} parent=5 // pred_region
        %s233 = ssub.s32 %s20, 1
        // Predicated region
        $region13: #{tpu_custom_call.1} parent=11 // pred_check
          %p234 = pneg %p67
        $region14: #{tpu_custom_call.1} parent=11 // pred_check_branch
          %236 = sbr.rel (%p234) target = $region16
        $region15: #{tpu_custom_call.1} parent=11 // pred_region
          %s238 = ssub.s32 12288, 12288
          %239 = vsyncadd [#allocation7], %s238
          %s240 = sshll.u32 [#allocation6], 4
          %s241 = int_to_ptr.vmem [resolvable:$true] %s240
          %246 = dma.hbm_to_vmem [thread:$0]  %s1, 12288, %s241, [#allocation7], 512, 512, 32
        $region16: #{tpu_custom_call.1} parent=11 // pred_fallthru
          _
        // Predicated region
        $region17: #{tpu_custom_call.1} parent=11 // pred_check
          %p247 = pneg %p88
        $region18: #{tpu_custom_call.1} parent=11 // pred_check_branch
          %249 = sbr.rel (%p247) target = $region20
        $region19: #{tpu_custom_call.1} parent=11 // pred_region
          _
        $region20: #{tpu_custom_call.1} parent=11 // pred_fallthru
          _
        // Predicated region
        $region21: #{tpu_custom_call.1} parent=11 // pred_check
          %p250 = pneg %p109
        $region22: #{tpu_custom_call.1} parent=11 // pred_check_branch
          %252 = sbr.rel (%p250) target = $region24
        $region23: #{tpu_custom_call.1} parent=11 // pred_region
          _
        $region24: #{tpu_custom_call.1} parent=11 // pred_fallthru
          _
        // Predicated region
        $region25: #{tpu_custom_call.1} parent=11 // pred_check
          %p253 = pneg %p130
        $region26: #{tpu_custom_call.1} parent=11 // pred_check_branch
          %255 = sbr.rel (%p253) target = $region28
        $region27: #{tpu_custom_call.1} parent=11 // pred_region
          _
        $region28: #{tpu_custom_call.1} parent=11 // pred_fallthru
          _
        // Predicated region
        $region29: #{tpu_custom_call.1} parent=11 // pred_check
          %p256 = pneg %p151
        $region30: #{tpu_custom_call.1} parent=11 // pred_check_branch
          %258 = sbr.rel (%p256) target = $region32
        $region31: #{tpu_custom_call.1} parent=11 // pred_region
          _
        $region32: #{tpu_custom_call.1} parent=11 // pred_fallthru
          _
        // Predicated region
        $region33: #{tpu_custom_call.1} parent=11 // pred_check
          %p259 = pneg %p172
        $region34: #{tpu_custom_call.1} parent=11 // pred_check_branch
          %261 = sbr.rel (%p259) target = $region36
        $region35: #{tpu_custom_call.1} parent=11 // pred_region
          _
        $region36: #{tpu_custom_call.1} parent=11 // pred_fallthru
          _
        // Predicated region
        $region37: #{tpu_custom_call.1} parent=11 // pred_check
          %p262 = pneg %p193
        $region38: #{tpu_custom_call.1} parent=11 // pred_check_branch
          %264 = sbr.rel (%p262) target = $region40
        $region39: #{tpu_custom_call.1} parent=11 // pred_region
          _
        $region40: #{tpu_custom_call.1} parent=11 // pred_fallthru
          _
      $region12: #{tpu_custom_call.1} parent=5 // pred_fallthru
        _
      %p265 = scmp.lt.s32.totalorder %s20, 3
      // Predicated region
      $region41: #{tpu_custom_call.1} parent=5 // pred_check
        %p266 = pneg %p265
      $region42: #{tpu_custom_call.1} parent=5 // pred_check_branch
        %268 = sbr.rel (%p266) target = $region44
      $region43: #{tpu_custom_call.1} parent=5 // pred_region
        // Predicated region
        $region45: #{tpu_custom_call.1} parent=43 // pred_check
          %p269 = pneg %p40
        $region46: #{tpu_custom_call.1} parent=43 // pred_check_branch
          %271 = sbr.rel (%p269) target = $region48
        $region47: #{tpu_custom_call.1} parent=43 // pred_region
          %s272 = smul.u32 4, %s20
          %p273 = scmp.lt.s32.totalorder %s272, 11
          %s274 = scalar_select %p273, %s272, 11
          %s275 = smul.addr %s274, 4
          %s276 = scalar_lea.vmem %s0, %s275
          %s277 = smul.u32 4, %s20
        $region48: #{tpu_custom_call.1} parent=43 // pred_fallthru
          _
      $region44: #{tpu_custom_call.1} parent=5 // pred_fallthru
        _
      %p278 = scmp.le.s32.totalorder 1, %s20
      %p279 = scmp.lt.s32.totalorder %s20, 4
      %p280 = pnand %p278, %p279
      %p281 = pneg %p280
      // Predicated region
      $region49: #{tpu_custom_call.1} parent=5 // pred_check
        _
      $region50: #{tpu_custom_call.1} parent=5 // pred_check_branch
        %283 = sbr.rel (%p280) target = $region52
      $region51: #{tpu_custom_call.1} parent=5 // pred_region
        %s284 = ssub.s32 %s20, 1
        // Predicated region
        $region53: #{tpu_custom_call.1} parent=51 // pred_check
          %p285 = pneg %p67
        $region54: #{tpu_custom_call.1} parent=51 // pred_check_branch
          %287 = sbr.rel (%p285) target = $region56
        $region55: #{tpu_custom_call.1} parent=51 // pred_region
          %288 = dma.done [#allocation7], 12288
        $region56: #{tpu_custom_call.1} parent=51 // pred_fallthru
          _
        %s289 = smul.u32 4, %s25
        %p290 = scmp.lt.s32.totalorder %s289, 11
        %s291 = scalar_select %p290, %s289, 11
        %s292 = smul.addr %s291, 4
        %s293 = scalar_lea.vmem %s0, %s292
        %p294 = pneg %p46
        %p295 = pneg %p43
        %p296 = pneg %p67
        %p297 = pneg %p64
        %p298 = pneg %p88
        %p299 = pneg %p85
        %p300 = pneg %p109
        %p301 = pneg %p106
        %p302 = pneg %p130
        %p303 = pneg %p127
        %p304 = pneg %p151
        %p305 = pneg %p148
        %p306 = pneg %p172
        %p307 = pneg %p169
        %p308 = pneg %p193
        %p309 = pneg %p190
        %p310 = pneg %p219
        %p311 = pneg %p216
        %s312 = sand.u32 %s206, 1
        %s313 = scalar_lea.sflag [#allocation8], %s312
        %s314 = sand.u32 %s206, 1
        %s315 = smul.addr %s314, 4
        %s316 = scalar_lea.vmem [#allocation9], %s315
        %s317 = smul.u32 4, %s25
        %p318 = scmp.lt.s32.totalorder %s317, 11
        %s319 = scalar_select %p318, %s317, 11
        %s320 = smul.addr %s319, 4
        %s321 = scalar_lea.vmem %s0, %s320
        %s322 = smul.u32 4, %s25
        %s323 = smul.u32 4, %s25
        %v324 = vld [vmem:[%s321] ss:$4 sm:$0xf]
        %v325 = vadd.f32 %v324, 1.0
        %v326 = vmul.f32 %v325, 15.5
        %s327 = scalar_lea.vmem %s321, 1
        %v328 = vld [vmem:[%s327] ss:$4 sm:$0xf]
        %v329 = vadd.f32 %v328, 1.0
        %v330 = vmul.f32 %v329, 15.5
        %s331 = scalar_lea.vmem %s321, 2
        %v332 = vld [vmem:[%s331] ss:$4 sm:$0xf]
        %v333 = vadd.f32 %v332, 1.0
        %v334 = vmul.f32 %v333, 15.5
        %v335 = vlaneseq
        %v336 = vshrl.u32 %v335, 7
        %v337 = vadd.s32 %v336, 8
        %v338 = vadd.s32 %v336, 16
        %v339 = vadd.s32 %v336, 24
        %v340 = vcvt.s32.f32 %v336
        %v341 = vcvt.s32.f32 %v337
        %v342 = vcvt.s32.f32 %v338
        %v343 = vcvt.s32.f32 %v339
        %v345 = vlaneseq
        %v346 = vshrl.u32 %v345, 7
        %v347 = vsub.s32 0, %v346
        %v348 = vrot.slane %v326, %v347
        %v349 = vlaneseq
        %v350 = vshrl.u32 %v349, 7
        %v351 = vsub.s32 1, %v350
        %v352 = vrot.slane %v326, %v351
        %v353 = vlaneseq
        %v354 = vshrl.u32 %v353, 7
        %v355 = vsub.s32 2, %v354
        %v356 = vrot.slane %v326, %v355
        %v357 = vlaneseq
        %v358 = vshrl.u32 %v357, 7
        %v359 = vsub.s32 3, %v358
        %v360 = vrot.slane %v326, %v359
        %v365 = vsub.f32 %v348, %v340
        %v366 = vsub.f32 %v352, %v340
        %v367 = vsub.f32 %v356, %v340
        %v368 = vsub.f32 %v360, %v340
        %v369 = vsub.f32 %v348, %v341
        %v370 = vsub.f32 %v352, %v341
        %v371 = vsub.f32 %v356, %v341
        %v372 = vsub.f32 %v360, %v341
        %v373 = vsub.f32 %v348, %v342
        %v374 = vsub.f32 %v352, %v342
        %v375 = vsub.f32 %v356, %v342
        %v376 = vsub.f32 %v360, %v342
        %v377 = vsub.f32 %v348, %v343
        %v378 = vsub.f32 %v352, %v343
        %v379 = vsub.f32 %v356, %v343
        %v380 = vsub.f32 %v360, %v343
        %v381 = vand.u32 2147483647, %v365
        %v382 = vand.u32 2147483647, %v366
        %v383 = vand.u32 2147483647, %v367
        %v384 = vand.u32 2147483647, %v368
        %v385 = vand.u32 2147483647, %v369
        %v386 = vand.u32 2147483647, %v370
        %v387 = vand.u32 2147483647, %v371
        %v388 = vand.u32 2147483647, %v372
        %v389 = vand.u32 2147483647, %v373
        %v390 = vand.u32 2147483647, %v374
        %v391 = vand.u32 2147483647, %v375
        %v392 = vand.u32 2147483647, %v376
        %v393 = vand.u32 2147483647, %v377
        %v394 = vand.u32 2147483647, %v378
        %v395 = vand.u32 2147483647, %v379
        %v396 = vand.u32 2147483647, %v380
        %v397 = vsub.f32 1.0, %v381
        %v398 = vsub.f32 1.0, %v382
        %v399 = vsub.f32 1.0, %v383
        %v400 = vsub.f32 1.0, %v384
        %v401 = vsub.f32 1.0, %v385
        %v402 = vsub.f32 1.0, %v386
        %v403 = vsub.f32 1.0, %v387
        %v404 = vsub.f32 1.0, %v388
        %v405 = vsub.f32 1.0, %v389
        %v406 = vsub.f32 1.0, %v390
        %v407 = vsub.f32 1.0, %v391
        %v408 = vsub.f32 1.0, %v392
        %v409 = vsub.f32 1.0, %v393
        %v410 = vsub.f32 1.0, %v394
        %v411 = vsub.f32 1.0, %v395
        %v412 = vsub.f32 1.0, %v396
        %v413 = vmax.f32 %v397, 0.0
        %v414 = vmax.f32 %v398, 0.0
        %v415 = vmax.f32 %v399, 0.0
        %v416 = vmax.f32 %v400, 0.0
        %v417 = vmax.f32 %v401, 0.0
        %v418 = vmax.f32 %v402, 0.0
        %v419 = vmax.f32 %v403, 0.0
        %v420 = vmax.f32 %v404, 0.0
        %v421 = vmax.f32 %v405, 0.0
        %v422 = vmax.f32 %v406, 0.0
        %v423 = vmax.f32 %v407, 0.0
        %v424 = vmax.f32 %v408, 0.0
        %v425 = vmax.f32 %v409, 0.0
        %v426 = vmax.f32 %v410, 0.0
        %v427 = vmax.f32 %v411, 0.0
        %v428 = vmax.f32 %v412, 0.0
        %v430 = vlaneseq
        %v431 = vshrl.u32 %v430, 7
        %v432 = vsub.s32 0, %v431
        %v433 = vrot.slane %v330, %v432
        %v434 = vlaneseq
        %v435 = vshrl.u32 %v434, 7
        %v436 = vsub.s32 1, %v435
        %v437 = vrot.slane %v330, %v436
        %v438 = vlaneseq
        %v439 = vshrl.u32 %v438, 7
        %v440 = vsub.s32 2, %v439
        %v441 = vrot.slane %v330, %v440
        %v442 = vlaneseq
        %v443 = vshrl.u32 %v442, 7
        %v444 = vsub.s32 3, %v443
        %v445 = vrot.slane %v330, %v444
        %v450 = vsub.f32 %v433, %v340
        %v451 = vsub.f32 %v437, %v340
        %v452 = vsub.f32 %v441, %v340
        %v453 = vsub.f32 %v445, %v340
        %v454 = vsub.f32 %v433, %v341
        %v455 = vsub.f32 %v437, %v341
        %v456 = vsub.f32 %v441, %v341
        %v457 = vsub.f32 %v445, %v341
        %v458 = vsub.f32 %v433, %v342
        %v459 = vsub.f32 %v437, %v342
        %v460 = vsub.f32 %v441, %v342
        %v461 = vsub.f32 %v445, %v342
        %v462 = vsub.f32 %v433, %v343
        %v463 = vsub.f32 %v437, %v343
        %v464 = vsub.f32 %v441, %v343
        %v465 = vsub.f32 %v445, %v343
        %v466 = vand.u32 2147483647, %v450
        %v467 = vand.u32 2147483647, %v451
        %v468 = vand.u32 2147483647, %v452
        %v469 = vand.u32 2147483647, %v453
        %v470 = vand.u32 2147483647, %v454
        %v471 = vand.u32 2147483647, %v455
        %v472 = vand.u32 2147483647, %v456
        %v473 = vand.u32 2147483647, %v457
        %v474 = vand.u32 2147483647, %v458
        %v475 = vand.u32 2147483647, %v459
        %v476 = vand.u32 2147483647, %v460
        %v477 = vand.u32 2147483647, %v461
        %v478 = vand.u32 2147483647, %v462
        %v479 = vand.u32 2147483647, %v463
        %v480 = vand.u32 2147483647, %v464
        %v481 = vand.u32 2147483647, %v465
        %v482 = vsub.f32 1.0, %v466
        %v483 = vsub.f32 1.0, %v467
        %v484 = vsub.f32 1.0, %v468
        %v485 = vsub.f32 1.0, %v469
        %v486 = vsub.f32 1.0, %v470
        %v487 = vsub.f32 1.0, %v471
        %v488 = vsub.f32 1.0, %v472
        %v489 = vsub.f32 1.0, %v473
        %v490 = vsub.f32 1.0, %v474
        %v491 = vsub.f32 1.0, %v475
        %v492 = vsub.f32 1.0, %v476
        %v493 = vsub.f32 1.0, %v477
        %v494 = vsub.f32 1.0, %v478
        %v495 = vsub.f32 1.0, %v479
        %v496 = vsub.f32 1.0, %v480
        %v497 = vsub.f32 1.0, %v481
        %v498 = vmax.f32 %v482, 0.0
        %v499 = vmax.f32 %v483, 0.0
        %v500 = vmax.f32 %v484, 0.0
        %v501 = vmax.f32 %v485, 0.0
        %v502 = vmax.f32 %v486, 0.0
        %v503 = vmax.f32 %v487, 0.0
        %v504 = vmax.f32 %v488, 0.0
        %v505 = vmax.f32 %v489, 0.0
        %v506 = vmax.f32 %v490, 0.0
        %v507 = vmax.f32 %v491, 0.0
        %v508 = vmax.f32 %v492, 0.0
        %v509 = vmax.f32 %v493, 0.0
        %v510 = vmax.f32 %v494, 0.0
        %v511 = vmax.f32 %v495, 0.0
        %v512 = vmax.f32 %v496, 0.0
        %v513 = vmax.f32 %v497, 0.0
        %v515 = vlaneseq
        %v516 = vshrl.u32 %v515, 7
        %v517 = vsub.s32 0, %v516
        %v518 = vrot.slane %v334, %v517
        %v519 = vlaneseq
        %v520 = vshrl.u32 %v519, 7
        %v521 = vsub.s32 1, %v520
        %v522 = vrot.slane %v334, %v521
        %v523 = vlaneseq
        %v524 = vshrl.u32 %v523, 7
        %v525 = vsub.s32 2, %v524
        %v526 = vrot.slane %v334, %v525
        %v527 = vlaneseq
        %v528 = vshrl.u32 %v527, 7
        %v529 = vsub.s32 3, %v528
        %v530 = vrot.slane %v334, %v529
        %v535 = vsub.f32 %v518, %v340
        %v536 = vsub.f32 %v522, %v340
        %v537 = vsub.f32 %v526, %v340
        %v538 = vsub.f32 %v530, %v340
        %v539 = vsub.f32 %v518, %v341
        %v540 = vsub.f32 %v522, %v341
        %v541 = vsub.f32 %v526, %v341
        %v542 = vsub.f32 %v530, %v341
        %v543 = vsub.f32 %v518, %v342
        %v544 = vsub.f32 %v522, %v342
        %v545 = vsub.f32 %v526, %v342
        %v546 = vsub.f32 %v530, %v342
        %v547 = vsub.f32 %v518, %v343
        %v548 = vsub.f32 %v522, %v343
        %v549 = vsub.f32 %v526, %v343
        %v550 = vsub.f32 %v530, %v343
        %v551 = vand.u32 2147483647, %v535
        %v552 = vand.u32 2147483647, %v536
        %v553 = vand.u32 2147483647, %v537
        %v554 = vand.u32 2147483647, %v538
        %v555 = vand.u32 2147483647, %v539
        %v556 = vand.u32 2147483647, %v540
        %v557 = vand.u32 2147483647, %v541
        %v558 = vand.u32 2147483647, %v542
        %v559 = vand.u32 2147483647, %v543
        %v560 = vand.u32 2147483647, %v544
        %v561 = vand.u32 2147483647, %v545
        %v562 = vand.u32 2147483647, %v546
        %v563 = vand.u32 2147483647, %v547
        %v564 = vand.u32 2147483647, %v548
        %v565 = vand.u32 2147483647, %v549
        %v566 = vand.u32 2147483647, %v550
        %v567 = vsub.f32 1.0, %v551
        %v568 = vsub.f32 1.0, %v552
        %v569 = vsub.f32 1.0, %v553
        %v570 = vsub.f32 1.0, %v554
        %v571 = vsub.f32 1.0, %v555
        %v572 = vsub.f32 1.0, %v556
        %v573 = vsub.f32 1.0, %v557
        %v574 = vsub.f32 1.0, %v558
        %v575 = vsub.f32 1.0, %v559
        %v576 = vsub.f32 1.0, %v560
        %v577 = vsub.f32 1.0, %v561
        %v578 = vsub.f32 1.0, %v562
        %v579 = vsub.f32 1.0, %v563
        %v580 = vsub.f32 1.0, %v564
        %v581 = vsub.f32 1.0, %v565
        %v582 = vsub.f32 1.0, %v566
        %v583 = vmax.f32 %v567, 0.0
        %v584 = vmax.f32 %v568, 0.0
        %v585 = vmax.f32 %v569, 0.0
        %v586 = vmax.f32 %v570, 0.0
        %v587 = vmax.f32 %v571, 0.0
        %v588 = vmax.f32 %v572, 0.0
        %v589 = vmax.f32 %v573, 0.0
        %v590 = vmax.f32 %v574, 0.0
        %v591 = vmax.f32 %v575, 0.0
        %v592 = vmax.f32 %v576, 0.0
        %v593 = vmax.f32 %v577, 0.0
        %v594 = vmax.f32 %v578, 0.0
        %v595 = vmax.f32 %v579, 0.0
        %v596 = vmax.f32 %v580, 0.0
        %v597 = vmax.f32 %v581, 0.0
        %v598 = vmax.f32 %v582, 0.0
        %v599 = vpack.c.bf16 %v417, %v413
        %v600 = vpack.c.bf16 %v418, %v414
        %v601 = vpack.c.bf16 %v419, %v415
        %v602 = vpack.c.bf16 %v420, %v416
        %v603 = vpack.c.bf16 %v425, %v421
        %v604 = vpack.c.bf16 %v426, %v422
        %v605 = vpack.c.bf16 %v427, %v423
        %v606 = vpack.c.bf16 %v428, %v424
        %v607 = vpack.c.bf16 %v502, %v498
        %v608 = vpack.c.bf16 %v503, %v499
        %v609 = vpack.c.bf16 %v504, %v500
        %v610 = vpack.c.bf16 %v505, %v501
        %v611 = vpack.c.bf16 %v510, %v506
        %v612 = vpack.c.bf16 %v511, %v507
        %v613 = vpack.c.bf16 %v512, %v508
        %v614 = vpack.c.bf16 %v513, %v509
        %v615 = vlaneseq
        %v616 = vshrl.u32 %v615, 7
        %v617 = vsub.s32 0, %v616
        %v618 = vrot.slane %v498, %v617
        %v619 = vlaneseq
        %v620 = vshrl.u32 %v619, 7
        %v621 = vsub.s32 0, %v620
        %v622 = vrot.slane %v499, %v621
        %v623 = vlaneseq
        %v624 = vshrl.u32 %v623, 7
        %v625 = vsub.s32 0, %v624
        %v626 = vrot.slane %v500, %v625
        %v627 = vlaneseq
        %v628 = vshrl.u32 %v627, 7
        %v629 = vsub.s32 0, %v628
        %v630 = vrot.slane %v501, %v629
        %v631 = vlaneseq
        %v632 = vshrl.u32 %v631, 7
        %v633 = vsub.s32 1, %v632
        %v634 = vrot.slane %v498, %v633
        %v635 = vlaneseq
        %v636 = vshrl.u32 %v635, 7
        %v637 = vsub.s32 1, %v636
        %v638 = vrot.slane %v499, %v637
        %v639 = vlaneseq
        %v640 = vshrl.u32 %v639, 7
        %v641 = vsub.s32 1, %v640
        %v642 = vrot.slane %v500, %v641
        %v643 = vlaneseq
        %v644 = vshrl.u32 %v643, 7
        %v645 = vsub.s32 1, %v644
        %v646 = vrot.slane %v501, %v645
        %v647 = vlaneseq
        %v648 = vshrl.u32 %v647, 7
        %v649 = vsub.s32 2, %v648
        %v650 = vrot.slane %v498, %v649
        %v651 = vlaneseq
        %v652 = vshrl.u32 %v651, 7
        %v653 = vsub.s32 2, %v652
        %v654 = vrot.slane %v499, %v653
        %v655 = vlaneseq
        %v656 = vshrl.u32 %v655, 7
        %v657 = vsub.s32 2, %v656
        %v658 = vrot.slane %v500, %v657
        %v659 = vlaneseq
        %v660 = vshrl.u32 %v659, 7
        %v661 = vsub.s32 2, %v660
        %v662 = vrot.slane %v501, %v661
        %v663 = vlaneseq
        %v664 = vshrl.u32 %v663, 7
        %v665 = vsub.s32 3, %v664
        %v666 = vrot.slane %v498, %v665
        %v667 = vlaneseq
        %v668 = vshrl.u32 %v667, 7
        %v669 = vsub.s32 3, %v668
        %v670 = vrot.slane %v499, %v669
        %v671 = vlaneseq
        %v672 = vshrl.u32 %v671, 7
        %v673 = vsub.s32 3, %v672
        %v674 = vrot.slane %v500, %v673
        %v675 = vlaneseq
        %v676 = vshrl.u32 %v675, 7
        %v677 = vsub.s32 3, %v676
        %v678 = vrot.slane %v501, %v677
        %v679 = vlaneseq
        %v680 = vshrl.u32 %v679, 7
        %v681 = vsub.s32 4, %v680
        %v682 = vrot.slane %v498, %v681
        %v683 = vlaneseq
        %v684 = vshrl.u32 %v683, 7
        %v685 = vsub.s32 4, %v684
        %v686 = vrot.slane %v499, %v685
        %v687 = vlaneseq
        %v688 = vshrl.u32 %v687, 7
        %v689 = vsub.s32 4, %v688
        %v690 = vrot.slane %v500, %v689
        %v691 = vlaneseq
        %v692 = vshrl.u32 %v691, 7
        %v693 = vsub.s32 4, %v692
        %v694 = vrot.slane %v501, %v693
        %v695 = vlaneseq
        %v696 = vshrl.u32 %v695, 7
        %v697 = vsub.s32 5, %v696
        %v698 = vrot.slane %v498, %v697
        %v699 = vlaneseq
        %v700 = vshrl.u32 %v699, 7
        %v701 = vsub.s32 5, %v700
        %v702 = vrot.slane %v499, %v701
        %v703 = vlaneseq
        %v704 = vshrl.u32 %v703, 7
        %v705 = vsub.s32 5, %v704
        %v706 = vrot.slane %v500, %v705
        %v707 = vlaneseq
        %v708 = vshrl.u32 %v707, 7
        %v709 = vsub.s32 5, %v708
        %v710 = vrot.slane %v501, %v709
        %v711 = vlaneseq
        %v712 = vshrl.u32 %v711, 7
        %v713 = vsub.s32 6, %v712
        %v714 = vrot.slane %v498, %v713
        %v715 = vlaneseq
        %v716 = vshrl.u32 %v715, 7
        %v717 = vsub.s32 6, %v716
        %v718 = vrot.slane %v499, %v717
        %v719 = vlaneseq
        %v720 = vshrl.u32 %v719, 7
        %v721 = vsub.s32 6, %v720
        %v722 = vrot.slane %v500, %v721
        %v723 = vlaneseq
        %v724 = vshrl.u32 %v723, 7
        %v725 = vsub.s32 6, %v724
        %v726 = vrot.slane %v501, %v725
        %v727 = vlaneseq
        %v728 = vshrl.u32 %v727, 7
        %v729 = vsub.s32 7, %v728
        %v730 = vrot.slane %v498, %v729
        %v731 = vlaneseq
        %v732 = vshrl.u32 %v731, 7
        %v733 = vsub.s32 7, %v732
        %v734 = vrot.slane %v499, %v733
        %v735 = vlaneseq
        %v736 = vshrl.u32 %v735, 7
        %v737 = vsub.s32 7, %v736
        %v738 = vrot.slane %v500, %v737
        %v739 = vlaneseq
        %v740 = vshrl.u32 %v739, 7
        %v741 = vsub.s32 7, %v740
        %v742 = vrot.slane %v501, %v741
        %v743 = vpack.c.bf16 %v618, %v618
        %v744 = vpack.c.bf16 %v622, %v622
        %v745 = vpack.c.bf16 %v626, %v626
        %v746 = vpack.c.bf16 %v630, %v630
        %v747 = vpack.c.bf16 %v634, %v634
        %v748 = vpack.c.bf16 %v638, %v638
        %v749 = vpack.c.bf16 %v642, %v642
        %v750 = vpack.c.bf16 %v646, %v646
        %v751 = vpack.c.bf16 %v650, %v650
        %v752 = vpack.c.bf16 %v654, %v654
        %v753 = vpack.c.bf16 %v658, %v658
        %v754 = vpack.c.bf16 %v662, %v662
        %v755 = vpack.c.bf16 %v666, %v666
        %v756 = vpack.c.bf16 %v670, %v670
        %v757 = vpack.c.bf16 %v674, %v674
        %v758 = vpack.c.bf16 %v678, %v678
        %v759 = vpack.c.bf16 %v682, %v682
        %v760 = vpack.c.bf16 %v686, %v686
        %v761 = vpack.c.bf16 %v690, %v690
        %v762 = vpack.c.bf16 %v694, %v694
        %v763 = vpack.c.bf16 %v698, %v698
        %v764 = vpack.c.bf16 %v702, %v702
        %v765 = vpack.c.bf16 %v706, %v706
        %v766 = vpack.c.bf16 %v710, %v710
        %v767 = vpack.c.bf16 %v714, %v714
        %v768 = vpack.c.bf16 %v718, %v718
        %v769 = vpack.c.bf16 %v722, %v722
        %v770 = vpack.c.bf16 %v726, %v726
        %v771 = vpack.c.bf16 %v730, %v730
        %v772 = vpack.c.bf16 %v734, %v734
        %v773 = vpack.c.bf16 %v738, %v738
        %v774 = vpack.c.bf16 %v742, %v742
        %v775 = vlaneseq
        %v776 = vshrl.u32 %v775, 7
        %v777 = vsub.s32 0, %v776
        %v778 = vrot.slane %v583, %v777
        %v779 = vlaneseq
        %v780 = vshrl.u32 %v779, 7
        %v781 = vsub.s32 0, %v780
        %v782 = vrot.slane %v584, %v781
        %v783 = vlaneseq
        %v784 = vshrl.u32 %v783, 7
        %v785 = vsub.s32 0, %v784
        %v786 = vrot.slane %v585, %v785
        %v787 = vlaneseq
        %v788 = vshrl.u32 %v787, 7
        %v789 = vsub.s32 0, %v788
        %v790 = vrot.slane %v586, %v789
        %v791 = vlaneseq
        %v792 = vshrl.u32 %v791, 7
        %v793 = vsub.s32 1, %v792
        %v794 = vrot.slane %v583, %v793
        %v795 = vlaneseq
        %v796 = vshrl.u32 %v795, 7
        %v797 = vsub.s32 1, %v796
        %v798 = vrot.slane %v584, %v797
        %v799 = vlaneseq
        %v800 = vshrl.u32 %v799, 7
        %v801 = vsub.s32 1, %v800
        %v802 = vrot.slane %v585, %v801
        %v803 = vlaneseq
        %v804 = vshrl.u32 %v803, 7
        %v805 = vsub.s32 1, %v804
        %v806 = vrot.slane %v586, %v805
        %v807 = vlaneseq
        %v808 = vshrl.u32 %v807, 7
        %v809 = vsub.s32 2, %v808
        %v810 = vrot.slane %v583, %v809
        %v811 = vlaneseq
        %v812 = vshrl.u32 %v811, 7
        %v813 = vsub.s32 2, %v812
        %v814 = vrot.slane %v584, %v813
        %v815 = vlaneseq
        %v816 = vshrl.u32 %v815, 7
        %v817 = vsub.s32 2, %v816
        %v818 = vrot.slane %v585, %v817
        %v819 = vlaneseq
        %v820 = vshrl.u32 %v819, 7
        %v821 = vsub.s32 2, %v820
        %v822 = vrot.slane %v586, %v821
        %v823 = vlaneseq
        %v824 = vshrl.u32 %v823, 7
        %v825 = vsub.s32 3, %v824
        %v826 = vrot.slane %v583, %v825
        %v827 = vlaneseq
        %v828 = vshrl.u32 %v827, 7
        %v829 = vsub.s32 3, %v828
        %v830 = vrot.slane %v584, %v829
        %v831 = vlaneseq
        %v832 = vshrl.u32 %v831, 7
        %v833 = vsub.s32 3, %v832
        %v834 = vrot.slane %v585, %v833
        %v835 = vlaneseq
        %v836 = vshrl.u32 %v835, 7
        %v837 = vsub.s32 3, %v836
        %v838 = vrot.slane %v586, %v837
        %v839 = vlaneseq
        %v840 = vshrl.u32 %v839, 7
        %v841 = vsub.s32 4, %v840
        %v842 = vrot.slane %v583, %v841
        %v843 = vlaneseq
        %v844 = vshrl.u32 %v843, 7
        %v845 = vsub.s32 4, %v844
        %v846 = vrot.slane %v584, %v845
        %v847 = vlaneseq
        %v848 = vshrl.u32 %v847, 7
        %v849 = vsub.s32 4, %v848
        %v850 = vrot.slane %v585, %v849
        %v851 = vlaneseq
        %v852 = vshrl.u32 %v851, 7
        %v853 = vsub.s32 4, %v852
        %v854 = vrot.slane %v586, %v853
        %v855 = vlaneseq
        %v856 = vshrl.u32 %v855, 7
        %v857 = vsub.s32 5, %v856
        %v858 = vrot.slane %v583, %v857
        %v859 = vlaneseq
        %v860 = vshrl.u32 %v859, 7
        %v861 = vsub.s32 5, %v860
        %v862 = vrot.slane %v584, %v861
        %v863 = vlaneseq
        %v864 = vshrl.u32 %v863, 7
        %v865 = vsub.s32 5, %v864
        %v866 = vrot.slane %v585, %v865
        %v867 = vlaneseq
        %v868 = vshrl.u32 %v867, 7
        %v869 = vsub.s32 5, %v868
        %v870 = vrot.slane %v586, %v869
        %v871 = vlaneseq
        %v872 = vshrl.u32 %v871, 7
        %v873 = vsub.s32 6, %v872
        %v874 = vrot.slane %v583, %v873
        %v875 = vlaneseq
        %v876 = vshrl.u32 %v875, 7
        %v877 = vsub.s32 6, %v876
        %v878 = vrot.slane %v584, %v877
        %v879 = vlaneseq
        %v880 = vshrl.u32 %v879, 7
        %v881 = vsub.s32 6, %v880
        %v882 = vrot.slane %v585, %v881
        %v883 = vlaneseq
        %v884 = vshrl.u32 %v883, 7
        %v885 = vsub.s32 6, %v884
        %v886 = vrot.slane %v586, %v885
        %v887 = vlaneseq
        %v888 = vshrl.u32 %v887, 7
        %v889 = vsub.s32 7, %v888
        %v890 = vrot.slane %v583, %v889
        %v891 = vlaneseq
        %v892 = vshrl.u32 %v891, 7
        %v893 = vsub.s32 7, %v892
        %v894 = vrot.slane %v584, %v893
        %v895 = vlaneseq
        %v896 = vshrl.u32 %v895, 7
        %v897 = vsub.s32 7, %v896
        %v898 = vrot.slane %v585, %v897
        %v899 = vlaneseq
        %v900 = vshrl.u32 %v899, 7
        %v901 = vsub.s32 7, %v900
        %v902 = vrot.slane %v586, %v901
        %v903 = vpack.c.bf16 %v778, %v778
        %v904 = vpack.c.bf16 %v782, %v782
        %v905 = vpack.c.bf16 %v786, %v786
        %v906 = vpack.c.bf16 %v790, %v790
        %v907 = vpack.c.bf16 %v794, %v794
        %v908 = vpack.c.bf16 %v798, %v798
        %v909 = vpack.c.bf16 %v802, %v802
        %v910 = vpack.c.bf16 %v806, %v806
        %v911 = vpack.c.bf16 %v810, %v810
        %v912 = vpack.c.bf16 %v814, %v814
        %v913 = vpack.c.bf16 %v818, %v818
        %v914 = vpack.c.bf16 %v822, %v822
        %v915 = vpack.c.bf16 %v826, %v826
        %v916 = vpack.c.bf16 %v830, %v830
        %v917 = vpack.c.bf16 %v834, %v834
        %v918 = vpack.c.bf16 %v838, %v838
        %v919 = vpack.c.bf16 %v842, %v842
        %v920 = vpack.c.bf16 %v846, %v846
        %v921 = vpack.c.bf16 %v850, %v850
        %v922 = vpack.c.bf16 %v854, %v854
        %v923 = vpack.c.bf16 %v858, %v858
        %v924 = vpack.c.bf16 %v862, %v862
        %v925 = vpack.c.bf16 %v866, %v866
        %v926 = vpack.c.bf16 %v870, %v870
        %v927 = vpack.c.bf16 %v874, %v874
        %v928 = vpack.c.bf16 %v878, %v878
        %v929 = vpack.c.bf16 %v882, %v882
        %v930 = vpack.c.bf16 %v886, %v886
        %v931 = vpack.c.bf16 %v890, %v890
        %v932 = vpack.c.bf16 %v894, %v894
        %v933 = vpack.c.bf16 %v898, %v898
        %v934 = vpack.c.bf16 %v902, %v902
        %v935 = vmul.bf16 %v743, %v599
        %v936 = vmul.bf16 %v744, %v600
        %v937 = vmul.bf16 %v745, %v601
        %v938 = vmul.bf16 %v746, %v602
        %v939 = vmul.bf16 %v743, %v603
        %v940 = vmul.bf16 %v744, %v604
        %v941 = vmul.bf16 %v745, %v605
        %v942 = vmul.bf16 %v746, %v606
        %v943 = vmul.bf16 %v747, %v599
        %v944 = vmul.bf16 %v748, %v600
        %v945 = vmul.bf16 %v749, %v601
        %v946 = vmul.bf16 %v750, %v602
        %v947 = vmul.bf16 %v747, %v603
        %v948 = vmul.bf16 %v748, %v604
        %v949 = vmul.bf16 %v749, %v605
        %v950 = vmul.bf16 %v750, %v606
        %v951 = vmul.bf16 %v751, %v599
        %v952 = vmul.bf16 %v752, %v600
        %v953 = vmul.bf16 %v753, %v601
        %v954 = vmul.bf16 %v754, %v602
        %v955 = vmul.bf16 %v751, %v603
        %v956 = vmul.bf16 %v752, %v604
        %v957 = vmul.bf16 %v753, %v605
        %v958 = vmul.bf16 %v754, %v606
        %v959 = vmul.bf16 %v755, %v599
        %v960 = vmul.bf16 %v756, %v600
        %v961 = vmul.bf16 %v757, %v601
        %v962 = vmul.bf16 %v758, %v602
        %v963 = vmul.bf16 %v755, %v603
        %v964 = vmul.bf16 %v756, %v604
        %v965 = vmul.bf16 %v757, %v605
        %v966 = vmul.bf16 %v758, %v606
        %v967 = vmul.bf16 %v759, %v599
        %v968 = vmul.bf16 %v760, %v600
        %v969 = vmul.bf16 %v761, %v601
        %v970 = vmul.bf16 %v762, %v602
        %v971 = vmul.bf16 %v759, %v603
        %v972 = vmul.bf16 %v760, %v604
        %v973 = vmul.bf16 %v761, %v605
        %v974 = vmul.bf16 %v762, %v606
        %v975 = vmul.bf16 %v763, %v599
        %v976 = vmul.bf16 %v764, %v600
        %v977 = vmul.bf16 %v765, %v601
        %v978 = vmul.bf16 %v766, %v602
        %v979 = vmul.bf16 %v763, %v603
        %v980 = vmul.bf16 %v764, %v604
        %v981 = vmul.bf16 %v765, %v605
        %v982 = vmul.bf16 %v766, %v606
        %v983 = vmul.bf16 %v767, %v599
        %v984 = vmul.bf16 %v768, %v600
        %v985 = vmul.bf16 %v769, %v601
        %v986 = vmul.bf16 %v770, %v602
        %v987 = vmul.bf16 %v767, %v603
        %v988 = vmul.bf16 %v768, %v604
        %v989 = vmul.bf16 %v769, %v605
        %v990 = vmul.bf16 %v770, %v606
        %v991 = vmul.bf16 %v771, %v599
        %v992 = vmul.bf16 %v772, %v600
        %v993 = vmul.bf16 %v773, %v601
        %v994 = vmul.bf16 %v774, %v602
        %v995 = vmul.bf16 %v771, %v603
        %v996 = vmul.bf16 %v772, %v604
        %v997 = vmul.bf16 %v773, %v605
        %v998 = vmul.bf16 %v774, %v606
        %v999 = vmul.bf16 %v903, %v607
        %v1000 = vmul.bf16 %v904, %v608
        %v1001 = vmul.bf16 %v905, %v609
        %v1002 = vmul.bf16 %v906, %v610
        %v1003 = vmul.bf16 %v903, %v611
        %v1004 = vmul.bf16 %v904, %v612
        %v1005 = vmul.bf16 %v905, %v613
        %v1006 = vmul.bf16 %v906, %v614
        %v1007 = vmul.bf16 %v907, %v607
        %v1008 = vmul.bf16 %v908, %v608
        %v1009 = vmul.bf16 %v909, %v609
        %v1010 = vmul.bf16 %v910, %v610
        %v1011 = vmul.bf16 %v907, %v611
        %v1012 = vmul.bf16 %v908, %v612
        %v1013 = vmul.bf16 %v909, %v613
        %v1014 = vmul.bf16 %v910, %v614
        %v1015 = vmul.bf16 %v911, %v607
        %v1016 = vmul.bf16 %v912, %v608
        %v1017 = vmul.bf16 %v913, %v609
        %v1018 = vmul.bf16 %v914, %v610
        %v1019 = vmul.bf16 %v911, %v611
        %v1020 = vmul.bf16 %v912, %v612
        %v1021 = vmul.bf16 %v913, %v613
        %v1022 = vmul.bf16 %v914, %v614
        %v1023 = vmul.bf16 %v915, %v607
        %v1024 = vmul.bf16 %v916, %v608
        %v1025 = vmul.bf16 %v917, %v609
        %v1026 = vmul.bf16 %v918, %v610
        %v1027 = vmul.bf16 %v915, %v611
        %v1028 = vmul.bf16 %v916, %v612
        %v1029 = vmul.bf16 %v917, %v613
        %v1030 = vmul.bf16 %v918, %v614
        %v1031 = vmul.bf16 %v919, %v607
        %v1032 = vmul.bf16 %v920, %v608
        %v1033 = vmul.bf16 %v921, %v609
        %v1034 = vmul.bf16 %v922, %v610
        %v1035 = vmul.bf16 %v919, %v611
        %v1036 = vmul.bf16 %v920, %v612
        %v1037 = vmul.bf16 %v921, %v613
        %v1038 = vmul.bf16 %v922, %v614
        %v1039 = vmul.bf16 %v923, %v607
        %v1040 = vmul.bf16 %v924, %v608
        %v1041 = vmul.bf16 %v925, %v609
        %v1042 = vmul.bf16 %v926, %v610
        %v1043 = vmul.bf16 %v923, %v611
        %v1044 = vmul.bf16 %v924, %v612
        %v1045 = vmul.bf16 %v925, %v613
        %v1046 = vmul.bf16 %v926, %v614
        %v1047 = vmul.bf16 %v927, %v607
        %v1048 = vmul.bf16 %v928, %v608
        %v1049 = vmul.bf16 %v929, %v609
        %v1050 = vmul.bf16 %v930, %v610
        %v1051 = vmul.bf16 %v927, %v611
        %v1052 = vmul.bf16 %v928, %v612
        %v1053 = vmul.bf16 %v929, %v613
        %v1054 = vmul.bf16 %v930, %v614
        %v1055 = vmul.bf16 %v931, %v607
        %v1056 = vmul.bf16 %v932, %v608
        %v1057 = vmul.bf16 %v933, %v609
        %v1058 = vmul.bf16 %v934, %v610
        %v1059 = vmul.bf16 %v931, %v611
        %v1060 = vmul.bf16 %v932, %v612
        %v1061 = vmul.bf16 %v933, %v613
        %v1062 = vmul.bf16 %v934, %v614
        %v1063 = vmul.bf16 %v903, %v599
        %v1064 = vmul.bf16 %v904, %v600
        %v1065 = vmul.bf16 %v905, %v601
        %v1066 = vmul.bf16 %v906, %v602
        %v1067 = vmul.bf16 %v903, %v603
        %v1068 = vmul.bf16 %v904, %v604
        %v1069 = vmul.bf16 %v905, %v605
        %v1070 = vmul.bf16 %v906, %v606
        %v1071 = vmul.bf16 %v907, %v599
        %v1072 = vmul.bf16 %v908, %v600
        %v1073 = vmul.bf16 %v909, %v601
        %v1074 = vmul.bf16 %v910, %v602
        %v1075 = vmul.bf16 %v907, %v603
        %v1076 = vmul.bf16 %v908, %v604
        %v1077 = vmul.bf16 %v909, %v605
        %v1078 = vmul.bf16 %v910, %v606
        %v1079 = vmul.bf16 %v911, %v599
        %v1080 = vmul.bf16 %v912, %v600
        %v1081 = vmul.bf16 %v913, %v601
        %v1082 = vmul.bf16 %v914, %v602
        %v1083 = vmul.bf16 %v911, %v603
        %v1084 = vmul.bf16 %v912, %v604
        %v1085 = vmul.bf16 %v913, %v605
        %v1086 = vmul.bf16 %v914, %v606
        %v1087 = vmul.bf16 %v915, %v599
        %v1088 = vmul.bf16 %v916, %v600
        %v1089 = vmul.bf16 %v917, %v601
        %v1090 = vmul.bf16 %v918, %v602
        %v1091 = vmul.bf16 %v915, %v603
        %v1092 = vmul.bf16 %v916, %v604
        %v1093 = vmul.bf16 %v917, %v605
        %v1094 = vmul.bf16 %v918, %v606
        %v1095 = vmul.bf16 %v919, %v599
        %v1096 = vmul.bf16 %v920, %v600
        %v1097 = vmul.bf16 %v921, %v601
        %v1098 = vmul.bf16 %v922, %v602
        %v1099 = vmul.bf16 %v919, %v603
        %v1100 = vmul.bf16 %v920, %v604
        %v1101 = vmul.bf16 %v921, %v605
        %v1102 = vmul.bf16 %v922, %v606
        %v1103 = vmul.bf16 %v923, %v599
        %v1104 = vmul.bf16 %v924, %v600
        %v1105 = vmul.bf16 %v925, %v601
        %v1106 = vmul.bf16 %v926, %v602
        %v1107 = vmul.bf16 %v923, %v603
        %v1108 = vmul.bf16 %v924, %v604
        %v1109 = vmul.bf16 %v925, %v605
        %v1110 = vmul.bf16 %v926, %v606
        %v1111 = vmul.bf16 %v927, %v599
        %v1112 = vmul.bf16 %v928, %v600
        %v1113 = vmul.bf16 %v929, %v601
        %v1114 = vmul.bf16 %v930, %v602
        %v1115 = vmul.bf16 %v927, %v603
        %v1116 = vmul.bf16 %v928, %v604
        %v1117 = vmul.bf16 %v929, %v605
        %v1118 = vmul.bf16 %v930, %v606
        %v1119 = vmul.bf16 %v931, %v599
        %v1120 = vmul.bf16 %v932, %v600
        %v1121 = vmul.bf16 %v933, %v601
        %v1122 = vmul.bf16 %v934, %v602
        %v1123 = vmul.bf16 %v931, %v603
        %v1124 = vmul.bf16 %v932, %v604
        %v1125 = vmul.bf16 %v933, %v605
        %v1126 = vmul.bf16 %v934, %v606
        %v1127 = vld [vmem:[#allocation6] sm:$0xff]
        %v1128 = vld [vmem:[#allocation6 + $0x20] sm:$0xff]
        %v1129 = vld [vmem:[#allocation6 + $0x40] sm:$0xff]
        %v1130 = vld [vmem:[#allocation6 + $0x60] sm:$0xff]
        %v1131 = vld [vmem:[#allocation6 + $0x80] sm:$0xff]
        %v1132 = vld [vmem:[#allocation6 + $0xa0] sm:$0xff]
        %v1133 = vld [vmem:[#allocation6 + $0xc0] sm:$0xff]
        %v1134 = vld [vmem:[#allocation6 + $0xe0] sm:$0xff]
        %v1143 = vunpack.c.l.b16 %v1127
        %v1144 = vunpack.c.h.b16 %v1127
        %v1145 = vunpack.c.l.b16 %v1128
        %v1146 = vunpack.c.h.b16 %v1128
        %v1147 = vunpack.c.l.b16 %v1129
        %v1148 = vunpack.c.h.b16 %v1129
        %v1149 = vunpack.c.l.b16 %v1130
        %v1150 = vunpack.c.h.b16 %v1130
        %v1151 = vunpack.c.l.b16 %v1131
        %v1152 = vunpack.c.h.b16 %v1131
        %v1153 = vunpack.c.l.b16 %v1132
        %v1154 = vunpack.c.h.b16 %v1132
        %v1155 = vunpack.c.l.b16 %v1133
        %v1156 = vunpack.c.h.b16 %v1133
        %v1157 = vunpack.c.l.b16 %v1134
        %v1158 = vunpack.c.h.b16 %v1134
        %v1159 = vpack.c.b16 %v1145, %v1143
        %v1160 = vpack.c.b16 %v1146, %v1144
        %v1161 = vpack.c.b16 %v1149, %v1147
        %v1162 = vpack.c.b16 %v1150, %v1148
        %v1163 = vpack.c.b16 %v1153, %v1151
        %v1164 = vpack.c.b16 %v1154, %v1152
        %v1165 = vpack.c.b16 %v1157, %v1155
        %v1166 = vpack.c.b16 %v1158, %v1156
        %1175 = vmatprep.subr.bf16.mxu0 %v936
        %1176 = vmatpush1.bf16.msra.mxu0 %v935
        %1177 = vmatprep.subr.bf16.mxu0 %v940
        %1178 = vmatpush1.bf16.msra.mxu0 %v939
        %1179 = vmatprep.subr.bf16.mxu0 %v944
        %1180 = vmatpush1.bf16.msra.mxu0 %v943
        %1181 = vmatprep.subr.bf16.mxu0 %v948
        %1182 = vmatpush1.bf16.msra.mxu0 %v947
        %1183 = vmatprep.subr.bf16.mxu0 %v952
        %1184 = vmatpush1.bf16.msra.mxu0 %v951
        %1185 = vmatprep.subr.bf16.mxu0 %v956
        %1186 = vmatpush1.bf16.msra.mxu0 %v955
        %1187 = vmatprep.subr.bf16.mxu0 %v960
        %1188 = vmatpush1.bf16.msra.mxu0 %v959
        %1189 = vmatprep.subr.bf16.mxu0 %v964
        %1190 = vmatpush1.bf16.msra.mxu0 %v963
        %1191 = vmatprep.subr.bf16.mxu0 %v968
        %1192 = vmatpush1.bf16.msra.mxu0 %v967
        %1193 = vmatprep.subr.bf16.mxu0 %v972
        %1194 = vmatpush1.bf16.msra.mxu0 %v971
        %1195 = vmatprep.subr.bf16.mxu0 %v976
        %1196 = vmatpush1.bf16.msra.mxu0 %v975
        %1197 = vmatprep.subr.bf16.mxu0 %v980
        %1198 = vmatpush1.bf16.msra.mxu0 %v979
        %1199 = vmatprep.subr.bf16.mxu0 %v984
        %1200 = vmatpush1.bf16.msra.mxu0 %v983
        %1201 = vmatprep.subr.bf16.mxu0 %v988
        %1202 = vmatpush1.bf16.msra.mxu0 %v987
        %1203 = vmatprep.subr.bf16.mxu0 %v992
        %1204 = vmatpush1.bf16.msra.mxu0 %v991
        %1205 = vmatprep.subr.bf16.mxu0 %v996
        %1206 = vmatpush1.bf16.msra.mxu0 %v995
        %1207 = vmatprep.mubr.bf16.mxu0 %v1160
        %1208 = vmatmul.mubr.bf16.gmra.mrb[0].mxu0 %v1159
        %v1209 = vpop.f32.mrb[0].mxu0
        %v1210 = vadd.f32 0.0, %v1209
        %v1211 = vpop.f32.mrb[0].mxu0
        %v1212 = vadd.f32 0.0, %v1211
        %v1213 = vpop.f32.mrb[0].mxu0
        %v1214 = vadd.f32 0.0, %v1213
        %v1215 = vpop.f32.mrb[0].mxu0
        %v1216 = vadd.f32 0.0, %v1215
        %1217 = vmatprep.mubr.bf16.mxu0 %v1162
        %1218 = vmatmul.mubr.bf16.gmra.mrb[0].mxu0 %v1161
        %v1219 = vpop.f32.mrb[0].mxu0
        %v1220 = vadd.f32 0.0, %v1219
        %v1221 = vpop.f32.mrb[0].mxu0
        %v1222 = vadd.f32 0.0, %v1221
        %v1223 = vpop.f32.mrb[0].mxu0
        %v1224 = vadd.f32 0.0, %v1223
        %v1225 = vpop.f32.mrb[0].mxu0
        %v1226 = vadd.f32 0.0, %v1225
        %1227 = vmatprep.mubr.bf16.mxu0 %v1164
        %1228 = vmatmul.mubr.bf16.gmra.mrb[0].mxu0 %v1163
        %v1229 = vpop.f32.mrb[0].mxu0
        %v1230 = vadd.f32 0.0, %v1229
        %v1231 = vpop.f32.mrb[0].mxu0
        %v1232 = vadd.f32 0.0, %v1231
        %v1233 = vpop.f32.mrb[0].mxu0
        %v1234 = vadd.f32 0.0, %v1233
        %v1235 = vpop.f32.mrb[0].mxu0
        %v1236 = vadd.f32 0.0, %v1235
        %1237 = vmatprep.mubr.bf16.mxu0 %v1166
        %1238 = vmatmul.mubr.bf16.gmra.mrb[0].mxu0 %v1165
        %v1239 = vpop.f32.mrb[0].mxu0
        %v1240 = vadd.f32 0.0, %v1239
        %v1241 = vpop.f32.mrb[0].mxu0
        %v1242 = vadd.f32 0.0, %v1241
        %v1243 = vpop.f32.mrb[0].mxu0
        %v1244 = vadd.f32 0.0, %v1243
        %v1245 = vpop.f32.mrb[0].mxu0
        %v1246 = vadd.f32 0.0, %v1245
        %1247 = vdwg.mxu0
        %1248 = vmatprep.subr.bf16.mxu0 %v938
        %1249 = vmatpush1.bf16.msra.mxu0 %v937
        %1250 = vmatprep.subr.bf16.mxu0 %v942
        %1251 = vmatpush1.bf16.msra.mxu0 %v941
        %1252 = vmatprep.subr.bf16.mxu0 %v946
        %1253 = vmatpush1.bf16.msra.mxu0 %v945
        %1254 = vmatprep.subr.bf16.mxu0 %v950
        %1255 = vmatpush1.bf16.msra.mxu0 %v949
        %1256 = vmatprep.subr.bf16.mxu0 %v954
        %1257 = vmatpush1.bf16.msra.mxu0 %v953
        %1258 = vmatprep.subr.bf16.mxu0 %v958
        %1259 = vmatpush1.bf16.msra.mxu0 %v957
        %1260 = vmatprep.subr.bf16.mxu0 %v962
        %1261 = vmatpush1.bf16.msra.mxu0 %v961
        %1262 = vmatprep.subr.bf16.mxu0 %v966
        %1263 = vmatpush1.bf16.msra.mxu0 %v965
        %1264 = vmatprep.subr.bf16.mxu0 %v970
        %1265 = vmatpush1.bf16.msra.mxu0 %v969
        %1266 = vmatprep.subr.bf16.mxu0 %v974
        %1267 = vmatpush1.bf16.msra.mxu0 %v973
        %1268 = vmatprep.subr.bf16.mxu0 %v978
        %1269 = vmatpush1.bf16.msra.mxu0 %v977
        %1270 = vmatprep.subr.bf16.mxu0 %v982
        %1271 = vmatpush1.bf16.msra.mxu0 %v981
        %1272 = vmatprep.subr.bf16.mxu0 %v986
        %1273 = vmatpush1.bf16.msra.mxu0 %v985
        %1274 = vmatprep.subr.bf16.mxu0 %v990
        %1275 = vmatpush1.bf16.msra.mxu0 %v989
        %1276 = vmatprep.subr.bf16.mxu0 %v994
        %1277 = vmatpush1.bf16.msra.mxu0 %v993
        %1278 = vmatprep.subr.bf16.mxu0 %v998
        %1279 = vmatpush1.bf16.msra.mxu0 %v997
        %1280 = vmatprep.mubr.bf16.mxu0 %v1160
        %1281 = vmatmul.mubr.bf16.gmra.mrb[0].mxu0 %v1159
        %v1282 = vpop.f32.mrb[0].mxu0
        %v1283 = vadd.f32 0.0, %v1282
        %v1284 = vpop.f32.mrb[0].mxu0
        %v1285 = vadd.f32 0.0, %v1284
        %v1286 = vpop.f32.mrb[0].mxu0
        %v1287 = vadd.f32 0.0, %v1286
        %v1288 = vpop.f32.mrb[0].mxu0
        %v1289 = vadd.f32 0.0, %v1288
        %1290 = vmatprep.mubr.bf16.mxu0 %v1162
        %1291 = vmatmul.mubr.bf16.gmra.mrb[0].mxu0 %v1161
        %v1292 = vpop.f32.mrb[0].mxu0
        %v1293 = vadd.f32 0.0, %v1292
        %v1294 = vpop.f32.mrb[0].mxu0
        %v1295 = vadd.f32 0.0, %v1294
        %v1296 = vpop.f32.mrb[0].mxu0
        %v1297 = vadd.f32 0.0, %v1296
        %v1298 = vpop.f32.mrb[0].mxu0
        %v1299 = vadd.f32 0.0, %v1298
        %1300 = vmatprep.mubr.bf16.mxu0 %v1164
        %1301 = vmatmul.mubr.bf16.gmra.mrb[0].mxu0 %v1163
        %v1302 = vpop.f32.mrb[0].mxu0
        %v1303 = vadd.f32 0.0, %v1302
        %v1304 = vpop.f32.mrb[0].mxu0
        %v1305 = vadd.f32 0.0, %v1304
        %v1306 = vpop.f32.mrb[0].mxu0
        %v1307 = vadd.f32 0.0, %v1306
        %v1308 = vpop.f32.mrb[0].mxu0
        %v1309 = vadd.f32 0.0, %v1308
        %1310 = vmatprep.mubr.bf16.mxu0 %v1166
        %1311 = vmatmul.mubr.bf16.gmra.mrb[0].mxu0 %v1165
        %v1312 = vpop.f32.mrb[0].mxu0
        %v1313 = vadd.f32 0.0, %v1312
        %v1314 = vpop.f32.mrb[0].mxu0
        %v1315 = vadd.f32 0.0, %v1314
        %v1316 = vpop.f32.mrb[0].mxu0
        %v1317 = vadd.f32 0.0, %v1316
        %v1318 = vpop.f32.mrb[0].mxu0
        %v1319 = vadd.f32 0.0, %v1318
        %1320 = vdwg.mxu0
        %s1321 = scalar_lea.vmem [#allocation6], 256
        %v1322 = vld [vmem:[%s1321] sm:$0xff]
        %v1323 = vld [vmem:[%s1321 + $0x20] sm:$0xff]
        %v1324 = vld [vmem:[%s1321 + $0x40] sm:$0xff]
        %v1325 = vld [vmem:[%s1321 + $0x60] sm:$0xff]
        %v1326 = vld [vmem:[%s1321 + $0x80] sm:$0xff]
        %v1327 = vld [vmem:[%s1321 + $0xa0] sm:$0xff]
        %v1328 = vld [vmem:[%s1321 + $0xc0] sm:$0xff]
        %v1329 = vld [vmem:[%s1321 + $0xe0] sm:$0xff]
        %v1338 = vunpack.c.l.b16 %v1322
        %v1339 = vunpack.c.h.b16 %v1322
        %v1340 = vunpack.c.l.b16 %v1323
        %v1341 = vunpack.c.h.b16 %v1323
        %v1342 = vunpack.c.l.b16 %v1324
        %v1343 = vunpack.c.h.b16 %v1324
        %v1344 = vunpack.c.l.b16 %v1325
        %v1345 = vunpack.c.h.b16 %v1325
        %v1346 = vunpack.c.l.b16 %v1326
        %v1347 = vunpack.c.h.b16 %v1326
        %v1348 = vunpack.c.l.b16 %v1327
        %v1349 = vunpack.c.h.b16 %v1327
        %v1350 = vunpack.c.l.b16 %v1328
        %v1351 = vunpack.c.h.b16 %v1328
        %v1352 = vunpack.c.l.b16 %v1329
        %v1353 = vunpack.c.h.b16 %v1329
        %v1354 = vpack.c.b16 %v1340, %v1338
        %v1355 = vpack.c.b16 %v1341, %v1339
        %v1356 = vpack.c.b16 %v1344, %v1342
        %v1357 = vpack.c.b16 %v1345, %v1343
        %v1358 = vpack.c.b16 %v1348, %v1346
        %v1359 = vpack.c.b16 %v1349, %v1347
        %v1360 = vpack.c.b16 %v1352, %v1350
        %v1361 = vpack.c.b16 %v1353, %v1351
        %1370 = vmatprep.subr.bf16.mxu0 %v1000
        %1371 = vmatpush1.bf16.msra.mxu0 %v999
        %1372 = vmatprep.subr.bf16.mxu0 %v1004
        %1373 = vmatpush1.bf16.msra.mxu0 %v1003
        %1374 = vmatprep.subr.bf16.mxu0 %v1008
        %1375 = vmatpush1.bf16.msra.mxu0 %v1007
        %1376 = vmatprep.subr.bf16.mxu0 %v1012
        %1377 = vmatpush1.bf16.msra.mxu0 %v1011
        %1378 = vmatprep.subr.bf16.mxu0 %v1016
        %1379 = vmatpush1.bf16.msra.mxu0 %v1015
        %1380 = vmatprep.subr.bf16.mxu0 %v1020
        %1381 = vmatpush1.bf16.msra.mxu0 %v1019
        %1382 = vmatprep.subr.bf16.mxu0 %v1024
        %1383 = vmatpush1.bf16.msra.mxu0 %v1023
        %1384 = vmatprep.subr.bf16.mxu0 %v1028
        %1385 = vmatpush1.bf16.msra.mxu0 %v1027
        %1386 = vmatprep.subr.bf16.mxu0 %v1032
        %1387 = vmatpush1.bf16.msra.mxu0 %v1031
        %1388 = vmatprep.subr.bf16.mxu0 %v1036
        %1389 = vmatpush1.bf16.msra.mxu0 %v1035
        %1390 = vmatprep.subr.bf16.mxu0 %v1040
        %1391 = vmatpush1.bf16.msra.mxu0 %v1039
        %1392 = vmatprep.subr.bf16.mxu0 %v1044
        %1393 = vmatpush1.bf16.msra.mxu0 %v1043
        %1394 = vmatprep.subr.bf16.mxu0 %v1048
        %1395 = vmatpush1.bf16.msra.mxu0 %v1047
        %1396 = vmatprep.subr.bf16.mxu0 %v1052
        %1397 = vmatpush1.bf16.msra.mxu0 %v1051
        %1398 = vmatprep.subr.bf16.mxu0 %v1056
        %1399 = vmatpush1.bf16.msra.mxu0 %v1055
        %1400 = vmatprep.subr.bf16.mxu0 %v1060
        %1401 = vmatpush1.bf16.msra.mxu0 %v1059
        %1402 = vmatprep.mubr.bf16.mxu0 %v1355
        %1403 = vmatmul.mubr.bf16.gmra.mrb[0].mxu0 %v1354
        %v1404 = vpop.f32.mrb[0].mxu0
        %v1405 = vadd.f32 0.0, %v1404
        %v1406 = vpop.f32.mrb[0].mxu0
        %v1407 = vadd.f32 0.0, %v1406
        %v1408 = vpop.f32.mrb[0].mxu0
        %v1409 = vadd.f32 0.0, %v1408
        %v1410 = vpop.f32.mrb[0].mxu0
        %v1411 = vadd.f32 0.0, %v1410
        %1412 = vmatprep.mubr.bf16.mxu0 %v1357
        %1413 = vmatmul.mubr.bf16.gmra.mrb[0].mxu0 %v1356
        %v1414 = vpop.f32.mrb[0].mxu0
        %v1415 = vadd.f32 0.0, %v1414
        %v1416 = vpop.f32.mrb[0].mxu0
        %v1417 = vadd.f32 0.0, %v1416
        %v1418 = vpop.f32.mrb[0].mxu0
        %v1419 = vadd.f32 0.0, %v1418
        %v1420 = vpop.f32.mrb[0].mxu0
        %v1421 = vadd.f32 0.0, %v1420
        %1422 = vmatprep.mubr.bf16.mxu0 %v1359
        %1423 = vmatmul.mubr.bf16.gmra.mrb[0].mxu0 %v1358
        %v1424 = vpop.f32.mrb[0].mxu0
        %v1425 = vadd.f32 0.0, %v1424
        %v1426 = vpop.f32.mrb[0].mxu0
        %v1427 = vadd.f32 0.0, %v1426
        %v1428 = vpop.f32.mrb[0].mxu0
        %v1429 = vadd.f32 0.0, %v1428
        %v1430 = vpop.f32.mrb[0].mxu0
        %v1431 = vadd.f32 0.0, %v1430
        %1432 = vmatprep.mubr.bf16.mxu0 %v1361
        %1433 = vmatmul.mubr.bf16.gmra.mrb[0].mxu0 %v1360
        %v1434 = vpop.f32.mrb[0].mxu0
        %v1435 = vadd.f32 0.0, %v1434
        %v1436 = vpop.f32.mrb[0].mxu0
        %v1437 = vadd.f32 0.0, %v1436
        %v1438 = vpop.f32.mrb[0].mxu0
        %v1439 = vadd.f32 0.0, %v1438
        %v1440 = vpop.f32.mrb[0].mxu0
        %v1441 = vadd.f32 0.0, %v1440
        %1442 = vdwg.mxu0
        %1443 = vmatprep.subr.bf16.mxu0 %v1002
        %1444 = vmatpush1.bf16.msra.mxu0 %v1001
        %1445 = vmatprep.subr.bf16.mxu0 %v1006
        %1446 = vmatpush1.bf16.msra.mxu0 %v1005
        %1447 = vmatprep.subr.bf16.mxu0 %v1010
        %1448 = vmatpush1.bf16.msra.mxu0 %v1009
        %1449 = vmatprep.subr.bf16.mxu0 %v1014
        %1450 = vmatpush1.bf16.msra.mxu0 %v1013
        %1451 = vmatprep.subr.bf16.mxu0 %v1018
        %1452 = vmatpush1.bf16.msra.mxu0 %v1017
        %1453 = vmatprep.subr.bf16.mxu0 %v1022
        %1454 = vmatpush1.bf16.msra.mxu0 %v1021
        %1455 = vmatprep.subr.bf16.mxu0 %v1026
        %1456 = vmatpush1.bf16.msra.mxu0 %v1025
        %1457 = vmatprep.subr.bf16.mxu0 %v1030
        %1458 = vmatpush1.bf16.msra.mxu0 %v1029
        %1459 = vmatprep.subr.bf16.mxu0 %v1034
        %1460 = vmatpush1.bf16.msra.mxu0 %v1033
        %1461 = vmatprep.subr.bf16.mxu0 %v1038
        %1462 = vmatpush1.bf16.msra.mxu0 %v1037
        %1463 = vmatprep.subr.bf16.mxu0 %v1042
        %1464 = vmatpush1.bf16.msra.mxu0 %v1041
        %1465 = vmatprep.subr.bf16.mxu0 %v1046
        %1466 = vmatpush1.bf16.msra.mxu0 %v1045
        %1467 = vmatprep.subr.bf16.mxu0 %v1050
        %1468 = vmatpush1.bf16.msra.mxu0 %v1049
        %1469 = vmatprep.subr.bf16.mxu0 %v1054
        %1470 = vmatpush1.bf16.msra.mxu0 %v1053
        %1471 = vmatprep.subr.bf16.mxu0 %v1058
        %1472 = vmatpush1.bf16.msra.mxu0 %v1057
        %1473 = vmatprep.subr.bf16.mxu0 %v1062
        %1474 = vmatpush1.bf16.msra.mxu0 %v1061
        %1475 = vmatprep.mubr.bf16.mxu0 %v1355
        %1476 = vmatmul.mubr.bf16.gmra.mrb[0].mxu0 %v1354
        %v1477 = vpop.f32.mrb[0].mxu0
        %v1478 = vadd.f32 0.0, %v1477
        %v1479 = vpop.f32.mrb[0].mxu0
        %v1480 = vadd.f32 0.0, %v1479
        %v1481 = vpop.f32.mrb[0].mxu0
        %v1482 = vadd.f32 0.0, %v1481
        %v1483 = vpop.f32.mrb[0].mxu0
        %v1484 = vadd.f32 0.0, %v1483
        %1485 = vmatprep.mubr.bf16.mxu0 %v1357
        %1486 = vmatmul.mubr.bf16.gmra.mrb[0].mxu0 %v1356
        %v1487 = vpop.f32.mrb[0].mxu0
        %v1488 = vadd.f32 0.0, %v1487
        %v1489 = vpop.f32.mrb[0].mxu0
        %v1490 = vadd.f32 0.0, %v1489
        %v1491 = vpop.f32.mrb[0].mxu0
        %v1492 = vadd.f32 0.0, %v1491
        %v1493 = vpop.f32.mrb[0].mxu0
        %v1494 = vadd.f32 0.0, %v1493
        %1495 = vmatprep.mubr.bf16.mxu0 %v1359
        %1496 = vmatmul.mubr.bf16.gmra.mrb[0].mxu0 %v1358
        %v1497 = vpop.f32.mrb[0].mxu0
        %v1498 = vadd.f32 0.0, %v1497
        %v1499 = vpop.f32.mrb[0].mxu0
        %v1500 = vadd.f32 0.0, %v1499
        %v1501 = vpop.f32.mrb[0].mxu0
        %v1502 = vadd.f32 0.0, %v1501
        %v1503 = vpop.f32.mrb[0].mxu0
        %v1504 = vadd.f32 0.0, %v1503
        %1505 = vmatprep.mubr.bf16.mxu0 %v1361
        %1506 = vmatmul.mubr.bf16.gmra.mrb[0].mxu0 %v1360
        %v1507 = vpop.f32.mrb[0].mxu0
        %v1508 = vadd.f32 0.0, %v1507
        %v1509 = vpop.f32.mrb[0].mxu0
        %v1510 = vadd.f32 0.0, %v1509
        %v1511 = vpop.f32.mrb[0].mxu0
        %v1512 = vadd.f32 0.0, %v1511
        %v1513 = vpop.f32.mrb[0].mxu0
        %v1514 = vadd.f32 0.0, %v1513
        %1515 = vdwg.mxu0
        %s1516 = scalar_lea.vmem [#allocation6], 512
        %v1517 = vld [vmem:[%s1516] sm:$0xff]
        %v1518 = vld [vmem:[%s1516 + $0x20] sm:$0xff]
        %v1519 = vld [vmem:[%s1516 + $0x40] sm:$0xff]
        %v1520 = vld [vmem:[%s1516 + $0x60] sm:$0xff]
        %v1521 = vld [vmem:[%s1516 + $0x80] sm:$0xff]
        %v1522 = vld [vmem:[%s1516 + $0xa0] sm:$0xff]
        %v1523 = vld [vmem:[%s1516 + $0xc0] sm:$0xff]
        %v1524 = vld [vmem:[%s1516 + $0xe0] sm:$0xff]
        %v1533 = vunpack.c.l.b16 %v1517
        %v1534 = vunpack.c.h.b16 %v1517
        %v1535 = vunpack.c.l.b16 %v1518
        %v1536 = vunpack.c.h.b16 %v1518
        %v1537 = vunpack.c.l.b16 %v1519
        %v1538 = vunpack.c.h.b16 %v1519
        %v1539 = vunpack.c.l.b16 %v1520
        %v1540 = vunpack.c.h.b16 %v1520
        %v1541 = vunpack.c.l.b16 %v1521
        %v1542 = vunpack.c.h.b16 %v1521
        %v1543 = vunpack.c.l.b16 %v1522
        %v1544 = vunpack.c.h.b16 %v1522
        %v1545 = vunpack.c.l.b16 %v1523
        %v1546 = vunpack.c.h.b16 %v1523
        %v1547 = vunpack.c.l.b16 %v1524
        %v1548 = vunpack.c.h.b16 %v1524
        %v1549 = vpack.c.b16 %v1535, %v1533
        %v1550 = vpack.c.b16 %v1536, %v1534
        %v1551 = vpack.c.b16 %v1539, %v1537
        %v1552 = vpack.c.b16 %v1540, %v1538
        %v1553 = vpack.c.b16 %v1543, %v1541
        %v1554 = vpack.c.b16 %v1544, %v1542
        %v1555 = vpack.c.b16 %v1547, %v1545
        %v1556 = vpack.c.b16 %v1548, %v1546
        %1565 = vmatprep.subr.bf16.mxu0 %v1064
        %1566 = vmatpush1.bf16.msra.mxu0 %v1063
        %1567 = vmatprep.subr.bf16.mxu0 %v1068
        %1568 = vmatpush1.bf16.msra.mxu0 %v1067
        %1569 = vmatprep.subr.bf16.mxu0 %v1072
        %1570 = vmatpush1.bf16.msra.mxu0 %v1071
        %1571 = vmatprep.subr.bf16.mxu0 %v1076
        %1572 = vmatpush1.bf16.msra.mxu0 %v1075
        %1573 = vmatprep.subr.bf16.mxu0 %v1080
        %1574 = vmatpush1.bf16.msra.mxu0 %v1079
        %1575 = vmatprep.subr.bf16.mxu0 %v1084
        %1576 = vmatpush1.bf16.msra.mxu0 %v1083
        %1577 = vmatprep.subr.bf16.mxu0 %v1088
        %1578 = vmatpush1.bf16.msra.mxu0 %v1087
        %1579 = vmatprep.subr.bf16.mxu0 %v1092
        %1580 = vmatpush1.bf16.msra.mxu0 %v1091
        %1581 = vmatprep.subr.bf16.mxu0 %v1096
        %1582 = vmatpush1.bf16.msra.mxu0 %v1095
        %1583 = vmatprep.subr.bf16.mxu0 %v1100
        %1584 = vmatpush1.bf16.msra.mxu0 %v1099
        %1585 = vmatprep.subr.bf16.mxu0 %v1104
        %1586 = vmatpush1.bf16.msra.mxu0 %v1103
        %1587 = vmatprep.subr.bf16.mxu0 %v1108
        %1588 = vmatpush1.bf16.msra.mxu0 %v1107
        %1589 = vmatprep.subr.bf16.mxu0 %v1112
        %1590 = vmatpush1.bf16.msra.mxu0 %v1111
        %1591 = vmatprep.subr.bf16.mxu0 %v1116
        %1592 = vmatpush1.bf16.msra.mxu0 %v1115
        %1593 = vmatprep.subr.bf16.mxu0 %v1120
        %1594 = vmatpush1.bf16.msra.mxu0 %v1119
        %1595 = vmatprep.subr.bf16.mxu0 %v1124
        %1596 = vmatpush1.bf16.msra.mxu0 %v1123
        %1597 = vmatprep.mubr.bf16.mxu0 %v1550
        %1598 = vmatmul.mubr.bf16.gmra.mrb[0].mxu0 %v1549
        %v1599 = vpop.f32.mrb[0].mxu0
        %v1600 = vadd.f32 0.0, %v1599
        %v1601 = vpop.f32.mrb[0].mxu0
        %v1602 = vadd.f32 0.0, %v1601
        %v1603 = vpop.f32.mrb[0].mxu0
        %v1604 = vadd.f32 0.0, %v1603
        %v1605 = vpop.f32.mrb[0].mxu0
        %v1606 = vadd.f32 0.0, %v1605
        %1607 = vmatprep.mubr.bf16.mxu0 %v1552
        %1608 = vmatmul.mubr.bf16.gmra.mrb[0].mxu0 %v1551
        %v1609 = vpop.f32.mrb[0].mxu0
        %v1610 = vadd.f32 0.0, %v1609
        %v1611 = vpop.f32.mrb[0].mxu0
        %v1612 = vadd.f32 0.0, %v1611
        %v1613 = vpop.f32.mrb[0].mxu0
        %v1614 = vadd.f32 0.0, %v1613
        %v1615 = vpop.f32.mrb[0].mxu0
        %v1616 = vadd.f32 0.0, %v1615
        %1617 = vmatprep.mubr.bf16.mxu0 %v1554
        %1618 = vmatmul.mubr.bf16.gmra.mrb[0].mxu0 %v1553
        %v1619 = vpop.f32.mrb[0].mxu0
        %v1620 = vadd.f32 0.0, %v1619
        %v1621 = vpop.f32.mrb[0].mxu0
        %v1622 = vadd.f32 0.0, %v1621
        %v1623 = vpop.f32.mrb[0].mxu0
        %v1624 = vadd.f32 0.0, %v1623
        %v1625 = vpop.f32.mrb[0].mxu0
        %v1626 = vadd.f32 0.0, %v1625
        %1627 = vmatprep.mubr.bf16.mxu0 %v1556
        %1628 = vmatmul.mubr.bf16.gmra.mrb[0].mxu0 %v1555
        %v1629 = vpop.f32.mrb[0].mxu0
        %v1630 = vadd.f32 0.0, %v1629
        %v1631 = vpop.f32.mrb[0].mxu0
        %v1632 = vadd.f32 0.0, %v1631
        %v1633 = vpop.f32.mrb[0].mxu0
        %v1634 = vadd.f32 0.0, %v1633
        %v1635 = vpop.f32.mrb[0].mxu0
        %v1636 = vadd.f32 0.0, %v1635
        %1637 = vdwg.mxu0
        %1638 = vmatprep.subr.bf16.mxu0 %v1066
        %1639 = vmatpush1.bf16.msra.mxu0 %v1065
        %1640 = vmatprep.subr.bf16.mxu0 %v1070
        %1641 = vmatpush1.bf16.msra.mxu0 %v1069
        %1642 = vmatprep.subr.bf16.mxu0 %v1074
        %1643 = vmatpush1.bf16.msra.mxu0 %v1073
        %1644 = vmatprep.subr.bf16.mxu0 %v1078
        %1645 = vmatpush1.bf16.msra.mxu0 %v1077
        %1646 = vmatprep.subr.bf16.mxu0 %v1082
        %1647 = vmatpush1.bf16.msra.mxu0 %v1081
        %1648 = vmatprep.subr.bf16.mxu0 %v1086
        %1649 = vmatpush1.bf16.msra.mxu0 %v1085
        %1650 = vmatprep.subr.bf16.mxu0 %v1090
        %1651 = vmatpush1.bf16.msra.mxu0 %v1089
        %1652 = vmatprep.subr.bf16.mxu0 %v1094
        %1653 = vmatpush1.bf16.msra.mxu0 %v1093
        %1654 = vmatprep.subr.bf16.mxu0 %v1098
        %1655 = vmatpush1.bf16.msra.mxu0 %v1097
        %1656 = vmatprep.subr.bf16.mxu0 %v1102
        %1657 = vmatpush1.bf16.msra.mxu0 %v1101
        %1658 = vmatprep.subr.bf16.mxu0 %v1106
        %1659 = vmatpush1.bf16.msra.mxu0 %v1105
        %1660 = vmatprep.subr.bf16.mxu0 %v1110
        %1661 = vmatpush1.bf16.msra.mxu0 %v1109
        %1662 = vmatprep.subr.bf16.mxu0 %v1114
        %1663 = vmatpush1.bf16.msra.mxu0 %v1113
        %1664 = vmatprep.subr.bf16.mxu0 %v1118
        %1665 = vmatpush1.bf16.msra.mxu0 %v1117
        %1666 = vmatprep.subr.bf16.mxu0 %v1122
        %1667 = vmatpush1.bf16.msra.mxu0 %v1121
        %1668 = vmatprep.subr.bf16.mxu0 %v1126
        %1669 = vmatpush1.bf16.msra.mxu0 %v1125
        %1670 = vmatprep.mubr.bf16.mxu0 %v1550
        %1671 = vmatmul.mubr.bf16.gmra.mrb[0].mxu0 %v1549
        %v1672 = vpop.f32.mrb[0].mxu0
        %v1673 = vadd.f32 0.0, %v1672
        %v1674 = vpop.f32.mrb[0].mxu0
        %v1675 = vadd.f32 0.0, %v1674
        %v1676 = vpop.f32.mrb[0].mxu0
        %v1677 = vadd.f32 0.0, %v1676
        %v1678 = vpop.f32.mrb[0].mxu0
        %v1679 = vadd.f32 0.0, %v1678
        %1680 = vmatprep.mubr.bf16.mxu0 %v1552
        %1681 = vmatmul.mubr.bf16.gmra.mrb[0].mxu0 %v1551
        %v1682 = vpop.f32.mrb[0].mxu0
        %v1683 = vadd.f32 0.0, %v1682
        %v1684 = vpop.f32.mrb[0].mxu0
        %v1685 = vadd.f32 0.0, %v1684
        %v1686 = vpop.f32.mrb[0].mxu0
        %v1687 = vadd.f32 0.0, %v1686
        %v1688 = vpop.f32.mrb[0].mxu0
        %v1689 = vadd.f32 0.0, %v1688
        %1690 = vmatprep.mubr.bf16.mxu0 %v1554
        %1691 = vmatmul.mubr.bf16.gmra.mrb[0].mxu0 %v1553
        %v1692 = vpop.f32.mrb[0].mxu0
        %v1693 = vadd.f32 0.0, %v1692
        %v1694 = vpop.f32.mrb[0].mxu0
        %v1695 = vadd.f32 0.0, %v1694
        %v1696 = vpop.f32.mrb[0].mxu0
        %v1697 = vadd.f32 0.0, %v1696
        %v1698 = vpop.f32.mrb[0].mxu0
        %v1699 = vadd.f32 0.0, %v1698
        %1700 = vmatprep.mubr.bf16.mxu0 %v1556
        %1701 = vmatmul.mubr.bf16.gmra.mrb[0].mxu0 %v1555
        %v1702 = vpop.f32.mrb[0].mxu0
        %v1703 = vadd.f32 0.0, %v1702
        %v1704 = vpop.f32.mrb[0].mxu0
        %v1705 = vadd.f32 0.0, %v1704
        %v1706 = vpop.f32.mrb[0].mxu0
        %v1707 = vadd.f32 0.0, %v1706
        %v1708 = vpop.f32.mrb[0].mxu0
        %v1709 = vadd.f32 0.0, %v1708
        %1710 = vdwg.mxu0
        %1711 = vst [vmem:[#allocation2] sm:$0xff] %v1210
        %1712 = vst [vmem:[#allocation2 + $0x8] sm:$0xff] %v1212
        %1713 = vst [vmem:[#allocation2 + $0x10] sm:$0xff] %v1283
        %1714 = vst [vmem:[#allocation2 + $0x18] sm:$0xff] %v1285
        %1715 = vst [vmem:[#allocation2 + $0x20] sm:$0xff] %v1214
        %1716 = vst [vmem:[#allocation2 + $0x28] sm:$0xff] %v1216
        %1717 = vst [vmem:[#allocation2 + $0x30] sm:$0xff] %v1287
        %1718 = vst [vmem:[#allocation2 + $0x38] sm:$0xff] %v1289
        %1719 = vst [vmem:[#allocation2 + $0x40] sm:$0xff] %v1220
        %1720 = vst [vmem:[#allocation2 + $0x48] sm:$0xff] %v1222
        %1721 = vst [vmem:[#allocation2 + $0x50] sm:$0xff] %v1293
        %1722 = vst [vmem:[#allocation2 + $0x58] sm:$0xff] %v1295
        %1723 = vst [vmem:[#allocation2 + $0x60] sm:$0xff] %v1224
        %1724 = vst [vmem:[#allocation2 + $0x68] sm:$0xff] %v1226
        %1725 = vst [vmem:[#allocation2 + $0x70] sm:$0xff] %v1297
        %1726 = vst [vmem:[#allocation2 + $0x78] sm:$0xff] %v1299
        %1727 = vst [vmem:[#allocation2 + $0x80] sm:$0xff] %v1230
        %1728 = vst [vmem:[#allocation2 + $0x88] sm:$0xff] %v1232
        %1729 = vst [vmem:[#allocation2 + $0x90] sm:$0xff] %v1303
        %1730 = vst [vmem:[#allocation2 + $0x98] sm:$0xff] %v1305
        %1731 = vst [vmem:[#allocation2 + $0xa0] sm:$0xff] %v1234
        %1732 = vst [vmem:[#allocation2 + $0xa8] sm:$0xff] %v1236
        %1733 = vst [vmem:[#allocation2 + $0xb0] sm:$0xff] %v1307
        %1734 = vst [vmem:[#allocation2 + $0xb8] sm:$0xff] %v1309
        %1735 = vst [vmem:[#allocation2 + $0xc0] sm:$0xff] %v1240
        %1736 = vst [vmem:[#allocation2 + $0xc8] sm:$0xff] %v1242
        %1737 = vst [vmem:[#allocation2 + $0xd0] sm:$0xff] %v1313
        %1738 = vst [vmem:[#allocation2 + $0xd8] sm:$0xff] %v1315
        %1739 = vst [vmem:[#allocation2 + $0xe0] sm:$0xff] %v1244
        %1740 = vst [vmem:[#allocation2 + $0xe8] sm:$0xff] %v1246
        %1741 = vst [vmem:[#allocation2 + $0xf0] sm:$0xff] %v1317
        %1742 = vst [vmem:[#allocation2 + $0xf8] sm:$0xff] %v1319
        %1743 = vst [vmem:[#allocation3] sm:$0xff] %v1405
        %1744 = vst [vmem:[#allocation3 + $0x8] sm:$0xff] %v1407
        %1745 = vst [vmem:[#allocation3 + $0x10] sm:$0xff] %v1478
        %1746 = vst [vmem:[#allocation3 + $0x18] sm:$0xff] %v1480
        %1747 = vst [vmem:[#allocation3 + $0x20] sm:$0xff] %v1409
        %1748 = vst [vmem:[#allocation3 + $0x28] sm:$0xff] %v1411
        %1749 = vst [vmem:[#allocation3 + $0x30] sm:$0xff] %v1482
        %1750 = vst [vmem:[#allocation3 + $0x38] sm:$0xff] %v1484
        %1751 = vst [vmem:[#allocation3 + $0x40] sm:$0xff] %v1415
        %1752 = vst [vmem:[#allocation3 + $0x48] sm:$0xff] %v1417
        %1753 = vst [vmem:[#allocation3 + $0x50] sm:$0xff] %v1488
        %1754 = vst [vmem:[#allocation3 + $0x58] sm:$0xff] %v1490
        %1755 = vst [vmem:[#allocation3 + $0x60] sm:$0xff] %v1419
        %1756 = vst [vmem:[#allocation3 + $0x68] sm:$0xff] %v1421
        %1757 = vst [vmem:[#allocation3 + $0x70] sm:$0xff] %v1492
        %1758 = vst [vmem:[#allocation3 + $0x78] sm:$0xff] %v1494
        %1759 = vst [vmem:[#allocation3 + $0x80] sm:$0xff] %v1425
        %1760 = vst [vmem:[#allocation3 + $0x88] sm:$0xff] %v1427
        %1761 = vst [vmem:[#allocation3 + $0x90] sm:$0xff] %v1498
        %1762 = vst [vmem:[#allocation3 + $0x98] sm:$0xff] %v1500
        %1763 = vst [vmem:[#allocation3 + $0xa0] sm:$0xff] %v1429
        %1764 = vst [vmem:[#allocation3 + $0xa8] sm:$0xff] %v1431
        %1765 = vst [vmem:[#allocation3 + $0xb0] sm:$0xff] %v1502
        %1766 = vst [vmem:[#allocation3 + $0xb8] sm:$0xff] %v1504
        %1767 = vst [vmem:[#allocation3 + $0xc0] sm:$0xff] %v1435
        %1768 = vst [vmem:[#allocation3 + $0xc8] sm:$0xff] %v1437
        %1769 = vst [vmem:[#allocation3 + $0xd0] sm:$0xff] %v1508
        %1770 = vst [vmem:[#allocation3 + $0xd8] sm:$0xff] %v1510
        %1771 = vst [vmem:[#allocation3 + $0xe0] sm:$0xff] %v1439
        %1772 = vst [vmem:[#allocation3 + $0xe8] sm:$0xff] %v1441
        %1773 = vst [vmem:[#allocation3 + $0xf0] sm:$0xff] %v1512
        %1774 = vst [vmem:[#allocation3 + $0xf8] sm:$0xff] %v1514
        %1775 = vst [vmem:[#allocation4] sm:$0xff] %v1600
        %1776 = vst [vmem:[#allocation4 + $0x8] sm:$0xff] %v1602
        %1777 = vst [vmem:[#allocation4 + $0x10] sm:$0xff] %v1673
        %1778 = vst [vmem:[#allocation4 + $0x18] sm:$0xff] %v1675
        %1779 = vst [vmem:[#allocation4 + $0x20] sm:$0xff] %v1604
        %1780 = vst [vmem:[#allocation4 + $0x28] sm:$0xff] %v1606
        %1781 = vst [vmem:[#allocation4 + $0x30] sm:$0xff] %v1677
        %1782 = vst [vmem:[#allocation4 + $0x38] sm:$0xff] %v1679
        %1783 = vst [vmem:[#allocation4 + $0x40] sm:$0xff] %v1610
        %1784 = vst [vmem:[#allocation4 + $0x48] sm:$0xff] %v1612
        %1785 = vst [vmem:[#allocation4 + $0x50] sm:$0xff] %v1683
        %1786 = vst [vmem:[#allocation4 + $0x58] sm:$0xff] %v1685
        %1787 = vst [vmem:[#allocation4 + $0x60] sm:$0xff] %v1614
        %1788 = vst [vmem:[#allocation4 + $0x68] sm:$0xff] %v1616
        %1789 = vst [vmem:[#allocation4 + $0x70] sm:$0xff] %v1687
        %1790 = vst [vmem:[#allocation4 + $0x78] sm:$0xff] %v1689
        %1791 = vst [vmem:[#allocation4 + $0x80] sm:$0xff] %v1620
        %1792 = vst [vmem:[#allocation4 + $0x88] sm:$0xff] %v1622
        %1793 = vst [vmem:[#allocation4 + $0x90] sm:$0xff] %v1693
        %1794 = vst [vmem:[#allocation4 + $0x98] sm:$0xff] %v1695
        %1795 = vst [vmem:[#allocation4 + $0xa0] sm:$0xff] %v1624
        %1796 = vst [vmem:[#allocation4 + $0xa8] sm:$0xff] %v1626
        %1797 = vst [vmem:[#allocation4 + $0xb0] sm:$0xff] %v1697
        %1798 = vst [vmem:[#allocation4 + $0xb8] sm:$0xff] %v1699
        %1799 = vst [vmem:[#allocation4 + $0xc0] sm:$0xff] %v1630
        %1800 = vst [vmem:[#allocation4 + $0xc8] sm:$0xff] %v1632
        %1801 = vst [vmem:[#allocation4 + $0xd0] sm:$0xff] %v1703
        %1802 = vst [vmem:[#allocation4 + $0xd8] sm:$0xff] %v1705
        %1803 = vst [vmem:[#allocation4 + $0xe0] sm:$0xff] %v1634
        %1804 = vst [vmem:[#allocation4 + $0xe8] sm:$0xff] %v1636
        %1805 = vst [vmem:[#allocation4 + $0xf0] sm:$0xff] %v1707
        %1806 = vst [vmem:[#allocation4 + $0xf8] sm:$0xff] %v1709
        %v1807 = vlaneseq
        %v1808 = vshrl.u32 %v1807, 7
        %v1809 = vsub.s32 0, %v1808
        %v1810 = vrot.slane %v502, %v1809
        %v1811 = vlaneseq
        %v1812 = vshrl.u32 %v1811, 7
        %v1813 = vsub.s32 0, %v1812
        %v1814 = vrot.slane %v503, %v1813
        %v1815 = vlaneseq
        %v1816 = vshrl.u32 %v1815, 7
        %v1817 = vsub.s32 0, %v1816
        %v1818 = vrot.slane %v504, %v1817
        %v1819 = vlaneseq
        %v1820 = vshrl.u32 %v1819, 7
        %v1821 = vsub.s32 0, %v1820
        %v1822 = vrot.slane %v505, %v1821
        %v1823 = vlaneseq
        %v1824 = vshrl.u32 %v1823, 7
        %v1825 = vsub.s32 1, %v1824
        %v1826 = vrot.slane %v502, %v1825
        %v1827 = vlaneseq
        %v1828 = vshrl.u32 %v1827, 7
        %v1829 = vsub.s32 1, %v1828
        %v1830 = vrot.slane %v503, %v1829
        %v1831 = vlaneseq
        %v1832 = vshrl.u32 %v1831, 7
        %v1833 = vsub.s32 1, %v1832
        %v1834 = vrot.slane %v504, %v1833
        %v1835 = vlaneseq
        %v1836 = vshrl.u32 %v1835, 7
        %v1837 = vsub.s32 1, %v1836
        %v1838 = vrot.slane %v505, %v1837
        %v1839 = vlaneseq
        %v1840 = vshrl.u32 %v1839, 7
        %v1841 = vsub.s32 2, %v1840
        %v1842 = vrot.slane %v502, %v1841
        %v1843 = vlaneseq
        %v1844 = vshrl.u32 %v1843, 7
        %v1845 = vsub.s32 2, %v1844
        %v1846 = vrot.slane %v503, %v1845
        %v1847 = vlaneseq
        %v1848 = vshrl.u32 %v1847, 7
        %v1849 = vsub.s32 2, %v1848
        %v1850 = vrot.slane %v504, %v1849
        %v1851 = vlaneseq
        %v1852 = vshrl.u32 %v1851, 7
        %v1853 = vsub.s32 2, %v1852
        %v1854 = vrot.slane %v505, %v1853
        %v1855 = vlaneseq
        %v1856 = vshrl.u32 %v1855, 7
        %v1857 = vsub.s32 3, %v1856
        %v1858 = vrot.slane %v502, %v1857
        %v1859 = vlaneseq
        %v1860 = vshrl.u32 %v1859, 7
        %v1861 = vsub.s32 3, %v1860
        %v1862 = vrot.slane %v503, %v1861
        %v1863 = vlaneseq
        %v1864 = vshrl.u32 %v1863, 7
        %v1865 = vsub.s32 3, %v1864
        %v1866 = vrot.slane %v504, %v1865
        %v1867 = vlaneseq
        %v1868 = vshrl.u32 %v1867, 7
        %v1869 = vsub.s32 3, %v1868
        %v1870 = vrot.slane %v505, %v1869
        %v1871 = vlaneseq
        %v1872 = vshrl.u32 %v1871, 7
        %v1873 = vsub.s32 4, %v1872
        %v1874 = vrot.slane %v502, %v1873
        %v1875 = vlaneseq
        %v1876 = vshrl.u32 %v1875, 7
        %v1877 = vsub.s32 4, %v1876
        %v1878 = vrot.slane %v503, %v1877
        %v1879 = vlaneseq
        %v1880 = vshrl.u32 %v1879, 7
        %v1881 = vsub.s32 4, %v1880
        %v1882 = vrot.slane %v504, %v1881
        %v1883 = vlaneseq
        %v1884 = vshrl.u32 %v1883, 7
        %v1885 = vsub.s32 4, %v1884
        %v1886 = vrot.slane %v505, %v1885
        %v1887 = vlaneseq
        %v1888 = vshrl.u32 %v1887, 7
        %v1889 = vsub.s32 5, %v1888
        %v1890 = vrot.slane %v502, %v1889
        %v1891 = vlaneseq
        %v1892 = vshrl.u32 %v1891, 7
        %v1893 = vsub.s32 5, %v1892
        %v1894 = vrot.slane %v503, %v1893
        %v1895 = vlaneseq
        %v1896 = vshrl.u32 %v1895, 7
        %v1897 = vsub.s32 5, %v1896
        %v1898 = vrot.slane %v504, %v1897
        %v1899 = vlaneseq
        %v1900 = vshrl.u32 %v1899, 7
        %v1901 = vsub.s32 5, %v1900
        %v1902 = vrot.slane %v505, %v1901
        %v1903 = vlaneseq
        %v1904 = vshrl.u32 %v1903, 7
        %v1905 = vsub.s32 6, %v1904
        %v1906 = vrot.slane %v502, %v1905
        %v1907 = vlaneseq
        %v1908 = vshrl.u32 %v1907, 7
        %v1909 = vsub.s32 6, %v1908
        %v1910 = vrot.slane %v503, %v1909
        %v1911 = vlaneseq
        %v1912 = vshrl.u32 %v1911, 7
        %v1913 = vsub.s32 6, %v1912
        %v1914 = vrot.slane %v504, %v1913
        %v1915 = vlaneseq
        %v1916 = vshrl.u32 %v1915, 7
        %v1917 = vsub.s32 6, %v1916
        %v1918 = vrot.slane %v505, %v1917
        %v1919 = vlaneseq
        %v1920 = vshrl.u32 %v1919, 7
        %v1921 = vsub.s32 7, %v1920
        %v1922 = vrot.slane %v502, %v1921
        %v1923 = vlaneseq
        %v1924 = vshrl.u32 %v1923, 7
        %v1925 = vsub.s32 7, %v1924
        %v1926 = vrot.slane %v503, %v1925
        %v1927 = vlaneseq
        %v1928 = vshrl.u32 %v1927, 7
        %v1929 = vsub.s32 7, %v1928
        %v1930 = vrot.slane %v504, %v1929
        %v1931 = vlaneseq
        %v1932 = vshrl.u32 %v1931, 7
        %v1933 = vsub.s32 7, %v1932
        %v1934 = vrot.slane %v505, %v1933
        %v1935 = vpack.c.bf16 %v1810, %v1810
        %v1936 = vpack.c.bf16 %v1814, %v1814
        %v1937 = vpack.c.bf16 %v1818, %v1818
        %v1938 = vpack.c.bf16 %v1822, %v1822
        %v1939 = vpack.c.bf16 %v1826, %v1826
        %v1940 = vpack.c.bf16 %v1830, %v1830
        %v1941 = vpack.c.bf16 %v1834, %v1834
        %v1942 = vpack.c.bf16 %v1838, %v1838
        %v1943 = vpack.c.bf16 %v1842, %v1842
        %v1944 = vpack.c.bf16 %v1846, %v1846
        %v1945 = vpack.c.bf16 %v1850, %v1850
        %v1946 = vpack.c.bf16 %v1854, %v1854
        %v1947 = vpack.c.bf16 %v1858, %v1858
        %v1948 = vpack.c.bf16 %v1862, %v1862
        %v1949 = vpack.c.bf16 %v1866, %v1866
        %v1950 = vpack.c.bf16 %v1870, %v1870
        %v1951 = vpack.c.bf16 %v1874, %v1874
        %v1952 = vpack.c.bf16 %v1878, %v1878
        %v1953 = vpack.c.bf16 %v1882, %v1882
        %v1954 = vpack.c.bf16 %v1886, %v1886
        %v1955 = vpack.c.bf16 %v1890, %v1890
        %v1956 = vpack.c.bf16 %v1894, %v1894
        %v1957 = vpack.c.bf16 %v1898, %v1898
        %v1958 = vpack.c.bf16 %v1902, %v1902
        %v1959 = vpack.c.bf16 %v1906, %v1906
        %v1960 = vpack.c.bf16 %v1910, %v1910
        %v1961 = vpack.c.bf16 %v1914, %v1914
        %v1962 = vpack.c.bf16 %v1918, %v1918
        %v1963 = vpack.c.bf16 %v1922, %v1922
        %v1964 = vpack.c.bf16 %v1926, %v1926
        %v1965 = vpack.c.bf16 %v1930, %v1930
        %v1966 = vpack.c.bf16 %v1934, %v1934
        %v1967 = vlaneseq
        %v1968 = vshrl.u32 %v1967, 7
        %v1969 = vsub.s32 0, %v1968
        %v1970 = vrot.slane %v587, %v1969
        %v1971 = vlaneseq
        %v1972 = vshrl.u32 %v1971, 7
        %v1973 = vsub.s32 0, %v1972
        %v1974 = vrot.slane %v588, %v1973
        %v1975 = vlaneseq
        %v1976 = vshrl.u32 %v1975, 7
        %v1977 = vsub.s32 0, %v1976
        %v1978 = vrot.slane %v589, %v1977
        %v1979 = vlaneseq
        %v1980 = vshrl.u32 %v1979, 7
        %v1981 = vsub.s32 0, %v1980
        %v1982 = vrot.slane %v590, %v1981
        %v1983 = vlaneseq
        %v1984 = vshrl.u32 %v1983, 7
        %v1985 = vsub.s32 1, %v1984
        %v1986 = vrot.slane %v587, %v1985
        %v1987 = vlaneseq
        %v1988 = vshrl.u32 %v1987, 7
        %v1989 = vsub.s32 1, %v1988
        %v1990 = vrot.slane %v588, %v1989
        %v1991 = vlaneseq
        %v1992 = vshrl.u32 %v1991, 7
        %v1993 = vsub.s32 1, %v1992
        %v1994 = vrot.slane %v589, %v1993
        %v1995 = vlaneseq
        %v1996 = vshrl.u32 %v1995, 7
        %v1997 = vsub.s32 1, %v1996
        %v1998 = vrot.slane %v590, %v1997
        %v1999 = vlaneseq
        %v2000 = vshrl.u32 %v1999, 7
        %v2001 = vsub.s32 2, %v2000
        %v2002 = vrot.slane %v587, %v2001
        %v2003 = vlaneseq
        %v2004 = vshrl.u32 %v2003, 7
        %v2005 = vsub.s32 2, %v2004
        %v2006 = vrot.slane %v588, %v2005
        %v2007 = vlaneseq
        %v2008 = vshrl.u32 %v2007, 7
        %v2009 = vsub.s32 2, %v2008
        %v2010 = vrot.slane %v589, %v2009
        %v2011 = vlaneseq
        %v2012 = vshrl.u32 %v2011, 7
        %v2013 = vsub.s32 2, %v2012
        %v2014 = vrot.slane %v590, %v2013
        %v2015 = vlaneseq
        %v2016 = vshrl.u32 %v2015, 7
        %v2017 = vsub.s32 3, %v2016
        %v2018 = vrot.slane %v587, %v2017
        %v2019 = vlaneseq
        %v2020 = vshrl.u32 %v2019, 7
        %v2021 = vsub.s32 3, %v2020
        %v2022 = vrot.slane %v588, %v2021
        %v2023 = vlaneseq
        %v2024 = vshrl.u32 %v2023, 7
        %v2025 = vsub.s32 3, %v2024
        %v2026 = vrot.slane %v589, %v2025
        %v2027 = vlaneseq
        %v2028 = vshrl.u32 %v2027, 7
        %v2029 = vsub.s32 3, %v2028
        %v2030 = vrot.slane %v590, %v2029
        %v2031 = vlaneseq
        %v2032 = vshrl.u32 %v2031, 7
        %v2033 = vsub.s32 4, %v2032
        %v2034 = vrot.slane %v587, %v2033
        %v2035 = vlaneseq
        %v2036 = vshrl.u32 %v2035, 7
        %v2037 = vsub.s32 4, %v2036
        %v2038 = vrot.slane %v588, %v2037
        %v2039 = vlaneseq
        %v2040 = vshrl.u32 %v2039, 7
        %v2041 = vsub.s32 4, %v2040
        %v2042 = vrot.slane %v589, %v2041
        %v2043 = vlaneseq
        %v2044 = vshrl.u32 %v2043, 7
        %v2045 = vsub.s32 4, %v2044
        %v2046 = vrot.slane %v590, %v2045
        %v2047 = vlaneseq
        %v2048 = vshrl.u32 %v2047, 7
        %v2049 = vsub.s32 5, %v2048
        %v2050 = vrot.slane %v587, %v2049
        %v2051 = vlaneseq
        %v2052 = vshrl.u32 %v2051, 7
        %v2053 = vsub.s32 5, %v2052
        %v2054 = vrot.slane %v588, %v2053
        %v2055 = vlaneseq
        %v2056 = vshrl.u32 %v2055, 7
        %v2057 = vsub.s32 5, %v2056
        %v2058 = vrot.slane %v589, %v2057
        %v2059 = vlaneseq
        %v2060 = vshrl.u32 %v2059, 7
        %v2061 = vsub.s32 5, %v2060
        %v2062 = vrot.slane %v590, %v2061
        %v2063 = vlaneseq
        %v2064 = vshrl.u32 %v2063, 7
        %v2065 = vsub.s32 6, %v2064
        %v2066 = vrot.slane %v587, %v2065
        %v2067 = vlaneseq
        %v2068 = vshrl.u32 %v2067, 7
        %v2069 = vsub.s32 6, %v2068
        %v2070 = vrot.slane %v588, %v2069
        %v2071 = vlaneseq
        %v2072 = vshrl.u32 %v2071, 7
        %v2073 = vsub.s32 6, %v2072
        %v2074 = vrot.slane %v589, %v2073
        %v2075 = vlaneseq
        %v2076 = vshrl.u32 %v2075, 7
        %v2077 = vsub.s32 6, %v2076
        %v2078 = vrot.slane %v590, %v2077
        %v2079 = vlaneseq
        %v2080 = vshrl.u32 %v2079, 7
        %v2081 = vsub.s32 7, %v2080
        %v2082 = vrot.slane %v587, %v2081
        %v2083 = vlaneseq
        %v2084 = vshrl.u32 %v2083, 7
        %v2085 = vsub.s32 7, %v2084
        %v2086 = vrot.slane %v588, %v2085
        %v2087 = vlaneseq
        %v2088 = vshrl.u32 %v2087, 7
        %v2089 = vsub.s32 7, %v2088
        %v2090 = vrot.slane %v589, %v2089
        %v2091 = vlaneseq
        %v2092 = vshrl.u32 %v2091, 7
        %v2093 = vsub.s32 7, %v2092
        %v2094 = vrot.slane %v590, %v2093
        %v2095 = vpack.c.bf16 %v1970, %v1970
        %v2096 = vpack.c.bf16 %v1974, %v1974
        %v2097 = vpack.c.bf16 %v1978, %v1978
        %v2098 = vpack.c.bf16 %v1982, %v1982
        %v2099 = vpack.c.bf16 %v1986, %v1986
        %v2100 = vpack.c.bf16 %v1990, %v1990
        %v2101 = vpack.c.bf16 %v1994, %v1994
        %v2102 = vpack.c.bf16 %v1998, %v1998
        %v2103 = vpack.c.bf16 %v2002, %v2002
        %v2104 = vpack.c.bf16 %v2006, %v2006
        %v2105 = vpack.c.bf16 %v2010, %v2010
        %v2106 = vpack.c.bf16 %v2014, %v2014
        %v2107 = vpack.c.bf16 %v2018, %v2018
        %v2108 = vpack.c.bf16 %v2022, %v2022
        %v2109 = vpack.c.bf16 %v2026, %v2026
        %v2110 = vpack.c.bf16 %v2030, %v2030
        %v2111 = vpack.c.bf16 %v2034, %v2034
        %v2112 = vpack.c.bf16 %v2038, %v2038
        %v2113 = vpack.c.bf16 %v2042, %v2042
        %v2114 = vpack.c.bf16 %v2046, %v2046
        %v2115 = vpack.c.bf16 %v2050, %v2050
        %v2116 = vpack.c.bf16 %v2054, %v2054
        %v2117 = vpack.c.bf16 %v2058, %v2058
        %v2118 = vpack.c.bf16 %v2062, %v2062
        %v2119 = vpack.c.bf16 %v2066, %v2066
        %v2120 = vpack.c.bf16 %v2070, %v2070
        %v2121 = vpack.c.bf16 %v2074, %v2074
        %v2122 = vpack.c.bf16 %v2078, %v2078
        %v2123 = vpack.c.bf16 %v2082, %v2082
        %v2124 = vpack.c.bf16 %v2086, %v2086
        %v2125 = vpack.c.bf16 %v2090, %v2090
        %v2126 = vpack.c.bf16 %v2094, %v2094
        %v2127 = vmul.bf16 %v1935, %v599
        %v2128 = vmul.bf16 %v1936, %v600
        %v2129 = vmul.bf16 %v1937, %v601
        %v2130 = vmul.bf16 %v1938, %v602
        %v2131 = vmul.bf16 %v1935, %v603
        %v2132 = vmul.bf16 %v1936, %v604
        %v2133 = vmul.bf16 %v1937, %v605
        %v2134 = vmul.bf16 %v1938, %v606
        %v2135 = vmul.bf16 %v1939, %v599
        %v2136 = vmul.bf16 %v1940, %v600
        %v2137 = vmul.bf16 %v1941, %v601
        %v2138 = vmul.bf16 %v1942, %v602
        %v2139 = vmul.bf16 %v1939, %v603
        %v2140 = vmul.bf16 %v1940, %v604
        %v2141 = vmul.bf16 %v1941, %v605
        %v2142 = vmul.bf16 %v1942, %v606
        %v2143 = vmul.bf16 %v1943, %v599
        %v2144 = vmul.bf16 %v1944, %v600
        %v2145 = vmul.bf16 %v1945, %v601
        %v2146 = vmul.bf16 %v1946, %v602
        %v2147 = vmul.bf16 %v1943, %v603
        %v2148 = vmul.bf16 %v1944, %v604
        %v2149 = vmul.bf16 %v1945, %v605
        %v2150 = vmul.bf16 %v1946, %v606
        %v2151 = vmul.bf16 %v1947, %v599
        %v2152 = vmul.bf16 %v1948, %v600
        %v2153 = vmul.bf16 %v1949, %v601
        %v2154 = vmul.bf16 %v1950, %v602
        %v2155 = vmul.bf16 %v1947, %v603
        %v2156 = vmul.bf16 %v1948, %v604
        %v2157 = vmul.bf16 %v1949, %v605
        %v2158 = vmul.bf16 %v1950, %v606
        %v2159 = vmul.bf16 %v1951, %v599
        %v2160 = vmul.bf16 %v1952, %v600
        %v2161 = vmul.bf16 %v1953, %v601
        %v2162 = vmul.bf16 %v1954, %v602
        %v2163 = vmul.bf16 %v1951, %v603
        %v2164 = vmul.bf16 %v1952, %v604
        %v2165 = vmul.bf16 %v1953, %v605
        %v2166 = vmul.bf16 %v1954, %v606
        %v2167 = vmul.bf16 %v1955, %v599
        %v2168 = vmul.bf16 %v1956, %v600
        %v2169 = vmul.bf16 %v1957, %v601
        %v2170 = vmul.bf16 %v1958, %v602
        %v2171 = vmul.bf16 %v1955, %v603
        %v2172 = vmul.bf16 %v1956, %v604
        %v2173 = vmul.bf16 %v1957, %v605
        %v2174 = vmul.bf16 %v1958, %v606
        %v2175 = vmul.bf16 %v1959, %v599
        %v2176 = vmul.bf16 %v1960, %v600
        %v2177 = vmul.bf16 %v1961, %v601
        %v2178 = vmul.bf16 %v1962, %v602
        %v2179 = vmul.bf16 %v1959, %v603
        %v2180 = vmul.bf16 %v1960, %v604
        %v2181 = vmul.bf16 %v1961, %v605
        %v2182 = vmul.bf16 %v1962, %v606
        %v2183 = vmul.bf16 %v1963, %v599
        %v2184 = vmul.bf16 %v1964, %v600
        %v2185 = vmul.bf16 %v1965, %v601
        %v2186 = vmul.bf16 %v1966, %v602
        %v2187 = vmul.bf16 %v1963, %v603
        %v2188 = vmul.bf16 %v1964, %v604
        %v2189 = vmul.bf16 %v1965, %v605
        %v2190 = vmul.bf16 %v1966, %v606
        %v2191 = vmul.bf16 %v2095, %v607
        %v2192 = vmul.bf16 %v2096, %v608
        %v2193 = vmul.bf16 %v2097, %v609
        %v2194 = vmul.bf16 %v2098, %v610
        %v2195 = vmul.bf16 %v2095, %v611
        %v2196 = vmul.bf16 %v2096, %v612
        %v2197 = vmul.bf16 %v2097, %v613
        %v2198 = vmul.bf16 %v2098, %v614
        %v2199 = vmul.bf16 %v2099, %v607
        %v2200 = vmul.bf16 %v2100, %v608
        %v2201 = vmul.bf16 %v2101, %v609
        %v2202 = vmul.bf16 %v2102, %v610
        %v2203 = vmul.bf16 %v2099, %v611
        %v2204 = vmul.bf16 %v2100, %v612
        %v2205 = vmul.bf16 %v2101, %v613
        %v2206 = vmul.bf16 %v2102, %v614
        %v2207 = vmul.bf16 %v2103, %v607
        %v2208 = vmul.bf16 %v2104, %v608
        %v2209 = vmul.bf16 %v2105, %v609
        %v2210 = vmul.bf16 %v2106, %v610
        %v2211 = vmul.bf16 %v2103, %v611
        %v2212 = vmul.bf16 %v2104, %v612
        %v2213 = vmul.bf16 %v2105, %v613
        %v2214 = vmul.bf16 %v2106, %v614
        %v2215 = vmul.bf16 %v2107, %v607
        %v2216 = vmul.bf16 %v2108, %v608
        %v2217 = vmul.bf16 %v2109, %v609
        %v2218 = vmul.bf16 %v2110, %v610
        %v2219 = vmul.bf16 %v2107, %v611
        %v2220 = vmul.bf16 %v2108, %v612
        %v2221 = vmul.bf16 %v2109, %v613
        %v2222 = vmul.bf16 %v2110, %v614
        %v2223 = vmul.bf16 %v2111, %v607
        %v2224 = vmul.bf16 %v2112, %v608
        %v2225 = vmul.bf16 %v2113, %v609
        %v2226 = vmul.bf16 %v2114, %v610
        %v2227 = vmul.bf16 %v2111, %v611
        %v2228 = vmul.bf16 %v2112, %v612
        %v2229 = vmul.bf16 %v2113, %v613
        %v2230 = vmul.bf16 %v2114, %v614
        %v2231 = vmul.bf16 %v2115, %v607
        %v2232 = vmul.bf16 %v2116, %v608
        %v2233 = vmul.bf16 %v2117, %v609
        %v2234 = vmul.bf16 %v2118, %v610
        %v2235 = vmul.bf16 %v2115, %v611
        %v2236 = vmul.bf16 %v2116, %v612
        %v2237 = vmul.bf16 %v2117, %v613
        %v2238 = vmul.bf16 %v2118, %v614
        %v2239 = vmul.bf16 %v2119, %v607
        %v2240 = vmul.bf16 %v2120, %v608
        %v2241 = vmul.bf16 %v2121, %v609
        %v2242 = vmul.bf16 %v2122, %v610
        %v2243 = vmul.bf16 %v2119, %v611
        %v2244 = vmul.bf16 %v2120, %v612
        %v2245 = vmul.bf16 %v2121, %v613
        %v2246 = vmul.bf16 %v2122, %v614
        %v2247 = vmul.bf16 %v2123, %v607
        %v2248 = vmul.bf16 %v2124, %v608
        %v2249 = vmul.bf16 %v2125, %v609
        %v2250 = vmul.bf16 %v2126, %v610
        %v2251 = vmul.bf16 %v2123, %v611
        %v2252 = vmul.bf16 %v2124, %v612
        %v2253 = vmul.bf16 %v2125, %v613
        %v2254 = vmul.bf16 %v2126, %v614
        %v2255 = vmul.bf16 %v2095, %v599
        %v2256 = vmul.bf16 %v2096, %v600
        %v2257 = vmul.bf16 %v2097, %v601
        %v2258 = vmul.bf16 %v2098, %v602
        %v2259 = vmul.bf16 %v2095, %v603
        %v2260 = vmul.bf16 %v2096, %v604
        %v2261 = vmul.bf16 %v2097, %v605
        %v2262 = vmul.bf16 %v2098, %v606
        %v2263 = vmul.bf16 %v2099, %v599
        %v2264 = vmul.bf16 %v2100, %v600
        %v2265 = vmul.bf16 %v2101, %v601
        %v2266 = vmul.bf16 %v2102, %v602
        %v2267 = vmul.bf16 %v2099, %v603
        %v2268 = vmul.bf16 %v2100, %v604
        %v2269 = vmul.bf16 %v2101, %v605
        %v2270 = vmul.bf16 %v2102, %v606
        %v2271 = vmul.bf16 %v2103, %v599
        %v2272 = vmul.bf16 %v2104, %v600
        %v2273 = vmul.bf16 %v2105, %v601
        %v2274 = vmul.bf16 %v2106, %v602
        %v2275 = vmul.bf16 %v2103, %v603
        %v2276 = vmul.bf16 %v2104, %v604
        %v2277 = vmul.bf16 %v2105, %v605
        %v2278 = vmul.bf16 %v2106, %v606
        %v2279 = vmul.bf16 %v2107, %v599
        %v2280 = vmul.bf16 %v2108, %v600
        %v2281 = vmul.bf16 %v2109, %v601
        %v2282 = vmul.bf16 %v2110, %v602
        %v2283 = vmul.bf16 %v2107, %v603
        %v2284 = vmul.bf16 %v2108, %v604
        %v2285 = vmul.bf16 %v2109, %v605
        %v2286 = vmul.bf16 %v2110, %v606
        %v2287 = vmul.bf16 %v2111, %v599
        %v2288 = vmul.bf16 %v2112, %v600
        %v2289 = vmul.bf16 %v2113, %v601
        %v2290 = vmul.bf16 %v2114, %v602
        %v2291 = vmul.bf16 %v2111, %v603
        %v2292 = vmul.bf16 %v2112, %v604
        %v2293 = vmul.bf16 %v2113, %v605
        %v2294 = vmul.bf16 %v2114, %v606
        %v2295 = vmul.bf16 %v2115, %v599
        %v2296 = vmul.bf16 %v2116, %v600
        %v2297 = vmul.bf16 %v2117, %v601
        %v2298 = vmul.bf16 %v2118, %v602
        %v2299 = vmul.bf16 %v2115, %v603
        %v2300 = vmul.bf16 %v2116, %v604
        %v2301 = vmul.bf16 %v2117, %v605
        %v2302 = vmul.bf16 %v2118, %v606
        %v2303 = vmul.bf16 %v2119, %v599
        %v2304 = vmul.bf16 %v2120, %v600
        %v2305 = vmul.bf16 %v2121, %v601
        %v2306 = vmul.bf16 %v2122, %v602
        %v2307 = vmul.bf16 %v2119, %v603
        %v2308 = vmul.bf16 %v2120, %v604
        %v2309 = vmul.bf16 %v2121, %v605
        %v2310 = vmul.bf16 %v2122, %v606
        %v2311 = vmul.bf16 %v2123, %v599
        %v2312 = vmul.bf16 %v2124, %v600
        %v2313 = vmul.bf16 %v2125, %v601
        %v2314 = vmul.bf16 %v2126, %v602
        %v2315 = vmul.bf16 %v2123, %v603
        %v2316 = vmul.bf16 %v2124, %v604
        %v2317 = vmul.bf16 %v2125, %v605
        %v2318 = vmul.bf16 %v2126, %v606
        %v2319 = vld [vmem:[#allocation6 + $0x8] sm:$0xff]
        %v2320 = vld [vmem:[#allocation6 + $0x28] sm:$0xff]
        %v2321 = vld [vmem:[#allocation6 + $0x48] sm:$0xff]
        %v2322 = vld [vmem:[#allocation6 + $0x68] sm:$0xff]
        %v2323 = vld [vmem:[#allocation6 + $0x88] sm:$0xff]
        %v2324 = vld [vmem:[#allocation6 + $0xa8] sm:$0xff]
        %v2325 = vld [vmem:[#allocation6 + $0xc8] sm:$0xff]
        %v2326 = vld [vmem:[#allocation6 + $0xe8] sm:$0xff]
        %v2335 = vunpack.c.l.b16 %v2319
        %v2336 = vunpack.c.h.b16 %v2319
        %v2337 = vunpack.c.l.b16 %v2320
        %v2338 = vunpack.c.h.b16 %v2320
        %v2339 = vunpack.c.l.b16 %v2321
        %v2340 = vunpack.c.h.b16 %v2321
        %v2341 = vunpack.c.l.b16 %v2322
        %v2342 = vunpack.c.h.b16 %v2322
        %v2343 = vunpack.c.l.b16 %v2323
        %v2344 = vunpack.c.h.b16 %v2323
        %v2345 = vunpack.c.l.b16 %v2324
        %v2346 = vunpack.c.h.b16 %v2324
        %v2347 = vunpack.c.l.b16 %v2325
        %v2348 = vunpack.c.h.b16 %v2325
        %v2349 = vunpack.c.l.b16 %v2326
        %v2350 = vunpack.c.h.b16 %v2326
        %v2351 = vpack.c.b16 %v2337, %v2335
        %v2352 = vpack.c.b16 %v2338, %v2336
        %v2353 = vpack.c.b16 %v2341, %v2339
        %v2354 = vpack.c.b16 %v2342, %v2340
        %v2355 = vpack.c.b16 %v2345, %v2343
        %v2356 = vpack.c.b16 %v2346, %v2344
        %v2357 = vpack.c.b16 %v2349, %v2347
        %v2358 = vpack.c.b16 %v2350, %v2348
        %2367 = vmatprep.subr.bf16.mxu0 %v2128
        %2368 = vmatpush1.bf16.msra.mxu0 %v2127
        %2369 = vmatprep.subr.bf16.mxu0 %v2132
        %2370 = vmatpush1.bf16.msra.mxu0 %v2131
        %2371 = vmatprep.subr.bf16.mxu0 %v2136
        %2372 = vmatpush1.bf16.msra.mxu0 %v2135
        %2373 = vmatprep.subr.bf16.mxu0 %v2140
        %2374 = vmatpush1.bf16.msra.mxu0 %v2139
        %2375 = vmatprep.subr.bf16.mxu0 %v2144
        %2376 = vmatpush1.bf16.msra.mxu0 %v2143
        %2377 = vmatprep.subr.bf16.mxu0 %v2148
        %2378 = vmatpush1.bf16.msra.mxu0 %v2147
        %2379 = vmatprep.subr.bf16.mxu0 %v2152
        %2380 = vmatpush1.bf16.msra.mxu0 %v2151
        %2381 = vmatprep.subr.bf16.mxu0 %v2156
        %2382 = vmatpush1.bf16.msra.mxu0 %v2155
        %2383 = vmatprep.subr.bf16.mxu0 %v2160
        %2384 = vmatpush1.bf16.msra.mxu0 %v2159
        %2385 = vmatprep.subr.bf16.mxu0 %v2164
        %2386 = vmatpush1.bf16.msra.mxu0 %v2163
        %2387 = vmatprep.subr.bf16.mxu0 %v2168
        %2388 = vmatpush1.bf16.msra.mxu0 %v2167
        %2389 = vmatprep.subr.bf16.mxu0 %v2172
        %2390 = vmatpush1.bf16.msra.mxu0 %v2171
        %2391 = vmatprep.subr.bf16.mxu0 %v2176
        %2392 = vmatpush1.bf16.msra.mxu0 %v2175
        %2393 = vmatprep.subr.bf16.mxu0 %v2180
        %2394 = vmatpush1.bf16.msra.mxu0 %v2179
        %2395 = vmatprep.subr.bf16.mxu0 %v2184
        %2396 = vmatpush1.bf16.msra.mxu0 %v2183
        %2397 = vmatprep.subr.bf16.mxu0 %v2188
        %2398 = vmatpush1.bf16.msra.mxu0 %v2187
        %2399 = vmatprep.mubr.bf16.mxu0 %v2352
        %2400 = vmatmul.mubr.bf16.gmra.mrb[0].mxu0 %v2351
        %v2401 = vpop.f32.mrb[0].mxu0
        %v2402 = vadd.f32 0.0, %v2401
        %v2403 = vpop.f32.mrb[0].mxu0
        %v2404 = vadd.f32 0.0, %v2403
        %v2405 = vpop.f32.mrb[0].mxu0
        %v2406 = vadd.f32 0.0, %v2405
        %v2407 = vpop.f32.mrb[0].mxu0
        %v2408 = vadd.f32 0.0, %v2407
        %2409 = vmatprep.mubr.bf16.mxu0 %v2354
        %2410 = vmatmul.mubr.bf16.gmra.mrb[0].mxu0 %v2353
        %v2411 = vpop.f32.mrb[0].mxu0
        %v2412 = vadd.f32 0.0, %v2411
        %v2413 = vpop.f32.mrb[0].mxu0
        %v2414 = vadd.f32 0.0, %v2413
        %v2415 = vpop.f32.mrb[0].mxu0
        %v2416 = vadd.f32 0.0, %v2415
        %v2417 = vpop.f32.mrb[0].mxu0
        %v2418 = vadd.f32 0.0, %v2417
        %2419 = vmatprep.mubr.bf16.mxu0 %v2356
        %2420 = vmatmul.mubr.bf16.gmra.mrb[0].mxu0 %v2355
        %v2421 = vpop.f32.mrb[0].mxu0
        %v2422 = vadd.f32 0.0, %v2421
        %v2423 = vpop.f32.mrb[0].mxu0
        %v2424 = vadd.f32 0.0, %v2423
        %v2425 = vpop.f32.mrb[0].mxu0
        %v2426 = vadd.f32 0.0, %v2425
        %v2427 = vpop.f32.mrb[0].mxu0
        %v2428 = vadd.f32 0.0, %v2427
        %2429 = vmatprep.mubr.bf16.mxu0 %v2358
        %2430 = vmatmul.mubr.bf16.gmra.mrb[0].mxu0 %v2357
        %v2431 = vpop.f32.mrb[0].mxu0
        %v2432 = vadd.f32 0.0, %v2431
        %v2433 = vpop.f32.mrb[0].mxu0
        %v2434 = vadd.f32 0.0, %v2433
        %v2435 = vpop.f32.mrb[0].mxu0
        %v2436 = vadd.f32 0.0, %v2435
        %v2437 = vpop.f32.mrb[0].mxu0
        %v2438 = vadd.f32 0.0, %v2437
        %2439 = vdwg.mxu0
        %2440 = vmatprep.subr.bf16.mxu0 %v2130
        %2441 = vmatpush1.bf16.msra.mxu0 %v2129
        %2442 = vmatprep.subr.bf16.mxu0 %v2134
        %2443 = vmatpush1.bf16.msra.mxu0 %v2133
        %2444 = vmatprep.subr.bf16.mxu0 %v2138
        %2445 = vmatpush1.bf16.msra.mxu0 %v2137
        %2446 = vmatprep.subr.bf16.mxu0 %v2142
        %2447 = vmatpush1.bf16.msra.mxu0 %v2141
        %2448 = vmatprep.subr.bf16.mxu0 %v2146
        %2449 = vmatpush1.bf16.msra.mxu0 %v2145
        %2450 = vmatprep.subr.bf16.mxu0 %v2150
        %2451 = vmatpush1.bf16.msra.mxu0 %v2149
        %2452 = vmatprep.subr.bf16.mxu0 %v2154
        %2453 = vmatpush1.bf16.msra.mxu0 %v2153
        %2454 = vmatprep.subr.bf16.mxu0 %v2158
        %2455 = vmatpush1.bf16.msra.mxu0 %v2157
        %2456 = vmatprep.subr.bf16.mxu0 %v2162
        %2457 = vmatpush1.bf16.msra.mxu0 %v2161
        %2458 = vmatprep.subr.bf16.mxu0 %v2166
        %2459 = vmatpush1.bf16.msra.mxu0 %v2165
        %2460 = vmatprep.subr.bf16.mxu0 %v2170
        %2461 = vmatpush1.bf16.msra.mxu0 %v2169
        %2462 = vmatprep.subr.bf16.mxu0 %v2174
        %2463 = vmatpush1.bf16.msra.mxu0 %v2173
        %2464 = vmatprep.subr.bf16.mxu0 %v2178
        %2465 = vmatpush1.bf16.msra.mxu0 %v2177
        %2466 = vmatprep.subr.bf16.mxu0 %v2182
        %2467 = vmatpush1.bf16.msra.mxu0 %v2181
        %2468 = vmatprep.subr.bf16.mxu0 %v2186
        %2469 = vmatpush1.bf16.msra.mxu0 %v2185
        %2470 = vmatprep.subr.bf16.mxu0 %v2190
        %2471 = vmatpush1.bf16.msra.mxu0 %v2189
        %2472 = vmatprep.mubr.bf16.mxu0 %v2352
        %2473 = vmatmul.mubr.bf16.gmra.mrb[0].mxu0 %v2351
        %v2474 = vpop.f32.mrb[0].mxu0
        %v2475 = vadd.f32 0.0, %v2474
        %v2476 = vpop.f32.mrb[0].mxu0
        %v2477 = vadd.f32 0.0, %v2476
        %v2478 = vpop.f32.mrb[0].mxu0
        %v2479 = vadd.f32 0.0, %v2478
        %v2480 = vpop.f32.mrb[0].mxu0
        %v2481 = vadd.f32 0.0, %v2480
        %2482 = vmatprep.mubr.bf16.mxu0 %v2354
        %2483 = vmatmul.mubr.bf16.gmra.mrb[0].mxu0 %v2353
        %v2484 = vpop.f32.mrb[0].mxu0
        %v2485 = vadd.f32 0.0, %v2484
        %v2486 = vpop.f32.mrb[0].mxu0
        %v2487 = vadd.f32 0.0, %v2486
        %v2488 = vpop.f32.mrb[0].mxu0
        %v2489 = vadd.f32 0.0, %v2488
        %v2490 = vpop.f32.mrb[0].mxu0
        %v2491 = vadd.f32 0.0, %v2490
        %2492 = vmatprep.mubr.bf16.mxu0 %v2356
        %2493 = vmatmul.mubr.bf16.gmra.mrb[0].mxu0 %v2355
        %v2494 = vpop.f32.mrb[0].mxu0
        %v2495 = vadd.f32 0.0, %v2494
        %v2496 = vpop.f32.mrb[0].mxu0
        %v2497 = vadd.f32 0.0, %v2496
        %v2498 = vpop.f32.mrb[0].mxu0
        %v2499 = vadd.f32 0.0, %v2498
        %v2500 = vpop.f32.mrb[0].mxu0
        %v2501 = vadd.f32 0.0, %v2500
        %2502 = vmatprep.mubr.bf16.mxu0 %v2358
        %2503 = vmatmul.mubr.bf16.gmra.mrb[0].mxu0 %v2357
        %v2504 = vpop.f32.mrb[0].mxu0
        %v2505 = vadd.f32 0.0, %v2504
        %v2506 = vpop.f32.mrb[0].mxu0
        %v2507 = vadd.f32 0.0, %v2506
        %v2508 = vpop.f32.mrb[0].mxu0
        %v2509 = vadd.f32 0.0, %v2508
        %v2510 = vpop.f32.mrb[0].mxu0
        %v2511 = vadd.f32 0.0, %v2510
        %2512 = vdwg.mxu0
        %v2513 = vld [vmem:[%s1321 + $0x8] sm:$0xff]
        %v2514 = vld [vmem:[%s1321 + $0x28] sm:$0xff]
        %v2515 = vld [vmem:[%s1321 + $0x48] sm:$0xff]
        %v2516 = vld [vmem:[%s1321 + $0x68] sm:$0xff]
        %v2517 = vld [vmem:[%s1321 + $0x88] sm:$0xff]
        %v2518 = vld [vmem:[%s1321 + $0xa8] sm:$0xff]
        %v2519 = vld [vmem:[%s1321 + $0xc8] sm:$0xff]
        %v2520 = vld [vmem:[%s1321 + $0xe8] sm:$0xff]
        %v2529 = vunpack.c.l.b16 %v2513
        %v2530 = vunpack.c.h.b16 %v2513
        %v2531 = vunpack.c.l.b16 %v2514
        %v2532 = vunpack.c.h.b16 %v2514
        %v2533 = vunpack.c.l.b16 %v2515
        %v2534 = vunpack.c.h.b16 %v2515
        %v2535 = vunpack.c.l.b16 %v2516
        %v2536 = vunpack.c.h.b16 %v2516
        %v2537 = vunpack.c.l.b16 %v2517
        %v2538 = vunpack.c.h.b16 %v2517
        %v2539 = vunpack.c.l.b16 %v2518
        %v2540 = vunpack.c.h.b16 %v2518
        %v2541 = vunpack.c.l.b16 %v2519
        %v2542 = vunpack.c.h.b16 %v2519
        %v2543 = vunpack.c.l.b16 %v2520
        %v2544 = vunpack.c.h.b16 %v2520
        %v2545 = vpack.c.b16 %v2531, %v2529
        %v2546 = vpack.c.b16 %v2532, %v2530
        %v2547 = vpack.c.b16 %v2535, %v2533
        %v2548 = vpack.c.b16 %v2536, %v2534
        %v2549 = vpack.c.b16 %v2539, %v2537
        %v2550 = vpack.c.b16 %v2540, %v2538
        %v2551 = vpack.c.b16 %v2543, %v2541
        %v2552 = vpack.c.b16 %v2544, %v2542
        %2561 = vmatprep.subr.bf16.mxu0 %v2192
        %2562 = vmatpush1.bf16.msra.mxu0 %v2191
        %2563 = vmatprep.subr.bf16.mxu0 %v2196
        %2564 = vmatpush1.bf16.msra.mxu0 %v2195
        %2565 = vmatprep.subr.bf16.mxu0 %v2200
        %2566 = vmatpush1.bf16.msra.mxu0 %v2199
        %2567 = vmatprep.subr.bf16.mxu0 %v2204
        %2568 = vmatpush1.bf16.msra.mxu0 %v2203
        %2569 = vmatprep.subr.bf16.mxu0 %v2208
        %2570 = vmatpush1.bf16.msra.mxu0 %v2207
        %2571 = vmatprep.subr.bf16.mxu0 %v2212
        %2572 = vmatpush1.bf16.msra.mxu0 %v2211
        %2573 = vmatprep.subr.bf16.mxu0 %v2216
        %2574 = vmatpush1.bf16.msra.mxu0 %v2215
        %2575 = vmatprep.subr.bf16.mxu0 %v2220
        %2576 = vmatpush1.bf16.msra.mxu0 %v2219
        %2577 = vmatprep.subr.bf16.mxu0 %v2224
        %2578 = vmatpush1.bf16.msra.mxu0 %v2223
        %2579 = vmatprep.subr.bf16.mxu0 %v2228
        %2580 = vmatpush1.bf16.msra.mxu0 %v2227
        %2581 = vmatprep.subr.bf16.mxu0 %v2232
        %2582 = vmatpush1.bf16.msra.mxu0 %v2231
        %2583 = vmatprep.subr.bf16.mxu0 %v2236
        %2584 = vmatpush1.bf16.msra.mxu0 %v2235
        %2585 = vmatprep.subr.bf16.mxu0 %v2240
        %2586 = vmatpush1.bf16.msra.mxu0 %v2239
        %2587 = vmatprep.subr.bf16.mxu0 %v2244
        %2588 = vmatpush1.bf16.msra.mxu0 %v2243
        %2589 = vmatprep.subr.bf16.mxu0 %v2248
        %2590 = vmatpush1.bf16.msra.mxu0 %v2247
        %2591 = vmatprep.subr.bf16.mxu0 %v2252
        %2592 = vmatpush1.bf16.msra.mxu0 %v2251
        %2593 = vmatprep.mubr.bf16.mxu0 %v2546
        %2594 = vmatmul.mubr.bf16.gmra.mrb[0].mxu0 %v2545
        %v2595 = vpop.f32.mrb[0].mxu0
        %v2596 = vadd.f32 0.0, %v2595
        %v2597 = vpop.f32.mrb[0].mxu0
        %v2598 = vadd.f32 0.0, %v2597
        %v2599 = vpop.f32.mrb[0].mxu0
        %v2600 = vadd.f32 0.0, %v2599
        %v2601 = vpop.f32.mrb[0].mxu0
        %v2602 = vadd.f32 0.0, %v2601
        %2603 = vmatprep.mubr.bf16.mxu0 %v2548
        %2604 = vmatmul.mubr.bf16.gmra.mrb[0].mxu0 %v2547
        %v2605 = vpop.f32.mrb[0].mxu0
        %v2606 = vadd.f32 0.0, %v2605
        %v2607 = vpop.f32.mrb[0].mxu0
        %v2608 = vadd.f32 0.0, %v2607
        %v2609 = vpop.f32.mrb[0].mxu0
        %v2610 = vadd.f32 0.0, %v2609
        %v2611 = vpop.f32.mrb[0].mxu0
        %v2612 = vadd.f32 0.0, %v2611
        %2613 = vmatprep.mubr.bf16.mxu0 %v2550
        %2614 = vmatmul.mubr.bf16.gmra.mrb[0].mxu0 %v2549
        %v2615 = vpop.f32.mrb[0].mxu0
        %v2616 = vadd.f32 0.0, %v2615
        %v2617 = vpop.f32.mrb[0].mxu0
        %v2618 = vadd.f32 0.0, %v2617
        %v2619 = vpop.f32.mrb[0].mxu0
        %v2620 = vadd.f32 0.0, %v2619
        %v2621 = vpop.f32.mrb[0].mxu0
        %v2622 = vadd.f32 0.0, %v2621
        %2623 = vmatprep.mubr.bf16.mxu0 %v2552
        %2624 = vmatmul.mubr.bf16.gmra.mrb[0].mxu0 %v2551
        %v2625 = vpop.f32.mrb[0].mxu0
        %v2626 = vadd.f32 0.0, %v2625
        %v2627 = vpop.f32.mrb[0].mxu0
        %v2628 = vadd.f32 0.0, %v2627
        %v2629 = vpop.f32.mrb[0].mxu0
        %v2630 = vadd.f32 0.0, %v2629
        %v2631 = vpop.f32.mrb[0].mxu0
        %v2632 = vadd.f32 0.0, %v2631
        %2633 = vdwg.mxu0
        %2634 = vmatprep.subr.bf16.mxu0 %v2194
        %2635 = vmatpush1.bf16.msra.mxu0 %v2193
        %2636 = vmatprep.subr.bf16.mxu0 %v2198
        %2637 = vmatpush1.bf16.msra.mxu0 %v2197
        %2638 = vmatprep.subr.bf16.mxu0 %v2202
        %2639 = vmatpush1.bf16.msra.mxu0 %v2201
        %2640 = vmatprep.subr.bf16.mxu0 %v2206
        %2641 = vmatpush1.bf16.msra.mxu0 %v2205
        %2642 = vmatprep.subr.bf16.mxu0 %v2210
        %2643 = vmatpush1.bf16.msra.mxu0 %v2209
        %2644 = vmatprep.subr.bf16.mxu0 %v2214
        %2645 = vmatpush1.bf16.msra.mxu0 %v2213
        %2646 = vmatprep.subr.bf16.mxu0 %v2218
        %2647 = vmatpush1.bf16.msra.mxu0 %v2217
        %2648 = vmatprep.subr.bf16.mxu0 %v2222
        %2649 = vmatpush1.bf16.msra.mxu0 %v2221
        %2650 = vmatprep.subr.bf16.mxu0 %v2226
        %2651 = vmatpush1.bf16.msra.mxu0 %v2225
        %2652 = vmatprep.subr.bf16.mxu0 %v2230
        %2653 = vmatpush1.bf16.msra.mxu0 %v2229
        %2654 = vmatprep.subr.bf16.mxu0 %v2234
        %2655 = vmatpush1.bf16.msra.mxu0 %v2233
        %2656 = vmatprep.subr.bf16.mxu0 %v2238
        %2657 = vmatpush1.bf16.msra.mxu0 %v2237
        %2658 = vmatprep.subr.bf16.mxu0 %v2242
        %2659 = vmatpush1.bf16.msra.mxu0 %v2241
        %2660 = vmatprep.subr.bf16.mxu0 %v2246
        %2661 = vmatpush1.bf16.msra.mxu0 %v2245
        %2662 = vmatprep.subr.bf16.mxu0 %v2250
        %2663 = vmatpush1.bf16.msra.mxu0 %v2249
        %2664 = vmatprep.subr.bf16.mxu0 %v2254
        %2665 = vmatpush1.bf16.msra.mxu0 %v2253
        %2666 = vmatprep.mubr.bf16.mxu0 %v2546
        %2667 = vmatmul.mubr.bf16.gmra.mrb[0].mxu0 %v2545
        %v2668 = vpop.f32.mrb[0].mxu0
        %v2669 = vadd.f32 0.0, %v2668
        %v2670 = vpop.f32.mrb[0].mxu0
        %v2671 = vadd.f32 0.0, %v2670
        %v2672 = vpop.f32.mrb[0].mxu0
        %v2673 = vadd.f32 0.0, %v2672
        %v2674 = vpop.f32.mrb[0].mxu0
        %v2675 = vadd.f32 0.0, %v2674
        %2676 = vmatprep.mubr.bf16.mxu0 %v2548
        %2677 = vmatmul.mubr.bf16.gmra.mrb[0].mxu0 %v2547
        %v2678 = vpop.f32.mrb[0].mxu0
        %v2679 = vadd.f32 0.0, %v2678
        %v2680 = vpop.f32.mrb[0].mxu0
        %v2681 = vadd.f32 0.0, %v2680
        %v2682 = vpop.f32.mrb[0].mxu0
        %v2683 = vadd.f32 0.0, %v2682
        %v2684 = vpop.f32.mrb[0].mxu0
        %v2685 = vadd.f32 0.0, %v2684
        %2686 = vmatprep.mubr.bf16.mxu0 %v2550
        %2687 = vmatmul.mubr.bf16.gmra.mrb[0].mxu0 %v2549
        %v2688 = vpop.f32.mrb[0].mxu0
        %v2689 = vadd.f32 0.0, %v2688
        %v2690 = vpop.f32.mrb[0].mxu0
        %v2691 = vadd.f32 0.0, %v2690
        %v2692 = vpop.f32.mrb[0].mxu0
        %v2693 = vadd.f32 0.0, %v2692
        %v2694 = vpop.f32.mrb[0].mxu0
        %v2695 = vadd.f32 0.0, %v2694
        %2696 = vmatprep.mubr.bf16.mxu0 %v2552
        %2697 = vmatmul.mubr.bf16.gmra.mrb[0].mxu0 %v2551
        %v2698 = vpop.f32.mrb[0].mxu0
        %v2699 = vadd.f32 0.0, %v2698
        %v2700 = vpop.f32.mrb[0].mxu0
        %v2701 = vadd.f32 0.0, %v2700
        %v2702 = vpop.f32.mrb[0].mxu0
        %v2703 = vadd.f32 0.0, %v2702
        %v2704 = vpop.f32.mrb[0].mxu0
        %v2705 = vadd.f32 0.0, %v2704
        %2706 = vdwg.mxu0
        %v2707 = vld [vmem:[%s1516 + $0x8] sm:$0xff]
        %v2708 = vld [vmem:[%s1516 + $0x28] sm:$0xff]
        %v2709 = vld [vmem:[%s1516 + $0x48] sm:$0xff]
        %v2710 = vld [vmem:[%s1516 + $0x68] sm:$0xff]
        %v2711 = vld [vmem:[%s1516 + $0x88] sm:$0xff]
        %v2712 = vld [vmem:[%s1516 + $0xa8] sm:$0xff]
        %v2713 = vld [vmem:[%s1516 + $0xc8] sm:$0xff]
        %v2714 = vld [vmem:[%s1516 + $0xe8] sm:$0xff]
        %v2723 = vunpack.c.l.b16 %v2707
        %v2724 = vunpack.c.h.b16 %v2707
        %v2725 = vunpack.c.l.b16 %v2708
        %v2726 = vunpack.c.h.b16 %v2708
        %v2727 = vunpack.c.l.b16 %v2709
        %v2728 = vunpack.c.h.b16 %v2709
        %v2729 = vunpack.c.l.b16 %v2710
        %v2730 = vunpack.c.h.b16 %v2710
        %v2731 = vunpack.c.l.b16 %v2711
        %v2732 = vunpack.c.h.b16 %v2711
        %v2733 = vunpack.c.l.b16 %v2712
        %v2734 = vunpack.c.h.b16 %v2712
        %v2735 = vunpack.c.l.b16 %v2713
        %v2736 = vunpack.c.h.b16 %v2713
        %v2737 = vunpack.c.l.b16 %v2714
        %v2738 = vunpack.c.h.b16 %v2714
        %v2739 = vpack.c.b16 %v2725, %v2723
        %v2740 = vpack.c.b16 %v2726, %v2724
        %v2741 = vpack.c.b16 %v2729, %v2727
        %v2742 = vpack.c.b16 %v2730, %v2728
        %v2743 = vpack.c.b16 %v2733, %v2731
        %v2744 = vpack.c.b16 %v2734, %v2732
        %v2745 = vpack.c.b16 %v2737, %v2735
        %v2746 = vpack.c.b16 %v2738, %v2736
        %2755 = vmatprep.subr.bf16.mxu0 %v2256
        %2756 = vmatpush1.bf16.msra.mxu0 %v2255
        %2757 = vmatprep.subr.bf16.mxu0 %v2260
        %2758 = vmatpush1.bf16.msra.mxu0 %v2259
        %2759 = vmatprep.subr.bf16.mxu0 %v2264
        %2760 = vmatpush1.bf16.msra.mxu0 %v2263
        %2761 = vmatprep.subr.bf16.mxu0 %v2268
        %2762 = vmatpush1.bf16.msra.mxu0 %v2267
        %2763 = vmatprep.subr.bf16.mxu0 %v2272
        %2764 = vmatpush1.bf16.msra.mxu0 %v2271
        %2765 = vmatprep.subr.bf16.mxu0 %v2276
        %2766 = vmatpush1.bf16.msra.mxu0 %v2275
        %2767 = vmatprep.subr.bf16.mxu0 %v2280
        %2768 = vmatpush1.bf16.msra.mxu0 %v2279
        %2769 = vmatprep.subr.bf16.mxu0 %v2284
        %2770 = vmatpush1.bf16.msra.mxu0 %v2283
        %2771 = vmatprep.subr.bf16.mxu0 %v2288
        %2772 = vmatpush1.bf16.msra.mxu0 %v2287
        %2773 = vmatprep.subr.bf16.mxu0 %v2292
        %2774 = vmatpush1.bf16.msra.mxu0 %v2291
        %2775 = vmatprep.subr.bf16.mxu0 %v2296
        %2776 = vmatpush1.bf16.msra.mxu0 %v2295
        %2777 = vmatprep.subr.bf16.mxu0 %v2300
        %2778 = vmatpush1.bf16.msra.mxu0 %v2299
        %2779 = vmatprep.subr.bf16.mxu0 %v2304
        %2780 = vmatpush1.bf16.msra.mxu0 %v2303
        %2781 = vmatprep.subr.bf16.mxu0 %v2308
        %2782 = vmatpush1.bf16.msra.mxu0 %v2307
        %2783 = vmatprep.subr.bf16.mxu0 %v2312
        %2784 = vmatpush1.bf16.msra.mxu0 %v2311
        %2785 = vmatprep.subr.bf16.mxu0 %v2316
        %2786 = vmatpush1.bf16.msra.mxu0 %v2315
        %2787 = vmatprep.mubr.bf16.mxu0 %v2740
        %2788 = vmatmul.mubr.bf16.gmra.mrb[0].mxu0 %v2739
        %v2789 = vpop.f32.mrb[0].mxu0
        %v2790 = vadd.f32 0.0, %v2789
        %v2791 = vpop.f32.mrb[0].mxu0
        %v2792 = vadd.f32 0.0, %v2791
        %v2793 = vpop.f32.mrb[0].mxu0
        %v2794 = vadd.f32 0.0, %v2793
        %v2795 = vpop.f32.mrb[0].mxu0
        %v2796 = vadd.f32 0.0, %v2795
        %2797 = vmatprep.mubr.bf16.mxu0 %v2742
        %2798 = vmatmul.mubr.bf16.gmra.mrb[0].mxu0 %v2741
        %v2799 = vpop.f32.mrb[0].mxu0
        %v2800 = vadd.f32 0.0, %v2799
        %v2801 = vpop.f32.mrb[0].mxu0
        %v2802 = vadd.f32 0.0, %v2801
        %v2803 = vpop.f32.mrb[0].mxu0
        %v2804 = vadd.f32 0.0, %v2803
        %v2805 = vpop.f32.mrb[0].mxu0
        %v2806 = vadd.f32 0.0, %v2805
        %2807 = vmatprep.mubr.bf16.mxu0 %v2744
        %2808 = vmatmul.mubr.bf16.gmra.mrb[0].mxu0 %v2743
        %v2809 = vpop.f32.mrb[0].mxu0
        %v2810 = vadd.f32 0.0, %v2809
        %v2811 = vpop.f32.mrb[0].mxu0
        %v2812 = vadd.f32 0.0, %v2811
        %v2813 = vpop.f32.mrb[0].mxu0
        %v2814 = vadd.f32 0.0, %v2813
        %v2815 = vpop.f32.mrb[0].mxu0
        %v2816 = vadd.f32 0.0, %v2815
        %2817 = vmatprep.mubr.bf16.mxu0 %v2746
        %2818 = vmatmul.mubr.bf16.gmra.mrb[0].mxu0 %v2745
        %v2819 = vpop.f32.mrb[0].mxu0
        %v2820 = vadd.f32 0.0, %v2819
        %v2821 = vpop.f32.mrb[0].mxu0
        %v2822 = vadd.f32 0.0, %v2821
        %v2823 = vpop.f32.mrb[0].mxu0
        %v2824 = vadd.f32 0.0, %v2823
        %v2825 = vpop.f32.mrb[0].mxu0
        %v2826 = vadd.f32 0.0, %v2825
        %2827 = vdwg.mxu0
        %2828 = vmatprep.subr.bf16.mxu0 %v2258
        %2829 = vmatpush1.bf16.msra.mxu0 %v2257
        %2830 = vmatprep.subr.bf16.mxu0 %v2262
        %2831 = vmatpush1.bf16.msra.mxu0 %v2261
        %2832 = vmatprep.subr.bf16.mxu0 %v2266
        %2833 = vmatpush1.bf16.msra.mxu0 %v2265
        %2834 = vmatprep.subr.bf16.mxu0 %v2270
        %2835 = vmatpush1.bf16.msra.mxu0 %v2269
        %2836 = vmatprep.subr.bf16.mxu0 %v2274
        %2837 = vmatpush1.bf16.msra.mxu0 %v2273
        %2838 = vmatprep.subr.bf16.mxu0 %v2278
        %2839 = vmatpush1.bf16.msra.mxu0 %v2277
        %2840 = vmatprep.subr.bf16.mxu0 %v2282
        %2841 = vmatpush1.bf16.msra.mxu0 %v2281
        %2842 = vmatprep.subr.bf16.mxu0 %v2286
        %2843 = vmatpush1.bf16.msra.mxu0 %v2285
        %2844 = vmatprep.subr.bf16.mxu0 %v2290
        %2845 = vmatpush1.bf16.msra.mxu0 %v2289
        %2846 = vmatprep.subr.bf16.mxu0 %v2294
        %2847 = vmatpush1.bf16.msra.mxu0 %v2293
        %2848 = vmatprep.subr.bf16.mxu0 %v2298
        %2849 = vmatpush1.bf16.msra.mxu0 %v2297
        %2850 = vmatprep.subr.bf16.mxu0 %v2302
        %2851 = vmatpush1.bf16.msra.mxu0 %v2301
        %2852 = vmatprep.subr.bf16.mxu0 %v2306
        %2853 = vmatpush1.bf16.msra.mxu0 %v2305
        %2854 = vmatprep.subr.bf16.mxu0 %v2310
        %2855 = vmatpush1.bf16.msra.mxu0 %v2309
        %2856 = vmatprep.subr.bf16.mxu0 %v2314
        %2857 = vmatpush1.bf16.msra.mxu0 %v2313
        %2858 = vmatprep.subr.bf16.mxu0 %v2318
        %2859 = vmatpush1.bf16.msra.mxu0 %v2317
        %2860 = vmatprep.mubr.bf16.mxu0 %v2740
        %2861 = vmatmul.mubr.bf16.gmra.mrb[0].mxu0 %v2739
        %v2862 = vpop.f32.mrb[0].mxu0
        %v2863 = vadd.f32 0.0, %v2862
        %v2864 = vpop.f32.mrb[0].mxu0
        %v2865 = vadd.f32 0.0, %v2864
        %v2866 = vpop.f32.mrb[0].mxu0
        %v2867 = vadd.f32 0.0, %v2866
        %v2868 = vpop.f32.mrb[0].mxu0
        %v2869 = vadd.f32 0.0, %v2868
        %2870 = vmatprep.mubr.bf16.mxu0 %v2742
        %2871 = vmatmul.mubr.bf16.gmra.mrb[0].mxu0 %v2741
        %v2872 = vpop.f32.mrb[0].mxu0
        %v2873 = vadd.f32 0.0, %v2872
        %v2874 = vpop.f32.mrb[0].mxu0
        %v2875 = vadd.f32 0.0, %v2874
        %v2876 = vpop.f32.mrb[0].mxu0
        %v2877 = vadd.f32 0.0, %v2876
        %v2878 = vpop.f32.mrb[0].mxu0
        %v2879 = vadd.f32 0.0, %v2878
        %2880 = vmatprep.mubr.bf16.mxu0 %v2744
        %2881 = vmatmul.mubr.bf16.gmra.mrb[0].mxu0 %v2743
        %v2882 = vpop.f32.mrb[0].mxu0
        %v2883 = vadd.f32 0.0, %v2882
        %v2884 = vpop.f32.mrb[0].mxu0
        %v2885 = vadd.f32 0.0, %v2884
        %v2886 = vpop.f32.mrb[0].mxu0
        %v2887 = vadd.f32 0.0, %v2886
        %v2888 = vpop.f32.mrb[0].mxu0
        %v2889 = vadd.f32 0.0, %v2888
        %2890 = vmatprep.mubr.bf16.mxu0 %v2746
        %2891 = vmatmul.mubr.bf16.gmra.mrb[0].mxu0 %v2745
        %v2892 = vpop.f32.mrb[0].mxu0
        %v2893 = vadd.f32 0.0, %v2892
        %v2894 = vpop.f32.mrb[0].mxu0
        %v2895 = vadd.f32 0.0, %v2894
        %v2896 = vpop.f32.mrb[0].mxu0
        %v2897 = vadd.f32 0.0, %v2896
        %v2898 = vpop.f32.mrb[0].mxu0
        %v2899 = vadd.f32 0.0, %v2898
        %2900 = vdwg.mxu0
        %v2901 = vld [vmem:[#allocation2] sm:$0xff]
        %v2902 = vld [vmem:[#allocation2 + $0x8] sm:$0xff]
        %v2903 = vld [vmem:[#allocation2 + $0x10] sm:$0xff]
        %v2904 = vld [vmem:[#allocation2 + $0x18] sm:$0xff]
        %v2905 = vld [vmem:[#allocation2 + $0x20] sm:$0xff]
        %v2906 = vld [vmem:[#allocation2 + $0x28] sm:$0xff]
        %v2907 = vld [vmem:[#allocation2 + $0x30] sm:$0xff]
        %v2908 = vld [vmem:[#allocation2 + $0x38] sm:$0xff]
        %v2909 = vld [vmem:[#allocation2 + $0x40] sm:$0xff]
        %v2910 = vld [vmem:[#allocation2 + $0x48] sm:$0xff]
        %v2911 = vld [vmem:[#allocation2 + $0x50] sm:$0xff]
        %v2912 = vld [vmem:[#allocation2 + $0x58] sm:$0xff]
        %v2913 = vld [vmem:[#allocation2 + $0x60] sm:$0xff]
        %v2914 = vld [vmem:[#allocation2 + $0x68] sm:$0xff]
        %v2915 = vld [vmem:[#allocation2 + $0x70] sm:$0xff]
        %v2916 = vld [vmem:[#allocation2 + $0x78] sm:$0xff]
        %v2917 = vld [vmem:[#allocation2 + $0x80] sm:$0xff]
        %v2918 = vld [vmem:[#allocation2 + $0x88] sm:$0xff]
        %v2919 = vld [vmem:[#allocation2 + $0x90] sm:$0xff]
        %v2920 = vld [vmem:[#allocation2 + $0x98] sm:$0xff]
        %v2921 = vld [vmem:[#allocation2 + $0xa0] sm:$0xff]
        %v2922 = vld [vmem:[#allocation2 + $0xa8] sm:$0xff]
        %v2923 = vld [vmem:[#allocation2 + $0xb0] sm:$0xff]
        %v2924 = vld [vmem:[#allocation2 + $0xb8] sm:$0xff]
        %v2925 = vld [vmem:[#allocation2 + $0xc0] sm:$0xff]
        %v2926 = vld [vmem:[#allocation2 + $0xc8] sm:$0xff]
        %v2927 = vld [vmem:[#allocation2 + $0xd0] sm:$0xff]
        %v2928 = vld [vmem:[#allocation2 + $0xd8] sm:$0xff]
        %v2929 = vld [vmem:[#allocation2 + $0xe0] sm:$0xff]
        %v2930 = vld [vmem:[#allocation2 + $0xe8] sm:$0xff]
        %v2931 = vld [vmem:[#allocation2 + $0xf0] sm:$0xff]
        %v2932 = vld [vmem:[#allocation2 + $0xf8] sm:$0xff]
        %v2933 = vadd.f32 %v2901, %v2402
        %v2934 = vadd.f32 %v2902, %v2404
        %v2935 = vadd.f32 %v2903, %v2475
        %v2936 = vadd.f32 %v2904, %v2477
        %v2937 = vadd.f32 %v2905, %v2406
        %v2938 = vadd.f32 %v2906, %v2408
        %v2939 = vadd.f32 %v2907, %v2479
        %v2940 = vadd.f32 %v2908, %v2481
        %v2941 = vadd.f32 %v2909, %v2412
        %v2942 = vadd.f32 %v2910, %v2414
        %v2943 = vadd.f32 %v2911, %v2485
        %v2944 = vadd.f32 %v2912, %v2487
        %v2945 = vadd.f32 %v2913, %v2416
        %v2946 = vadd.f32 %v2914, %v2418
        %v2947 = vadd.f32 %v2915, %v2489
        %v2948 = vadd.f32 %v2916, %v2491
        %v2949 = vadd.f32 %v2917, %v2422
        %v2950 = vadd.f32 %v2918, %v2424
        %v2951 = vadd.f32 %v2919, %v2495
        %v2952 = vadd.f32 %v2920, %v2497
        %v2953 = vadd.f32 %v2921, %v2426
        %v2954 = vadd.f32 %v2922, %v2428
        %v2955 = vadd.f32 %v2923, %v2499
        %v2956 = vadd.f32 %v2924, %v2501
        %v2957 = vadd.f32 %v2925, %v2432
        %v2958 = vadd.f32 %v2926, %v2434
        %v2959 = vadd.f32 %v2927, %v2505
        %v2960 = vadd.f32 %v2928, %v2507
        %v2961 = vadd.f32 %v2929, %v2436
        %v2962 = vadd.f32 %v2930, %v2438
        %v2963 = vadd.f32 %v2931, %v2509
        %v2964 = vadd.f32 %v2932, %v2511
        %2965 = vst [vmem:[#allocation2] sm:$0xff] %v2933
        %2966 = vst [vmem:[#allocation2 + $0x8] sm:$0xff] %v2934
        %2967 = vst [vmem:[#allocation2 + $0x10] sm:$0xff] %v2935
        %2968 = vst [vmem:[#allocation2 + $0x18] sm:$0xff] %v2936
        %2969 = vst [vmem:[#allocation2 + $0x20] sm:$0xff] %v2937
        %2970 = vst [vmem:[#allocation2 + $0x28] sm:$0xff] %v2938
        %2971 = vst [vmem:[#allocation2 + $0x30] sm:$0xff] %v2939
        %2972 = vst [vmem:[#allocation2 + $0x38] sm:$0xff] %v2940
        %2973 = vst [vmem:[#allocation2 + $0x40] sm:$0xff] %v2941
        %2974 = vst [vmem:[#allocation2 + $0x48] sm:$0xff] %v2942
        %2975 = vst [vmem:[#allocation2 + $0x50] sm:$0xff] %v2943
        %2976 = vst [vmem:[#allocation2 + $0x58] sm:$0xff] %v2944
        %2977 = vst [vmem:[#allocation2 + $0x60] sm:$0xff] %v2945
        %2978 = vst [vmem:[#allocation2 + $0x68] sm:$0xff] %v2946
        %2979 = vst [vmem:[#allocation2 + $0x70] sm:$0xff] %v2947
        %2980 = vst [vmem:[#allocation2 + $0x78] sm:$0xff] %v2948
        %2981 = vst [vmem:[#allocation2 + $0x80] sm:$0xff] %v2949
        %2982 = vst [vmem:[#allocation2 + $0x88] sm:$0xff] %v2950
        %2983 = vst [vmem:[#allocation2 + $0x90] sm:$0xff] %v2951
        %2984 = vst [vmem:[#allocation2 + $0x98] sm:$0xff] %v2952
        %2985 = vst [vmem:[#allocation2 + $0xa0] sm:$0xff] %v2953
        %2986 = vst [vmem:[#allocation2 + $0xa8] sm:$0xff] %v2954
        %2987 = vst [vmem:[#allocation2 + $0xb0] sm:$0xff] %v2955
        %2988 = vst [vmem:[#allocation2 + $0xb8] sm:$0xff] %v2956
        %2989 = vst [vmem:[#allocation2 + $0xc0] sm:$0xff] %v2957
        %2990 = vst [vmem:[#allocation2 + $0xc8] sm:$0xff] %v2958
        %2991 = vst [vmem:[#allocation2 + $0xd0] sm:$0xff] %v2959
        %2992 = vst [vmem:[#allocation2 + $0xd8] sm:$0xff] %v2960
        %2993 = vst [vmem:[#allocation2 + $0xe0] sm:$0xff] %v2961
        %2994 = vst [vmem:[#allocation2 + $0xe8] sm:$0xff] %v2962
        %2995 = vst [vmem:[#allocation2 + $0xf0] sm:$0xff] %v2963
        %2996 = vst [vmem:[#allocation2 + $0xf8] sm:$0xff] %v2964
        %v2997 = vld [vmem:[#allocation3] sm:$0xff]
        %v2998 = vld [vmem:[#allocation3 + $0x8] sm:$0xff]
        %v2999 = vld [vmem:[#allocation3 + $0x10] sm:$0xff]
        %v3000 = vld [vmem:[#allocation3 + $0x18] sm:$0xff]
        %v3001 = vld [vmem:[#allocation3 + $0x20] sm:$0xff]
        %v3002 = vld [vmem:[#allocation3 + $0x28] sm:$0xff]
        %v3003 = vld [vmem:[#allocation3 + $0x30] sm:$0xff]
        %v3004 = vld [vmem:[#allocation3 + $0x38] sm:$0xff]
        %v3005 = vld [vmem:[#allocation3 + $0x40] sm:$0xff]
        %v3006 = vld [vmem:[#allocation3 + $0x48] sm:$0xff]
        %v3007 = vld [vmem:[#allocation3 + $0x50] sm:$0xff]
        %v3008 = vld [vmem:[#allocation3 + $0x58] sm:$0xff]
        %v3009 = vld [vmem:[#allocation3 + $0x60] sm:$0xff]
        %v3010 = vld [vmem:[#allocation3 + $0x68] sm:$0xff]
        %v3011 = vld [vmem:[#allocation3 + $0x70] sm:$0xff]
        %v3012 = vld [vmem:[#allocation3 + $0x78] sm:$0xff]
        %v3013 = vld [vmem:[#allocation3 + $0x80] sm:$0xff]
        %v3014 = vld [vmem:[#allocation3 + $0x88] sm:$0xff]
        %v3015 = vld [vmem:[#allocation3 + $0x90] sm:$0xff]
        %v3016 = vld [vmem:[#allocation3 + $0x98] sm:$0xff]
        %v3017 = vld [vmem:[#allocation3 + $0xa0] sm:$0xff]
        %v3018 = vld [vmem:[#allocation3 + $0xa8] sm:$0xff]
        %v3019 = vld [vmem:[#allocation3 + $0xb0] sm:$0xff]
        %v3020 = vld [vmem:[#allocation3 + $0xb8] sm:$0xff]
        %v3021 = vld [vmem:[#allocation3 + $0xc0] sm:$0xff]
        %v3022 = vld [vmem:[#allocation3 + $0xc8] sm:$0xff]
        %v3023 = vld [vmem:[#allocation3 + $0xd0] sm:$0xff]
        %v3024 = vld [vmem:[#allocation3 + $0xd8] sm:$0xff]
        %v3025 = vld [vmem:[#allocation3 + $0xe0] sm:$0xff]
        %v3026 = vld [vmem:[#allocation3 + $0xe8] sm:$0xff]
        %v3027 = vld [vmem:[#allocation3 + $0xf0] sm:$0xff]
        %v3028 = vld [vmem:[#allocation3 + $0xf8] sm:$0xff]
        %v3029 = vadd.f32 %v2997, %v2596
        %v3030 = vadd.f32 %v2998, %v2598
        %v3031 = vadd.f32 %v2999, %v2669
        %v3032 = vadd.f32 %v3000, %v2671
        %v3033 = vadd.f32 %v3001, %v2600
        %v3034 = vadd.f32 %v3002, %v2602
        %v3035 = vadd.f32 %v3003, %v2673
        %v3036 = vadd.f32 %v3004, %v2675
        %v3037 = vadd.f32 %v3005, %v2606
        %v3038 = vadd.f32 %v3006, %v2608
        %v3039 = vadd.f32 %v3007, %v2679
        %v3040 = vadd.f32 %v3008, %v2681
        %v3041 = vadd.f32 %v3009, %v2610
        %v3042 = vadd.f32 %v3010, %v2612
        %v3043 = vadd.f32 %v3011, %v2683
        %v3044 = vadd.f32 %v3012, %v2685
        %v3045 = vadd.f32 %v3013, %v2616
        %v3046 = vadd.f32 %v3014, %v2618
        %v3047 = vadd.f32 %v3015, %v2689
        %v3048 = vadd.f32 %v3016, %v2691
        %v3049 = vadd.f32 %v3017, %v2620
        %v3050 = vadd.f32 %v3018, %v2622
        %v3051 = vadd.f32 %v3019, %v2693
        %v3052 = vadd.f32 %v3020, %v2695
        %v3053 = vadd.f32 %v3021, %v2626
        %v3054 = vadd.f32 %v3022, %v2628
        %v3055 = vadd.f32 %v3023, %v2699
        %v3056 = vadd.f32 %v3024, %v2701
        %v3057 = vadd.f32 %v3025, %v2630
        %v3058 = vadd.f32 %v3026, %v2632
        %v3059 = vadd.f32 %v3027, %v2703
        %v3060 = vadd.f32 %v3028, %v2705
        %3061 = vst [vmem:[#allocation3] sm:$0xff] %v3029
        %3062 = vst [vmem:[#allocation3 + $0x8] sm:$0xff] %v3030
        %3063 = vst [vmem:[#allocation3 + $0x10] sm:$0xff] %v3031
        %3064 = vst [vmem:[#allocation3 + $0x18] sm:$0xff] %v3032
        %3065 = vst [vmem:[#allocation3 + $0x20] sm:$0xff] %v3033
        %3066 = vst [vmem:[#allocation3 + $0x28] sm:$0xff] %v3034
        %3067 = vst [vmem:[#allocation3 + $0x30] sm:$0xff] %v3035
        %3068 = vst [vmem:[#allocation3 + $0x38] sm:$0xff] %v3036
        %3069 = vst [vmem:[#allocation3 + $0x40] sm:$0xff] %v3037
        %3070 = vst [vmem:[#allocation3 + $0x48] sm:$0xff] %v3038
        %3071 = vst [vmem:[#allocation3 + $0x50] sm:$0xff] %v3039
        %3072 = vst [vmem:[#allocation3 + $0x58] sm:$0xff] %v3040
        %3073 = vst [vmem:[#allocation3 + $0x60] sm:$0xff] %v3041
        %3074 = vst [vmem:[#allocation3 + $0x68] sm:$0xff] %v3042
        %3075 = vst [vmem:[#allocation3 + $0x70] sm:$0xff] %v3043
        %3076 = vst [vmem:[#allocation3 + $0x78] sm:$0xff] %v3044
        %3077 = vst [vmem:[#allocation3 + $0x80] sm:$0xff] %v3045
        %3078 = vst [vmem:[#allocation3 + $0x88] sm:$0xff] %v3046
        %3079 = vst [vmem:[#allocation3 + $0x90] sm:$0xff] %v3047
        %3080 = vst [vmem:[#allocation3 + $0x98] sm:$0xff] %v3048
        %3081 = vst [vmem:[#allocation3 + $0xa0] sm:$0xff] %v3049
        %3082 = vst [vmem:[#allocation3 + $0xa8] sm:$0xff] %v3050
        %3083 = vst [vmem:[#allocation3 + $0xb0] sm:$0xff] %v3051
        %3084 = vst [vmem:[#allocation3 + $0xb8] sm:$0xff] %v3052
        %3085 = vst [vmem:[#allocation3 + $0xc0] sm:$0xff] %v3053
        %3086 = vst [vmem:[#allocation3 + $0xc8] sm:$0xff] %v3054
        %3087 = vst [vmem:[#allocation3 + $0xd0] sm:$0xff] %v3055
        %3088 = vst [vmem:[#allocation3 + $0xd8] sm:$0xff] %v3056
        %3089 = vst [vmem:[#allocation3 + $0xe0] sm:$0xff] %v3057
        %3090 = vst [vmem:[#allocation3 + $0xe8] sm:$0xff] %v3058
        %3091 = vst [vmem:[#allocation3 + $0xf0] sm:$0xff] %v3059
        %3092 = vst [vmem:[#allocation3 + $0xf8] sm:$0xff] %v3060
        %v3093 = vld [vmem:[#allocation4] sm:$0xff]
        %v3094 = vld [vmem:[#allocation4 + $0x8] sm:$0xff]
        %v3095 = vld [vmem:[#allocation4 + $0x10] sm:$0xff]
        %v3096 = vld [vmem:[#allocation4 + $0x18] sm:$0xff]
        %v3097 = vld [vmem:[#allocation4 + $0x20] sm:$0xff]
        %v3098 = vld [vmem:[#allocation4 + $0x28] sm:$0xff]
        %v3099 = vld [vmem:[#allocation4 + $0x30] sm:$0xff]
        %v3100 = vld [vmem:[#allocation4 + $0x38] sm:$0xff]
        %v3101 = vld [vmem:[#allocation4 + $0x40] sm:$0xff]
        %v3102 = vld [vmem:[#allocation4 + $0x48] sm:$0xff]
        %v3103 = vld [vmem:[#allocation4 + $0x50] sm:$0xff]
        %v3104 = vld [vmem:[#allocation4 + $0x58] sm:$0xff]
        %v3105 = vld [vmem:[#allocation4 + $0x60] sm:$0xff]
        %v3106 = vld [vmem:[#allocation4 + $0x68] sm:$0xff]
        %v3107 = vld [vmem:[#allocation4 + $0x70] sm:$0xff]
        %v3108 = vld [vmem:[#allocation4 + $0x78] sm:$0xff]
        %v3109 = vld [vmem:[#allocation4 + $0x80] sm:$0xff]
        %v3110 = vld [vmem:[#allocation4 + $0x88] sm:$0xff]
        %v3111 = vld [vmem:[#allocation4 + $0x90] sm:$0xff]
        %v3112 = vld [vmem:[#allocation4 + $0x98] sm:$0xff]
        %v3113 = vld [vmem:[#allocation4 + $0xa0] sm:$0xff]
        %v3114 = vld [vmem:[#allocation4 + $0xa8] sm:$0xff]
        %v3115 = vld [vmem:[#allocation4 + $0xb0] sm:$0xff]
        %v3116 = vld [vmem:[#allocation4 + $0xb8] sm:$0xff]
        %v3117 = vld [vmem:[#allocation4 + $0xc0] sm:$0xff]
        %v3118 = vld [vmem:[#allocation4 + $0xc8] sm:$0xff]
        %v3119 = vld [vmem:[#allocation4 + $0xd0] sm:$0xff]
        %v3120 = vld [vmem:[#allocation4 + $0xd8] sm:$0xff]
        %v3121 = vld [vmem:[#allocation4 + $0xe0] sm:$0xff]
        %v3122 = vld [vmem:[#allocation4 + $0xe8] sm:$0xff]
        %v3123 = vld [vmem:[#allocation4 + $0xf0] sm:$0xff]
        %v3124 = vld [vmem:[#allocation4 + $0xf8] sm:$0xff]
        %v3125 = vadd.f32 %v3093, %v2790
        %v3126 = vadd.f32 %v3094, %v2792
        %v3127 = vadd.f32 %v3095, %v2863
        %v3128 = vadd.f32 %v3096, %v2865
        %v3129 = vadd.f32 %v3097, %v2794
        %v3130 = vadd.f32 %v3098, %v2796
        %v3131 = vadd.f32 %v3099, %v2867
        %v3132 = vadd.f32 %v3100, %v2869
        %v3133 = vadd.f32 %v3101, %v2800
        %v3134 = vadd.f32 %v3102, %v2802
        %v3135 = vadd.f32 %v3103, %v2873
        %v3136 = vadd.f32 %v3104, %v2875
        %v3137 = vadd.f32 %v3105, %v2804
        %v3138 = vadd.f32 %v3106, %v2806
        %v3139 = vadd.f32 %v3107, %v2877
        %v3140 = vadd.f32 %v3108, %v2879
        %v3141 = vadd.f32 %v3109, %v2810
        %v3142 = vadd.f32 %v3110, %v2812
        %v3143 = vadd.f32 %v3111, %v2883
        %v3144 = vadd.f32 %v3112, %v2885
        %v3145 = vadd.f32 %v3113, %v2814
        %v3146 = vadd.f32 %v3114, %v2816
        %v3147 = vadd.f32 %v3115, %v2887
        %v3148 = vadd.f32 %v3116, %v2889
        %v3149 = vadd.f32 %v3117, %v2820
        %v3150 = vadd.f32 %v3118, %v2822
        %v3151 = vadd.f32 %v3119, %v2893
        %v3152 = vadd.f32 %v3120, %v2895
        %v3153 = vadd.f32 %v3121, %v2824
        %v3154 = vadd.f32 %v3122, %v2826
        %v3155 = vadd.f32 %v3123, %v2897
        %v3156 = vadd.f32 %v3124, %v2899
        %3157 = vst [vmem:[#allocation4] sm:$0xff] %v3125
        %3158 = vst [vmem:[#allocation4 + $0x8] sm:$0xff] %v3126
        %3159 = vst [vmem:[#allocation4 + $0x10] sm:$0xff] %v3127
        %3160 = vst [vmem:[#allocation4 + $0x18] sm:$0xff] %v3128
        %3161 = vst [vmem:[#allocation4 + $0x20] sm:$0xff] %v3129
        %3162 = vst [vmem:[#allocation4 + $0x28] sm:$0xff] %v3130
        %3163 = vst [vmem:[#allocation4 + $0x30] sm:$0xff] %v3131
        %3164 = vst [vmem:[#allocation4 + $0x38] sm:$0xff] %v3132
        %3165 = vst [vmem:[#allocation4 + $0x40] sm:$0xff] %v3133
        %3166 = vst [vmem:[#allocation4 + $0x48] sm:$0xff] %v3134
        %3167 = vst [vmem:[#allocation4 + $0x50] sm:$0xff] %v3135
        %3168 = vst [vmem:[#allocation4 + $0x58] sm:$0xff] %v3136
        %3169 = vst [vmem:[#allocation4 + $0x60] sm:$0xff] %v3137
        %3170 = vst [vmem:[#allocation4 + $0x68] sm:$0xff] %v3138
        %3171 = vst [vmem:[#allocation4 + $0x70] sm:$0xff] %v3139
        %3172 = vst [vmem:[#allocation4 + $0x78] sm:$0xff] %v3140
        %3173 = vst [vmem:[#allocation4 + $0x80] sm:$0xff] %v3141
        %3174 = vst [vmem:[#allocation4 + $0x88] sm:$0xff] %v3142
        %3175 = vst [vmem:[#allocation4 + $0x90] sm:$0xff] %v3143
        %3176 = vst [vmem:[#allocation4 + $0x98] sm:$0xff] %v3144
        %3177 = vst [vmem:[#allocation4 + $0xa0] sm:$0xff] %v3145
        %3178 = vst [vmem:[#allocation4 + $0xa8] sm:$0xff] %v3146
        %3179 = vst [vmem:[#allocation4 + $0xb0] sm:$0xff] %v3147
        %3180 = vst [vmem:[#allocation4 + $0xb8] sm:$0xff] %v3148
        %3181 = vst [vmem:[#allocation4 + $0xc0] sm:$0xff] %v3149
        %3182 = vst [vmem:[#allocation4 + $0xc8] sm:$0xff] %v3150
        %3183 = vst [vmem:[#allocation4 + $0xd0] sm:$0xff] %v3151
        %3184 = vst [vmem:[#allocation4 + $0xd8] sm:$0xff] %v3152
        %3185 = vst [vmem:[#allocation4 + $0xe0] sm:$0xff] %v3153
        %3186 = vst [vmem:[#allocation4 + $0xe8] sm:$0xff] %v3154
        %3187 = vst [vmem:[#allocation4 + $0xf0] sm:$0xff] %v3155
        %3188 = vst [vmem:[#allocation4 + $0xf8] sm:$0xff] %v3156
        %v3189 = vlaneseq
        %v3190 = vshrl.u32 %v3189, 7
        %v3191 = vsub.s32 0, %v3190
        %v3192 = vrot.slane %v506, %v3191
        %v3193 = vlaneseq
        %v3194 = vshrl.u32 %v3193, 7
        %v3195 = vsub.s32 0, %v3194
        %v3196 = vrot.slane %v507, %v3195
        %v3197 = vlaneseq
        %v3198 = vshrl.u32 %v3197, 7
        %v3199 = vsub.s32 0, %v3198
        %v3200 = vrot.slane %v508, %v3199
        %v3201 = vlaneseq
        %v3202 = vshrl.u32 %v3201, 7
        %v3203 = vsub.s32 0, %v3202
        %v3204 = vrot.slane %v509, %v3203
        %v3205 = vlaneseq
        %v3206 = vshrl.u32 %v3205, 7
        %v3207 = vsub.s32 1, %v3206
        %v3208 = vrot.slane %v506, %v3207
        %v3209 = vlaneseq
        %v3210 = vshrl.u32 %v3209, 7
        %v3211 = vsub.s32 1, %v3210
        %v3212 = vrot.slane %v507, %v3211
        %v3213 = vlaneseq
        %v3214 = vshrl.u32 %v3213, 7
        %v3215 = vsub.s32 1, %v3214
        %v3216 = vrot.slane %v508, %v3215
        %v3217 = vlaneseq
        %v3218 = vshrl.u32 %v3217, 7
        %v3219 = vsub.s32 1, %v3218
        %v3220 = vrot.slane %v509, %v3219
        %v3221 = vlaneseq
        %v3222 = vshrl.u32 %v3221, 7
        %v3223 = vsub.s32 2, %v3222
        %v3224 = vrot.slane %v506, %v3223
        %v3225 = vlaneseq
        %v3226 = vshrl.u32 %v3225, 7
        %v3227 = vsub.s32 2, %v3226
        %v3228 = vrot.slane %v507, %v3227
        %v3229 = vlaneseq
        %v3230 = vshrl.u32 %v3229, 7
        %v3231 = vsub.s32 2, %v3230
        %v3232 = vrot.slane %v508, %v3231
        %v3233 = vlaneseq
        %v3234 = vshrl.u32 %v3233, 7
        %v3235 = vsub.s32 2, %v3234
        %v3236 = vrot.slane %v509, %v3235
        %v3237 = vlaneseq
        %v3238 = vshrl.u32 %v3237, 7
        %v3239 = vsub.s32 3, %v3238
        %v3240 = vrot.slane %v506, %v3239
        %v3241 = vlaneseq
        %v3242 = vshrl.u32 %v3241, 7
        %v3243 = vsub.s32 3, %v3242
        %v3244 = vrot.slane %v507, %v3243
        %v3245 = vlaneseq
        %v3246 = vshrl.u32 %v3245, 7
        %v3247 = vsub.s32 3, %v3246
        %v3248 = vrot.slane %v508, %v3247
        %v3249 = vlaneseq
        %v3250 = vshrl.u32 %v3249, 7
        %v3251 = vsub.s32 3, %v3250
        %v3252 = vrot.slane %v509, %v3251
        %v3253 = vlaneseq
        %v3254 = vshrl.u32 %v3253, 7
        %v3255 = vsub.s32 4, %v3254
        %v3256 = vrot.slane %v506, %v3255
        %v3257 = vlaneseq
        %v3258 = vshrl.u32 %v3257, 7
        %v3259 = vsub.s32 4, %v3258
        %v3260 = vrot.slane %v507, %v3259
        %v3261 = vlaneseq
        %v3262 = vshrl.u32 %v3261, 7
        %v3263 = vsub.s32 4, %v3262
        %v3264 = vrot.slane %v508, %v3263
        %v3265 = vlaneseq
        %v3266 = vshrl.u32 %v3265, 7
        %v3267 = vsub.s32 4, %v3266
        %v3268 = vrot.slane %v509, %v3267
        %v3269 = vlaneseq
        %v3270 = vshrl.u32 %v3269, 7
        %v3271 = vsub.s32 5, %v3270
        %v3272 = vrot.slane %v506, %v3271
        %v3273 = vlaneseq
        %v3274 = vshrl.u32 %v3273, 7
        %v3275 = vsub.s32 5, %v3274
        %v3276 = vrot.slane %v507, %v3275
        %v3277 = vlaneseq
        %v3278 = vshrl.u32 %v3277, 7
        %v3279 = vsub.s32 5, %v3278
        %v3280 = vrot.slane %v508, %v3279
        %v3281 = vlaneseq
        %v3282 = vshrl.u32 %v3281, 7
        %v3283 = vsub.s32 5, %v3282
        %v3284 = vrot.slane %v509, %v3283
        %v3285 = vlaneseq
        %v3286 = vshrl.u32 %v3285, 7
        %v3287 = vsub.s32 6, %v3286
        %v3288 = vrot.slane %v506, %v3287
        %v3289 = vlaneseq
        %v3290 = vshrl.u32 %v3289, 7
        %v3291 = vsub.s32 6, %v3290
        %v3292 = vrot.slane %v507, %v3291
        %v3293 = vlaneseq
        %v3294 = vshrl.u32 %v3293, 7
        %v3295 = vsub.s32 6, %v3294
        %v3296 = vrot.slane %v508, %v3295
        %v3297 = vlaneseq
        %v3298 = vshrl.u32 %v3297, 7
        %v3299 = vsub.s32 6, %v3298
        %v3300 = vrot.slane %v509, %v3299
        %v3301 = vlaneseq
        %v3302 = vshrl.u32 %v3301, 7
        %v3303 = vsub.s32 7, %v3302
        %v3304 = vrot.slane %v506, %v3303
        %v3305 = vlaneseq
        %v3306 = vshrl.u32 %v3305, 7
        %v3307 = vsub.s32 7, %v3306
        %v3308 = vrot.slane %v507, %v3307
        %v3309 = vlaneseq
        %v3310 = vshrl.u32 %v3309, 7
        %v3311 = vsub.s32 7, %v3310
        %v3312 = vrot.slane %v508, %v3311
        %v3313 = vlaneseq
        %v3314 = vshrl.u32 %v3313, 7
        %v3315 = vsub.s32 7, %v3314
        %v3316 = vrot.slane %v509, %v3315
        %v3317 = vpack.c.bf16 %v3192, %v3192
        %v3318 = vpack.c.bf16 %v3196, %v3196
        %v3319 = vpack.c.bf16 %v3200, %v3200
        %v3320 = vpack.c.bf16 %v3204, %v3204
        %v3321 = vpack.c.bf16 %v3208, %v3208
        %v3322 = vpack.c.bf16 %v3212, %v3212
        %v3323 = vpack.c.bf16 %v3216, %v3216
        %v3324 = vpack.c.bf16 %v3220, %v3220
        %v3325 = vpack.c.bf16 %v3224, %v3224
        %v3326 = vpack.c.bf16 %v3228, %v3228
        %v3327 = vpack.c.bf16 %v3232, %v3232
        %v3328 = vpack.c.bf16 %v3236, %v3236
        %v3329 = vpack.c.bf16 %v3240, %v3240
        %v3330 = vpack.c.bf16 %v3244, %v3244
        %v3331 = vpack.c.bf16 %v3248, %v3248
        %v3332 = vpack.c.bf16 %v3252, %v3252
        %v3333 = vpack.c.bf16 %v3256, %v3256
        %v3334 = vpack.c.bf16 %v3260, %v3260
        %v3335 = vpack.c.bf16 %v3264, %v3264
        %v3336 = vpack.c.bf16 %v3268, %v3268
        %v3337 = vpack.c.bf16 %v3272, %v3272
        %v3338 = vpack.c.bf16 %v3276, %v3276
        %v3339 = vpack.c.bf16 %v3280, %v3280
        %v3340 = vpack.c.bf16 %v3284, %v3284
        %v3341 = vpack.c.bf16 %v3288, %v3288
        %v3342 = vpack.c.bf16 %v3292, %v3292
        %v3343 = vpack.c.bf16 %v3296, %v3296
        %v3344 = vpack.c.bf16 %v3300, %v3300
        %v3345 = vpack.c.bf16 %v3304, %v3304
        %v3346 = vpack.c.bf16 %v3308, %v3308
        %v3347 = vpack.c.bf16 %v3312, %v3312
        %v3348 = vpack.c.bf16 %v3316, %v3316
        %v3349 = vlaneseq
        %v3350 = vshrl.u32 %v3349, 7
        %v3351 = vsub.s32 0, %v3350
        %v3352 = vrot.slane %v591, %v3351
        %v3353 = vlaneseq
        %v3354 = vshrl.u32 %v3353, 7
        %v3355 = vsub.s32 0, %v3354
        %v3356 = vrot.slane %v592, %v3355
        %v3357 = vlaneseq
        %v3358 = vshrl.u32 %v3357, 7
        %v3359 = vsub.s32 0, %v3358
        %v3360 = vrot.slane %v593, %v3359
        %v3361 = vlaneseq
        %v3362 = vshrl.u32 %v3361, 7
        %v3363 = vsub.s32 0, %v3362
        %v3364 = vrot.slane %v594, %v3363
        %v3365 = vlaneseq
        %v3366 = vshrl.u32 %v3365, 7
        %v3367 = vsub.s32 1, %v3366
        %v3368 = vrot.slane %v591, %v3367
        %v3369 = vlaneseq
        %v3370 = vshrl.u32 %v3369, 7
        %v3371 = vsub.s32 1, %v3370
        %v3372 = vrot.slane %v592, %v3371
        %v3373 = vlaneseq
        %v3374 = vshrl.u32 %v3373, 7
        %v3375 = vsub.s32 1, %v3374
        %v3376 = vrot.slane %v593, %v3375
        %v3377 = vlaneseq
        %v3378 = vshrl.u32 %v3377, 7
        %v3379 = vsub.s32 1, %v3378
        %v3380 = vrot.slane %v594, %v3379
        %v3381 = vlaneseq
        %v3382 = vshrl.u32 %v3381, 7
        %v3383 = vsub.s32 2, %v3382
        %v3384 = vrot.slane %v591, %v3383
        %v3385 = vlaneseq
        %v3386 = vshrl.u32 %v3385, 7
        %v3387 = vsub.s32 2, %v3386
        %v3388 = vrot.slane %v592, %v3387
        %v3389 = vlaneseq
        %v3390 = vshrl.u32 %v3389, 7
        %v3391 = vsub.s32 2, %v3390
        %v3392 = vrot.slane %v593, %v3391
        %v3393 = vlaneseq
        %v3394 = vshrl.u32 %v3393, 7
        %v3395 = vsub.s32 2, %v3394
        %v3396 = vrot.slane %v594, %v3395
        %v3397 = vlaneseq
        %v3398 = vshrl.u32 %v3397, 7
        %v3399 = vsub.s32 3, %v3398
        %v3400 = vrot.slane %v591, %v3399
        %v3401 = vlaneseq
        %v3402 = vshrl.u32 %v3401, 7
        %v3403 = vsub.s32 3, %v3402
        %v3404 = vrot.slane %v592, %v3403
        %v3405 = vlaneseq
        %v3406 = vshrl.u32 %v3405, 7
        %v3407 = vsub.s32 3, %v3406
        %v3408 = vrot.slane %v593, %v3407
        %v3409 = vlaneseq
        %v3410 = vshrl.u32 %v3409, 7
        %v3411 = vsub.s32 3, %v3410
        %v3412 = vrot.slane %v594, %v3411
        %v3413 = vlaneseq
        %v3414 = vshrl.u32 %v3413, 7
        %v3415 = vsub.s32 4, %v3414
        %v3416 = vrot.slane %v591, %v3415
        %v3417 = vlaneseq
        %v3418 = vshrl.u32 %v3417, 7
        %v3419 = vsub.s32 4, %v3418
        %v3420 = vrot.slane %v592, %v3419
        %v3421 = vlaneseq
        %v3422 = vshrl.u32 %v3421, 7
        %v3423 = vsub.s32 4, %v3422
        %v3424 = vrot.slane %v593, %v3423
        %v3425 = vlaneseq
        %v3426 = vshrl.u32 %v3425, 7
        %v3427 = vsub.s32 4, %v3426
        %v3428 = vrot.slane %v594, %v3427
        %v3429 = vlaneseq
        %v3430 = vshrl.u32 %v3429, 7
        %v3431 = vsub.s32 5, %v3430
        %v3432 = vrot.slane %v591, %v3431
        %v3433 = vlaneseq
        %v3434 = vshrl.u32 %v3433, 7
        %v3435 = vsub.s32 5, %v3434
        %v3436 = vrot.slane %v592, %v3435
        %v3437 = vlaneseq
        %v3438 = vshrl.u32 %v3437, 7
        %v3439 = vsub.s32 5, %v3438
        %v3440 = vrot.slane %v593, %v3439
        %v3441 = vlaneseq
        %v3442 = vshrl.u32 %v3441, 7
        %v3443 = vsub.s32 5, %v3442
        %v3444 = vrot.slane %v594, %v3443
        %v3445 = vlaneseq
        %v3446 = vshrl.u32 %v3445, 7
        %v3447 = vsub.s32 6, %v3446
        %v3448 = vrot.slane %v591, %v3447
        %v3449 = vlaneseq
        %v3450 = vshrl.u32 %v3449, 7
        %v3451 = vsub.s32 6, %v3450
        %v3452 = vrot.slane %v592, %v3451
        %v3453 = vlaneseq
        %v3454 = vshrl.u32 %v3453, 7
        %v3455 = vsub.s32 6, %v3454
        %v3456 = vrot.slane %v593, %v3455
        %v3457 = vlaneseq
        %v3458 = vshrl.u32 %v3457, 7
        %v3459 = vsub.s32 6, %v3458
        %v3460 = vrot.slane %v594, %v3459
        %v3461 = vlaneseq
        %v3462 = vshrl.u32 %v3461, 7
        %v3463 = vsub.s32 7, %v3462
        %v3464 = vrot.slane %v591, %v3463
        %v3465 = vlaneseq
        %v3466 = vshrl.u32 %v3465, 7
        %v3467 = vsub.s32 7, %v3466
        %v3468 = vrot.slane %v592, %v3467
        %v3469 = vlaneseq
        %v3470 = vshrl.u32 %v3469, 7
        %v3471 = vsub.s32 7, %v3470
        %v3472 = vrot.slane %v593, %v3471
        %v3473 = vlaneseq
        %v3474 = vshrl.u32 %v3473, 7
        %v3475 = vsub.s32 7, %v3474
        %v3476 = vrot.slane %v594, %v3475
        %v3477 = vpack.c.bf16 %v3352, %v3352
        %v3478 = vpack.c.bf16 %v3356, %v3356
        %v3479 = vpack.c.bf16 %v3360, %v3360
        %v3480 = vpack.c.bf16 %v3364, %v3364
        %v3481 = vpack.c.bf16 %v3368, %v3368
        %v3482 = vpack.c.bf16 %v3372, %v3372
        %v3483 = vpack.c.bf16 %v3376, %v3376
        %v3484 = vpack.c.bf16 %v3380, %v3380
        %v3485 = vpack.c.bf16 %v3384, %v3384
        %v3486 = vpack.c.bf16 %v3388, %v3388
        %v3487 = vpack.c.bf16 %v3392, %v3392
        %v3488 = vpack.c.bf16 %v3396, %v3396
        %v3489 = vpack.c.bf16 %v3400, %v3400
        %v3490 = vpack.c.bf16 %v3404, %v3404
        %v3491 = vpack.c.bf16 %v3408, %v3408
        %v3492 = vpack.c.bf16 %v3412, %v3412
        %v3493 = vpack.c.bf16 %v3416, %v3416
        %v3494 = vpack.c.bf16 %v3420, %v3420
        %v3495 = vpack.c.bf16 %v3424, %v3424
        %v3496 = vpack.c.bf16 %v3428, %v3428
        %v3497 = vpack.c.bf16 %v3432, %v3432
        %v3498 = vpack.c.bf16 %v3436, %v3436
        %v3499 = vpack.c.bf16 %v3440, %v3440
        %v3500 = vpack.c.bf16 %v3444, %v3444
        %v3501 = vpack.c.bf16 %v3448, %v3448
        %v3502 = vpack.c.bf16 %v3452, %v3452
        %v3503 = vpack.c.bf16 %v3456, %v3456
        %v3504 = vpack.c.bf16 %v3460, %v3460
        %v3505 = vpack.c.bf16 %v3464, %v3464
        %v3506 = vpack.c.bf16 %v3468, %v3468
        %v3507 = vpack.c.bf16 %v3472, %v3472
        %v3508 = vpack.c.bf16 %v3476, %v3476
        %v3509 = vmul.bf16 %v3317, %v599
        %v3510 = vmul.bf16 %v3318, %v600
        %v3511 = vmul.bf16 %v3319, %v601
        %v3512 = vmul.bf16 %v3320, %v602
        %v3513 = vmul.bf16 %v3317, %v603
        %v3514 = vmul.bf16 %v3318, %v604
        %v3515 = vmul.bf16 %v3319, %v605
        %v3516 = vmul.bf16 %v3320, %v606
        %v3517 = vmul.bf16 %v3321, %v599
        %v3518 = vmul.bf16 %v3322, %v600
        %v3519 = vmul.bf16 %v3323, %v601
        %v3520 = vmul.bf16 %v3324, %v602
        %v3521 = vmul.bf16 %v3321, %v603
        %v3522 = vmul.bf16 %v3322, %v604
        %v3523 = vmul.bf16 %v3323, %v605
        %v3524 = vmul.bf16 %v3324, %v606
        %v3525 = vmul.bf16 %v3325, %v599
        %v3526 = vmul.bf16 %v3326, %v600
        %v3527 = vmul.bf16 %v3327, %v601
        %v3528 = vmul.bf16 %v3328, %v602
        %v3529 = vmul.bf16 %v3325, %v603
        %v3530 = vmul.bf16 %v3326, %v604
        %v3531 = vmul.bf16 %v3327, %v605
        %v3532 = vmul.bf16 %v3328, %v606
        %v3533 = vmul.bf16 %v3329, %v599
        %v3534 = vmul.bf16 %v3330, %v600
        %v3535 = vmul.bf16 %v3331, %v601
        %v3536 = vmul.bf16 %v3332, %v602
        %v3537 = vmul.bf16 %v3329, %v603
        %v3538 = vmul.bf16 %v3330, %v604
        %v3539 = vmul.bf16 %v3331, %v605
        %v3540 = vmul.bf16 %v3332, %v606
        %v3541 = vmul.bf16 %v3333, %v599
        %v3542 = vmul.bf16 %v3334, %v600
        %v3543 = vmul.bf16 %v3335, %v601
        %v3544 = vmul.bf16 %v3336, %v602
        %v3545 = vmul.bf16 %v3333, %v603
        %v3546 = vmul.bf16 %v3334, %v604
        %v3547 = vmul.bf16 %v3335, %v605
        %v3548 = vmul.bf16 %v3336, %v606
        %v3549 = vmul.bf16 %v3337, %v599
        %v3550 = vmul.bf16 %v3338, %v600
        %v3551 = vmul.bf16 %v3339, %v601
        %v3552 = vmul.bf16 %v3340, %v602
        %v3553 = vmul.bf16 %v3337, %v603
        %v3554 = vmul.bf16 %v3338, %v604
        %v3555 = vmul.bf16 %v3339, %v605
        %v3556 = vmul.bf16 %v3340, %v606
        %v3557 = vmul.bf16 %v3341, %v599
        %v3558 = vmul.bf16 %v3342, %v600
        %v3559 = vmul.bf16 %v3343, %v601
        %v3560 = vmul.bf16 %v3344, %v602
        %v3561 = vmul.bf16 %v3341, %v603
        %v3562 = vmul.bf16 %v3342, %v604
        %v3563 = vmul.bf16 %v3343, %v605
        %v3564 = vmul.bf16 %v3344, %v606
        %v3565 = vmul.bf16 %v3345, %v599
        %v3566 = vmul.bf16 %v3346, %v600
        %v3567 = vmul.bf16 %v3347, %v601
        %v3568 = vmul.bf16 %v3348, %v602
        %v3569 = vmul.bf16 %v3345, %v603
        %v3570 = vmul.bf16 %v3346, %v604
        %v3571 = vmul.bf16 %v3347, %v605
        %v3572 = vmul.bf16 %v3348, %v606
        %v3573 = vmul.bf16 %v3477, %v607
        %v3574 = vmul.bf16 %v3478, %v608
        %v3575 = vmul.bf16 %v3479, %v609
        %v3576 = vmul.bf16 %v3480, %v610
        %v3577 = vmul.bf16 %v3477, %v611
        %v3578 = vmul.bf16 %v3478, %v612
        %v3579 = vmul.bf16 %v3479, %v613
        %v3580 = vmul.bf16 %v3480, %v614
        %v3581 = vmul.bf16 %v3481, %v607
        %v3582 = vmul.bf16 %v3482, %v608
        %v3583 = vmul.bf16 %v3483, %v609
        %v3584 = vmul.bf16 %v3484, %v610
        %v3585 = vmul.bf16 %v3481, %v611
        %v3586 = vmul.bf16 %v3482, %v612
        %v3587 = vmul.bf16 %v3483, %v613
        %v3588 = vmul.bf16 %v3484, %v614
        %v3589 = vmul.bf16 %v3485, %v607
        %v3590 = vmul.bf16 %v3486, %v608
        %v3591 = vmul.bf16 %v3487, %v609
        %v3592 = vmul.bf16 %v3488, %v610
        %v3593 = vmul.bf16 %v3485, %v611
        %v3594 = vmul.bf16 %v3486, %v612
        %v3595 = vmul.bf16 %v3487, %v613
        %v3596 = vmul.bf16 %v3488, %v614
        %v3597 = vmul.bf16 %v3489, %v607
        %v3598 = vmul.bf16 %v3490, %v608
        %v3599 = vmul.bf16 %v3491, %v609
        %v3600 = vmul.bf16 %v3492, %v610
        %v3601 = vmul.bf16 %v3489, %v611
        %v3602 = vmul.bf16 %v3490, %v612
        %v3603 = vmul.bf16 %v3491, %v613
        %v3604 = vmul.bf16 %v3492, %v614
        %v3605 = vmul.bf16 %v3493, %v607
        %v3606 = vmul.bf16 %v3494, %v608
        %v3607 = vmul.bf16 %v3495, %v609
        %v3608 = vmul.bf16 %v3496, %v610
        %v3609 = vmul.bf16 %v3493, %v611
        %v3610 = vmul.bf16 %v3494, %v612
        %v3611 = vmul.bf16 %v3495, %v613
        %v3612 = vmul.bf16 %v3496, %v614
        %v3613 = vmul.bf16 %v3497, %v607
        %v3614 = vmul.bf16 %v3498, %v608
        %v3615 = vmul.bf16 %v3499, %v609
        %v3616 = vmul.bf16 %v3500, %v610
        %v3617 = vmul.bf16 %v3497, %v611
        %v3618 = vmul.bf16 %v3498, %v612
        %v3619 = vmul.bf16 %v3499, %v613
        %v3620 = vmul.bf16 %v3500, %v614
        %v3621 = vmul.bf16 %v3501, %v607
        %v3622 = vmul.bf16 %v3502, %v608
        %v3623 = vmul.bf16 %v3503, %v609
        %v3624 = vmul.bf16 %v3504, %v610
        %v3625 = vmul.bf16 %v3501, %v611
        %v3626 = vmul.bf16 %v3502, %v612
        %v3627 = vmul.bf16 %v3503, %v613
        %v3628 = vmul.bf16 %v3504, %v614
        %v3629 = vmul.bf16 %v3505, %v607
        %v3630 = vmul.bf16 %v3506, %v608
        %v3631 = vmul.bf16 %v3507, %v609
        %v3632 = vmul.bf16 %v3508, %v610
        %v3633 = vmul.bf16 %v3505, %v611
        %v3634 = vmul.bf16 %v3506, %v612
        %v3635 = vmul.bf16 %v3507, %v613
        %v3636 = vmul.bf16 %v3508, %v614
        %v3637 = vmul.bf16 %v3477, %v599
        %v3638 = vmul.bf16 %v3478, %v600
        %v3639 = vmul.bf16 %v3479, %v601
        %v3640 = vmul.bf16 %v3480, %v602
        %v3641 = vmul.bf16 %v3477, %v603
        %v3642 = vmul.bf16 %v3478, %v604
        %v3643 = vmul.bf16 %v3479, %v605
        %v3644 = vmul.bf16 %v3480, %v606
        %v3645 = vmul.bf16 %v3481, %v599
        %v3646 = vmul.bf16 %v3482, %v600
        %v3647 = vmul.bf16 %v3483, %v601
        %v3648 = vmul.bf16 %v3484, %v602
        %v3649 = vmul.bf16 %v3481, %v603
        %v3650 = vmul.bf16 %v3482, %v604
        %v3651 = vmul.bf16 %v3483, %v605
        %v3652 = vmul.bf16 %v3484, %v606
        %v3653 = vmul.bf16 %v3485, %v599
        %v3654 = vmul.bf16 %v3486, %v600
        %v3655 = vmul.bf16 %v3487, %v601
        %v3656 = vmul.bf16 %v3488, %v602
        %v3657 = vmul.bf16 %v3485, %v603
        %v3658 = vmul.bf16 %v3486, %v604
        %v3659 = vmul.bf16 %v3487, %v605
        %v3660 = vmul.bf16 %v3488, %v606
        %v3661 = vmul.bf16 %v3489, %v599
        %v3662 = vmul.bf16 %v3490, %v600
        %v3663 = vmul.bf16 %v3491, %v601
        %v3664 = vmul.bf16 %v3492, %v602
        %v3665 = vmul.bf16 %v3489, %v603
        %v3666 = vmul.bf16 %v3490, %v604
        %v3667 = vmul.bf16 %v3491, %v605
        %v3668 = vmul.bf16 %v3492, %v606
        %v3669 = vmul.bf16 %v3493, %v599
        %v3670 = vmul.bf16 %v3494, %v600
        %v3671 = vmul.bf16 %v3495, %v601
        %v3672 = vmul.bf16 %v3496, %v602
        %v3673 = vmul.bf16 %v3493, %v603
        %v3674 = vmul.bf16 %v3494, %v604
        %v3675 = vmul.bf16 %v3495, %v605
        %v3676 = vmul.bf16 %v3496, %v606
        %v3677 = vmul.bf16 %v3497, %v599
        %v3678 = vmul.bf16 %v3498, %v600
        %v3679 = vmul.bf16 %v3499, %v601
        %v3680 = vmul.bf16 %v3500, %v602
        %v3681 = vmul.bf16 %v3497, %v603
        %v3682 = vmul.bf16 %v3498, %v604
        %v3683 = vmul.bf16 %v3499, %v605
        %v3684 = vmul.bf16 %v3500, %v606
        %v3685 = vmul.bf16 %v3501, %v599
        %v3686 = vmul.bf16 %v3502, %v600
        %v3687 = vmul.bf16 %v3503, %v601
        %v3688 = vmul.bf16 %v3504, %v602
        %v3689 = vmul.bf16 %v3501, %v603
        %v3690 = vmul.bf16 %v3502, %v604
        %v3691 = vmul.bf16 %v3503, %v605
        %v3692 = vmul.bf16 %v3504, %v606
        %v3693 = vmul.bf16 %v3505, %v599
        %v3694 = vmul.bf16 %v3506, %v600
        %v3695 = vmul.bf16 %v3507, %v601
        %v3696 = vmul.bf16 %v3508, %v602
        %v3697 = vmul.bf16 %v3505, %v603
        %v3698 = vmul.bf16 %v3506, %v604
        %v3699 = vmul.bf16 %v3507, %v605
        %v3700 = vmul.bf16 %v3508, %v606
        %v3701 = vld [vmem:[#allocation6 + $0x10] sm:$0xff]
        %v3702 = vld [vmem:[#allocation6 + $0x30] sm:$0xff]
        %v3703 = vld [vmem:[#allocation6 + $0x50] sm:$0xff]
        %v3704 = vld [vmem:[#allocation6 + $0x70] sm:$0xff]
        %v3705 = vld [vmem:[#allocation6 + $0x90] sm:$0xff]
        %v3706 = vld [vmem:[#allocation6 + $0xb0] sm:$0xff]
        %v3707 = vld [vmem:[#allocation6 + $0xd0] sm:$0xff]
        %v3708 = vld [vmem:[#allocation6 + $0xf0] sm:$0xff]
        %v3717 = vunpack.c.l.b16 %v3701
        %v3718 = vunpack.c.h.b16 %v3701
        %v3719 = vunpack.c.l.b16 %v3702
        %v3720 = vunpack.c.h.b16 %v3702
        %v3721 = vunpack.c.l.b16 %v3703
        %v3722 = vunpack.c.h.b16 %v3703
        %v3723 = vunpack.c.l.b16 %v3704
        %v3724 = vunpack.c.h.b16 %v3704
        %v3725 = vunpack.c.l.b16 %v3705
        %v3726 = vunpack.c.h.b16 %v3705
        %v3727 = vunpack.c.l.b16 %v3706
        %v3728 = vunpack.c.h.b16 %v3706
        %v3729 = vunpack.c.l.b16 %v3707
        %v3730 = vunpack.c.h.b16 %v3707
        %v3731 = vunpack.c.l.b16 %v3708
        %v3732 = vunpack.c.h.b16 %v3708
        %v3733 = vpack.c.b16 %v3719, %v3717
        %v3734 = vpack.c.b16 %v3720, %v3718
        %v3735 = vpack.c.b16 %v3723, %v3721
        %v3736 = vpack.c.b16 %v3724, %v3722
        %v3737 = vpack.c.b16 %v3727, %v3725
        %v3738 = vpack.c.b16 %v3728, %v3726
        %v3739 = vpack.c.b16 %v3731, %v3729
        %v3740 = vpack.c.b16 %v3732, %v3730
        %3749 = vmatprep.subr.bf16.mxu0 %v3510
        %3750 = vmatpush1.bf16.msra.mxu0 %v3509
        %3751 = vmatprep.subr.bf16.mxu0 %v3514
        %3752 = vmatpush1.bf16.msra.mxu0 %v3513
        %3753 = vmatprep.subr.bf16.mxu0 %v3518
        %3754 = vmatpush1.bf16.msra.mxu0 %v3517
        %3755 = vmatprep.subr.bf16.mxu0 %v3522
        %3756 = vmatpush1.bf16.msra.mxu0 %v3521
        %3757 = vmatprep.subr.bf16.mxu0 %v3526
        %3758 = vmatpush1.bf16.msra.mxu0 %v3525
        %3759 = vmatprep.subr.bf16.mxu0 %v3530
        %3760 = vmatpush1.bf16.msra.mxu0 %v3529
        %3761 = vmatprep.subr.bf16.mxu0 %v3534
        %3762 = vmatpush1.bf16.msra.mxu0 %v3533
        %3763 = vmatprep.subr.bf16.mxu0 %v3538
        %3764 = vmatpush1.bf16.msra.mxu0 %v3537
        %3765 = vmatprep.subr.bf16.mxu0 %v3542
        %3766 = vmatpush1.bf16.msra.mxu0 %v3541
        %3767 = vmatprep.subr.bf16.mxu0 %v3546
        %3768 = vmatpush1.bf16.msra.mxu0 %v3545
        %3769 = vmatprep.subr.bf16.mxu0 %v3550
        %3770 = vmatpush1.bf16.msra.mxu0 %v3549
        %3771 = vmatprep.subr.bf16.mxu0 %v3554
        %3772 = vmatpush1.bf16.msra.mxu0 %v3553
        %3773 = vmatprep.subr.bf16.mxu0 %v3558
        %3774 = vmatpush1.bf16.msra.mxu0 %v3557
        %3775 = vmatprep.subr.bf16.mxu0 %v3562
        %3776 = vmatpush1.bf16.msra.mxu0 %v3561
        %3777 = vmatprep.subr.bf16.mxu0 %v3566
        %3778 = vmatpush1.bf16.msra.mxu0 %v3565
        %3779 = vmatprep.subr.bf16.mxu0 %v3570
        %3780 = vmatpush1.bf16.msra.mxu0 %v3569
        %3781 = vmatprep.mubr.bf16.mxu0 %v3734
        %3782 = vmatmul.mubr.bf16.gmra.mrb[0].mxu0 %v3733
        %v3783 = vpop.f32.mrb[0].mxu0
        %v3784 = vadd.f32 0.0, %v3783
        %v3785 = vpop.f32.mrb[0].mxu0
        %v3786 = vadd.f32 0.0, %v3785
        %v3787 = vpop.f32.mrb[0].mxu0
        %v3788 = vadd.f32 0.0, %v3787
        %v3789 = vpop.f32.mrb[0].mxu0
        %v3790 = vadd.f32 0.0, %v3789
        %3791 = vmatprep.mubr.bf16.mxu0 %v3736
        %3792 = vmatmul.mubr.bf16.gmra.mrb[0].mxu0 %v3735
        %v3793 = vpop.f32.mrb[0].mxu0
        %v3794 = vadd.f32 0.0, %v3793
        %v3795 = vpop.f32.mrb[0].mxu0
        %v3796 = vadd.f32 0.0, %v3795
        %v3797 = vpop.f32.mrb[0].mxu0
        %v3798 = vadd.f32 0.0, %v3797
        %v3799 = vpop.f32.mrb[0].mxu0
        %v3800 = vadd.f32 0.0, %v3799
        %3801 = vmatprep.mubr.bf16.mxu0 %v3738
        %3802 = vmatmul.mubr.bf16.gmra.mrb[0].mxu0 %v3737
        %v3803 = vpop.f32.mrb[0].mxu0
        %v3804 = vadd.f32 0.0, %v3803
        %v3805 = vpop.f32.mrb[0].mxu0
        %v3806 = vadd.f32 0.0, %v3805
        %v3807 = vpop.f32.mrb[0].mxu0
        %v3808 = vadd.f32 0.0, %v3807
        %v3809 = vpop.f32.mrb[0].mxu0
        %v3810 = vadd.f32 0.0, %v3809
        %3811 = vmatprep.mubr.bf16.mxu0 %v3740
        %3812 = vmatmul.mubr.bf16.gmra.mrb[0].mxu0 %v3739
        %v3813 = vpop.f32.mrb[0].mxu0
        %v3814 = vadd.f32 0.0, %v3813
        %v3815 = vpop.f32.mrb[0].mxu0
        %v3816 = vadd.f32 0.0, %v3815
        %v3817 = vpop.f32.mrb[0].mxu0
        %v3818 = vadd.f32 0.0, %v3817
        %v3819 = vpop.f32.mrb[0].mxu0
        %v3820 = vadd.f32 0.0, %v3819
        %3821 = vdwg.mxu0
        %3822 = vmatprep.subr.bf16.mxu0 %v3512
        %3823 = vmatpush1.bf16.msra.mxu0 %v3511
        %3824 = vmatprep.subr.bf16.mxu0 %v3516
        %3825 = vmatpush1.bf16.msra.mxu0 %v3515
        %3826 = vmatprep.subr.bf16.mxu0 %v3520
        %3827 = vmatpush1.bf16.msra.mxu0 %v3519
        %3828 = vmatprep.subr.bf16.mxu0 %v3524
        %3829 = vmatpush1.bf16.msra.mxu0 %v3523
        %3830 = vmatprep.subr.bf16.mxu0 %v3528
        %3831 = vmatpush1.bf16.msra.mxu0 %v3527
        %3832 = vmatprep.subr.bf16.mxu0 %v3532
        %3833 = vmatpush1.bf16.msra.mxu0 %v3531
        %3834 = vmatprep.subr.bf16.mxu0 %v3536
        %3835 = vmatpush1.bf16.msra.mxu0 %v3535
        %3836 = vmatprep.subr.bf16.mxu0 %v3540
        %3837 = vmatpush1.bf16.msra.mxu0 %v3539
        %3838 = vmatprep.subr.bf16.mxu0 %v3544
        %3839 = vmatpush1.bf16.msra.mxu0 %v3543
        %3840 = vmatprep.subr.bf16.mxu0 %v3548
        %3841 = vmatpush1.bf16.msra.mxu0 %v3547
        %3842 = vmatprep.subr.bf16.mxu0 %v3552
        %3843 = vmatpush1.bf16.msra.mxu0 %v3551
        %3844 = vmatprep.subr.bf16.mxu0 %v3556
        %3845 = vmatpush1.bf16.msra.mxu0 %v3555
        %3846 = vmatprep.subr.bf16.mxu0 %v3560
        %3847 = vmatpush1.bf16.msra.mxu0 %v3559
        %3848 = vmatprep.subr.bf16.mxu0 %v3564
        %3849 = vmatpush1.bf16.msra.mxu0 %v3563
        %3850 = vmatprep.subr.bf16.mxu0 %v3568
        %3851 = vmatpush1.bf16.msra.mxu0 %v3567
        %3852 = vmatprep.subr.bf16.mxu0 %v3572
        %3853 = vmatpush1.bf16.msra.mxu0 %v3571
        %3854 = vmatprep.mubr.bf16.mxu0 %v3734
        %3855 = vmatmul.mubr.bf16.gmra.mrb[0].mxu0 %v3733
        %v3856 = vpop.f32.mrb[0].mxu0
        %v3857 = vadd.f32 0.0, %v3856
        %v3858 = vpop.f32.mrb[0].mxu0
        %v3859 = vadd.f32 0.0, %v3858
        %v3860 = vpop.f32.mrb[0].mxu0
        %v3861 = vadd.f32 0.0, %v3860
        %v3862 = vpop.f32.mrb[0].mxu0
        %v3863 = vadd.f32 0.0, %v3862
        %3864 = vmatprep.mubr.bf16.mxu0 %v3736
        %3865 = vmatmul.mubr.bf16.gmra.mrb[0].mxu0 %v3735
        %v3866 = vpop.f32.mrb[0].mxu0
        %v3867 = vadd.f32 0.0, %v3866
        %v3868 = vpop.f32.mrb[0].mxu0
        %v3869 = vadd.f32 0.0, %v3868
        %v3870 = vpop.f32.mrb[0].mxu0
        %v3871 = vadd.f32 0.0, %v3870
        %v3872 = vpop.f32.mrb[0].mxu0
        %v3873 = vadd.f32 0.0, %v3872
        %3874 = vmatprep.mubr.bf16.mxu0 %v3738
        %3875 = vmatmul.mubr.bf16.gmra.mrb[0].mxu0 %v3737
        %v3876 = vpop.f32.mrb[0].mxu0
        %v3877 = vadd.f32 0.0, %v3876
        %v3878 = vpop.f32.mrb[0].mxu0
        %v3879 = vadd.f32 0.0, %v3878
        %v3880 = vpop.f32.mrb[0].mxu0
        %v3881 = vadd.f32 0.0, %v3880
        %v3882 = vpop.f32.mrb[0].mxu0
        %v3883 = vadd.f32 0.0, %v3882
        %3884 = vmatprep.mubr.bf16.mxu0 %v3740
        %3885 = vmatmul.mubr.bf16.gmra.mrb[0].mxu0 %v3739
        %v3886 = vpop.f32.mrb[0].mxu0
        %v3887 = vadd.f32 0.0, %v3886
        %v3888 = vpop.f32.mrb[0].mxu0
        %v3889 = vadd.f32 0.0, %v3888
        %v3890 = vpop.f32.mrb[0].mxu0
        %v3891 = vadd.f32 0.0, %v3890
        %v3892 = vpop.f32.mrb[0].mxu0
        %v3893 = vadd.f32 0.0, %v3892
        %3894 = vdwg.mxu0
        %v3895 = vld [vmem:[%s1321 + $0x10] sm:$0xff]
        %v3896 = vld [vmem:[%s1321 + $0x30] sm:$0xff]
        %v3897 = vld [vmem:[%s1321 + $0x50] sm:$0xff]
        %v3898 = vld [vmem:[%s1321 + $0x70] sm:$0xff]
        %v3899 = vld [vmem:[%s1321 + $0x90] sm:$0xff]
        %v3900 = vld [vmem:[%s1321 + $0xb0] sm:$0xff]
        %v3901 = vld [vmem:[%s1321 + $0xd0] sm:$0xff]
        %v3902 = vld [vmem:[%s1321 + $0xf0] sm:$0xff]
        %v3911 = vunpack.c.l.b16 %v3895
        %v3912 = vunpack.c.h.b16 %v3895
        %v3913 = vunpack.c.l.b16 %v3896
        %v3914 = vunpack.c.h.b16 %v3896
        %v3915 = vunpack.c.l.b16 %v3897
        %v3916 = vunpack.c.h.b16 %v3897
        %v3917 = vunpack.c.l.b16 %v3898
        %v3918 = vunpack.c.h.b16 %v3898
        %v3919 = vunpack.c.l.b16 %v3899
        %v3920 = vunpack.c.h.b16 %v3899
        %v3921 = vunpack.c.l.b16 %v3900
        %v3922 = vunpack.c.h.b16 %v3900
        %v3923 = vunpack.c.l.b16 %v3901
        %v3924 = vunpack.c.h.b16 %v3901
        %v3925 = vunpack.c.l.b16 %v3902
        %v3926 = vunpack.c.h.b16 %v3902
        %v3927 = vpack.c.b16 %v3913, %v3911
        %v3928 = vpack.c.b16 %v3914, %v3912
        %v3929 = vpack.c.b16 %v3917, %v3915
        %v3930 = vpack.c.b16 %v3918, %v3916
        %v3931 = vpack.c.b16 %v3921, %v3919
        %v3932 = vpack.c.b16 %v3922, %v3920
        %v3933 = vpack.c.b16 %v3925, %v3923
        %v3934 = vpack.c.b16 %v3926, %v3924
        %3943 = vmatprep.subr.bf16.mxu0 %v3574
        %3944 = vmatpush1.bf16.msra.mxu0 %v3573
        %3945 = vmatprep.subr.bf16.mxu0 %v3578
        %3946 = vmatpush1.bf16.msra.mxu0 %v3577
        %3947 = vmatprep.subr.bf16.mxu0 %v3582
        %3948 = vmatpush1.bf16.msra.mxu0 %v3581
        %3949 = vmatprep.subr.bf16.mxu0 %v3586
        %3950 = vmatpush1.bf16.msra.mxu0 %v3585
        %3951 = vmatprep.subr.bf16.mxu0 %v3590
        %3952 = vmatpush1.bf16.msra.mxu0 %v3589
        %3953 = vmatprep.subr.bf16.mxu0 %v3594
        %3954 = vmatpush1.bf16.msra.mxu0 %v3593
        %3955 = vmatprep.subr.bf16.mxu0 %v3598
        %3956 = vmatpush1.bf16.msra.mxu0 %v3597
        %3957 = vmatprep.subr.bf16.mxu0 %v3602
        %3958 = vmatpush1.bf16.msra.mxu0 %v3601
        %3959 = vmatprep.subr.bf16.mxu0 %v3606
        %3960 = vmatpush1.bf16.msra.mxu0 %v3605
        %3961 = vmatprep.subr.bf16.mxu0 %v3610
        %3962 = vmatpush1.bf16.msra.mxu0 %v3609
        %3963 = vmatprep.subr.bf16.mxu0 %v3614
        %3964 = vmatpush1.bf16.msra.mxu0 %v3613
        %3965 = vmatprep.subr.bf16.mxu0 %v3618
        %3966 = vmatpush1.bf16.msra.mxu0 %v3617
        %3967 = vmatprep.subr.bf16.mxu0 %v3622
        %3968 = vmatpush1.bf16.msra.mxu0 %v3621
        %3969 = vmatprep.subr.bf16.mxu0 %v3626
        %3970 = vmatpush1.bf16.msra.mxu0 %v3625
        %3971 = vmatprep.subr.bf16.mxu0 %v3630
        %3972 = vmatpush1.bf16.msra.mxu0 %v3629
        %3973 = vmatprep.subr.bf16.mxu0 %v3634
        %3974 = vmatpush1.bf16.msra.mxu0 %v3633
        %3975 = vmatprep.mubr.bf16.mxu0 %v3928
        %3976 = vmatmul.mubr.bf16.gmra.mrb[0].mxu0 %v3927
        %v3977 = vpop.f32.mrb[0].mxu0
        %v3978 = vadd.f32 0.0, %v3977
        %v3979 = vpop.f32.mrb[0].mxu0
        %v3980 = vadd.f32 0.0, %v3979
        %v3981 = vpop.f32.mrb[0].mxu0
        %v3982 = vadd.f32 0.0, %v3981
        %v3983 = vpop.f32.mrb[0].mxu0
        %v3984 = vadd.f32 0.0, %v3983
        %3985 = vmatprep.mubr.bf16.mxu0 %v3930
        %3986 = vmatmul.mubr.bf16.gmra.mrb[0].mxu0 %v3929
        %v3987 = vpop.f32.mrb[0].mxu0
        %v3988 = vadd.f32 0.0, %v3987
        %v3989 = vpop.f32.mrb[0].mxu0
        %v3990 = vadd.f32 0.0, %v3989
        %v3991 = vpop.f32.mrb[0].mxu0
        %v3992 = vadd.f32 0.0, %v3991
        %v3993 = vpop.f32.mrb[0].mxu0
        %v3994 = vadd.f32 0.0, %v3993
        %3995 = vmatprep.mubr.bf16.mxu0 %v3932
        %3996 = vmatmul.mubr.bf16.gmra.mrb[0].mxu0 %v3931
        %v3997 = vpop.f32.mrb[0].mxu0
        %v3998 = vadd.f32 0.0, %v3997
        %v3999 = vpop.f32.mrb[0].mxu0
        %v4000 = vadd.f32 0.0, %v3999
        %v4001 = vpop.f32.mrb[0].mxu0
        %v4002 = vadd.f32 0.0, %v4001
        %v4003 = vpop.f32.mrb[0].mxu0
        %v4004 = vadd.f32 0.0, %v4003
        %4005 = vmatprep.mubr.bf16.mxu0 %v3934
        %4006 = vmatmul.mubr.bf16.gmra.mrb[0].mxu0 %v3933
        %v4007 = vpop.f32.mrb[0].mxu0
        %v4008 = vadd.f32 0.0, %v4007
        %v4009 = vpop.f32.mrb[0].mxu0
        %v4010 = vadd.f32 0.0, %v4009
        %v4011 = vpop.f32.mrb[0].mxu0
        %v4012 = vadd.f32 0.0, %v4011
        %v4013 = vpop.f32.mrb[0].mxu0
        %v4014 = vadd.f32 0.0, %v4013
        %4015 = vdwg.mxu0
        %4016 = vmatprep.subr.bf16.mxu0 %v3576
        %4017 = vmatpush1.bf16.msra.mxu0 %v3575
        %4018 = vmatprep.subr.bf16.mxu0 %v3580
        %4019 = vmatpush1.bf16.msra.mxu0 %v3579
        %4020 = vmatprep.subr.bf16.mxu0 %v3584
        %4021 = vmatpush1.bf16.msra.mxu0 %v3583
        %4022 = vmatprep.subr.bf16.mxu0 %v3588
        %4023 = vmatpush1.bf16.msra.mxu0 %v3587
        %4024 = vmatprep.subr.bf16.mxu0 %v3592
        %4025 = vmatpush1.bf16.msra.mxu0 %v3591
        %4026 = vmatprep.subr.bf16.mxu0 %v3596
        %4027 = vmatpush1.bf16.msra.mxu0 %v3595
        %4028 = vmatprep.subr.bf16.mxu0 %v3600
        %4029 = vmatpush1.bf16.msra.mxu0 %v3599
        %4030 = vmatprep.subr.bf16.mxu0 %v3604
        %4031 = vmatpush1.bf16.msra.mxu0 %v3603
        %4032 = vmatprep.subr.bf16.mxu0 %v3608
        %4033 = vmatpush1.bf16.msra.mxu0 %v3607
        %4034 = vmatprep.subr.bf16.mxu0 %v3612
        %4035 = vmatpush1.bf16.msra.mxu0 %v3611
        %4036 = vmatprep.subr.bf16.mxu0 %v3616
        %4037 = vmatpush1.bf16.msra.mxu0 %v3615
        %4038 = vmatprep.subr.bf16.mxu0 %v3620
        %4039 = vmatpush1.bf16.msra.mxu0 %v3619
        %4040 = vmatprep.subr.bf16.mxu0 %v3624
        %4041 = vmatpush1.bf16.msra.mxu0 %v3623
        %4042 = vmatprep.subr.bf16.mxu0 %v3628
        %4043 = vmatpush1.bf16.msra.mxu0 %v3627
        %4044 = vmatprep.subr.bf16.mxu0 %v3632
        %4045 = vmatpush1.bf16.msra.mxu0 %v3631
        %4046 = vmatprep.subr.bf16.mxu0 %v3636
        %4047 = vmatpush1.bf16.msra.mxu0 %v3635
        %4048 = vmatprep.mubr.bf16.mxu0 %v3928
        %4049 = vmatmul.mubr.bf16.gmra.mrb[0].mxu0 %v3927
        %v4050 = vpop.f32.mrb[0].mxu0
        %v4051 = vadd.f32 0.0, %v4050
        %v4052 = vpop.f32.mrb[0].mxu0
        %v4053 = vadd.f32 0.0, %v4052
        %v4054 = vpop.f32.mrb[0].mxu0
        %v4055 = vadd.f32 0.0, %v4054
        %v4056 = vpop.f32.mrb[0].mxu0
        %v4057 = vadd.f32 0.0, %v4056
        %4058 = vmatprep.mubr.bf16.mxu0 %v3930
        %4059 = vmatmul.mubr.bf16.gmra.mrb[0].mxu0 %v3929
        %v4060 = vpop.f32.mrb[0].mxu0
        %v4061 = vadd.f32 0.0, %v4060
        %v4062 = vpop.f32.mrb[0].mxu0
        %v4063 = vadd.f32 0.0, %v4062
        %v4064 = vpop.f32.mrb[0].mxu0
        %v4065 = vadd.f32 0.0, %v4064
        %v4066 = vpop.f32.mrb[0].mxu0
        %v4067 = vadd.f32 0.0, %v4066
        %4068 = vmatprep.mubr.bf16.mxu0 %v3932
        %4069 = vmatmul.mubr.bf16.gmra.mrb[0].mxu0 %v3931
        %v4070 = vpop.f32.mrb[0].mxu0
        %v4071 = vadd.f32 0.0, %v4070
        %v4072 = vpop.f32.mrb[0].mxu0
        %v4073 = vadd.f32 0.0, %v4072
        %v4074 = vpop.f32.mrb[0].mxu0
        %v4075 = vadd.f32 0.0, %v4074
        %v4076 = vpop.f32.mrb[0].mxu0
        %v4077 = vadd.f32 0.0, %v4076
        %4078 = vmatprep.mubr.bf16.mxu0 %v3934
        %4079 = vmatmul.mubr.bf16.gmra.mrb[0].mxu0 %v3933
        %v4080 = vpop.f32.mrb[0].mxu0
        %v4081 = vadd.f32 0.0, %v4080
        %v4082 = vpop.f32.mrb[0].mxu0
        %v4083 = vadd.f32 0.0, %v4082
        %v4084 = vpop.f32.mrb[0].mxu0
        %v4085 = vadd.f32 0.0, %v4084
        %v4086 = vpop.f32.mrb[0].mxu0
        %v4087 = vadd.f32 0.0, %v4086
        %4088 = vdwg.mxu0
        %v4089 = vld [vmem:[%s1516 + $0x10] sm:$0xff]
        %v4090 = vld [vmem:[%s1516 + $0x30] sm:$0xff]
        %v4091 = vld [vmem:[%s1516 + $0x50] sm:$0xff]
        %v4092 = vld [vmem:[%s1516 + $0x70] sm:$0xff]
        %v4093 = vld [vmem:[%s1516 + $0x90] sm:$0xff]
        %v4094 = vld [vmem:[%s1516 + $0xb0] sm:$0xff]
        %v4095 = vld [vmem:[%s1516 + $0xd0] sm:$0xff]
        %v4096 = vld [vmem:[%s1516 + $0xf0] sm:$0xff]
        %v4105 = vunpack.c.l.b16 %v4089
        %v4106 = vunpack.c.h.b16 %v4089
        %v4107 = vunpack.c.l.b16 %v4090
        %v4108 = vunpack.c.h.b16 %v4090
        %v4109 = vunpack.c.l.b16 %v4091
        %v4110 = vunpack.c.h.b16 %v4091
        %v4111 = vunpack.c.l.b16 %v4092
        %v4112 = vunpack.c.h.b16 %v4092
        %v4113 = vunpack.c.l.b16 %v4093
        %v4114 = vunpack.c.h.b16 %v4093
        %v4115 = vunpack.c.l.b16 %v4094
        %v4116 = vunpack.c.h.b16 %v4094
        %v4117 = vunpack.c.l.b16 %v4095
        %v4118 = vunpack.c.h.b16 %v4095
        %v4119 = vunpack.c.l.b16 %v4096
        %v4120 = vunpack.c.h.b16 %v4096
        %v4121 = vpack.c.b16 %v4107, %v4105
        %v4122 = vpack.c.b16 %v4108, %v4106
        %v4123 = vpack.c.b16 %v4111, %v4109
        %v4124 = vpack.c.b16 %v4112, %v4110
        %v4125 = vpack.c.b16 %v4115, %v4113
        %v4126 = vpack.c.b16 %v4116, %v4114
        %v4127 = vpack.c.b16 %v4119, %v4117
        %v4128 = vpack.c.b16 %v4120, %v4118
        %4137 = vmatprep.subr.bf16.mxu0 %v3638
        %4138 = vmatpush1.bf16.msra.mxu0 %v3637
        %4139 = vmatprep.subr.bf16.mxu0 %v3642
        %4140 = vmatpush1.bf16.msra.mxu0 %v3641
        %4141 = vmatprep.subr.bf16.mxu0 %v3646
        %4142 = vmatpush1.bf16.msra.mxu0 %v3645
        %4143 = vmatprep.subr.bf16.mxu0 %v3650
        %4144 = vmatpush1.bf16.msra.mxu0 %v3649
        %4145 = vmatprep.subr.bf16.mxu0 %v3654
        %4146 = vmatpush1.bf16.msra.mxu0 %v3653
        %4147 = vmatprep.subr.bf16.mxu0 %v3658
        %4148 = vmatpush1.bf16.msra.mxu0 %v3657
        %4149 = vmatprep.subr.bf16.mxu0 %v3662
        %4150 = vmatpush1.bf16.msra.mxu0 %v3661
        %4151 = vmatprep.subr.bf16.mxu0 %v3666
        %4152 = vmatpush1.bf16.msra.mxu0 %v3665
        %4153 = vmatprep.subr.bf16.mxu0 %v3670
        %4154 = vmatpush1.bf16.msra.mxu0 %v3669
        %4155 = vmatprep.subr.bf16.mxu0 %v3674
        %4156 = vmatpush1.bf16.msra.mxu0 %v3673
        %4157 = vmatprep.subr.bf16.mxu0 %v3678
        %4158 = vmatpush1.bf16.msra.mxu0 %v3677
        %4159 = vmatprep.subr.bf16.mxu0 %v3682
        %4160 = vmatpush1.bf16.msra.mxu0 %v3681
        %4161 = vmatprep.subr.bf16.mxu0 %v3686
        %4162 = vmatpush1.bf16.msra.mxu0 %v3685
        %4163 = vmatprep.subr.bf16.mxu0 %v3690
        %4164 = vmatpush1.bf16.msra.mxu0 %v3689
        %4165 = vmatprep.subr.bf16.mxu0 %v3694
        %4166 = vmatpush1.bf16.msra.mxu0 %v3693
        %4167 = vmatprep.subr.bf16.mxu0 %v3698
        %4168 = vmatpush1.bf16.msra.mxu0 %v3697
        %4169 = vmatprep.mubr.bf16.mxu0 %v4122
        %4170 = vmatmul.mubr.bf16.gmra.mrb[0].mxu0 %v4121
        %v4171 = vpop.f32.mrb[0].mxu0
        %v4172 = vadd.f32 0.0, %v4171
        %v4173 = vpop.f32.mrb[0].mxu0
        %v4174 = vadd.f32 0.0, %v4173
        %v4175 = vpop.f32.mrb[0].mxu0
        %v4176 = vadd.f32 0.0, %v4175
        %v4177 = vpop.f32.mrb[0].mxu0
        %v4178 = vadd.f32 0.0, %v4177
        %4179 = vmatprep.mubr.bf16.mxu0 %v4124
        %4180 = vmatmul.mubr.bf16.gmra.mrb[0].mxu0 %v4123
        %v4181 = vpop.f32.mrb[0].mxu0
        %v4182 = vadd.f32 0.0, %v4181
        %v4183 = vpop.f32.mrb[0].mxu0
        %v4184 = vadd.f32 0.0, %v4183
        %v4185 = vpop.f32.mrb[0].mxu0
        %v4186 = vadd.f32 0.0, %v4185
        %v4187 = vpop.f32.mrb[0].mxu0
        %v4188 = vadd.f32 0.0, %v4187
        %4189 = vmatprep.mubr.bf16.mxu0 %v4126
        %4190 = vmatmul.mubr.bf16.gmra.mrb[0].mxu0 %v4125
        %v4191 = vpop.f32.mrb[0].mxu0
        %v4192 = vadd.f32 0.0, %v4191
        %v4193 = vpop.f32.mrb[0].mxu0
        %v4194 = vadd.f32 0.0, %v4193
        %v4195 = vpop.f32.mrb[0].mxu0
        %v4196 = vadd.f32 0.0, %v4195
        %v4197 = vpop.f32.mrb[0].mxu0
        %v4198 = vadd.f32 0.0, %v4197
        %4199 = vmatprep.mubr.bf16.mxu0 %v4128
        %4200 = vmatmul.mubr.bf16.gmra.mrb[0].mxu0 %v4127
        %v4201 = vpop.f32.mrb[0].mxu0
        %v4202 = vadd.f32 0.0, %v4201
        %v4203 = vpop.f32.mrb[0].mxu0
        %v4204 = vadd.f32 0.0, %v4203
        %v4205 = vpop.f32.mrb[0].mxu0
        %v4206 = vadd.f32 0.0, %v4205
        %v4207 = vpop.f32.mrb[0].mxu0
        %v4208 = vadd.f32 0.0, %v4207
        %4209 = vdwg.mxu0
        %4210 = vmatprep.subr.bf16.mxu0 %v3640
        %4211 = vmatpush1.bf16.msra.mxu0 %v3639
        %4212 = vmatprep.subr.bf16.mxu0 %v3644
        %4213 = vmatpush1.bf16.msra.mxu0 %v3643
        %4214 = vmatprep.subr.bf16.mxu0 %v3648
        %4215 = vmatpush1.bf16.msra.mxu0 %v3647
        %4216 = vmatprep.subr.bf16.mxu0 %v3652
        %4217 = vmatpush1.bf16.msra.mxu0 %v3651
        %4218 = vmatprep.subr.bf16.mxu0 %v3656
        %4219 = vmatpush1.bf16.msra.mxu0 %v3655
        %4220 = vmatprep.subr.bf16.mxu0 %v3660
        %4221 = vmatpush1.bf16.msra.mxu0 %v3659
        %4222 = vmatprep.subr.bf16.mxu0 %v3664
        %4223 = vmatpush1.bf16.msra.mxu0 %v3663
        %4224 = vmatprep.subr.bf16.mxu0 %v3668
        %4225 = vmatpush1.bf16.msra.mxu0 %v3667
        %4226 = vmatprep.subr.bf16.mxu0 %v3672
        %4227 = vmatpush1.bf16.msra.mxu0 %v3671
        %4228 = vmatprep.subr.bf16.mxu0 %v3676
        %4229 = vmatpush1.bf16.msra.mxu0 %v3675
        %4230 = vmatprep.subr.bf16.mxu0 %v3680
        %4231 = vmatpush1.bf16.msra.mxu0 %v3679
        %4232 = vmatprep.subr.bf16.mxu0 %v3684
        %4233 = vmatpush1.bf16.msra.mxu0 %v3683
        %4234 = vmatprep.subr.bf16.mxu0 %v3688
        %4235 = vmatpush1.bf16.msra.mxu0 %v3687
        %4236 = vmatprep.subr.bf16.mxu0 %v3692
        %4237 = vmatpush1.bf16.msra.mxu0 %v3691
        %4238 = vmatprep.subr.bf16.mxu0 %v3696
        %4239 = vmatpush1.bf16.msra.mxu0 %v3695
        %4240 = vmatprep.subr.bf16.mxu0 %v3700
        %4241 = vmatpush1.bf16.msra.mxu0 %v3699
        %4242 = vmatprep.mubr.bf16.mxu0 %v4122
        %4243 = vmatmul.mubr.bf16.gmra.mrb[0].mxu0 %v4121
        %v4244 = vpop.f32.mrb[0].mxu0
        %v4245 = vadd.f32 0.0, %v4244
        %v4246 = vpop.f32.mrb[0].mxu0
        %v4247 = vadd.f32 0.0, %v4246
        %v4248 = vpop.f32.mrb[0].mxu0
        %v4249 = vadd.f32 0.0, %v4248
        %v4250 = vpop.f32.mrb[0].mxu0
        %v4251 = vadd.f32 0.0, %v4250
        %4252 = vmatprep.mubr.bf16.mxu0 %v4124
        %4253 = vmatmul.mubr.bf16.gmra.mrb[0].mxu0 %v4123
        %v4254 = vpop.f32.mrb[0].mxu0
        %v4255 = vadd.f32 0.0, %v4254
        %v4256 = vpop.f32.mrb[0].mxu0
        %v4257 = vadd.f32 0.0, %v4256
        %v4258 = vpop.f32.mrb[0].mxu0
        %v4259 = vadd.f32 0.0, %v4258
        %v4260 = vpop.f32.mrb[0].mxu0
        %v4261 = vadd.f32 0.0, %v4260
        %4262 = vmatprep.mubr.bf16.mxu0 %v4126
        %4263 = vmatmul.mubr.bf16.gmra.mrb[0].mxu0 %v4125
        %v4264 = vpop.f32.mrb[0].mxu0
        %v4265 = vadd.f32 0.0, %v4264
        %v4266 = vpop.f32.mrb[0].mxu0
        %v4267 = vadd.f32 0.0, %v4266
        %v4268 = vpop.f32.mrb[0].mxu0
        %v4269 = vadd.f32 0.0, %v4268
        %v4270 = vpop.f32.mrb[0].mxu0
        %v4271 = vadd.f32 0.0, %v4270
        %4272 = vmatprep.mubr.bf16.mxu0 %v4128
        %4273 = vmatmul.mubr.bf16.gmra.mrb[0].mxu0 %v4127
        %v4274 = vpop.f32.mrb[0].mxu0
        %v4275 = vadd.f32 0.0, %v4274
        %v4276 = vpop.f32.mrb[0].mxu0
        %v4277 = vadd.f32 0.0, %v4276
        %v4278 = vpop.f32.mrb[0].mxu0
        %v4279 = vadd.f32 0.0, %v4278
        %v4280 = vpop.f32.mrb[0].mxu0
        %v4281 = vadd.f32 0.0, %v4280
        %4282 = vdwg.mxu0
        %v4283 = vld [vmem:[#allocation2] sm:$0xff]
        %v4284 = vld [vmem:[#allocation2 + $0x8] sm:$0xff]
        %v4285 = vld [vmem:[#allocation2 + $0x10] sm:$0xff]
        %v4286 = vld [vmem:[#allocation2 + $0x18] sm:$0xff]
        %v4287 = vld [vmem:[#allocation2 + $0x20] sm:$0xff]
        %v4288 = vld [vmem:[#allocation2 + $0x28] sm:$0xff]
        %v4289 = vld [vmem:[#allocation2 + $0x30] sm:$0xff]
        %v4290 = vld [vmem:[#allocation2 + $0x38] sm:$0xff]
        %v4291 = vld [vmem:[#allocation2 + $0x40] sm:$0xff]
        %v4292 = vld [vmem:[#allocation2 + $0x48] sm:$0xff]
        %v4293 = vld [vmem:[#allocation2 + $0x50] sm:$0xff]
        %v4294 = vld [vmem:[#allocation2 + $0x58] sm:$0xff]
        %v4295 = vld [vmem:[#allocation2 + $0x60] sm:$0xff]
        %v4296 = vld [vmem:[#allocation2 + $0x68] sm:$0xff]
        %v4297 = vld [vmem:[#allocation2 + $0x70] sm:$0xff]
        %v4298 = vld [vmem:[#allocation2 + $0x78] sm:$0xff]
        %v4299 = vld [vmem:[#allocation2 + $0x80] sm:$0xff]
        %v4300 = vld [vmem:[#allocation2 + $0x88] sm:$0xff]
        %v4301 = vld [vmem:[#allocation2 + $0x90] sm:$0xff]
        %v4302 = vld [vmem:[#allocation2 + $0x98] sm:$0xff]
        %v4303 = vld [vmem:[#allocation2 + $0xa0] sm:$0xff]
        %v4304 = vld [vmem:[#allocation2 + $0xa8] sm:$0xff]
        %v4305 = vld [vmem:[#allocation2 + $0xb0] sm:$0xff]
        %v4306 = vld [vmem:[#allocation2 + $0xb8] sm:$0xff]
        %v4307 = vld [vmem:[#allocation2 + $0xc0] sm:$0xff]
        %v4308 = vld [vmem:[#allocation2 + $0xc8] sm:$0xff]
        %v4309 = vld [vmem:[#allocation2 + $0xd0] sm:$0xff]
        %v4310 = vld [vmem:[#allocation2 + $0xd8] sm:$0xff]
        %v4311 = vld [vmem:[#allocation2 + $0xe0] sm:$0xff]
        %v4312 = vld [vmem:[#allocation2 + $0xe8] sm:$0xff]
        %v4313 = vld [vmem:[#allocation2 + $0xf0] sm:$0xff]
        %v4314 = vld [vmem:[#allocation2 + $0xf8] sm:$0xff]
        %v4315 = vadd.f32 %v4283, %v3784
        %v4316 = vadd.f32 %v4284, %v3786
        %v4317 = vadd.f32 %v4285, %v3857
        %v4318 = vadd.f32 %v4286, %v3859
        %v4319 = vadd.f32 %v4287, %v3788
        %v4320 = vadd.f32 %v4288, %v3790
        %v4321 = vadd.f32 %v4289, %v3861
        %v4322 = vadd.f32 %v4290, %v3863
        %v4323 = vadd.f32 %v4291, %v3794
        %v4324 = vadd.f32 %v4292, %v3796
        %v4325 = vadd.f32 %v4293, %v3867
        %v4326 = vadd.f32 %v4294, %v3869
        %v4327 = vadd.f32 %v4295, %v3798
        %v4328 = vadd.f32 %v4296, %v3800
        %v4329 = vadd.f32 %v4297, %v3871
        %v4330 = vadd.f32 %v4298, %v3873
        %v4331 = vadd.f32 %v4299, %v3804
        %v4332 = vadd.f32 %v4300, %v3806
        %v4333 = vadd.f32 %v4301, %v3877
        %v4334 = vadd.f32 %v4302, %v3879
        %v4335 = vadd.f32 %v4303, %v3808
        %v4336 = vadd.f32 %v4304, %v3810
        %v4337 = vadd.f32 %v4305, %v3881
        %v4338 = vadd.f32 %v4306, %v3883
        %v4339 = vadd.f32 %v4307, %v3814
        %v4340 = vadd.f32 %v4308, %v3816
        %v4341 = vadd.f32 %v4309, %v3887
        %v4342 = vadd.f32 %v4310, %v3889
        %v4343 = vadd.f32 %v4311, %v3818
        %v4344 = vadd.f32 %v4312, %v3820
        %v4345 = vadd.f32 %v4313, %v3891
        %v4346 = vadd.f32 %v4314, %v3893
        %4347 = vst [vmem:[#allocation2] sm:$0xff] %v4315
        %4348 = vst [vmem:[#allocation2 + $0x8] sm:$0xff] %v4316
        %4349 = vst [vmem:[#allocation2 + $0x10] sm:$0xff] %v4317
        %4350 = vst [vmem:[#allocation2 + $0x18] sm:$0xff] %v4318
        %4351 = vst [vmem:[#allocation2 + $0x20] sm:$0xff] %v4319
        %4352 = vst [vmem:[#allocation2 + $0x28] sm:$0xff] %v4320
        %4353 = vst [vmem:[#allocation2 + $0x30] sm:$0xff] %v4321
        %4354 = vst [vmem:[#allocation2 + $0x38] sm:$0xff] %v4322
        %4355 = vst [vmem:[#allocation2 + $0x40] sm:$0xff] %v4323
        %4356 = vst [vmem:[#allocation2 + $0x48] sm:$0xff] %v4324
        %4357 = vst [vmem:[#allocation2 + $0x50] sm:$0xff] %v4325
        %4358 = vst [vmem:[#allocation2 + $0x58] sm:$0xff] %v4326
        %4359 = vst [vmem:[#allocation2 + $0x60] sm:$0xff] %v4327
        %4360 = vst [vmem:[#allocation2 + $0x68] sm:$0xff] %v4328
        %4361 = vst [vmem:[#allocation2 + $0x70] sm:$0xff] %v4329
        %4362 = vst [vmem:[#allocation2 + $0x78] sm:$0xff] %v4330
        %4363 = vst [vmem:[#allocation2 + $0x80] sm:$0xff] %v4331
        %4364 = vst [vmem:[#allocation2 + $0x88] sm:$0xff] %v4332
        %4365 = vst [vmem:[#allocation2 + $0x90] sm:$0xff] %v4333
        %4366 = vst [vmem:[#allocation2 + $0x98] sm:$0xff] %v4334
        %4367 = vst [vmem:[#allocation2 + $0xa0] sm:$0xff] %v4335
        %4368 = vst [vmem:[#allocation2 + $0xa8] sm:$0xff] %v4336
        %4369 = vst [vmem:[#allocation2 + $0xb0] sm:$0xff] %v4337
        %4370 = vst [vmem:[#allocation2 + $0xb8] sm:$0xff] %v4338
        %4371 = vst [vmem:[#allocation2 + $0xc0] sm:$0xff] %v4339
        %4372 = vst [vmem:[#allocation2 + $0xc8] sm:$0xff] %v4340
        %4373 = vst [vmem:[#allocation2 + $0xd0] sm:$0xff] %v4341
        %4374 = vst [vmem:[#allocation2 + $0xd8] sm:$0xff] %v4342
        %4375 = vst [vmem:[#allocation2 + $0xe0] sm:$0xff] %v4343
        %4376 = vst [vmem:[#allocation2 + $0xe8] sm:$0xff] %v4344
        %4377 = vst [vmem:[#allocation2 + $0xf0] sm:$0xff] %v4345
        %4378 = vst [vmem:[#allocation2 + $0xf8] sm:$0xff] %v4346
        %v4379 = vld [vmem:[#allocation3] sm:$0xff]
        %v4380 = vld [vmem:[#allocation3 + $0x8] sm:$0xff]
        %v4381 = vld [vmem:[#allocation3 + $0x10] sm:$0xff]
        %v4382 = vld [vmem:[#allocation3 + $0x18] sm:$0xff]
        %v4383 = vld [vmem:[#allocation3 + $0x20] sm:$0xff]
        %v4384 = vld [vmem:[#allocation3 + $0x28] sm:$0xff]
        %v4385 = vld [vmem:[#allocation3 + $0x30] sm:$0xff]
        %v4386 = vld [vmem:[#allocation3 + $0x38] sm:$0xff]
        %v4387 = vld [vmem:[#allocation3 + $0x40] sm:$0xff]
        %v4388 = vld [vmem:[#allocation3 + $0x48] sm:$0xff]
        %v4389 = vld [vmem:[#allocation3 + $0x50] sm:$0xff]
        %v4390 = vld [vmem:[#allocation3 + $0x58] sm:$0xff]
        %v4391 = vld [vmem:[#allocation3 + $0x60] sm:$0xff]
        %v4392 = vld [vmem:[#allocation3 + $0x68] sm:$0xff]
        %v4393 = vld [vmem:[#allocation3 + $0x70] sm:$0xff]
        %v4394 = vld [vmem:[#allocation3 + $0x78] sm:$0xff]
        %v4395 = vld [vmem:[#allocation3 + $0x80] sm:$0xff]
        %v4396 = vld [vmem:[#allocation3 + $0x88] sm:$0xff]
        %v4397 = vld [vmem:[#allocation3 + $0x90] sm:$0xff]
        %v4398 = vld [vmem:[#allocation3 + $0x98] sm:$0xff]
        %v4399 = vld [vmem:[#allocation3 + $0xa0] sm:$0xff]
        %v4400 = vld [vmem:[#allocation3 + $0xa8] sm:$0xff]
        %v4401 = vld [vmem:[#allocation3 + $0xb0] sm:$0xff]
        %v4402 = vld [vmem:[#allocation3 + $0xb8] sm:$0xff]
        %v4403 = vld [vmem:[#allocation3 + $0xc0] sm:$0xff]
        %v4404 = vld [vmem:[#allocation3 + $0xc8] sm:$0xff]
        %v4405 = vld [vmem:[#allocation3 + $0xd0] sm:$0xff]
        %v4406 = vld [vmem:[#allocation3 + $0xd8] sm:$0xff]
        %v4407 = vld [vmem:[#allocation3 + $0xe0] sm:$0xff]
        %v4408 = vld [vmem:[#allocation3 + $0xe8] sm:$0xff]
        %v4409 = vld [vmem:[#allocation3 + $0xf0] sm:$0xff]
        %v4410 = vld [vmem:[#allocation3 + $0xf8] sm:$0xff]
        %v4411 = vadd.f32 %v4379, %v3978
        %v4412 = vadd.f32 %v4380, %v3980
        %v4413 = vadd.f32 %v4381, %v4051
        %v4414 = vadd.f32 %v4382, %v4053
        %v4415 = vadd.f32 %v4383, %v3982
        %v4416 = vadd.f32 %v4384, %v3984
        %v4417 = vadd.f32 %v4385, %v4055
        %v4418 = vadd.f32 %v4386, %v4057
        %v4419 = vadd.f32 %v4387, %v3988
        %v4420 = vadd.f32 %v4388, %v3990
        %v4421 = vadd.f32 %v4389, %v4061
        %v4422 = vadd.f32 %v4390, %v4063
        %v4423 = vadd.f32 %v4391, %v3992
        %v4424 = vadd.f32 %v4392, %v3994
        %v4425 = vadd.f32 %v4393, %v4065
        %v4426 = vadd.f32 %v4394, %v4067
        %v4427 = vadd.f32 %v4395, %v3998
        %v4428 = vadd.f32 %v4396, %v4000
        %v4429 = vadd.f32 %v4397, %v4071
        %v4430 = vadd.f32 %v4398, %v4073
        %v4431 = vadd.f32 %v4399, %v4002
        %v4432 = vadd.f32 %v4400, %v4004
        %v4433 = vadd.f32 %v4401, %v4075
        %v4434 = vadd.f32 %v4402, %v4077
        %v4435 = vadd.f32 %v4403, %v4008
        %v4436 = vadd.f32 %v4404, %v4010
        %v4437 = vadd.f32 %v4405, %v4081
        %v4438 = vadd.f32 %v4406, %v4083
        %v4439 = vadd.f32 %v4407, %v4012
        %v4440 = vadd.f32 %v4408, %v4014
        %v4441 = vadd.f32 %v4409, %v4085
        %v4442 = vadd.f32 %v4410, %v4087
        %4443 = vst [vmem:[#allocation3] sm:$0xff] %v4411
        %4444 = vst [vmem:[#allocation3 + $0x8] sm:$0xff] %v4412
        %4445 = vst [vmem:[#allocation3 + $0x10] sm:$0xff] %v4413
        %4446 = vst [vmem:[#allocation3 + $0x18] sm:$0xff] %v4414
        %4447 = vst [vmem:[#allocation3 + $0x20] sm:$0xff] %v4415
        %4448 = vst [vmem:[#allocation3 + $0x28] sm:$0xff] %v4416
        %4449 = vst [vmem:[#allocation3 + $0x30] sm:$0xff] %v4417
        %4450 = vst [vmem:[#allocation3 + $0x38] sm:$0xff] %v4418
        %4451 = vst [vmem:[#allocation3 + $0x40] sm:$0xff] %v4419
        %4452 = vst [vmem:[#allocation3 + $0x48] sm:$0xff] %v4420
        %4453 = vst [vmem:[#allocation3 + $0x50] sm:$0xff] %v4421
        %4454 = vst [vmem:[#allocation3 + $0x58] sm:$0xff] %v4422
        %4455 = vst [vmem:[#allocation3 + $0x60] sm:$0xff] %v4423
        %4456 = vst [vmem:[#allocation3 + $0x68] sm:$0xff] %v4424
        %4457 = vst [vmem:[#allocation3 + $0x70] sm:$0xff] %v4425
        %4458 = vst [vmem:[#allocation3 + $0x78] sm:$0xff] %v4426
        %4459 = vst [vmem:[#allocation3 + $0x80] sm:$0xff] %v4427
        %4460 = vst [vmem:[#allocation3 + $0x88] sm:$0xff] %v4428
        %4461 = vst [vmem:[#allocation3 + $0x90] sm:$0xff] %v4429
        %4462 = vst [vmem:[#allocation3 + $0x98] sm:$0xff] %v4430
        %4463 = vst [vmem:[#allocation3 + $0xa0] sm:$0xff] %v4431
        %4464 = vst [vmem:[#allocation3 + $0xa8] sm:$0xff] %v4432
        %4465 = vst [vmem:[#allocation3 + $0xb0] sm:$0xff] %v4433
        %4466 = vst [vmem:[#allocation3 + $0xb8] sm:$0xff] %v4434
        %4467 = vst [vmem:[#allocation3 + $0xc0] sm:$0xff] %v4435
        %4468 = vst [vmem:[#allocation3 + $0xc8] sm:$0xff] %v4436
        %4469 = vst [vmem:[#allocation3 + $0xd0] sm:$0xff] %v4437
        %4470 = vst [vmem:[#allocation3 + $0xd8] sm:$0xff] %v4438
        %4471 = vst [vmem:[#allocation3 + $0xe0] sm:$0xff] %v4439
        %4472 = vst [vmem:[#allocation3 + $0xe8] sm:$0xff] %v4440
        %4473 = vst [vmem:[#allocation3 + $0xf0] sm:$0xff] %v4441
        %4474 = vst [vmem:[#allocation3 + $0xf8] sm:$0xff] %v4442
        %v4475 = vld [vmem:[#allocation4] sm:$0xff]
        %v4476 = vld [vmem:[#allocation4 + $0x8] sm:$0xff]
        %v4477 = vld [vmem:[#allocation4 + $0x10] sm:$0xff]
        %v4478 = vld [vmem:[#allocation4 + $0x18] sm:$0xff]
        %v4479 = vld [vmem:[#allocation4 + $0x20] sm:$0xff]
        %v4480 = vld [vmem:[#allocation4 + $0x28] sm:$0xff]
        %v4481 = vld [vmem:[#allocation4 + $0x30] sm:$0xff]
        %v4482 = vld [vmem:[#allocation4 + $0x38] sm:$0xff]
        %v4483 = vld [vmem:[#allocation4 + $0x40] sm:$0xff]
        %v4484 = vld [vmem:[#allocation4 + $0x48] sm:$0xff]
        %v4485 = vld [vmem:[#allocation4 + $0x50] sm:$0xff]
        %v4486 = vld [vmem:[#allocation4 + $0x58] sm:$0xff]
        %v4487 = vld [vmem:[#allocation4 + $0x60] sm:$0xff]
        %v4488 = vld [vmem:[#allocation4 + $0x68] sm:$0xff]
        %v4489 = vld [vmem:[#allocation4 + $0x70] sm:$0xff]
        %v4490 = vld [vmem:[#allocation4 + $0x78] sm:$0xff]
        %v4491 = vld [vmem:[#allocation4 + $0x80] sm:$0xff]
        %v4492 = vld [vmem:[#allocation4 + $0x88] sm:$0xff]
        %v4493 = vld [vmem:[#allocation4 + $0x90] sm:$0xff]
        %v4494 = vld [vmem:[#allocation4 + $0x98] sm:$0xff]
        %v4495 = vld [vmem:[#allocation4 + $0xa0] sm:$0xff]
        %v4496 = vld [vmem:[#allocation4 + $0xa8] sm:$0xff]
        %v4497 = vld [vmem:[#allocation4 + $0xb0] sm:$0xff]
        %v4498 = vld [vmem:[#allocation4 + $0xb8] sm:$0xff]
        %v4499 = vld [vmem:[#allocation4 + $0xc0] sm:$0xff]
        %v4500 = vld [vmem:[#allocation4 + $0xc8] sm:$0xff]
        %v4501 = vld [vmem:[#allocation4 + $0xd0] sm:$0xff]
        %v4502 = vld [vmem:[#allocation4 + $0xd8] sm:$0xff]
        %v4503 = vld [vmem:[#allocation4 + $0xe0] sm:$0xff]
        %v4504 = vld [vmem:[#allocation4 + $0xe8] sm:$0xff]
        %v4505 = vld [vmem:[#allocation4 + $0xf0] sm:$0xff]
        %v4506 = vld [vmem:[#allocation4 + $0xf8] sm:$0xff]
        %v4507 = vadd.f32 %v4475, %v4172
        %v4508 = vadd.f32 %v4476, %v4174
        %v4509 = vadd.f32 %v4477, %v4245
        %v4510 = vadd.f32 %v4478, %v4247
        %v4511 = vadd.f32 %v4479, %v4176
        %v4512 = vadd.f32 %v4480, %v4178
        %v4513 = vadd.f32 %v4481, %v4249
        %v4514 = vadd.f32 %v4482, %v4251
        %v4515 = vadd.f32 %v4483, %v4182
        %v4516 = vadd.f32 %v4484, %v4184
        %v4517 = vadd.f32 %v4485, %v4255
        %v4518 = vadd.f32 %v4486, %v4257
        %v4519 = vadd.f32 %v4487, %v4186
        %v4520 = vadd.f32 %v4488, %v4188
        %v4521 = vadd.f32 %v4489, %v4259
        %v4522 = vadd.f32 %v4490, %v4261
        %v4523 = vadd.f32 %v4491, %v4192
        %v4524 = vadd.f32 %v4492, %v4194
        %v4525 = vadd.f32 %v4493, %v4265
        %v4526 = vadd.f32 %v4494, %v4267
        %v4527 = vadd.f32 %v4495, %v4196
        %v4528 = vadd.f32 %v4496, %v4198
        %v4529 = vadd.f32 %v4497, %v4269
        %v4530 = vadd.f32 %v4498, %v4271
        %v4531 = vadd.f32 %v4499, %v4202
        %v4532 = vadd.f32 %v4500, %v4204
        %v4533 = vadd.f32 %v4501, %v4275
        %v4534 = vadd.f32 %v4502, %v4277
        %v4535 = vadd.f32 %v4503, %v4206
        %v4536 = vadd.f32 %v4504, %v4208
        %v4537 = vadd.f32 %v4505, %v4279
        %v4538 = vadd.f32 %v4506, %v4281
        %4539 = vst [vmem:[#allocation4] sm:$0xff] %v4507
        %4540 = vst [vmem:[#allocation4 + $0x8] sm:$0xff] %v4508
        %4541 = vst [vmem:[#allocation4 + $0x10] sm:$0xff] %v4509
        %4542 = vst [vmem:[#allocation4 + $0x18] sm:$0xff] %v4510
        %4543 = vst [vmem:[#allocation4 + $0x20] sm:$0xff] %v4511
        %4544 = vst [vmem:[#allocation4 + $0x28] sm:$0xff] %v4512
        %4545 = vst [vmem:[#allocation4 + $0x30] sm:$0xff] %v4513
        %4546 = vst [vmem:[#allocation4 + $0x38] sm:$0xff] %v4514
        %4547 = vst [vmem:[#allocation4 + $0x40] sm:$0xff] %v4515
        %4548 = vst [vmem:[#allocation4 + $0x48] sm:$0xff] %v4516
        %4549 = vst [vmem:[#allocation4 + $0x50] sm:$0xff] %v4517
        %4550 = vst [vmem:[#allocation4 + $0x58] sm:$0xff] %v4518
        %4551 = vst [vmem:[#allocation4 + $0x60] sm:$0xff] %v4519
        %4552 = vst [vmem:[#allocation4 + $0x68] sm:$0xff] %v4520
        %4553 = vst [vmem:[#allocation4 + $0x70] sm:$0xff] %v4521
        %4554 = vst [vmem:[#allocation4 + $0x78] sm:$0xff] %v4522
        %4555 = vst [vmem:[#allocation4 + $0x80] sm:$0xff] %v4523
        %4556 = vst [vmem:[#allocation4 + $0x88] sm:$0xff] %v4524
        %4557 = vst [vmem:[#allocation4 + $0x90] sm:$0xff] %v4525
        %4558 = vst [vmem:[#allocation4 + $0x98] sm:$0xff] %v4526
        %4559 = vst [vmem:[#allocation4 + $0xa0] sm:$0xff] %v4527
        %4560 = vst [vmem:[#allocation4 + $0xa8] sm:$0xff] %v4528
        %4561 = vst [vmem:[#allocation4 + $0xb0] sm:$0xff] %v4529
        %4562 = vst [vmem:[#allocation4 + $0xb8] sm:$0xff] %v4530
        %4563 = vst [vmem:[#allocation4 + $0xc0] sm:$0xff] %v4531
        %4564 = vst [vmem:[#allocation4 + $0xc8] sm:$0xff] %v4532
        %4565 = vst [vmem:[#allocation4 + $0xd0] sm:$0xff] %v4533
        %4566 = vst [vmem:[#allocation4 + $0xd8] sm:$0xff] %v4534
        %4567 = vst [vmem:[#allocation4 + $0xe0] sm:$0xff] %v4535
        %4568 = vst [vmem:[#allocation4 + $0xe8] sm:$0xff] %v4536
        %4569 = vst [vmem:[#allocation4 + $0xf0] sm:$0xff] %v4537
        %4570 = vst [vmem:[#allocation4 + $0xf8] sm:$0xff] %v4538
        %v4571 = vlaneseq
        %v4572 = vshrl.u32 %v4571, 7
        %v4573 = vsub.s32 0, %v4572
        %v4574 = vrot.slane %v510, %v4573
        %v4575 = vlaneseq
        %v4576 = vshrl.u32 %v4575, 7
        %v4577 = vsub.s32 0, %v4576
        %v4578 = vrot.slane %v511, %v4577
        %v4579 = vlaneseq
        %v4580 = vshrl.u32 %v4579, 7
        %v4581 = vsub.s32 0, %v4580
        %v4582 = vrot.slane %v512, %v4581
        %v4583 = vlaneseq
        %v4584 = vshrl.u32 %v4583, 7
        %v4585 = vsub.s32 0, %v4584
        %v4586 = vrot.slane %v513, %v4585
        %v4587 = vlaneseq
        %v4588 = vshrl.u32 %v4587, 7
        %v4589 = vsub.s32 1, %v4588
        %v4590 = vrot.slane %v510, %v4589
        %v4591 = vlaneseq
        %v4592 = vshrl.u32 %v4591, 7
        %v4593 = vsub.s32 1, %v4592
        %v4594 = vrot.slane %v511, %v4593
        %v4595 = vlaneseq
        %v4596 = vshrl.u32 %v4595, 7
        %v4597 = vsub.s32 1, %v4596
        %v4598 = vrot.slane %v512, %v4597
        %v4599 = vlaneseq
        %v4600 = vshrl.u32 %v4599, 7
        %v4601 = vsub.s32 1, %v4600
        %v4602 = vrot.slane %v513, %v4601
        %v4603 = vlaneseq
        %v4604 = vshrl.u32 %v4603, 7
        %v4605 = vsub.s32 2, %v4604
        %v4606 = vrot.slane %v510, %v4605
        %v4607 = vlaneseq
        %v4608 = vshrl.u32 %v4607, 7
        %v4609 = vsub.s32 2, %v4608
        %v4610 = vrot.slane %v511, %v4609
        %v4611 = vlaneseq
        %v4612 = vshrl.u32 %v4611, 7
        %v4613 = vsub.s32 2, %v4612
        %v4614 = vrot.slane %v512, %v4613
        %v4615 = vlaneseq
        %v4616 = vshrl.u32 %v4615, 7
        %v4617 = vsub.s32 2, %v4616
        %v4618 = vrot.slane %v513, %v4617
        %v4619 = vlaneseq
        %v4620 = vshrl.u32 %v4619, 7
        %v4621 = vsub.s32 3, %v4620
        %v4622 = vrot.slane %v510, %v4621
        %v4623 = vlaneseq
        %v4624 = vshrl.u32 %v4623, 7
        %v4625 = vsub.s32 3, %v4624
        %v4626 = vrot.slane %v511, %v4625
        %v4627 = vlaneseq
        %v4628 = vshrl.u32 %v4627, 7
        %v4629 = vsub.s32 3, %v4628
        %v4630 = vrot.slane %v512, %v4629
        %v4631 = vlaneseq
        %v4632 = vshrl.u32 %v4631, 7
        %v4633 = vsub.s32 3, %v4632
        %v4634 = vrot.slane %v513, %v4633
        %v4635 = vlaneseq
        %v4636 = vshrl.u32 %v4635, 7
        %v4637 = vsub.s32 4, %v4636
        %v4638 = vrot.slane %v510, %v4637
        %v4639 = vlaneseq
        %v4640 = vshrl.u32 %v4639, 7
        %v4641 = vsub.s32 4, %v4640
        %v4642 = vrot.slane %v511, %v4641
        %v4643 = vlaneseq
        %v4644 = vshrl.u32 %v4643, 7
        %v4645 = vsub.s32 4, %v4644
        %v4646 = vrot.slane %v512, %v4645
        %v4647 = vlaneseq
        %v4648 = vshrl.u32 %v4647, 7
        %v4649 = vsub.s32 4, %v4648
        %v4650 = vrot.slane %v513, %v4649
        %v4651 = vlaneseq
        %v4652 = vshrl.u32 %v4651, 7
        %v4653 = vsub.s32 5, %v4652
        %v4654 = vrot.slane %v510, %v4653
        %v4655 = vlaneseq
        %v4656 = vshrl.u32 %v4655, 7
        %v4657 = vsub.s32 5, %v4656
        %v4658 = vrot.slane %v511, %v4657
        %v4659 = vlaneseq
        %v4660 = vshrl.u32 %v4659, 7
        %v4661 = vsub.s32 5, %v4660
        %v4662 = vrot.slane %v512, %v4661
        %v4663 = vlaneseq
        %v4664 = vshrl.u32 %v4663, 7
        %v4665 = vsub.s32 5, %v4664
        %v4666 = vrot.slane %v513, %v4665
        %v4667 = vlaneseq
        %v4668 = vshrl.u32 %v4667, 7
        %v4669 = vsub.s32 6, %v4668
        %v4670 = vrot.slane %v510, %v4669
        %v4671 = vlaneseq
        %v4672 = vshrl.u32 %v4671, 7
        %v4673 = vsub.s32 6, %v4672
        %v4674 = vrot.slane %v511, %v4673
        %v4675 = vlaneseq
        %v4676 = vshrl.u32 %v4675, 7
        %v4677 = vsub.s32 6, %v4676
        %v4678 = vrot.slane %v512, %v4677
        %v4679 = vlaneseq
        %v4680 = vshrl.u32 %v4679, 7
        %v4681 = vsub.s32 6, %v4680
        %v4682 = vrot.slane %v513, %v4681
        %v4683 = vlaneseq
        %v4684 = vshrl.u32 %v4683, 7
        %v4685 = vsub.s32 7, %v4684
        %v4686 = vrot.slane %v510, %v4685
        %v4687 = vlaneseq
        %v4688 = vshrl.u32 %v4687, 7
        %v4689 = vsub.s32 7, %v4688
        %v4690 = vrot.slane %v511, %v4689
        %v4691 = vlaneseq
        %v4692 = vshrl.u32 %v4691, 7
        %v4693 = vsub.s32 7, %v4692
        %v4694 = vrot.slane %v512, %v4693
        %v4695 = vlaneseq
        %v4696 = vshrl.u32 %v4695, 7
        %v4697 = vsub.s32 7, %v4696
        %v4698 = vrot.slane %v513, %v4697
        %v4699 = vpack.c.bf16 %v4574, %v4574
        %v4700 = vpack.c.bf16 %v4578, %v4578
        %v4701 = vpack.c.bf16 %v4582, %v4582
        %v4702 = vpack.c.bf16 %v4586, %v4586
        %v4703 = vpack.c.bf16 %v4590, %v4590
        %v4704 = vpack.c.bf16 %v4594, %v4594
        %v4705 = vpack.c.bf16 %v4598, %v4598
        %v4706 = vpack.c.bf16 %v4602, %v4602
        %v4707 = vpack.c.bf16 %v4606, %v4606
        %v4708 = vpack.c.bf16 %v4610, %v4610
        %v4709 = vpack.c.bf16 %v4614, %v4614
        %v4710 = vpack.c.bf16 %v4618, %v4618
        %v4711 = vpack.c.bf16 %v4622, %v4622
        %v4712 = vpack.c.bf16 %v4626, %v4626
        %v4713 = vpack.c.bf16 %v4630, %v4630
        %v4714 = vpack.c.bf16 %v4634, %v4634
        %v4715 = vpack.c.bf16 %v4638, %v4638
        %v4716 = vpack.c.bf16 %v4642, %v4642
        %v4717 = vpack.c.bf16 %v4646, %v4646
        %v4718 = vpack.c.bf16 %v4650, %v4650
        %v4719 = vpack.c.bf16 %v4654, %v4654
        %v4720 = vpack.c.bf16 %v4658, %v4658
        %v4721 = vpack.c.bf16 %v4662, %v4662
        %v4722 = vpack.c.bf16 %v4666, %v4666
        %v4723 = vpack.c.bf16 %v4670, %v4670
        %v4724 = vpack.c.bf16 %v4674, %v4674
        %v4725 = vpack.c.bf16 %v4678, %v4678
        %v4726 = vpack.c.bf16 %v4682, %v4682
        %v4727 = vpack.c.bf16 %v4686, %v4686
        %v4728 = vpack.c.bf16 %v4690, %v4690
        %v4729 = vpack.c.bf16 %v4694, %v4694
        %v4730 = vpack.c.bf16 %v4698, %v4698
        %v4731 = vlaneseq
        %v4732 = vshrl.u32 %v4731, 7
        %v4733 = vsub.s32 0, %v4732
        %v4734 = vrot.slane %v595, %v4733
        %v4735 = vlaneseq
        %v4736 = vshrl.u32 %v4735, 7
        %v4737 = vsub.s32 0, %v4736
        %v4738 = vrot.slane %v596, %v4737
        %v4739 = vlaneseq
        %v4740 = vshrl.u32 %v4739, 7
        %v4741 = vsub.s32 0, %v4740
        %v4742 = vrot.slane %v597, %v4741
        %v4743 = vlaneseq
        %v4744 = vshrl.u32 %v4743, 7
        %v4745 = vsub.s32 0, %v4744
        %v4746 = vrot.slane %v598, %v4745
        %v4747 = vlaneseq
        %v4748 = vshrl.u32 %v4747, 7
        %v4749 = vsub.s32 1, %v4748
        %v4750 = vrot.slane %v595, %v4749
        %v4751 = vlaneseq
        %v4752 = vshrl.u32 %v4751, 7
        %v4753 = vsub.s32 1, %v4752
        %v4754 = vrot.slane %v596, %v4753
        %v4755 = vlaneseq
        %v4756 = vshrl.u32 %v4755, 7
        %v4757 = vsub.s32 1, %v4756
        %v4758 = vrot.slane %v597, %v4757
        %v4759 = vlaneseq
        %v4760 = vshrl.u32 %v4759, 7
        %v4761 = vsub.s32 1, %v4760
        %v4762 = vrot.slane %v598, %v4761
        %v4763 = vlaneseq
        %v4764 = vshrl.u32 %v4763, 7
        %v4765 = vsub.s32 2, %v4764
        %v4766 = vrot.slane %v595, %v4765
        %v4767 = vlaneseq
        %v4768 = vshrl.u32 %v4767, 7
        %v4769 = vsub.s32 2, %v4768
        %v4770 = vrot.slane %v596, %v4769
        %v4771 = vlaneseq
        %v4772 = vshrl.u32 %v4771, 7
        %v4773 = vsub.s32 2, %v4772
        %v4774 = vrot.slane %v597, %v4773
        %v4775 = vlaneseq
        %v4776 = vshrl.u32 %v4775, 7
        %v4777 = vsub.s32 2, %v4776
        %v4778 = vrot.slane %v598, %v4777
        %v4779 = vlaneseq
        %v4780 = vshrl.u32 %v4779, 7
        %v4781 = vsub.s32 3, %v4780
        %v4782 = vrot.slane %v595, %v4781
        %v4783 = vlaneseq
        %v4784 = vshrl.u32 %v4783, 7
        %v4785 = vsub.s32 3, %v4784
        %v4786 = vrot.slane %v596, %v4785
        %v4787 = vlaneseq
        %v4788 = vshrl.u32 %v4787, 7
        %v4789 = vsub.s32 3, %v4788
        %v4790 = vrot.slane %v597, %v4789
        %v4791 = vlaneseq
        %v4792 = vshrl.u32 %v4791, 7
        %v4793 = vsub.s32 3, %v4792
        %v4794 = vrot.slane %v598, %v4793
        %v4795 = vlaneseq
        %v4796 = vshrl.u32 %v4795, 7
        %v4797 = vsub.s32 4, %v4796
        %v4798 = vrot.slane %v595, %v4797
        %v4799 = vlaneseq
        %v4800 = vshrl.u32 %v4799, 7
        %v4801 = vsub.s32 4, %v4800
        %v4802 = vrot.slane %v596, %v4801
        %v4803 = vlaneseq
        %v4804 = vshrl.u32 %v4803, 7
        %v4805 = vsub.s32 4, %v4804
        %v4806 = vrot.slane %v597, %v4805
        %v4807 = vlaneseq
        %v4808 = vshrl.u32 %v4807, 7
        %v4809 = vsub.s32 4, %v4808
        %v4810 = vrot.slane %v598, %v4809
        %v4811 = vlaneseq
        %v4812 = vshrl.u32 %v4811, 7
        %v4813 = vsub.s32 5, %v4812
        %v4814 = vrot.slane %v595, %v4813
        %v4815 = vlaneseq
        %v4816 = vshrl.u32 %v4815, 7
        %v4817 = vsub.s32 5, %v4816
        %v4818 = vrot.slane %v596, %v4817
        %v4819 = vlaneseq
        %v4820 = vshrl.u32 %v4819, 7
        %v4821 = vsub.s32 5, %v4820
        %v4822 = vrot.slane %v597, %v4821
        %v4823 = vlaneseq
        %v4824 = vshrl.u32 %v4823, 7
        %v4825 = vsub.s32 5, %v4824
        %v4826 = vrot.slane %v598, %v4825
        %v4827 = vlaneseq
        %v4828 = vshrl.u32 %v4827, 7
        %v4829 = vsub.s32 6, %v4828
        %v4830 = vrot.slane %v595, %v4829
        %v4831 = vlaneseq
        %v4832 = vshrl.u32 %v4831, 7
        %v4833 = vsub.s32 6, %v4832
        %v4834 = vrot.slane %v596, %v4833
        %v4835 = vlaneseq
        %v4836 = vshrl.u32 %v4835, 7
        %v4837 = vsub.s32 6, %v4836
        %v4838 = vrot.slane %v597, %v4837
        %v4839 = vlaneseq
        %v4840 = vshrl.u32 %v4839, 7
        %v4841 = vsub.s32 6, %v4840
        %v4842 = vrot.slane %v598, %v4841
        %v4843 = vlaneseq
        %v4844 = vshrl.u32 %v4843, 7
        %v4845 = vsub.s32 7, %v4844
        %v4846 = vrot.slane %v595, %v4845
        %v4847 = vlaneseq
        %v4848 = vshrl.u32 %v4847, 7
        %v4849 = vsub.s32 7, %v4848
        %v4850 = vrot.slane %v596, %v4849
        %v4851 = vlaneseq
        %v4852 = vshrl.u32 %v4851, 7
        %v4853 = vsub.s32 7, %v4852
        %v4854 = vrot.slane %v597, %v4853
        %v4855 = vlaneseq
        %v4856 = vshrl.u32 %v4855, 7
        %v4857 = vsub.s32 7, %v4856
        %v4858 = vrot.slane %v598, %v4857
        %v4859 = vpack.c.bf16 %v4734, %v4734
        %v4860 = vpack.c.bf16 %v4738, %v4738
        %v4861 = vpack.c.bf16 %v4742, %v4742
        %v4862 = vpack.c.bf16 %v4746, %v4746
        %v4863 = vpack.c.bf16 %v4750, %v4750
        %v4864 = vpack.c.bf16 %v4754, %v4754
        %v4865 = vpack.c.bf16 %v4758, %v4758
        %v4866 = vpack.c.bf16 %v4762, %v4762
        %v4867 = vpack.c.bf16 %v4766, %v4766
        %v4868 = vpack.c.bf16 %v4770, %v4770
        %v4869 = vpack.c.bf16 %v4774, %v4774
        %v4870 = vpack.c.bf16 %v4778, %v4778
        %v4871 = vpack.c.bf16 %v4782, %v4782
        %v4872 = vpack.c.bf16 %v4786, %v4786
        %v4873 = vpack.c.bf16 %v4790, %v4790
        %v4874 = vpack.c.bf16 %v4794, %v4794
        %v4875 = vpack.c.bf16 %v4798, %v4798
        %v4876 = vpack.c.bf16 %v4802, %v4802
        %v4877 = vpack.c.bf16 %v4806, %v4806
        %v4878 = vpack.c.bf16 %v4810, %v4810
        %v4879 = vpack.c.bf16 %v4814, %v4814
        %v4880 = vpack.c.bf16 %v4818, %v4818
        %v4881 = vpack.c.bf16 %v4822, %v4822
        %v4882 = vpack.c.bf16 %v4826, %v4826
        %v4883 = vpack.c.bf16 %v4830, %v4830
        %v4884 = vpack.c.bf16 %v4834, %v4834
        %v4885 = vpack.c.bf16 %v4838, %v4838
        %v4886 = vpack.c.bf16 %v4842, %v4842
        %v4887 = vpack.c.bf16 %v4846, %v4846
        %v4888 = vpack.c.bf16 %v4850, %v4850
        %v4889 = vpack.c.bf16 %v4854, %v4854
        %v4890 = vpack.c.bf16 %v4858, %v4858
        %v4891 = vmul.bf16 %v4699, %v599
        %v4892 = vmul.bf16 %v4700, %v600
        %v4893 = vmul.bf16 %v4701, %v601
        %v4894 = vmul.bf16 %v4702, %v602
        %v4895 = vmul.bf16 %v4699, %v603
        %v4896 = vmul.bf16 %v4700, %v604
        %v4897 = vmul.bf16 %v4701, %v605
        %v4898 = vmul.bf16 %v4702, %v606
        %v4899 = vmul.bf16 %v4703, %v599
        %v4900 = vmul.bf16 %v4704, %v600
        %v4901 = vmul.bf16 %v4705, %v601
        %v4902 = vmul.bf16 %v4706, %v602
        %v4903 = vmul.bf16 %v4703, %v603
        %v4904 = vmul.bf16 %v4704, %v604
        %v4905 = vmul.bf16 %v4705, %v605
        %v4906 = vmul.bf16 %v4706, %v606
        %v4907 = vmul.bf16 %v4707, %v599
        %v4908 = vmul.bf16 %v4708, %v600
        %v4909 = vmul.bf16 %v4709, %v601
        %v4910 = vmul.bf16 %v4710, %v602
        %v4911 = vmul.bf16 %v4707, %v603
        %v4912 = vmul.bf16 %v4708, %v604
        %v4913 = vmul.bf16 %v4709, %v605
        %v4914 = vmul.bf16 %v4710, %v606
        %v4915 = vmul.bf16 %v4711, %v599
        %v4916 = vmul.bf16 %v4712, %v600
        %v4917 = vmul.bf16 %v4713, %v601
        %v4918 = vmul.bf16 %v4714, %v602
        %v4919 = vmul.bf16 %v4711, %v603
        %v4920 = vmul.bf16 %v4712, %v604
        %v4921 = vmul.bf16 %v4713, %v605
        %v4922 = vmul.bf16 %v4714, %v606
        %v4923 = vmul.bf16 %v4715, %v599
        %v4924 = vmul.bf16 %v4716, %v600
        %v4925 = vmul.bf16 %v4717, %v601
        %v4926 = vmul.bf16 %v4718, %v602
        %v4927 = vmul.bf16 %v4715, %v603
        %v4928 = vmul.bf16 %v4716, %v604
        %v4929 = vmul.bf16 %v4717, %v605
        %v4930 = vmul.bf16 %v4718, %v606
        %v4931 = vmul.bf16 %v4719, %v599
        %v4932 = vmul.bf16 %v4720, %v600
        %v4933 = vmul.bf16 %v4721, %v601
        %v4934 = vmul.bf16 %v4722, %v602
        %v4935 = vmul.bf16 %v4719, %v603
        %v4936 = vmul.bf16 %v4720, %v604
        %v4937 = vmul.bf16 %v4721, %v605
        %v4938 = vmul.bf16 %v4722, %v606
        %v4939 = vmul.bf16 %v4723, %v599
        %v4940 = vmul.bf16 %v4724, %v600
        %v4941 = vmul.bf16 %v4725, %v601
        %v4942 = vmul.bf16 %v4726, %v602
        %v4943 = vmul.bf16 %v4723, %v603
        %v4944 = vmul.bf16 %v4724, %v604
        %v4945 = vmul.bf16 %v4725, %v605
        %v4946 = vmul.bf16 %v4726, %v606
        %v4947 = vmul.bf16 %v4727, %v599
        %v4948 = vmul.bf16 %v4728, %v600
        %v4949 = vmul.bf16 %v4729, %v601
        %v4950 = vmul.bf16 %v4730, %v602
        %v4951 = vmul.bf16 %v4727, %v603
        %v4952 = vmul.bf16 %v4728, %v604
        %v4953 = vmul.bf16 %v4729, %v605
        %v4954 = vmul.bf16 %v4730, %v606
        %v4955 = vmul.bf16 %v4859, %v607
        %v4956 = vmul.bf16 %v4860, %v608
        %v4957 = vmul.bf16 %v4861, %v609
        %v4958 = vmul.bf16 %v4862, %v610
        %v4959 = vmul.bf16 %v4859, %v611
        %v4960 = vmul.bf16 %v4860, %v612
        %v4961 = vmul.bf16 %v4861, %v613
        %v4962 = vmul.bf16 %v4862, %v614
        %v4963 = vmul.bf16 %v4863, %v607
        %v4964 = vmul.bf16 %v4864, %v608
        %v4965 = vmul.bf16 %v4865, %v609
        %v4966 = vmul.bf16 %v4866, %v610
        %v4967 = vmul.bf16 %v4863, %v611
        %v4968 = vmul.bf16 %v4864, %v612
        %v4969 = vmul.bf16 %v4865, %v613
        %v4970 = vmul.bf16 %v4866, %v614
        %v4971 = vmul.bf16 %v4867, %v607
        %v4972 = vmul.bf16 %v4868, %v608
        %v4973 = vmul.bf16 %v4869, %v609
        %v4974 = vmul.bf16 %v4870, %v610
        %v4975 = vmul.bf16 %v4867, %v611
        %v4976 = vmul.bf16 %v4868, %v612
        %v4977 = vmul.bf16 %v4869, %v613
        %v4978 = vmul.bf16 %v4870, %v614
        %v4979 = vmul.bf16 %v4871, %v607
        %v4980 = vmul.bf16 %v4872, %v608
        %v4981 = vmul.bf16 %v4873, %v609
        %v4982 = vmul.bf16 %v4874, %v610
        %v4983 = vmul.bf16 %v4871, %v611
        %v4984 = vmul.bf16 %v4872, %v612
        %v4985 = vmul.bf16 %v4873, %v613
        %v4986 = vmul.bf16 %v4874, %v614
        %v4987 = vmul.bf16 %v4875, %v607
        %v4988 = vmul.bf16 %v4876, %v608
        %v4989 = vmul.bf16 %v4877, %v609
        %v4990 = vmul.bf16 %v4878, %v610
        %v4991 = vmul.bf16 %v4875, %v611
        %v4992 = vmul.bf16 %v4876, %v612
        %v4993 = vmul.bf16 %v4877, %v613
        %v4994 = vmul.bf16 %v4878, %v614
        %v4995 = vmul.bf16 %v4879, %v607
        %v4996 = vmul.bf16 %v4880, %v608
        %v4997 = vmul.bf16 %v4881, %v609
        %v4998 = vmul.bf16 %v4882, %v610
        %v4999 = vmul.bf16 %v4879, %v611
        %v5000 = vmul.bf16 %v4880, %v612
        %v5001 = vmul.bf16 %v4881, %v613
        %v5002 = vmul.bf16 %v4882, %v614
        %v5003 = vmul.bf16 %v4883, %v607
        %v5004 = vmul.bf16 %v4884, %v608
        %v5005 = vmul.bf16 %v4885, %v609
        %v5006 = vmul.bf16 %v4886, %v610
        %v5007 = vmul.bf16 %v4883, %v611
        %v5008 = vmul.bf16 %v4884, %v612
        %v5009 = vmul.bf16 %v4885, %v613
        %v5010 = vmul.bf16 %v4886, %v614
        %v5011 = vmul.bf16 %v4887, %v607
        %v5012 = vmul.bf16 %v4888, %v608
        %v5013 = vmul.bf16 %v4889, %v609
        %v5014 = vmul.bf16 %v4890, %v610
        %v5015 = vmul.bf16 %v4887, %v611
        %v5016 = vmul.bf16 %v4888, %v612
        %v5017 = vmul.bf16 %v4889, %v613
        %v5018 = vmul.bf16 %v4890, %v614
        %v5019 = vmul.bf16 %v4859, %v599
        %v5020 = vmul.bf16 %v4860, %v600
        %v5021 = vmul.bf16 %v4861, %v601
        %v5022 = vmul.bf16 %v4862, %v602
        %v5023 = vmul.bf16 %v4859, %v603
        %v5024 = vmul.bf16 %v4860, %v604
        %v5025 = vmul.bf16 %v4861, %v605
        %v5026 = vmul.bf16 %v4862, %v606
        %v5027 = vmul.bf16 %v4863, %v599
        %v5028 = vmul.bf16 %v4864, %v600
        %v5029 = vmul.bf16 %v4865, %v601
        %v5030 = vmul.bf16 %v4866, %v602
        %v5031 = vmul.bf16 %v4863, %v603
        %v5032 = vmul.bf16 %v4864, %v604
        %v5033 = vmul.bf16 %v4865, %v605
        %v5034 = vmul.bf16 %v4866, %v606
        %v5035 = vmul.bf16 %v4867, %v599
        %v5036 = vmul.bf16 %v4868, %v600
        %v5037 = vmul.bf16 %v4869, %v601
        %v5038 = vmul.bf16 %v4870, %v602
        %v5039 = vmul.bf16 %v4867, %v603
        %v5040 = vmul.bf16 %v4868, %v604
        %v5041 = vmul.bf16 %v4869, %v605
        %v5042 = vmul.bf16 %v4870, %v606
        %v5043 = vmul.bf16 %v4871, %v599
        %v5044 = vmul.bf16 %v4872, %v600
        %v5045 = vmul.bf16 %v4873, %v601
        %v5046 = vmul.bf16 %v4874, %v602
        %v5047 = vmul.bf16 %v4871, %v603
        %v5048 = vmul.bf16 %v4872, %v604
        %v5049 = vmul.bf16 %v4873, %v605
        %v5050 = vmul.bf16 %v4874, %v606
        %v5051 = vmul.bf16 %v4875, %v599
        %v5052 = vmul.bf16 %v4876, %v600
        %v5053 = vmul.bf16 %v4877, %v601
        %v5054 = vmul.bf16 %v4878, %v602
        %v5055 = vmul.bf16 %v4875, %v603
        %v5056 = vmul.bf16 %v4876, %v604
        %v5057 = vmul.bf16 %v4877, %v605
        %v5058 = vmul.bf16 %v4878, %v606
        %v5059 = vmul.bf16 %v4879, %v599
        %v5060 = vmul.bf16 %v4880, %v600
        %v5061 = vmul.bf16 %v4881, %v601
        %v5062 = vmul.bf16 %v4882, %v602
        %v5063 = vmul.bf16 %v4879, %v603
        %v5064 = vmul.bf16 %v4880, %v604
        %v5065 = vmul.bf16 %v4881, %v605
        %v5066 = vmul.bf16 %v4882, %v606
        %v5067 = vmul.bf16 %v4883, %v599
        %v5068 = vmul.bf16 %v4884, %v600
        %v5069 = vmul.bf16 %v4885, %v601
        %v5070 = vmul.bf16 %v4886, %v602
        %v5071 = vmul.bf16 %v4883, %v603
        %v5072 = vmul.bf16 %v4884, %v604
        %v5073 = vmul.bf16 %v4885, %v605
        %v5074 = vmul.bf16 %v4886, %v606
        %v5075 = vmul.bf16 %v4887, %v599
        %v5076 = vmul.bf16 %v4888, %v600
        %v5077 = vmul.bf16 %v4889, %v601
        %v5078 = vmul.bf16 %v4890, %v602
        %v5079 = vmul.bf16 %v4887, %v603
        %v5080 = vmul.bf16 %v4888, %v604
        %v5081 = vmul.bf16 %v4889, %v605
        %v5082 = vmul.bf16 %v4890, %v606
        %v5083 = vld [vmem:[#allocation6 + $0x18] sm:$0xff]
        %v5084 = vld [vmem:[#allocation6 + $0x38] sm:$0xff]
        %v5085 = vld [vmem:[#allocation6 + $0x58] sm:$0xff]
        %v5086 = vld [vmem:[#allocation6 + $0x78] sm:$0xff]
        %v5087 = vld [vmem:[#allocation6 + $0x98] sm:$0xff]
        %v5088 = vld [vmem:[#allocation6 + $0xb8] sm:$0xff]
        %v5089 = vld [vmem:[#allocation6 + $0xd8] sm:$0xff]
        %v5090 = vld [vmem:[#allocation6 + $0xf8] sm:$0xff]
        %v5099 = vunpack.c.l.b16 %v5083
        %v5100 = vunpack.c.h.b16 %v5083
        %v5101 = vunpack.c.l.b16 %v5084
        %v5102 = vunpack.c.h.b16 %v5084
        %v5103 = vunpack.c.l.b16 %v5085
        %v5104 = vunpack.c.h.b16 %v5085
        %v5105 = vunpack.c.l.b16 %v5086
        %v5106 = vunpack.c.h.b16 %v5086
        %v5107 = vunpack.c.l.b16 %v5087
        %v5108 = vunpack.c.h.b16 %v5087
        %v5109 = vunpack.c.l.b16 %v5088
        %v5110 = vunpack.c.h.b16 %v5088
        %v5111 = vunpack.c.l.b16 %v5089
        %v5112 = vunpack.c.h.b16 %v5089
        %v5113 = vunpack.c.l.b16 %v5090
        %v5114 = vunpack.c.h.b16 %v5090
        %v5115 = vpack.c.b16 %v5101, %v5099
        %v5116 = vpack.c.b16 %v5102, %v5100
        %v5117 = vpack.c.b16 %v5105, %v5103
        %v5118 = vpack.c.b16 %v5106, %v5104
        %v5119 = vpack.c.b16 %v5109, %v5107
        %v5120 = vpack.c.b16 %v5110, %v5108
        %v5121 = vpack.c.b16 %v5113, %v5111
        %v5122 = vpack.c.b16 %v5114, %v5112
        %5131 = vmatprep.subr.bf16.mxu0 %v4892
        %5132 = vmatpush1.bf16.msra.mxu0 %v4891
        %5133 = vmatprep.subr.bf16.mxu0 %v4896
        %5134 = vmatpush1.bf16.msra.mxu0 %v4895
        %5135 = vmatprep.subr.bf16.mxu0 %v4900
        %5136 = vmatpush1.bf16.msra.mxu0 %v4899
        %5137 = vmatprep.subr.bf16.mxu0 %v4904
        %5138 = vmatpush1.bf16.msra.mxu0 %v4903
        %5139 = vmatprep.subr.bf16.mxu0 %v4908
        %5140 = vmatpush1.bf16.msra.mxu0 %v4907
        %5141 = vmatprep.subr.bf16.mxu0 %v4912
        %5142 = vmatpush1.bf16.msra.mxu0 %v4911
        %5143 = vmatprep.subr.bf16.mxu0 %v4916
        %5144 = vmatpush1.bf16.msra.mxu0 %v4915
        %5145 = vmatprep.subr.bf16.mxu0 %v4920
        %5146 = vmatpush1.bf16.msra.mxu0 %v4919
        %5147 = vmatprep.subr.bf16.mxu0 %v4924
        %5148 = vmatpush1.bf16.msra.mxu0 %v4923
        %5149 = vmatprep.subr.bf16.mxu0 %v4928
        %5150 = vmatpush1.bf16.msra.mxu0 %v4927
        %5151 = vmatprep.subr.bf16.mxu0 %v4932
        %5152 = vmatpush1.bf16.msra.mxu0 %v4931
        %5153 = vmatprep.subr.bf16.mxu0 %v4936
        %5154 = vmatpush1.bf16.msra.mxu0 %v4935
        %5155 = vmatprep.subr.bf16.mxu0 %v4940
        %5156 = vmatpush1.bf16.msra.mxu0 %v4939
        %5157 = vmatprep.subr.bf16.mxu0 %v4944
        %5158 = vmatpush1.bf16.msra.mxu0 %v4943
        %5159 = vmatprep.subr.bf16.mxu0 %v4948
        %5160 = vmatpush1.bf16.msra.mxu0 %v4947
        %5161 = vmatprep.subr.bf16.mxu0 %v4952
        %5162 = vmatpush1.bf16.msra.mxu0 %v4951
        %5163 = vmatprep.mubr.bf16.mxu0 %v5116
        %5164 = vmatmul.mubr.bf16.gmra.mrb[0].mxu0 %v5115
        %v5165 = vpop.f32.mrb[0].mxu0
        %v5166 = vadd.f32 0.0, %v5165
        %v5167 = vpop.f32.mrb[0].mxu0
        %v5168 = vadd.f32 0.0, %v5167
        %v5169 = vpop.f32.mrb[0].mxu0
        %v5170 = vadd.f32 0.0, %v5169
        %v5171 = vpop.f32.mrb[0].mxu0
        %v5172 = vadd.f32 0.0, %v5171
        %5173 = vmatprep.mubr.bf16.mxu0 %v5118
        %5174 = vmatmul.mubr.bf16.gmra.mrb[0].mxu0 %v5117
        %v5175 = vpop.f32.mrb[0].mxu0
        %v5176 = vadd.f32 0.0, %v5175
        %v5177 = vpop.f32.mrb[0].mxu0
        %v5178 = vadd.f32 0.0, %v5177
        %v5179 = vpop.f32.mrb[0].mxu0
        %v5180 = vadd.f32 0.0, %v5179
        %v5181 = vpop.f32.mrb[0].mxu0
        %v5182 = vadd.f32 0.0, %v5181
        %5183 = vmatprep.mubr.bf16.mxu0 %v5120
        %5184 = vmatmul.mubr.bf16.gmra.mrb[0].mxu0 %v5119
        %v5185 = vpop.f32.mrb[0].mxu0
        %v5186 = vadd.f32 0.0, %v5185
        %v5187 = vpop.f32.mrb[0].mxu0
        %v5188 = vadd.f32 0.0, %v5187
        %v5189 = vpop.f32.mrb[0].mxu0
        %v5190 = vadd.f32 0.0, %v5189
        %v5191 = vpop.f32.mrb[0].mxu0
        %v5192 = vadd.f32 0.0, %v5191
        %5193 = vmatprep.mubr.bf16.mxu0 %v5122
        %5194 = vmatmul.mubr.bf16.gmra.mrb[0].mxu0 %v5121
        %v5195 = vpop.f32.mrb[0].mxu0
        %v5196 = vadd.f32 0.0, %v5195
        %v5197 = vpop.f32.mrb[0].mxu0
        %v5198 = vadd.f32 0.0, %v5197
        %v5199 = vpop.f32.mrb[0].mxu0
        %v5200 = vadd.f32 0.0, %v5199
        %v5201 = vpop.f32.mrb[0].mxu0
        %v5202 = vadd.f32 0.0, %v5201
        %5203 = vdwg.mxu0
        %5204 = vmatprep.subr.bf16.mxu0 %v4894
        %5205 = vmatpush1.bf16.msra.mxu0 %v4893
        %5206 = vmatprep.subr.bf16.mxu0 %v4898
        %5207 = vmatpush1.bf16.msra.mxu0 %v4897
        %5208 = vmatprep.subr.bf16.mxu0 %v4902
        %5209 = vmatpush1.bf16.msra.mxu0 %v4901
        %5210 = vmatprep.subr.bf16.mxu0 %v4906
        %5211 = vmatpush1.bf16.msra.mxu0 %v4905
        %5212 = vmatprep.subr.bf16.mxu0 %v4910
        %5213 = vmatpush1.bf16.msra.mxu0 %v4909
        %5214 = vmatprep.subr.bf16.mxu0 %v4914
        %5215 = vmatpush1.bf16.msra.mxu0 %v4913
        %5216 = vmatprep.subr.bf16.mxu0 %v4918
        %5217 = vmatpush1.bf16.msra.mxu0 %v4917
        %5218 = vmatprep.subr.bf16.mxu0 %v4922
        %5219 = vmatpush1.bf16.msra.mxu0 %v4921
        %5220 = vmatprep.subr.bf16.mxu0 %v4926
        %5221 = vmatpush1.bf16.msra.mxu0 %v4925
        %5222 = vmatprep.subr.bf16.mxu0 %v4930
        %5223 = vmatpush1.bf16.msra.mxu0 %v4929
        %5224 = vmatprep.subr.bf16.mxu0 %v4934
        %5225 = vmatpush1.bf16.msra.mxu0 %v4933
        %5226 = vmatprep.subr.bf16.mxu0 %v4938
        %5227 = vmatpush1.bf16.msra.mxu0 %v4937
        %5228 = vmatprep.subr.bf16.mxu0 %v4942
        %5229 = vmatpush1.bf16.msra.mxu0 %v4941
        %5230 = vmatprep.subr.bf16.mxu0 %v4946
        %5231 = vmatpush1.bf16.msra.mxu0 %v4945
        %5232 = vmatprep.subr.bf16.mxu0 %v4950
        %5233 = vmatpush1.bf16.msra.mxu0 %v4949
        %5234 = vmatprep.subr.bf16.mxu0 %v4954
        %5235 = vmatpush1.bf16.msra.mxu0 %v4953
        %5236 = vmatprep.mubr.bf16.mxu0 %v5116
        %5237 = vmatmul.mubr.bf16.gmra.mrb[0].mxu0 %v5115
        %v5238 = vpop.f32.mrb[0].mxu0
        %v5239 = vadd.f32 0.0, %v5238
        %v5240 = vpop.f32.mrb[0].mxu0
        %v5241 = vadd.f32 0.0, %v5240
        %v5242 = vpop.f32.mrb[0].mxu0
        %v5243 = vadd.f32 0.0, %v5242
        %v5244 = vpop.f32.mrb[0].mxu0
        %v5245 = vadd.f32 0.0, %v5244
        %5246 = vmatprep.mubr.bf16.mxu0 %v5118
        %5247 = vmatmul.mubr.bf16.gmra.mrb[0].mxu0 %v5117
        %v5248 = vpop.f32.mrb[0].mxu0
        %v5249 = vadd.f32 0.0, %v5248
        %v5250 = vpop.f32.mrb[0].mxu0
        %v5251 = vadd.f32 0.0, %v5250
        %v5252 = vpop.f32.mrb[0].mxu0
        %v5253 = vadd.f32 0.0, %v5252
        %v5254 = vpop.f32.mrb[0].mxu0
        %v5255 = vadd.f32 0.0, %v5254
        %5256 = vmatprep.mubr.bf16.mxu0 %v5120
        %5257 = vmatmul.mubr.bf16.gmra.mrb[0].mxu0 %v5119
        %v5258 = vpop.f32.mrb[0].mxu0
        %v5259 = vadd.f32 0.0, %v5258
        %v5260 = vpop.f32.mrb[0].mxu0
        %v5261 = vadd.f32 0.0, %v5260
        %v5262 = vpop.f32.mrb[0].mxu0
        %v5263 = vadd.f32 0.0, %v5262
        %v5264 = vpop.f32.mrb[0].mxu0
        %v5265 = vadd.f32 0.0, %v5264
        %5266 = vmatprep.mubr.bf16.mxu0 %v5122
        %5267 = vmatmul.mubr.bf16.gmra.mrb[0].mxu0 %v5121
        %v5268 = vpop.f32.mrb[0].mxu0
        %v5269 = vadd.f32 0.0, %v5268
        %v5270 = vpop.f32.mrb[0].mxu0
        %v5271 = vadd.f32 0.0, %v5270
        %v5272 = vpop.f32.mrb[0].mxu0
        %v5273 = vadd.f32 0.0, %v5272
        %v5274 = vpop.f32.mrb[0].mxu0
        %v5275 = vadd.f32 0.0, %v5274
        %5276 = vdwg.mxu0
        %v5277 = vld [vmem:[%s1321 + $0x18] sm:$0xff]
        %v5278 = vld [vmem:[%s1321 + $0x38] sm:$0xff]
        %v5279 = vld [vmem:[%s1321 + $0x58] sm:$0xff]
        %v5280 = vld [vmem:[%s1321 + $0x78] sm:$0xff]
        %v5281 = vld [vmem:[%s1321 + $0x98] sm:$0xff]
        %v5282 = vld [vmem:[%s1321 + $0xb8] sm:$0xff]
        %v5283 = vld [vmem:[%s1321 + $0xd8] sm:$0xff]
        %v5284 = vld [vmem:[%s1321 + $0xf8] sm:$0xff]
        %v5293 = vunpack.c.l.b16 %v5277
        %v5294 = vunpack.c.h.b16 %v5277
        %v5295 = vunpack.c.l.b16 %v5278
        %v5296 = vunpack.c.h.b16 %v5278
        %v5297 = vunpack.c.l.b16 %v5279
        %v5298 = vunpack.c.h.b16 %v5279
        %v5299 = vunpack.c.l.b16 %v5280
        %v5300 = vunpack.c.h.b16 %v5280
        %v5301 = vunpack.c.l.b16 %v5281
        %v5302 = vunpack.c.h.b16 %v5281
        %v5303 = vunpack.c.l.b16 %v5282
        %v5304 = vunpack.c.h.b16 %v5282
        %v5305 = vunpack.c.l.b16 %v5283
        %v5306 = vunpack.c.h.b16 %v5283
        %v5307 = vunpack.c.l.b16 %v5284
        %v5308 = vunpack.c.h.b16 %v5284
        %v5309 = vpack.c.b16 %v5295, %v5293
        %v5310 = vpack.c.b16 %v5296, %v5294
        %v5311 = vpack.c.b16 %v5299, %v5297
        %v5312 = vpack.c.b16 %v5300, %v5298
        %v5313 = vpack.c.b16 %v5303, %v5301
        %v5314 = vpack.c.b16 %v5304, %v5302
        %v5315 = vpack.c.b16 %v5307, %v5305
        %v5316 = vpack.c.b16 %v5308, %v5306
        %5325 = vmatprep.subr.bf16.mxu0 %v4956
        %5326 = vmatpush1.bf16.msra.mxu0 %v4955
        %5327 = vmatprep.subr.bf16.mxu0 %v4960
        %5328 = vmatpush1.bf16.msra.mxu0 %v4959
        %5329 = vmatprep.subr.bf16.mxu0 %v4964
        %5330 = vmatpush1.bf16.msra.mxu0 %v4963
        %5331 = vmatprep.subr.bf16.mxu0 %v4968
        %5332 = vmatpush1.bf16.msra.mxu0 %v4967
        %5333 = vmatprep.subr.bf16.mxu0 %v4972
        %5334 = vmatpush1.bf16.msra.mxu0 %v4971
        %5335 = vmatprep.subr.bf16.mxu0 %v4976
        %5336 = vmatpush1.bf16.msra.mxu0 %v4975
        %5337 = vmatprep.subr.bf16.mxu0 %v4980
        %5338 = vmatpush1.bf16.msra.mxu0 %v4979
        %5339 = vmatprep.subr.bf16.mxu0 %v4984
        %5340 = vmatpush1.bf16.msra.mxu0 %v4983
        %5341 = vmatprep.subr.bf16.mxu0 %v4988
        %5342 = vmatpush1.bf16.msra.mxu0 %v4987
        %5343 = vmatprep.subr.bf16.mxu0 %v4992
        %5344 = vmatpush1.bf16.msra.mxu0 %v4991
        %5345 = vmatprep.subr.bf16.mxu0 %v4996
        %5346 = vmatpush1.bf16.msra.mxu0 %v4995
        %5347 = vmatprep.subr.bf16.mxu0 %v5000
        %5348 = vmatpush1.bf16.msra.mxu0 %v4999
        %5349 = vmatprep.subr.bf16.mxu0 %v5004
        %5350 = vmatpush1.bf16.msra.mxu0 %v5003
        %5351 = vmatprep.subr.bf16.mxu0 %v5008
        %5352 = vmatpush1.bf16.msra.mxu0 %v5007
        %5353 = vmatprep.subr.bf16.mxu0 %v5012
        %5354 = vmatpush1.bf16.msra.mxu0 %v5011
        %5355 = vmatprep.subr.bf16.mxu0 %v5016
        %5356 = vmatpush1.bf16.msra.mxu0 %v5015
        %5357 = vmatprep.mubr.bf16.mxu0 %v5310
        %5358 = vmatmul.mubr.bf16.gmra.mrb[0].mxu0 %v5309
        %v5359 = vpop.f32.mrb[0].mxu0
        %v5360 = vadd.f32 0.0, %v5359
        %v5361 = vpop.f32.mrb[0].mxu0
        %v5362 = vadd.f32 0.0, %v5361
        %v5363 = vpop.f32.mrb[0].mxu0
        %v5364 = vadd.f32 0.0, %v5363
        %v5365 = vpop.f32.mrb[0].mxu0
        %v5366 = vadd.f32 0.0, %v5365
        %5367 = vmatprep.mubr.bf16.mxu0 %v5312
        %5368 = vmatmul.mubr.bf16.gmra.mrb[0].mxu0 %v5311
        %v5369 = vpop.f32.mrb[0].mxu0
        %v5370 = vadd.f32 0.0, %v5369
        %v5371 = vpop.f32.mrb[0].mxu0
        %v5372 = vadd.f32 0.0, %v5371
        %v5373 = vpop.f32.mrb[0].mxu0
        %v5374 = vadd.f32 0.0, %v5373
        %v5375 = vpop.f32.mrb[0].mxu0
        %v5376 = vadd.f32 0.0, %v5375
        %5377 = vmatprep.mubr.bf16.mxu0 %v5314
        %5378 = vmatmul.mubr.bf16.gmra.mrb[0].mxu0 %v5313
        %v5379 = vpop.f32.mrb[0].mxu0
        %v5380 = vadd.f32 0.0, %v5379
        %v5381 = vpop.f32.mrb[0].mxu0
        %v5382 = vadd.f32 0.0, %v5381
        %v5383 = vpop.f32.mrb[0].mxu0
        %v5384 = vadd.f32 0.0, %v5383
        %v5385 = vpop.f32.mrb[0].mxu0
        %v5386 = vadd.f32 0.0, %v5385
        %5387 = vmatprep.mubr.bf16.mxu0 %v5316
        %5388 = vmatmul.mubr.bf16.gmra.mrb[0].mxu0 %v5315
        %v5389 = vpop.f32.mrb[0].mxu0
        %v5390 = vadd.f32 0.0, %v5389
        %v5391 = vpop.f32.mrb[0].mxu0
        %v5392 = vadd.f32 0.0, %v5391
        %v5393 = vpop.f32.mrb[0].mxu0
        %v5394 = vadd.f32 0.0, %v5393
        %v5395 = vpop.f32.mrb[0].mxu0
        %v5396 = vadd.f32 0.0, %v5395
        %5397 = vdwg.mxu0
        %5398 = vmatprep.subr.bf16.mxu0 %v4958
        %5399 = vmatpush1.bf16.msra.mxu0 %v4957
        %5400 = vmatprep.subr.bf16.mxu0 %v4962
        %5401 = vmatpush1.bf16.msra.mxu0 %v4961
        %5402 = vmatprep.subr.bf16.mxu0 %v4966
        %5403 = vmatpush1.bf16.msra.mxu0 %v4965
        %5404 = vmatprep.subr.bf16.mxu0 %v4970
        %5405 = vmatpush1.bf16.msra.mxu0 %v4969
        %5406 = vmatprep.subr.bf16.mxu0 %v4974
        %5407 = vmatpush1.bf16.msra.mxu0 %v4973
        %5408 = vmatprep.subr.bf16.mxu0 %v4978
        %5409 = vmatpush1.bf16.msra.mxu0 %v4977
        %5410 = vmatprep.subr.bf16.mxu0 %v4982
        %5411 = vmatpush1.bf16.msra.mxu0 %v4981
        %5412 = vmatprep.subr.bf16.mxu0 %v4986
        %5413 = vmatpush1.bf16.msra.mxu0 %v4985
        %5414 = vmatprep.subr.bf16.mxu0 %v4990
        %5415 = vmatpush1.bf16.msra.mxu0 %v4989
        %5416 = vmatprep.subr.bf16.mxu0 %v4994
        %5417 = vmatpush1.bf16.msra.mxu0 %v4993
        %5418 = vmatprep.subr.bf16.mxu0 %v4998
        %5419 = vmatpush1.bf16.msra.mxu0 %v4997
        %5420 = vmatprep.subr.bf16.mxu0 %v5002
        %5421 = vmatpush1.bf16.msra.mxu0 %v5001
        %5422 = vmatprep.subr.bf16.mxu0 %v5006
        %5423 = vmatpush1.bf16.msra.mxu0 %v5005
        %5424 = vmatprep.subr.bf16.mxu0 %v5010
        %5425 = vmatpush1.bf16.msra.mxu0 %v5009
        %5426 = vmatprep.subr.bf16.mxu0 %v5014
        %5427 = vmatpush1.bf16.msra.mxu0 %v5013
        %5428 = vmatprep.subr.bf16.mxu0 %v5018
        %5429 = vmatpush1.bf16.msra.mxu0 %v5017
        %5430 = vmatprep.mubr.bf16.mxu0 %v5310
        %5431 = vmatmul.mubr.bf16.gmra.mrb[0].mxu0 %v5309
        %v5432 = vpop.f32.mrb[0].mxu0
        %v5433 = vadd.f32 0.0, %v5432
        %v5434 = vpop.f32.mrb[0].mxu0
        %v5435 = vadd.f32 0.0, %v5434
        %v5436 = vpop.f32.mrb[0].mxu0
        %v5437 = vadd.f32 0.0, %v5436
        %v5438 = vpop.f32.mrb[0].mxu0
        %v5439 = vadd.f32 0.0, %v5438
        %5440 = vmatprep.mubr.bf16.mxu0 %v5312
        %5441 = vmatmul.mubr.bf16.gmra.mrb[0].mxu0 %v5311
        %v5442 = vpop.f32.mrb[0].mxu0
        %v5443 = vadd.f32 0.0, %v5442
        %v5444 = vpop.f32.mrb[0].mxu0
        %v5445 = vadd.f32 0.0, %v5444
        %v5446 = vpop.f32.mrb[0].mxu0
        %v5447 = vadd.f32 0.0, %v5446
        %v5448 = vpop.f32.mrb[0].mxu0
        %v5449 = vadd.f32 0.0, %v5448
        %5450 = vmatprep.mubr.bf16.mxu0 %v5314
        %5451 = vmatmul.mubr.bf16.gmra.mrb[0].mxu0 %v5313
        %v5452 = vpop.f32.mrb[0].mxu0
        %v5453 = vadd.f32 0.0, %v5452
        %v5454 = vpop.f32.mrb[0].mxu0
        %v5455 = vadd.f32 0.0, %v5454
        %v5456 = vpop.f32.mrb[0].mxu0
        %v5457 = vadd.f32 0.0, %v5456
        %v5458 = vpop.f32.mrb[0].mxu0
        %v5459 = vadd.f32 0.0, %v5458
        %5460 = vmatprep.mubr.bf16.mxu0 %v5316
        %5461 = vmatmul.mubr.bf16.gmra.mrb[0].mxu0 %v5315
        %v5462 = vpop.f32.mrb[0].mxu0
        %v5463 = vadd.f32 0.0, %v5462
        %v5464 = vpop.f32.mrb[0].mxu0
        %v5465 = vadd.f32 0.0, %v5464
        %v5466 = vpop.f32.mrb[0].mxu0
        %v5467 = vadd.f32 0.0, %v5466
        %v5468 = vpop.f32.mrb[0].mxu0
        %v5469 = vadd.f32 0.0, %v5468
        %5470 = vdwg.mxu0
        %v5471 = vld [vmem:[%s1516 + $0x18] sm:$0xff]
        %v5472 = vld [vmem:[%s1516 + $0x38] sm:$0xff]
        %v5473 = vld [vmem:[%s1516 + $0x58] sm:$0xff]
        %v5474 = vld [vmem:[%s1516 + $0x78] sm:$0xff]
        %v5475 = vld [vmem:[%s1516 + $0x98] sm:$0xff]
        %v5476 = vld [vmem:[%s1516 + $0xb8] sm:$0xff]
        %v5477 = vld [vmem:[%s1516 + $0xd8] sm:$0xff]
        %v5478 = vld [vmem:[%s1516 + $0xf8] sm:$0xff]
        %v5487 = vunpack.c.l.b16 %v5471
        %v5488 = vunpack.c.h.b16 %v5471
        %v5489 = vunpack.c.l.b16 %v5472
        %v5490 = vunpack.c.h.b16 %v5472
        %v5491 = vunpack.c.l.b16 %v5473
        %v5492 = vunpack.c.h.b16 %v5473
        %v5493 = vunpack.c.l.b16 %v5474
        %v5494 = vunpack.c.h.b16 %v5474
        %v5495 = vunpack.c.l.b16 %v5475
        %v5496 = vunpack.c.h.b16 %v5475
        %v5497 = vunpack.c.l.b16 %v5476
        %v5498 = vunpack.c.h.b16 %v5476
        %v5499 = vunpack.c.l.b16 %v5477
        %v5500 = vunpack.c.h.b16 %v5477
        %v5501 = vunpack.c.l.b16 %v5478
        %v5502 = vunpack.c.h.b16 %v5478
        %v5503 = vpack.c.b16 %v5489, %v5487
        %v5504 = vpack.c.b16 %v5490, %v5488
        %v5505 = vpack.c.b16 %v5493, %v5491
        %v5506 = vpack.c.b16 %v5494, %v5492
        %v5507 = vpack.c.b16 %v5497, %v5495
        %v5508 = vpack.c.b16 %v5498, %v5496
        %v5509 = vpack.c.b16 %v5501, %v5499
        %v5510 = vpack.c.b16 %v5502, %v5500
        %5519 = vmatprep.subr.bf16.mxu0 %v5020
        %5520 = vmatpush1.bf16.msra.mxu0 %v5019
        %5521 = vmatprep.subr.bf16.mxu0 %v5024
        %5522 = vmatpush1.bf16.msra.mxu0 %v5023
        %5523 = vmatprep.subr.bf16.mxu0 %v5028
        %5524 = vmatpush1.bf16.msra.mxu0 %v5027
        %5525 = vmatprep.subr.bf16.mxu0 %v5032
        %5526 = vmatpush1.bf16.msra.mxu0 %v5031
        %5527 = vmatprep.subr.bf16.mxu0 %v5036
        %5528 = vmatpush1.bf16.msra.mxu0 %v5035
        %5529 = vmatprep.subr.bf16.mxu0 %v5040
        %5530 = vmatpush1.bf16.msra.mxu0 %v5039
        %5531 = vmatprep.subr.bf16.mxu0 %v5044
        %5532 = vmatpush1.bf16.msra.mxu0 %v5043
        %5533 = vmatprep.subr.bf16.mxu0 %v5048
        %5534 = vmatpush1.bf16.msra.mxu0 %v5047
        %5535 = vmatprep.subr.bf16.mxu0 %v5052
        %5536 = vmatpush1.bf16.msra.mxu0 %v5051
        %5537 = vmatprep.subr.bf16.mxu0 %v5056
        %5538 = vmatpush1.bf16.msra.mxu0 %v5055
        %5539 = vmatprep.subr.bf16.mxu0 %v5060
        %5540 = vmatpush1.bf16.msra.mxu0 %v5059
        %5541 = vmatprep.subr.bf16.mxu0 %v5064
        %5542 = vmatpush1.bf16.msra.mxu0 %v5063
        %5543 = vmatprep.subr.bf16.mxu0 %v5068
        %5544 = vmatpush1.bf16.msra.mxu0 %v5067
        %5545 = vmatprep.subr.bf16.mxu0 %v5072
        %5546 = vmatpush1.bf16.msra.mxu0 %v5071
        %5547 = vmatprep.subr.bf16.mxu0 %v5076
        %5548 = vmatpush1.bf16.msra.mxu0 %v5075
        %5549 = vmatprep.subr.bf16.mxu0 %v5080
        %5550 = vmatpush1.bf16.msra.mxu0 %v5079
        %5551 = vmatprep.mubr.bf16.mxu0 %v5504
        %5552 = vmatmul.mubr.bf16.gmra.mrb[0].mxu0 %v5503
        %v5553 = vpop.f32.mrb[0].mxu0
        %v5554 = vadd.f32 0.0, %v5553
        %v5555 = vpop.f32.mrb[0].mxu0
        %v5556 = vadd.f32 0.0, %v5555
        %v5557 = vpop.f32.mrb[0].mxu0
        %v5558 = vadd.f32 0.0, %v5557
        %v5559 = vpop.f32.mrb[0].mxu0
        %v5560 = vadd.f32 0.0, %v5559
        %5561 = vmatprep.mubr.bf16.mxu0 %v5506
        %5562 = vmatmul.mubr.bf16.gmra.mrb[0].mxu0 %v5505
        %v5563 = vpop.f32.mrb[0].mxu0
        %v5564 = vadd.f32 0.0, %v5563
        %v5565 = vpop.f32.mrb[0].mxu0
        %v5566 = vadd.f32 0.0, %v5565
        %v5567 = vpop.f32.mrb[0].mxu0
        %v5568 = vadd.f32 0.0, %v5567
        %v5569 = vpop.f32.mrb[0].mxu0
        %v5570 = vadd.f32 0.0, %v5569
        %5571 = vmatprep.mubr.bf16.mxu0 %v5508
        %5572 = vmatmul.mubr.bf16.gmra.mrb[0].mxu0 %v5507
        %v5573 = vpop.f32.mrb[0].mxu0
        %v5574 = vadd.f32 0.0, %v5573
        %v5575 = vpop.f32.mrb[0].mxu0
        %v5576 = vadd.f32 0.0, %v5575
        %v5577 = vpop.f32.mrb[0].mxu0
        %v5578 = vadd.f32 0.0, %v5577
        %v5579 = vpop.f32.mrb[0].mxu0
        %v5580 = vadd.f32 0.0, %v5579
        %5581 = vmatprep.mubr.bf16.mxu0 %v5510
        %5582 = vmatmul.mubr.bf16.gmra.mrb[0].mxu0 %v5509
        %v5583 = vpop.f32.mrb[0].mxu0
        %v5584 = vadd.f32 0.0, %v5583
        %v5585 = vpop.f32.mrb[0].mxu0
        %v5586 = vadd.f32 0.0, %v5585
        %v5587 = vpop.f32.mrb[0].mxu0
        %v5588 = vadd.f32 0.0, %v5587
        %v5589 = vpop.f32.mrb[0].mxu0
        %v5590 = vadd.f32 0.0, %v5589
        %5591 = vdwg.mxu0
        %5592 = vmatprep.subr.bf16.mxu0 %v5022
        %5593 = vmatpush1.bf16.msra.mxu0 %v5021
        %5594 = vmatprep.subr.bf16.mxu0 %v5026
        %5595 = vmatpush1.bf16.msra.mxu0 %v5025
        %5596 = vmatprep.subr.bf16.mxu0 %v5030
        %5597 = vmatpush1.bf16.msra.mxu0 %v5029
        %5598 = vmatprep.subr.bf16.mxu0 %v5034
        %5599 = vmatpush1.bf16.msra.mxu0 %v5033
        %5600 = vmatprep.subr.bf16.mxu0 %v5038
        %5601 = vmatpush1.bf16.msra.mxu0 %v5037
        %5602 = vmatprep.subr.bf16.mxu0 %v5042
        %5603 = vmatpush1.bf16.msra.mxu0 %v5041
        %5604 = vmatprep.subr.bf16.mxu0 %v5046
        %5605 = vmatpush1.bf16.msra.mxu0 %v5045
        %5606 = vmatprep.subr.bf16.mxu0 %v5050
        %5607 = vmatpush1.bf16.msra.mxu0 %v5049
        %5608 = vmatprep.subr.bf16.mxu0 %v5054
        %5609 = vmatpush1.bf16.msra.mxu0 %v5053
        %5610 = vmatprep.subr.bf16.mxu0 %v5058
        %5611 = vmatpush1.bf16.msra.mxu0 %v5057
        %5612 = vmatprep.subr.bf16.mxu0 %v5062
        %5613 = vmatpush1.bf16.msra.mxu0 %v5061
        %5614 = vmatprep.subr.bf16.mxu0 %v5066
        %5615 = vmatpush1.bf16.msra.mxu0 %v5065
        %5616 = vmatprep.subr.bf16.mxu0 %v5070
        %5617 = vmatpush1.bf16.msra.mxu0 %v5069
        %5618 = vmatprep.subr.bf16.mxu0 %v5074
        %5619 = vmatpush1.bf16.msra.mxu0 %v5073
        %5620 = vmatprep.subr.bf16.mxu0 %v5078
        %5621 = vmatpush1.bf16.msra.mxu0 %v5077
        %5622 = vmatprep.subr.bf16.mxu0 %v5082
        %5623 = vmatpush1.bf16.msra.mxu0 %v5081
        %5624 = vmatprep.mubr.bf16.mxu0 %v5504
        %5625 = vmatmul.mubr.bf16.gmra.mrb[0].mxu0 %v5503
        %v5626 = vpop.f32.mrb[0].mxu0
        %v5627 = vadd.f32 0.0, %v5626
        %v5628 = vpop.f32.mrb[0].mxu0
        %v5629 = vadd.f32 0.0, %v5628
        %v5630 = vpop.f32.mrb[0].mxu0
        %v5631 = vadd.f32 0.0, %v5630
        %v5632 = vpop.f32.mrb[0].mxu0
        %v5633 = vadd.f32 0.0, %v5632
        %5634 = vmatprep.mubr.bf16.mxu0 %v5506
        %5635 = vmatmul.mubr.bf16.gmra.mrb[0].mxu0 %v5505
        %v5636 = vpop.f32.mrb[0].mxu0
        %v5637 = vadd.f32 0.0, %v5636
        %v5638 = vpop.f32.mrb[0].mxu0
        %v5639 = vadd.f32 0.0, %v5638
        %v5640 = vpop.f32.mrb[0].mxu0
        %v5641 = vadd.f32 0.0, %v5640
        %v5642 = vpop.f32.mrb[0].mxu0
        %v5643 = vadd.f32 0.0, %v5642
        %5644 = vmatprep.mubr.bf16.mxu0 %v5508
        %5645 = vmatmul.mubr.bf16.gmra.mrb[0].mxu0 %v5507
        %v5646 = vpop.f32.mrb[0].mxu0
        %v5647 = vadd.f32 0.0, %v5646
        %v5648 = vpop.f32.mrb[0].mxu0
        %v5649 = vadd.f32 0.0, %v5648
        %v5650 = vpop.f32.mrb[0].mxu0
        %v5651 = vadd.f32 0.0, %v5650
        %v5652 = vpop.f32.mrb[0].mxu0
        %v5653 = vadd.f32 0.0, %v5652
        %5654 = vmatprep.mubr.bf16.mxu0 %v5510
        %5655 = vmatmul.mubr.bf16.gmra.mrb[0].mxu0 %v5509
        %v5656 = vpop.f32.mrb[0].mxu0
        %v5657 = vadd.f32 0.0, %v5656
        %v5658 = vpop.f32.mrb[0].mxu0
        %v5659 = vadd.f32 0.0, %v5658
        %v5660 = vpop.f32.mrb[0].mxu0
        %v5661 = vadd.f32 0.0, %v5660
        %v5662 = vpop.f32.mrb[0].mxu0
        %v5663 = vadd.f32 0.0, %v5662
        %5664 = vdwg.mxu0
        %v5665 = vld [vmem:[#allocation2] sm:$0xff]
        %v5666 = vld [vmem:[#allocation2 + $0x8] sm:$0xff]
        %v5667 = vld [vmem:[#allocation2 + $0x10] sm:$0xff]
        %v5668 = vld [vmem:[#allocation2 + $0x18] sm:$0xff]
        %v5669 = vld [vmem:[#allocation2 + $0x20] sm:$0xff]
        %v5670 = vld [vmem:[#allocation2 + $0x28] sm:$0xff]
        %v5671 = vld [vmem:[#allocation2 + $0x30] sm:$0xff]
        %v5672 = vld [vmem:[#allocation2 + $0x38] sm:$0xff]
        %v5673 = vld [vmem:[#allocation2 + $0x40] sm:$0xff]
        %v5674 = vld [vmem:[#allocation2 + $0x48] sm:$0xff]
        %v5675 = vld [vmem:[#allocation2 + $0x50] sm:$0xff]
        %v5676 = vld [vmem:[#allocation2 + $0x58] sm:$0xff]
        %v5677 = vld [vmem:[#allocation2 + $0x60] sm:$0xff]
        %v5678 = vld [vmem:[#allocation2 + $0x68] sm:$0xff]
        %v5679 = vld [vmem:[#allocation2 + $0x70] sm:$0xff]
        %v5680 = vld [vmem:[#allocation2 + $0x78] sm:$0xff]
        %v5681 = vld [vmem:[#allocation2 + $0x80] sm:$0xff]
        %v5682 = vld [vmem:[#allocation2 + $0x88] sm:$0xff]
        %v5683 = vld [vmem:[#allocation2 + $0x90] sm:$0xff]
        %v5684 = vld [vmem:[#allocation2 + $0x98] sm:$0xff]
        %v5685 = vld [vmem:[#allocation2 + $0xa0] sm:$0xff]
        %v5686 = vld [vmem:[#allocation2 + $0xa8] sm:$0xff]
        %v5687 = vld [vmem:[#allocation2 + $0xb0] sm:$0xff]
        %v5688 = vld [vmem:[#allocation2 + $0xb8] sm:$0xff]
        %v5689 = vld [vmem:[#allocation2 + $0xc0] sm:$0xff]
        %v5690 = vld [vmem:[#allocation2 + $0xc8] sm:$0xff]
        %v5691 = vld [vmem:[#allocation2 + $0xd0] sm:$0xff]
        %v5692 = vld [vmem:[#allocation2 + $0xd8] sm:$0xff]
        %v5693 = vld [vmem:[#allocation2 + $0xe0] sm:$0xff]
        %v5694 = vld [vmem:[#allocation2 + $0xe8] sm:$0xff]
        %v5695 = vld [vmem:[#allocation2 + $0xf0] sm:$0xff]
        %v5696 = vld [vmem:[#allocation2 + $0xf8] sm:$0xff]
        %v5697 = vadd.f32 %v5665, %v5166
        %v5698 = vadd.f32 %v5666, %v5168
        %v5699 = vadd.f32 %v5667, %v5239
        %v5700 = vadd.f32 %v5668, %v5241
        %v5701 = vadd.f32 %v5669, %v5170
        %v5702 = vadd.f32 %v5670, %v5172
        %v5703 = vadd.f32 %v5671, %v5243
        %v5704 = vadd.f32 %v5672, %v5245
        %v5705 = vadd.f32 %v5673, %v5176
        %v5706 = vadd.f32 %v5674, %v5178
        %v5707 = vadd.f32 %v5675, %v5249
        %v5708 = vadd.f32 %v5676, %v5251
        %v5709 = vadd.f32 %v5677, %v5180
        %v5710 = vadd.f32 %v5678, %v5182
        %v5711 = vadd.f32 %v5679, %v5253
        %v5712 = vadd.f32 %v5680, %v5255
        %v5713 = vadd.f32 %v5681, %v5186
        %v5714 = vadd.f32 %v5682, %v5188
        %v5715 = vadd.f32 %v5683, %v5259
        %v5716 = vadd.f32 %v5684, %v5261
        %v5717 = vadd.f32 %v5685, %v5190
        %v5718 = vadd.f32 %v5686, %v5192
        %v5719 = vadd.f32 %v5687, %v5263
        %v5720 = vadd.f32 %v5688, %v5265
        %v5721 = vadd.f32 %v5689, %v5196
        %v5722 = vadd.f32 %v5690, %v5198
        %v5723 = vadd.f32 %v5691, %v5269
        %v5724 = vadd.f32 %v5692, %v5271
        %v5725 = vadd.f32 %v5693, %v5200
        %v5726 = vadd.f32 %v5694, %v5202
        %v5727 = vadd.f32 %v5695, %v5273
        %v5728 = vadd.f32 %v5696, %v5275
        %5729 = vst [vmem:[#allocation2] sm:$0xff] %v5697
        %5730 = vst [vmem:[#allocation2 + $0x8] sm:$0xff] %v5698
        %5731 = vst [vmem:[#allocation2 + $0x10] sm:$0xff] %v5699
        %5732 = vst [vmem:[#allocation2 + $0x18] sm:$0xff] %v5700
        %5733 = vst [vmem:[#allocation2 + $0x20] sm:$0xff] %v5701
        %5734 = vst [vmem:[#allocation2 + $0x28] sm:$0xff] %v5702
        %5735 = vst [vmem:[#allocation2 + $0x30] sm:$0xff] %v5703
        %5736 = vst [vmem:[#allocation2 + $0x38] sm:$0xff] %v5704
        %5737 = vst [vmem:[#allocation2 + $0x40] sm:$0xff] %v5705
        %5738 = vst [vmem:[#allocation2 + $0x48] sm:$0xff] %v5706
        %5739 = vst [vmem:[#allocation2 + $0x50] sm:$0xff] %v5707
        %5740 = vst [vmem:[#allocation2 + $0x58] sm:$0xff] %v5708
        %5741 = vst [vmem:[#allocation2 + $0x60] sm:$0xff] %v5709
        %5742 = vst [vmem:[#allocation2 + $0x68] sm:$0xff] %v5710
        %5743 = vst [vmem:[#allocation2 + $0x70] sm:$0xff] %v5711
        %5744 = vst [vmem:[#allocation2 + $0x78] sm:$0xff] %v5712
        %5745 = vst [vmem:[#allocation2 + $0x80] sm:$0xff] %v5713
        %5746 = vst [vmem:[#allocation2 + $0x88] sm:$0xff] %v5714
        %5747 = vst [vmem:[#allocation2 + $0x90] sm:$0xff] %v5715
        %5748 = vst [vmem:[#allocation2 + $0x98] sm:$0xff] %v5716
        %5749 = vst [vmem:[#allocation2 + $0xa0] sm:$0xff] %v5717
        %5750 = vst [vmem:[#allocation2 + $0xa8] sm:$0xff] %v5718
        %5751 = vst [vmem:[#allocation2 + $0xb0] sm:$0xff] %v5719
        %5752 = vst [vmem:[#allocation2 + $0xb8] sm:$0xff] %v5720
        %5753 = vst [vmem:[#allocation2 + $0xc0] sm:$0xff] %v5721
        %5754 = vst [vmem:[#allocation2 + $0xc8] sm:$0xff] %v5722
        %5755 = vst [vmem:[#allocation2 + $0xd0] sm:$0xff] %v5723
        %5756 = vst [vmem:[#allocation2 + $0xd8] sm:$0xff] %v5724
        %5757 = vst [vmem:[#allocation2 + $0xe0] sm:$0xff] %v5725
        %5758 = vst [vmem:[#allocation2 + $0xe8] sm:$0xff] %v5726
        %5759 = vst [vmem:[#allocation2 + $0xf0] sm:$0xff] %v5727
        %5760 = vst [vmem:[#allocation2 + $0xf8] sm:$0xff] %v5728
        %v5761 = vld [vmem:[#allocation3] sm:$0xff]
        %v5762 = vld [vmem:[#allocation3 + $0x8] sm:$0xff]
        %v5763 = vld [vmem:[#allocation3 + $0x10] sm:$0xff]
        %v5764 = vld [vmem:[#allocation3 + $0x18] sm:$0xff]
        %v5765 = vld [vmem:[#allocation3 + $0x20] sm:$0xff]
        %v5766 = vld [vmem:[#allocation3 + $0x28] sm:$0xff]
        %v5767 = vld [vmem:[#allocation3 + $0x30] sm:$0xff]
        %v5768 = vld [vmem:[#allocation3 + $0x38] sm:$0xff]
        %v5769 = vld [vmem:[#allocation3 + $0x40] sm:$0xff]
        %v5770 = vld [vmem:[#allocation3 + $0x48] sm:$0xff]
        %v5771 = vld [vmem:[#allocation3 + $0x50] sm:$0xff]
        %v5772 = vld [vmem:[#allocation3 + $0x58] sm:$0xff]
        %v5773 = vld [vmem:[#allocation3 + $0x60] sm:$0xff]
        %v5774 = vld [vmem:[#allocation3 + $0x68] sm:$0xff]
        %v5775 = vld [vmem:[#allocation3 + $0x70] sm:$0xff]
        %v5776 = vld [vmem:[#allocation3 + $0x78] sm:$0xff]
        %v5777 = vld [vmem:[#allocation3 + $0x80] sm:$0xff]
        %v5778 = vld [vmem:[#allocation3 + $0x88] sm:$0xff]
        %v5779 = vld [vmem:[#allocation3 + $0x90] sm:$0xff]
        %v5780 = vld [vmem:[#allocation3 + $0x98] sm:$0xff]
        %v5781 = vld [vmem:[#allocation3 + $0xa0] sm:$0xff]
        %v5782 = vld [vmem:[#allocation3 + $0xa8] sm:$0xff]
        %v5783 = vld [vmem:[#allocation3 + $0xb0] sm:$0xff]
        %v5784 = vld [vmem:[#allocation3 + $0xb8] sm:$0xff]
        %v5785 = vld [vmem:[#allocation3 + $0xc0] sm:$0xff]
        %v5786 = vld [vmem:[#allocation3 + $0xc8] sm:$0xff]
        %v5787 = vld [vmem:[#allocation3 + $0xd0] sm:$0xff]
        %v5788 = vld [vmem:[#allocation3 + $0xd8] sm:$0xff]
        %v5789 = vld [vmem:[#allocation3 + $0xe0] sm:$0xff]
        %v5790 = vld [vmem:[#allocation3 + $0xe8] sm:$0xff]
        %v5791 = vld [vmem:[#allocation3 + $0xf0] sm:$0xff]
        %v5792 = vld [vmem:[#allocation3 + $0xf8] sm:$0xff]
        %v5793 = vadd.f32 %v5761, %v5360
        %v5794 = vadd.f32 %v5762, %v5362
        %v5795 = vadd.f32 %v5763, %v5433
        %v5796 = vadd.f32 %v5764, %v5435
        %v5797 = vadd.f32 %v5765, %v5364
        %v5798 = vadd.f32 %v5766, %v5366
        %v5799 = vadd.f32 %v5767, %v5437
        %v5800 = vadd.f32 %v5768, %v5439
        %v5801 = vadd.f32 %v5769, %v5370
        %v5802 = vadd.f32 %v5770, %v5372
        %v5803 = vadd.f32 %v5771, %v5443
        %v5804 = vadd.f32 %v5772, %v5445
        %v5805 = vadd.f32 %v5773, %v5374
        %v5806 = vadd.f32 %v5774, %v5376
        %v5807 = vadd.f32 %v5775, %v5447
        %v5808 = vadd.f32 %v5776, %v5449
        %v5809 = vadd.f32 %v5777, %v5380
        %v5810 = vadd.f32 %v5778, %v5382
        %v5811 = vadd.f32 %v5779, %v5453
        %v5812 = vadd.f32 %v5780, %v5455
        %v5813 = vadd.f32 %v5781, %v5384
        %v5814 = vadd.f32 %v5782, %v5386
        %v5815 = vadd.f32 %v5783, %v5457
        %v5816 = vadd.f32 %v5784, %v5459
        %v5817 = vadd.f32 %v5785, %v5390
        %v5818 = vadd.f32 %v5786, %v5392
        %v5819 = vadd.f32 %v5787, %v5463
        %v5820 = vadd.f32 %v5788, %v5465
        %v5821 = vadd.f32 %v5789, %v5394
        %v5822 = vadd.f32 %v5790, %v5396
        %v5823 = vadd.f32 %v5791, %v5467
        %v5824 = vadd.f32 %v5792, %v5469
        %5825 = vst [vmem:[#allocation3] sm:$0xff] %v5793
        %5826 = vst [vmem:[#allocation3 + $0x8] sm:$0xff] %v5794
        %5827 = vst [vmem:[#allocation3 + $0x10] sm:$0xff] %v5795
        %5828 = vst [vmem:[#allocation3 + $0x18] sm:$0xff] %v5796
        %5829 = vst [vmem:[#allocation3 + $0x20] sm:$0xff] %v5797
        %5830 = vst [vmem:[#allocation3 + $0x28] sm:$0xff] %v5798
        %5831 = vst [vmem:[#allocation3 + $0x30] sm:$0xff] %v5799
        %5832 = vst [vmem:[#allocation3 + $0x38] sm:$0xff] %v5800
        %5833 = vst [vmem:[#allocation3 + $0x40] sm:$0xff] %v5801
        %5834 = vst [vmem:[#allocation3 + $0x48] sm:$0xff] %v5802
        %5835 = vst [vmem:[#allocation3 + $0x50] sm:$0xff] %v5803
        %5836 = vst [vmem:[#allocation3 + $0x58] sm:$0xff] %v5804
        %5837 = vst [vmem:[#allocation3 + $0x60] sm:$0xff] %v5805
        %5838 = vst [vmem:[#allocation3 + $0x68] sm:$0xff] %v5806
        %5839 = vst [vmem:[#allocation3 + $0x70] sm:$0xff] %v5807
        %5840 = vst [vmem:[#allocation3 + $0x78] sm:$0xff] %v5808
        %5841 = vst [vmem:[#allocation3 + $0x80] sm:$0xff] %v5809
        %5842 = vst [vmem:[#allocation3 + $0x88] sm:$0xff] %v5810
        %5843 = vst [vmem:[#allocation3 + $0x90] sm:$0xff] %v5811
        %5844 = vst [vmem:[#allocation3 + $0x98] sm:$0xff] %v5812
        %5845 = vst [vmem:[#allocation3 + $0xa0] sm:$0xff] %v5813
        %5846 = vst [vmem:[#allocation3 + $0xa8] sm:$0xff] %v5814
        %5847 = vst [vmem:[#allocation3 + $0xb0] sm:$0xff] %v5815
        %5848 = vst [vmem:[#allocation3 + $0xb8] sm:$0xff] %v5816
        %5849 = vst [vmem:[#allocation3 + $0xc0] sm:$0xff] %v5817
        %5850 = vst [vmem:[#allocation3 + $0xc8] sm:$0xff] %v5818
        %5851 = vst [vmem:[#allocation3 + $0xd0] sm:$0xff] %v5819
        %5852 = vst [vmem:[#allocation3 + $0xd8] sm:$0xff] %v5820
        %5853 = vst [vmem:[#allocation3 + $0xe0] sm:$0xff] %v5821
        %5854 = vst [vmem:[#allocation3 + $0xe8] sm:$0xff] %v5822
        %5855 = vst [vmem:[#allocation3 + $0xf0] sm:$0xff] %v5823
        %5856 = vst [vmem:[#allocation3 + $0xf8] sm:$0xff] %v5824
        %v5857 = vld [vmem:[#allocation4] sm:$0xff]
        %v5858 = vld [vmem:[#allocation4 + $0x8] sm:$0xff]
        %v5859 = vld [vmem:[#allocation4 + $0x10] sm:$0xff]
        %v5860 = vld [vmem:[#allocation4 + $0x18] sm:$0xff]
        %v5861 = vld [vmem:[#allocation4 + $0x20] sm:$0xff]
        %v5862 = vld [vmem:[#allocation4 + $0x28] sm:$0xff]
        %v5863 = vld [vmem:[#allocation4 + $0x30] sm:$0xff]
        %v5864 = vld [vmem:[#allocation4 + $0x38] sm:$0xff]
        %v5865 = vld [vmem:[#allocation4 + $0x40] sm:$0xff]
        %v5866 = vld [vmem:[#allocation4 + $0x48] sm:$0xff]
        %v5867 = vld [vmem:[#allocation4 + $0x50] sm:$0xff]
        %v5868 = vld [vmem:[#allocation4 + $0x58] sm:$0xff]
        %v5869 = vld [vmem:[#allocation4 + $0x60] sm:$0xff]
        %v5870 = vld [vmem:[#allocation4 + $0x68] sm:$0xff]
        %v5871 = vld [vmem:[#allocation4 + $0x70] sm:$0xff]
        %v5872 = vld [vmem:[#allocation4 + $0x78] sm:$0xff]
        %v5873 = vld [vmem:[#allocation4 + $0x80] sm:$0xff]
        %v5874 = vld [vmem:[#allocation4 + $0x88] sm:$0xff]
        %v5875 = vld [vmem:[#allocation4 + $0x90] sm:$0xff]
        %v5876 = vld [vmem:[#allocation4 + $0x98] sm:$0xff]
        %v5877 = vld [vmem:[#allocation4 + $0xa0] sm:$0xff]
        %v5878 = vld [vmem:[#allocation4 + $0xa8] sm:$0xff]
        %v5879 = vld [vmem:[#allocation4 + $0xb0] sm:$0xff]
        %v5880 = vld [vmem:[#allocation4 + $0xb8] sm:$0xff]
        %v5881 = vld [vmem:[#allocation4 + $0xc0] sm:$0xff]
        %v5882 = vld [vmem:[#allocation4 + $0xc8] sm:$0xff]
        %v5883 = vld [vmem:[#allocation4 + $0xd0] sm:$0xff]
        %v5884 = vld [vmem:[#allocation4 + $0xd8] sm:$0xff]
        %v5885 = vld [vmem:[#allocation4 + $0xe0] sm:$0xff]
        %v5886 = vld [vmem:[#allocation4 + $0xe8] sm:$0xff]
        %v5887 = vld [vmem:[#allocation4 + $0xf0] sm:$0xff]
        %v5888 = vld [vmem:[#allocation4 + $0xf8] sm:$0xff]
        %v5889 = vadd.f32 %v5857, %v5554
        %v5890 = vadd.f32 %v5858, %v5556
        %v5891 = vadd.f32 %v5859, %v5627
        %v5892 = vadd.f32 %v5860, %v5629
        %v5893 = vadd.f32 %v5861, %v5558
        %v5894 = vadd.f32 %v5862, %v5560
        %v5895 = vadd.f32 %v5863, %v5631
        %v5896 = vadd.f32 %v5864, %v5633
        %v5897 = vadd.f32 %v5865, %v5564
        %v5898 = vadd.f32 %v5866, %v5566
        %v5899 = vadd.f32 %v5867, %v5637
        %v5900 = vadd.f32 %v5868, %v5639
        %v5901 = vadd.f32 %v5869, %v5568
        %v5902 = vadd.f32 %v5870, %v5570
        %v5903 = vadd.f32 %v5871, %v5641
        %v5904 = vadd.f32 %v5872, %v5643
        %v5905 = vadd.f32 %v5873, %v5574
        %v5906 = vadd.f32 %v5874, %v5576
        %v5907 = vadd.f32 %v5875, %v5647
        %v5908 = vadd.f32 %v5876, %v5649
        %v5909 = vadd.f32 %v5877, %v5578
        %v5910 = vadd.f32 %v5878, %v5580
        %v5911 = vadd.f32 %v5879, %v5651
        %v5912 = vadd.f32 %v5880, %v5653
        %v5913 = vadd.f32 %v5881, %v5584
        %v5914 = vadd.f32 %v5882, %v5586
        %v5915 = vadd.f32 %v5883, %v5657
        %v5916 = vadd.f32 %v5884, %v5659
        %v5917 = vadd.f32 %v5885, %v5588
        %v5918 = vadd.f32 %v5886, %v5590
        %v5919 = vadd.f32 %v5887, %v5661
        %v5920 = vadd.f32 %v5888, %v5663
        %5921 = vst [vmem:[#allocation4] sm:$0xff] %v5889
        %5922 = vst [vmem:[#allocation4 + $0x8] sm:$0xff] %v5890
        %5923 = vst [vmem:[#allocation4 + $0x10] sm:$0xff] %v5891
        %5924 = vst [vmem:[#allocation4 + $0x18] sm:$0xff] %v5892
        %5925 = vst [vmem:[#allocation4 + $0x20] sm:$0xff] %v5893
        %5926 = vst [vmem:[#allocation4 + $0x28] sm:$0xff] %v5894
        %5927 = vst [vmem:[#allocation4 + $0x30] sm:$0xff] %v5895
        %5928 = vst [vmem:[#allocation4 + $0x38] sm:$0xff] %v5896
        %5929 = vst [vmem:[#allocation4 + $0x40] sm:$0xff] %v5897
        %5930 = vst [vmem:[#allocation4 + $0x48] sm:$0xff] %v5898
        %5931 = vst [vmem:[#allocation4 + $0x50] sm:$0xff] %v5899
        %5932 = vst [vmem:[#allocation4 + $0x58] sm:$0xff] %v5900
        %5933 = vst [vmem:[#allocation4 + $0x60] sm:$0xff] %v5901
        %5934 = vst [vmem:[#allocation4 + $0x68] sm:$0xff] %v5902
        %5935 = vst [vmem:[#allocation4 + $0x70] sm:$0xff] %v5903
        %5936 = vst [vmem:[#allocation4 + $0x78] sm:$0xff] %v5904
        %5937 = vst [vmem:[#allocation4 + $0x80] sm:$0xff] %v5905
        %5938 = vst [vmem:[#allocation4 + $0x88] sm:$0xff] %v5906
        %5939 = vst [vmem:[#allocation4 + $0x90] sm:$0xff] %v5907
        %5940 = vst [vmem:[#allocation4 + $0x98] sm:$0xff] %v5908
        %5941 = vst [vmem:[#allocation4 + $0xa0] sm:$0xff] %v5909
        %5942 = vst [vmem:[#allocation4 + $0xa8] sm:$0xff] %v5910
        %5943 = vst [vmem:[#allocation4 + $0xb0] sm:$0xff] %v5911
        %5944 = vst [vmem:[#allocation4 + $0xb8] sm:$0xff] %v5912
        %5945 = vst [vmem:[#allocation4 + $0xc0] sm:$0xff] %v5913
        %5946 = vst [vmem:[#allocation4 + $0xc8] sm:$0xff] %v5914
        %5947 = vst [vmem:[#allocation4 + $0xd0] sm:$0xff] %v5915
        %5948 = vst [vmem:[#allocation4 + $0xd8] sm:$0xff] %v5916
        %5949 = vst [vmem:[#allocation4 + $0xe0] sm:$0xff] %v5917
        %5950 = vst [vmem:[#allocation4 + $0xe8] sm:$0xff] %v5918
        %5951 = vst [vmem:[#allocation4 + $0xf0] sm:$0xff] %v5919
        %5952 = vst [vmem:[#allocation4 + $0xf8] sm:$0xff] %v5920
        %v5953 = vld [vmem:[#allocation2] sm:$0xff]
        %v5954 = vld [vmem:[#allocation2 + $0x8] sm:$0xff]
        %v5955 = vld [vmem:[#allocation2 + $0x10] sm:$0xff]
        %v5956 = vld [vmem:[#allocation2 + $0x18] sm:$0xff]
        %v5957 = vld [vmem:[#allocation2 + $0x20] sm:$0xff]
        %v5958 = vld [vmem:[#allocation2 + $0x28] sm:$0xff]
        %v5959 = vld [vmem:[#allocation2 + $0x30] sm:$0xff]
        %v5960 = vld [vmem:[#allocation2 + $0x38] sm:$0xff]
        %v5961 = vld [vmem:[#allocation2 + $0x40] sm:$0xff]
        %v5962 = vld [vmem:[#allocation2 + $0x48] sm:$0xff]
        %v5963 = vld [vmem:[#allocation2 + $0x50] sm:$0xff]
        %v5964 = vld [vmem:[#allocation2 + $0x58] sm:$0xff]
        %v5965 = vld [vmem:[#allocation2 + $0x60] sm:$0xff]
        %v5966 = vld [vmem:[#allocation2 + $0x68] sm:$0xff]
        %v5967 = vld [vmem:[#allocation2 + $0x70] sm:$0xff]
        %v5968 = vld [vmem:[#allocation2 + $0x78] sm:$0xff]
        %v5969 = vld [vmem:[#allocation2 + $0x80] sm:$0xff]
        %v5970 = vld [vmem:[#allocation2 + $0x88] sm:$0xff]
        %v5971 = vld [vmem:[#allocation2 + $0x90] sm:$0xff]
        %v5972 = vld [vmem:[#allocation2 + $0x98] sm:$0xff]
        %v5973 = vld [vmem:[#allocation2 + $0xa0] sm:$0xff]
        %v5974 = vld [vmem:[#allocation2 + $0xa8] sm:$0xff]
        %v5975 = vld [vmem:[#allocation2 + $0xb0] sm:$0xff]
        %v5976 = vld [vmem:[#allocation2 + $0xb8] sm:$0xff]
        %v5977 = vld [vmem:[#allocation2 + $0xc0] sm:$0xff]
        %v5978 = vld [vmem:[#allocation2 + $0xc8] sm:$0xff]
        %v5979 = vld [vmem:[#allocation2 + $0xd0] sm:$0xff]
        %v5980 = vld [vmem:[#allocation2 + $0xd8] sm:$0xff]
        %v5981 = vld [vmem:[#allocation2 + $0xe0] sm:$0xff]
        %v5982 = vld [vmem:[#allocation2 + $0xe8] sm:$0xff]
        %v5983 = vld [vmem:[#allocation2 + $0xf0] sm:$0xff]
        %v5984 = vld [vmem:[#allocation2 + $0xf8] sm:$0xff]
        %v5985 = vld [vmem:[#allocation3] sm:$0xff]
        %v5986 = vld [vmem:[#allocation3 + $0x8] sm:$0xff]
        %v5987 = vld [vmem:[#allocation3 + $0x10] sm:$0xff]
        %v5988 = vld [vmem:[#allocation3 + $0x18] sm:$0xff]
        %v5989 = vld [vmem:[#allocation3 + $0x20] sm:$0xff]
        %v5990 = vld [vmem:[#allocation3 + $0x28] sm:$0xff]
        %v5991 = vld [vmem:[#allocation3 + $0x30] sm:$0xff]
        %v5992 = vld [vmem:[#allocation3 + $0x38] sm:$0xff]
        %v5993 = vld [vmem:[#allocation3 + $0x40] sm:$0xff]
        %v5994 = vld [vmem:[#allocation3 + $0x48] sm:$0xff]
        %v5995 = vld [vmem:[#allocation3 + $0x50] sm:$0xff]
        %v5996 = vld [vmem:[#allocation3 + $0x58] sm:$0xff]
        %v5997 = vld [vmem:[#allocation3 + $0x60] sm:$0xff]
        %v5998 = vld [vmem:[#allocation3 + $0x68] sm:$0xff]
        %v5999 = vld [vmem:[#allocation3 + $0x70] sm:$0xff]
        %v6000 = vld [vmem:[#allocation3 + $0x78] sm:$0xff]
        %v6001 = vld [vmem:[#allocation3 + $0x80] sm:$0xff]
        %v6002 = vld [vmem:[#allocation3 + $0x88] sm:$0xff]
        %v6003 = vld [vmem:[#allocation3 + $0x90] sm:$0xff]
        %v6004 = vld [vmem:[#allocation3 + $0x98] sm:$0xff]
        %v6005 = vld [vmem:[#allocation3 + $0xa0] sm:$0xff]
        %v6006 = vld [vmem:[#allocation3 + $0xa8] sm:$0xff]
        %v6007 = vld [vmem:[#allocation3 + $0xb0] sm:$0xff]
        %v6008 = vld [vmem:[#allocation3 + $0xb8] sm:$0xff]
        %v6009 = vld [vmem:[#allocation3 + $0xc0] sm:$0xff]
        %v6010 = vld [vmem:[#allocation3 + $0xc8] sm:$0xff]
        %v6011 = vld [vmem:[#allocation3 + $0xd0] sm:$0xff]
        %v6012 = vld [vmem:[#allocation3 + $0xd8] sm:$0xff]
        %v6013 = vld [vmem:[#allocation3 + $0xe0] sm:$0xff]
        %v6014 = vld [vmem:[#allocation3 + $0xe8] sm:$0xff]
        %v6015 = vld [vmem:[#allocation3 + $0xf0] sm:$0xff]
        %v6016 = vld [vmem:[#allocation3 + $0xf8] sm:$0xff]
        %v6017 = vmul.f32 %v5953, %v5985
        %v6018 = vmul.f32 %v5954, %v5986
        %v6019 = vmul.f32 %v5955, %v5987
        %v6020 = vmul.f32 %v5956, %v5988
        %v6021 = vmul.f32 %v5957, %v5989
        %v6022 = vmul.f32 %v5958, %v5990
        %v6023 = vmul.f32 %v5959, %v5991
        %v6024 = vmul.f32 %v5960, %v5992
        %v6025 = vmul.f32 %v5961, %v5993
        %v6026 = vmul.f32 %v5962, %v5994
        %v6027 = vmul.f32 %v5963, %v5995
        %v6028 = vmul.f32 %v5964, %v5996
        %v6029 = vmul.f32 %v5965, %v5997
        %v6030 = vmul.f32 %v5966, %v5998
        %v6031 = vmul.f32 %v5967, %v5999
        %v6032 = vmul.f32 %v5968, %v6000
        %v6033 = vmul.f32 %v5969, %v6001
        %v6034 = vmul.f32 %v5970, %v6002
        %v6035 = vmul.f32 %v5971, %v6003
        %v6036 = vmul.f32 %v5972, %v6004
        %v6037 = vmul.f32 %v5973, %v6005
        %v6038 = vmul.f32 %v5974, %v6006
        %v6039 = vmul.f32 %v5975, %v6007
        %v6040 = vmul.f32 %v5976, %v6008
        %v6041 = vmul.f32 %v5977, %v6009
        %v6042 = vmul.f32 %v5978, %v6010
        %v6043 = vmul.f32 %v5979, %v6011
        %v6044 = vmul.f32 %v5980, %v6012
        %v6045 = vmul.f32 %v5981, %v6013
        %v6046 = vmul.f32 %v5982, %v6014
        %v6047 = vmul.f32 %v5983, %v6015
        %v6048 = vmul.f32 %v5984, %v6016
        %v6049 = vld [vmem:[#allocation4] sm:$0xff]
        %v6050 = vld [vmem:[#allocation4 + $0x8] sm:$0xff]
        %v6051 = vld [vmem:[#allocation4 + $0x10] sm:$0xff]
        %v6052 = vld [vmem:[#allocation4 + $0x18] sm:$0xff]
        %v6053 = vld [vmem:[#allocation4 + $0x20] sm:$0xff]
        %v6054 = vld [vmem:[#allocation4 + $0x28] sm:$0xff]
        %v6055 = vld [vmem:[#allocation4 + $0x30] sm:$0xff]
        %v6056 = vld [vmem:[#allocation4 + $0x38] sm:$0xff]
        %v6057 = vld [vmem:[#allocation4 + $0x40] sm:$0xff]
        %v6058 = vld [vmem:[#allocation4 + $0x48] sm:$0xff]
        %v6059 = vld [vmem:[#allocation4 + $0x50] sm:$0xff]
        %v6060 = vld [vmem:[#allocation4 + $0x58] sm:$0xff]
        %v6061 = vld [vmem:[#allocation4 + $0x60] sm:$0xff]
        %v6062 = vld [vmem:[#allocation4 + $0x68] sm:$0xff]
        %v6063 = vld [vmem:[#allocation4 + $0x70] sm:$0xff]
        %v6064 = vld [vmem:[#allocation4 + $0x78] sm:$0xff]
        %v6065 = vld [vmem:[#allocation4 + $0x80] sm:$0xff]
        %v6066 = vld [vmem:[#allocation4 + $0x88] sm:$0xff]
        %v6067 = vld [vmem:[#allocation4 + $0x90] sm:$0xff]
        %v6068 = vld [vmem:[#allocation4 + $0x98] sm:$0xff]
        %v6069 = vld [vmem:[#allocation4 + $0xa0] sm:$0xff]
        %v6070 = vld [vmem:[#allocation4 + $0xa8] sm:$0xff]
        %v6071 = vld [vmem:[#allocation4 + $0xb0] sm:$0xff]
        %v6072 = vld [vmem:[#allocation4 + $0xb8] sm:$0xff]
        %v6073 = vld [vmem:[#allocation4 + $0xc0] sm:$0xff]
        %v6074 = vld [vmem:[#allocation4 + $0xc8] sm:$0xff]
        %v6075 = vld [vmem:[#allocation4 + $0xd0] sm:$0xff]
        %v6076 = vld [vmem:[#allocation4 + $0xd8] sm:$0xff]
        %v6077 = vld [vmem:[#allocation4 + $0xe0] sm:$0xff]
        %v6078 = vld [vmem:[#allocation4 + $0xe8] sm:$0xff]
        %v6079 = vld [vmem:[#allocation4 + $0xf0] sm:$0xff]
        %v6080 = vld [vmem:[#allocation4 + $0xf8] sm:$0xff]
        %v6081 = vmul.f32 %v6017, %v6049
        %v6082 = vmul.f32 %v6018, %v6050
        %v6083 = vmul.f32 %v6019, %v6051
        %v6084 = vmul.f32 %v6020, %v6052
        %v6085 = vmul.f32 %v6021, %v6053
        %v6086 = vmul.f32 %v6022, %v6054
        %v6087 = vmul.f32 %v6023, %v6055
        %v6088 = vmul.f32 %v6024, %v6056
        %v6089 = vmul.f32 %v6025, %v6057
        %v6090 = vmul.f32 %v6026, %v6058
        %v6091 = vmul.f32 %v6027, %v6059
        %v6092 = vmul.f32 %v6028, %v6060
        %v6093 = vmul.f32 %v6029, %v6061
        %v6094 = vmul.f32 %v6030, %v6062
        %v6095 = vmul.f32 %v6031, %v6063
        %v6096 = vmul.f32 %v6032, %v6064
        %v6097 = vmul.f32 %v6033, %v6065
        %v6098 = vmul.f32 %v6034, %v6066
        %v6099 = vmul.f32 %v6035, %v6067
        %v6100 = vmul.f32 %v6036, %v6068
        %v6101 = vmul.f32 %v6037, %v6069
        %v6102 = vmul.f32 %v6038, %v6070
        %v6103 = vmul.f32 %v6039, %v6071
        %v6104 = vmul.f32 %v6040, %v6072
        %v6105 = vmul.f32 %v6041, %v6073
        %v6106 = vmul.f32 %v6042, %v6074
        %v6107 = vmul.f32 %v6043, %v6075
        %v6108 = vmul.f32 %v6044, %v6076
        %v6109 = vmul.f32 %v6045, %v6077
        %v6110 = vmul.f32 %v6046, %v6078
        %v6111 = vmul.f32 %v6047, %v6079
        %v6112 = vmul.f32 %v6048, %v6080
        %v6113 = vld [vmem:[%s2] sm:$0xff]
        %v6114 = vld [vmem:[%s2 + $0x8] sm:$0xff]
        %v6115 = vld [vmem:[%s2 + $0x10] sm:$0xff]
        %v6116 = vld [vmem:[%s2 + $0x18] sm:$0xff]
        %v6117 = vld [vmem:[%s2 + $0x20] sm:$0xff]
        %v6118 = vld [vmem:[%s2 + $0x28] sm:$0xff]
        %v6119 = vld [vmem:[%s2 + $0x30] sm:$0xff]
        %v6120 = vld [vmem:[%s2 + $0x38] sm:$0xff]
        %v6121 = vld [vmem:[%s2 + $0x40] sm:$0xff]
        %v6122 = vld [vmem:[%s2 + $0x48] sm:$0xff]
        %v6123 = vld [vmem:[%s2 + $0x50] sm:$0xff]
        %v6124 = vld [vmem:[%s2 + $0x58] sm:$0xff]
        %v6125 = vld [vmem:[%s2 + $0x60] sm:$0xff]
        %v6126 = vld [vmem:[%s2 + $0x68] sm:$0xff]
        %v6127 = vld [vmem:[%s2 + $0x70] sm:$0xff]
        %v6128 = vld [vmem:[%s2 + $0x78] sm:$0xff]
        %v6129 = vld [vmem:[%s3] sm:$0xff]
        %v6130 = vld [vmem:[%s3 + $0x8] sm:$0xff]
        %v6131 = vld [vmem:[%s3 + $0x10] sm:$0xff]
        %v6132 = vld [vmem:[%s3 + $0x18] sm:$0xff]
        %v6133 = vld [vmem:[%s3 + $0x20] sm:$0xff]
        %v6134 = vld [vmem:[%s3 + $0x28] sm:$0xff]
        %v6135 = vld [vmem:[%s3 + $0x30] sm:$0xff]
        %v6136 = vld [vmem:[%s3 + $0x38] sm:$0xff]
        %v6137 = vld [vmem:[%s3 + $0x40] sm:$0xff]
        %v6138 = vld [vmem:[%s3 + $0x48] sm:$0xff]
        %v6139 = vld [vmem:[%s3 + $0x50] sm:$0xff]
        %v6140 = vld [vmem:[%s3 + $0x58] sm:$0xff]
        %v6141 = vld [vmem:[%s3 + $0x60] sm:$0xff]
        %v6142 = vld [vmem:[%s3 + $0x68] sm:$0xff]
        %v6143 = vld [vmem:[%s3 + $0x70] sm:$0xff]
        %v6144 = vld [vmem:[%s3 + $0x78] sm:$0xff]
        %6146 = vset.pattern.permute.xlu0 0
        %6147 = vperm.xlu0 %6146, %v6129
        %v6148 = vpop.permute.xlu0 %6147
        %6151 = vset.pattern.permute.xlu0 0
        %6152 = vperm.xlu0 %6151, %v6130
        %v6153 = vpop.permute.xlu0 %6152
        %6156 = vset.pattern.permute.xlu0 0
        %6157 = vperm.xlu0 %6156, %v6131
        %v6158 = vpop.permute.xlu0 %6157
        %6161 = vset.pattern.permute.xlu0 0
        %6162 = vperm.xlu0 %6161, %v6132
        %v6163 = vpop.permute.xlu0 %6162
        %6166 = vset.pattern.permute.xlu0 0
        %6167 = vperm.xlu0 %6166, %v6133
        %v6168 = vpop.permute.xlu0 %6167
        %6171 = vset.pattern.permute.xlu0 0
        %6172 = vperm.xlu0 %6171, %v6134
        %v6173 = vpop.permute.xlu0 %6172
        %6176 = vset.pattern.permute.xlu0 0
        %6177 = vperm.xlu0 %6176, %v6135
        %v6178 = vpop.permute.xlu0 %6177
        %6181 = vset.pattern.permute.xlu0 0
        %6182 = vperm.xlu0 %6181, %v6136
        %v6183 = vpop.permute.xlu0 %6182
        %6186 = vset.pattern.permute.xlu0 0
        %6187 = vperm.xlu0 %6186, %v6137
        %v6188 = vpop.permute.xlu0 %6187
        %6191 = vset.pattern.permute.xlu0 0
        %6192 = vperm.xlu0 %6191, %v6138
        %v6193 = vpop.permute.xlu0 %6192
        %6196 = vset.pattern.permute.xlu0 0
        %6197 = vperm.xlu0 %6196, %v6139
        %v6198 = vpop.permute.xlu0 %6197
        %6201 = vset.pattern.permute.xlu0 0
        %6202 = vperm.xlu0 %6201, %v6140
        %v6203 = vpop.permute.xlu0 %6202
        %6206 = vset.pattern.permute.xlu0 0
        %6207 = vperm.xlu0 %6206, %v6141
        %v6208 = vpop.permute.xlu0 %6207
        %6211 = vset.pattern.permute.xlu0 0
        %6212 = vperm.xlu0 %6211, %v6142
        %v6213 = vpop.permute.xlu0 %6212
        %6216 = vset.pattern.permute.xlu0 0
        %6217 = vperm.xlu0 %6216, %v6143
        %v6218 = vpop.permute.xlu0 %6217
        %6221 = vset.pattern.permute.xlu0 0
        %6222 = vperm.xlu0 %6221, %v6144
        %v6223 = vpop.permute.xlu0 %6222
        %vm6225 = vcmask 523264
        %v6227 = vsel %vm6225, %v6113, 0
        %v6230 = vsel %vm6225, %v6114, 0
        %v6233 = vsel %vm6225, %v6115, 0
        %v6236 = vsel %vm6225, %v6116, 0
        %v6239 = vsel %vm6225, %v6117, 0
        %v6242 = vsel %vm6225, %v6118, 0
        %v6245 = vsel %vm6225, %v6119, 0
        %v6248 = vsel %vm6225, %v6120, 0
        %v6251 = vsel %vm6225, %v6121, 0
        %v6254 = vsel %vm6225, %v6122, 0
        %v6257 = vsel %vm6225, %v6123, 0
        %v6260 = vsel %vm6225, %v6124, 0
        %v6263 = vsel %vm6225, %v6125, 0
        %v6266 = vsel %vm6225, %v6126, 0
        %v6269 = vsel %vm6225, %v6127, 0
        %v6272 = vsel %vm6225, %v6128, 0
        %6274 = vmatprep.subr.mxu0 %v6082
        %6275 = vmatpush1.msra.mxu0 %v6081
        %6276 = vmatprep.subr.mxu0 %v6086
        %6277 = vmatpush1.msra.mxu0 %v6085
        %6278 = vmatprep.subr.mxu0 %v6090
        %6279 = vmatpush1.msra.mxu0 %v6089
        %6280 = vmatprep.subr.mxu0 %v6094
        %6281 = vmatpush1.msra.mxu0 %v6093
        %6282 = vmatprep.subr.mxu0 %v6098
        %6283 = vmatpush1.msra.mxu0 %v6097
        %6284 = vmatprep.subr.mxu0 %v6102
        %6285 = vmatpush1.msra.mxu0 %v6101
        %6286 = vmatprep.subr.mxu0 %v6106
        %6287 = vmatpush1.msra.mxu0 %v6105
        %6288 = vmatprep.subr.mxu0 %v6110
        %6289 = vmatpush1.msra.mxu0 %v6109
        %6290 = vmatprep.subr.mxu0 0.0
        %6291 = vmatpush1.msra.mxu0 0.0
        %6292 = vmatprep.subr.mxu0 0.0
        %6293 = vmatpush1.msra.mxu0 0.0
        %6294 = vmatprep.subr.mxu0 0.0
        %6295 = vmatpush1.msra.mxu0 0.0
        %6296 = vmatprep.subr.mxu0 0.0
        %6297 = vmatpush1.msra.mxu0 0.0
        %6298 = vmatprep.subr.mxu0 0.0
        %6299 = vmatpush1.msra.mxu0 0.0
        %6300 = vmatprep.subr.mxu0 0.0
        %6301 = vmatpush1.msra.mxu0 0.0
        %6302 = vmatprep.subr.mxu0 0.0
        %6303 = vmatpush1.msra.mxu0 0.0
        %6304 = vmatprep.subr.mxu0 0.0
        %6305 = vmatpush1.msra.mxu0 0.0
        %6306 = vmatprep.subr.mxu0 0.0
        %6307 = vmatpush1.msra.mxu0 0.0
        %6308 = vmatprep.subr.mxu0 0.0
        %6309 = vmatpush1.msra.mxu0 0.0
        %6310 = vmatprep.subr.mxu0 0.0
        %6311 = vmatpush1.msra.mxu0 0.0
        %6312 = vmatprep.subr.mxu0 0.0
        %6313 = vmatpush1.msra.mxu0 0.0
        %6314 = vmatprep.subr.mxu0 0.0
        %6315 = vmatpush1.msra.mxu0 0.0
        %6316 = vmatprep.subr.mxu0 0.0
        %6317 = vmatpush1.msra.mxu0 0.0
        %6318 = vmatprep.subr.mxu0 0.0
        %6319 = vmatpush1.msra.mxu0 0.0
        %6320 = vmatprep.subr.mxu0 0.0
        %6321 = vmatpush1.msra.mxu0 0.0
        %6322 = vmatprep.subr.mxu0 0.0
        %6323 = vmatpush1.msra.mxu0 0.0
        %6324 = vmatprep.subr.mxu0 0.0
        %6325 = vmatpush1.msra.mxu0 0.0
        %6326 = vmatprep.subr.mxu0 0.0
        %6327 = vmatpush1.msra.mxu0 0.0
        %6328 = vmatprep.subr.mxu0 0.0
        %6329 = vmatpush1.msra.mxu0 0.0
        %6330 = vmatprep.subr.mxu0 0.0
        %6331 = vmatpush1.msra.mxu0 0.0
        %6332 = vmatprep.subr.mxu0 0.0
        %6333 = vmatpush1.msra.mxu0 0.0
        %6334 = vmatprep.subr.mxu0 0.0
        %6335 = vmatpush1.msra.mxu0 0.0
        %6336 = vmatprep.subr.mxu0 0.0
        %6337 = vmatpush1.msra.mxu0 0.0
        %6338 = vmatprep.mubr.f32.mxu0 0.0
        %6339 = vmatmul.mubr.f32.gmra.mrb[0].mxu0 %v6227
        %v6340 = vpop.f32.mrb[0].mxu0
        %v6341 = vadd.f32 %v6148, %v6340
        %v6342 = vpop.f32.mrb[0].mxu0
        %v6343 = vadd.f32 %v6148, %v6342
        %6344 = vmatprep.mubr.f32.mxu0 0.0
        %6345 = vmatmul.mubr.f32.gmra.mrb[0].mxu0 %v6230
        %v6346 = vpop.f32.mrb[0].mxu0
        %v6347 = vadd.f32 %v6153, %v6346
        %v6348 = vpop.f32.mrb[0].mxu0
        %v6349 = vadd.f32 %v6153, %v6348
        %6350 = vmatprep.mubr.f32.mxu0 0.0
        %6351 = vmatmul.mubr.f32.gmra.mrb[0].mxu0 %v6233
        %v6352 = vpop.f32.mrb[0].mxu0
        %v6353 = vadd.f32 %v6158, %v6352
        %v6354 = vpop.f32.mrb[0].mxu0
        %v6355 = vadd.f32 %v6158, %v6354
        %6356 = vmatprep.mubr.f32.mxu0 0.0
        %6357 = vmatmul.mubr.f32.gmra.mrb[0].mxu0 %v6236
        %v6358 = vpop.f32.mrb[0].mxu0
        %v6359 = vadd.f32 %v6163, %v6358
        %v6360 = vpop.f32.mrb[0].mxu0
        %v6361 = vadd.f32 %v6163, %v6360
        %6362 = vmatprep.mubr.f32.mxu0 0.0
        %6363 = vmatmul.mubr.f32.gmra.mrb[0].mxu0 %v6239
        %v6364 = vpop.f32.mrb[0].mxu0
        %v6365 = vadd.f32 %v6168, %v6364
        %v6366 = vpop.f32.mrb[0].mxu0
        %v6367 = vadd.f32 %v6168, %v6366
        %6368 = vmatprep.mubr.f32.mxu0 0.0
        %6369 = vmatmul.mubr.f32.gmra.mrb[0].mxu0 %v6242
        %v6370 = vpop.f32.mrb[0].mxu0
        %v6371 = vadd.f32 %v6173, %v6370
        %v6372 = vpop.f32.mrb[0].mxu0
        %v6373 = vadd.f32 %v6173, %v6372
        %6374 = vmatprep.mubr.f32.mxu0 0.0
        %6375 = vmatmul.mubr.f32.gmra.mrb[0].mxu0 %v6245
        %v6376 = vpop.f32.mrb[0].mxu0
        %v6377 = vadd.f32 %v6178, %v6376
        %v6378 = vpop.f32.mrb[0].mxu0
        %v6379 = vadd.f32 %v6178, %v6378
        %6380 = vmatprep.mubr.f32.mxu0 0.0
        %6381 = vmatmul.mubr.f32.gmra.mrb[0].mxu0 %v6248
        %v6382 = vpop.f32.mrb[0].mxu0
        %v6383 = vadd.f32 %v6183, %v6382
        %v6384 = vpop.f32.mrb[0].mxu0
        %v6385 = vadd.f32 %v6183, %v6384
        %6386 = vmatprep.mubr.f32.mxu0 0.0
        %6387 = vmatmul.mubr.f32.gmra.mrb[0].mxu0 %v6251
        %v6388 = vpop.f32.mrb[0].mxu0
        %v6389 = vadd.f32 %v6188, %v6388
        %v6390 = vpop.f32.mrb[0].mxu0
        %v6391 = vadd.f32 %v6188, %v6390
        %6392 = vmatprep.mubr.f32.mxu0 0.0
        %6393 = vmatmul.mubr.f32.gmra.mrb[0].mxu0 %v6254
        %v6394 = vpop.f32.mrb[0].mxu0
        %v6395 = vadd.f32 %v6193, %v6394
        %v6396 = vpop.f32.mrb[0].mxu0
        %v6397 = vadd.f32 %v6193, %v6396
        %6398 = vmatprep.mubr.f32.mxu0 0.0
        %6399 = vmatmul.mubr.f32.gmra.mrb[0].mxu0 %v6257
        %v6400 = vpop.f32.mrb[0].mxu0
        %v6401 = vadd.f32 %v6198, %v6400
        %v6402 = vpop.f32.mrb[0].mxu0
        %v6403 = vadd.f32 %v6198, %v6402
        %6404 = vmatprep.mubr.f32.mxu0 0.0
        %6405 = vmatmul.mubr.f32.gmra.mrb[0].mxu0 %v6260
        %v6406 = vpop.f32.mrb[0].mxu0
        %v6407 = vadd.f32 %v6203, %v6406
        %v6408 = vpop.f32.mrb[0].mxu0
        %v6409 = vadd.f32 %v6203, %v6408
        %6410 = vmatprep.mubr.f32.mxu0 0.0
        %6411 = vmatmul.mubr.f32.gmra.mrb[0].mxu0 %v6263
        %v6412 = vpop.f32.mrb[0].mxu0
        %v6413 = vadd.f32 %v6208, %v6412
        %v6414 = vpop.f32.mrb[0].mxu0
        %v6415 = vadd.f32 %v6208, %v6414
        %6416 = vmatprep.mubr.f32.mxu0 0.0
        %6417 = vmatmul.mubr.f32.gmra.mrb[0].mxu0 %v6266
        %v6418 = vpop.f32.mrb[0].mxu0
        %v6419 = vadd.f32 %v6213, %v6418
        %v6420 = vpop.f32.mrb[0].mxu0
        %v6421 = vadd.f32 %v6213, %v6420
        %6422 = vmatprep.mubr.f32.mxu0 0.0
        %6423 = vmatmul.mubr.f32.gmra.mrb[0].mxu0 %v6269
        %v6424 = vpop.f32.mrb[0].mxu0
        %v6425 = vadd.f32 %v6218, %v6424
        %v6426 = vpop.f32.mrb[0].mxu0
        %v6427 = vadd.f32 %v6218, %v6426
        %6428 = vmatprep.mubr.f32.mxu0 0.0
        %6429 = vmatmul.mubr.f32.gmra.mrb[0].mxu0 %v6272
        %v6430 = vpop.f32.mrb[0].mxu0
        %v6431 = vadd.f32 %v6223, %v6430
        %v6432 = vpop.f32.mrb[0].mxu0
        %v6433 = vadd.f32 %v6223, %v6432
        %6434 = vdwg.mxu0
        %6435 = vmatprep.subr.mxu0 %v6084
        %6436 = vmatpush1.msra.mxu0 %v6083
        %6437 = vmatprep.subr.mxu0 %v6088
        %6438 = vmatpush1.msra.mxu0 %v6087
        %6439 = vmatprep.subr.mxu0 %v6092
        %6440 = vmatpush1.msra.mxu0 %v6091
        %6441 = vmatprep.subr.mxu0 %v6096
        %6442 = vmatpush1.msra.mxu0 %v6095
        %6443 = vmatprep.subr.mxu0 %v6100
        %6444 = vmatpush1.msra.mxu0 %v6099
        %6445 = vmatprep.subr.mxu0 %v6104
        %6446 = vmatpush1.msra.mxu0 %v6103
        %6447 = vmatprep.subr.mxu0 %v6108
        %6448 = vmatpush1.msra.mxu0 %v6107
        %6449 = vmatprep.subr.mxu0 %v6112
        %6450 = vmatpush1.msra.mxu0 %v6111
        %6451 = vmatprep.subr.mxu0 0.0
        %6452 = vmatpush1.msra.mxu0 0.0
        %6453 = vmatprep.subr.mxu0 0.0
        %6454 = vmatpush1.msra.mxu0 0.0
        %6455 = vmatprep.subr.mxu0 0.0
        %6456 = vmatpush1.msra.mxu0 0.0
        %6457 = vmatprep.subr.mxu0 0.0
        %6458 = vmatpush1.msra.mxu0 0.0
        %6459 = vmatprep.subr.mxu0 0.0
        %6460 = vmatpush1.msra.mxu0 0.0
        %6461 = vmatprep.subr.mxu0 0.0
        %6462 = vmatpush1.msra.mxu0 0.0
        %6463 = vmatprep.subr.mxu0 0.0
        %6464 = vmatpush1.msra.mxu0 0.0
        %6465 = vmatprep.subr.mxu0 0.0
        %6466 = vmatpush1.msra.mxu0 0.0
        %6467 = vmatprep.subr.mxu0 0.0
        %6468 = vmatpush1.msra.mxu0 0.0
        %6469 = vmatprep.subr.mxu0 0.0
        %6470 = vmatpush1.msra.mxu0 0.0
        %6471 = vmatprep.subr.mxu0 0.0
        %6472 = vmatpush1.msra.mxu0 0.0
        %6473 = vmatprep.subr.mxu0 0.0
        %6474 = vmatpush1.msra.mxu0 0.0
        %6475 = vmatprep.subr.mxu0 0.0
        %6476 = vmatpush1.msra.mxu0 0.0
        %6477 = vmatprep.subr.mxu0 0.0
        %6478 = vmatpush1.msra.mxu0 0.0
        %6479 = vmatprep.subr.mxu0 0.0
        %6480 = vmatpush1.msra.mxu0 0.0
        %6481 = vmatprep.subr.mxu0 0.0
        %6482 = vmatpush1.msra.mxu0 0.0
        %6483 = vmatprep.subr.mxu0 0.0
        %6484 = vmatpush1.msra.mxu0 0.0
        %6485 = vmatprep.subr.mxu0 0.0
        %6486 = vmatpush1.msra.mxu0 0.0
        %6487 = vmatprep.subr.mxu0 0.0
        %6488 = vmatpush1.msra.mxu0 0.0
        %6489 = vmatprep.subr.mxu0 0.0
        %6490 = vmatpush1.msra.mxu0 0.0
        %6491 = vmatprep.subr.mxu0 0.0
        %6492 = vmatpush1.msra.mxu0 0.0
        %6493 = vmatprep.subr.mxu0 0.0
        %6494 = vmatpush1.msra.mxu0 0.0
        %6495 = vmatprep.subr.mxu0 0.0
        %6496 = vmatpush1.msra.mxu0 0.0
        %6497 = vmatprep.subr.mxu0 0.0
        %6498 = vmatpush1.msra.mxu0 0.0
        %6499 = vmatprep.mubr.f32.mxu0 0.0
        %6500 = vmatmul.mubr.f32.gmra.mrb[0].mxu0 %v6227
        %v6501 = vpop.f32.mrb[0].mxu0
        %v6502 = vadd.f32 %v6148, %v6501
        %v6503 = vpop.f32.mrb[0].mxu0
        %v6504 = vadd.f32 %v6148, %v6503
        %6505 = vmatprep.mubr.f32.mxu0 0.0
        %6506 = vmatmul.mubr.f32.gmra.mrb[0].mxu0 %v6230
        %v6507 = vpop.f32.mrb[0].mxu0
        %v6508 = vadd.f32 %v6153, %v6507
        %v6509 = vpop.f32.mrb[0].mxu0
        %v6510 = vadd.f32 %v6153, %v6509
        %6511 = vmatprep.mubr.f32.mxu0 0.0
        %6512 = vmatmul.mubr.f32.gmra.mrb[0].mxu0 %v6233
        %v6513 = vpop.f32.mrb[0].mxu0
        %v6514 = vadd.f32 %v6158, %v6513
        %v6515 = vpop.f32.mrb[0].mxu0
        %v6516 = vadd.f32 %v6158, %v6515
        %6517 = vmatprep.mubr.f32.mxu0 0.0
        %6518 = vmatmul.mubr.f32.gmra.mrb[0].mxu0 %v6236
        %v6519 = vpop.f32.mrb[0].mxu0
        %v6520 = vadd.f32 %v6163, %v6519
        %v6521 = vpop.f32.mrb[0].mxu0
        %v6522 = vadd.f32 %v6163, %v6521
        %6523 = vmatprep.mubr.f32.mxu0 0.0
        %6524 = vmatmul.mubr.f32.gmra.mrb[0].mxu0 %v6239
        %v6525 = vpop.f32.mrb[0].mxu0
        %v6526 = vadd.f32 %v6168, %v6525
        %v6527 = vpop.f32.mrb[0].mxu0
        %v6528 = vadd.f32 %v6168, %v6527
        %6529 = vmatprep.mubr.f32.mxu0 0.0
        %6530 = vmatmul.mubr.f32.gmra.mrb[0].mxu0 %v6242
        %v6531 = vpop.f32.mrb[0].mxu0
        %v6532 = vadd.f32 %v6173, %v6531
        %v6533 = vpop.f32.mrb[0].mxu0
        %v6534 = vadd.f32 %v6173, %v6533
        %6535 = vmatprep.mubr.f32.mxu0 0.0
        %6536 = vmatmul.mubr.f32.gmra.mrb[0].mxu0 %v6245
        %v6537 = vpop.f32.mrb[0].mxu0
        %v6538 = vadd.f32 %v6178, %v6537
        %v6539 = vpop.f32.mrb[0].mxu0
        %v6540 = vadd.f32 %v6178, %v6539
        %6541 = vmatprep.mubr.f32.mxu0 0.0
        %6542 = vmatmul.mubr.f32.gmra.mrb[0].mxu0 %v6248
        %v6543 = vpop.f32.mrb[0].mxu0
        %v6544 = vadd.f32 %v6183, %v6543
        %v6545 = vpop.f32.mrb[0].mxu0
        %v6546 = vadd.f32 %v6183, %v6545
        %6547 = vmatprep.mubr.f32.mxu0 0.0
        %6548 = vmatmul.mubr.f32.gmra.mrb[0].mxu0 %v6251
        %v6549 = vpop.f32.mrb[0].mxu0
        %v6550 = vadd.f32 %v6188, %v6549
        %v6551 = vpop.f32.mrb[0].mxu0
        %v6552 = vadd.f32 %v6188, %v6551
        %6553 = vmatprep.mubr.f32.mxu0 0.0
        %6554 = vmatmul.mubr.f32.gmra.mrb[0].mxu0 %v6254
        %v6555 = vpop.f32.mrb[0].mxu0
        %v6556 = vadd.f32 %v6193, %v6555
        %v6557 = vpop.f32.mrb[0].mxu0
        %v6558 = vadd.f32 %v6193, %v6557
        %6559 = vmatprep.mubr.f32.mxu0 0.0
        %6560 = vmatmul.mubr.f32.gmra.mrb[0].mxu0 %v6257
        %v6561 = vpop.f32.mrb[0].mxu0
        %v6562 = vadd.f32 %v6198, %v6561
        %v6563 = vpop.f32.mrb[0].mxu0
        %v6564 = vadd.f32 %v6198, %v6563
        %6565 = vmatprep.mubr.f32.mxu0 0.0
        %6566 = vmatmul.mubr.f32.gmra.mrb[0].mxu0 %v6260
        %v6567 = vpop.f32.mrb[0].mxu0
        %v6568 = vadd.f32 %v6203, %v6567
        %v6569 = vpop.f32.mrb[0].mxu0
        %v6570 = vadd.f32 %v6203, %v6569
        %6571 = vmatprep.mubr.f32.mxu0 0.0
        %6572 = vmatmul.mubr.f32.gmra.mrb[0].mxu0 %v6263
        %v6573 = vpop.f32.mrb[0].mxu0
        %v6574 = vadd.f32 %v6208, %v6573
        %v6575 = vpop.f32.mrb[0].mxu0
        %v6576 = vadd.f32 %v6208, %v6575
        %6577 = vmatprep.mubr.f32.mxu0 0.0
        %6578 = vmatmul.mubr.f32.gmra.mrb[0].mxu0 %v6266
        %v6579 = vpop.f32.mrb[0].mxu0
        %v6580 = vadd.f32 %v6213, %v6579
        %v6581 = vpop.f32.mrb[0].mxu0
        %v6582 = vadd.f32 %v6213, %v6581
        %6583 = vmatprep.mubr.f32.mxu0 0.0
        %6584 = vmatmul.mubr.f32.gmra.mrb[0].mxu0 %v6269
        %v6585 = vpop.f32.mrb[0].mxu0
        %v6586 = vadd.f32 %v6218, %v6585
        %v6587 = vpop.f32.mrb[0].mxu0
        %v6588 = vadd.f32 %v6218, %v6587
        %6589 = vmatprep.mubr.f32.mxu0 0.0
        %6590 = vmatmul.mubr.f32.gmra.mrb[0].mxu0 %v6272
        %v6591 = vpop.f32.mrb[0].mxu0
        %v6592 = vadd.f32 %v6223, %v6591
        %v6593 = vpop.f32.mrb[0].mxu0
        %v6594 = vadd.f32 %v6223, %v6593
        %6595 = vdwg.mxu0
        %v6596 = vmax.f32 %v6341, 0.0
        %v6597 = vmax.f32 %v6343, 0.0
        %v6598 = vmax.f32 %v6502, 0.0
        %v6599 = vmax.f32 %v6504, 0.0
        %v6600 = vmax.f32 %v6347, 0.0
        %v6601 = vmax.f32 %v6349, 0.0
        %v6602 = vmax.f32 %v6508, 0.0
        %v6603 = vmax.f32 %v6510, 0.0
        %v6604 = vmax.f32 %v6353, 0.0
        %v6605 = vmax.f32 %v6355, 0.0
        %v6606 = vmax.f32 %v6514, 0.0
        %v6607 = vmax.f32 %v6516, 0.0
        %v6608 = vmax.f32 %v6359, 0.0
        %v6609 = vmax.f32 %v6361, 0.0
        %v6610 = vmax.f32 %v6520, 0.0
        %v6611 = vmax.f32 %v6522, 0.0
        %v6612 = vmax.f32 %v6365, 0.0
        %v6613 = vmax.f32 %v6367, 0.0
        %v6614 = vmax.f32 %v6526, 0.0
        %v6615 = vmax.f32 %v6528, 0.0
        %v6616 = vmax.f32 %v6371, 0.0
        %v6617 = vmax.f32 %v6373, 0.0
        %v6618 = vmax.f32 %v6532, 0.0
        %v6619 = vmax.f32 %v6534, 0.0
        %v6620 = vmax.f32 %v6377, 0.0
        %v6621 = vmax.f32 %v6379, 0.0
        %v6622 = vmax.f32 %v6538, 0.0
        %v6623 = vmax.f32 %v6540, 0.0
        %v6624 = vmax.f32 %v6383, 0.0
        %v6625 = vmax.f32 %v6385, 0.0
        %v6626 = vmax.f32 %v6544, 0.0
        %v6627 = vmax.f32 %v6546, 0.0
        %v6628 = vmax.f32 %v6389, 0.0
        %v6629 = vmax.f32 %v6391, 0.0
        %v6630 = vmax.f32 %v6550, 0.0
        %v6631 = vmax.f32 %v6552, 0.0
        %v6632 = vmax.f32 %v6395, 0.0
        %v6633 = vmax.f32 %v6397, 0.0
        %v6634 = vmax.f32 %v6556, 0.0
        %v6635 = vmax.f32 %v6558, 0.0
        %v6636 = vmax.f32 %v6401, 0.0
        %v6637 = vmax.f32 %v6403, 0.0
        %v6638 = vmax.f32 %v6562, 0.0
        %v6639 = vmax.f32 %v6564, 0.0
        %v6640 = vmax.f32 %v6407, 0.0
        %v6641 = vmax.f32 %v6409, 0.0
        %v6642 = vmax.f32 %v6568, 0.0
        %v6643 = vmax.f32 %v6570, 0.0
        %v6644 = vmax.f32 %v6413, 0.0
        %v6645 = vmax.f32 %v6415, 0.0
        %v6646 = vmax.f32 %v6574, 0.0
        %v6647 = vmax.f32 %v6576, 0.0
        %v6648 = vmax.f32 %v6419, 0.0
        %v6649 = vmax.f32 %v6421, 0.0
        %v6650 = vmax.f32 %v6580, 0.0
        %v6651 = vmax.f32 %v6582, 0.0
        %v6652 = vmax.f32 %v6425, 0.0
        %v6653 = vmax.f32 %v6427, 0.0
        %v6654 = vmax.f32 %v6586, 0.0
        %v6655 = vmax.f32 %v6588, 0.0
        %v6656 = vmax.f32 %v6431, 0.0
        %v6657 = vmax.f32 %v6433, 0.0
        %v6658 = vmax.f32 %v6592, 0.0
        %v6659 = vmax.f32 %v6594, 0.0
        %v6660 = vld [vmem:[%s4] sm:$0xff]
        %v6661 = vld [vmem:[%s4 + $0x8] sm:$0xff]
        %v6662 = vld [vmem:[%s4 + $0x10] sm:$0xff]
        %v6663 = vld [vmem:[%s4 + $0x18] sm:$0xff]
        %v6664 = vld [vmem:[%s4 + $0x20] sm:$0xff]
        %v6665 = vld [vmem:[%s4 + $0x28] sm:$0xff]
        %v6666 = vld [vmem:[%s4 + $0x30] sm:$0xff]
        %v6667 = vld [vmem:[%s4 + $0x38] sm:$0xff]
        %v6668 = vld [vmem:[%s4 + $0x40] sm:$0xff]
        %v6669 = vld [vmem:[%s4 + $0x48] sm:$0xff]
        %v6670 = vld [vmem:[%s4 + $0x50] sm:$0xff]
        %v6671 = vld [vmem:[%s4 + $0x58] sm:$0xff]
        %v6672 = vld [vmem:[%s4 + $0x60] sm:$0xff]
        %v6673 = vld [vmem:[%s4 + $0x68] sm:$0xff]
        %v6674 = vld [vmem:[%s4 + $0x70] sm:$0xff]
        %v6675 = vld [vmem:[%s4 + $0x78] sm:$0xff]
        %v6676 = vld [vmem:[%s5] sm:$0xff]
        %v6677 = vld [vmem:[%s5 + $0x8] sm:$0xff]
        %v6678 = vld [vmem:[%s5 + $0x10] sm:$0xff]
        %v6679 = vld [vmem:[%s5 + $0x18] sm:$0xff]
        %v6680 = vld [vmem:[%s5 + $0x20] sm:$0xff]
        %v6681 = vld [vmem:[%s5 + $0x28] sm:$0xff]
        %v6682 = vld [vmem:[%s5 + $0x30] sm:$0xff]
        %v6683 = vld [vmem:[%s5 + $0x38] sm:$0xff]
        %v6684 = vld [vmem:[%s5 + $0x40] sm:$0xff]
        %v6685 = vld [vmem:[%s5 + $0x48] sm:$0xff]
        %v6686 = vld [vmem:[%s5 + $0x50] sm:$0xff]
        %v6687 = vld [vmem:[%s5 + $0x58] sm:$0xff]
        %v6688 = vld [vmem:[%s5 + $0x60] sm:$0xff]
        %v6689 = vld [vmem:[%s5 + $0x68] sm:$0xff]
        %v6690 = vld [vmem:[%s5 + $0x70] sm:$0xff]
        %v6691 = vld [vmem:[%s5 + $0x78] sm:$0xff]
        %6693 = vset.pattern.permute.xlu0 0
        %6694 = vperm.xlu0 %6693, %v6676
        %v6695 = vpop.permute.xlu0 %6694
        %6698 = vset.pattern.permute.xlu0 0
        %6699 = vperm.xlu0 %6698, %v6677
        %v6700 = vpop.permute.xlu0 %6699
        %6703 = vset.pattern.permute.xlu0 0
        %6704 = vperm.xlu0 %6703, %v6678
        %v6705 = vpop.permute.xlu0 %6704
        %6708 = vset.pattern.permute.xlu0 0
        %6709 = vperm.xlu0 %6708, %v6679
        %v6710 = vpop.permute.xlu0 %6709
        %6713 = vset.pattern.permute.xlu0 0
        %6714 = vperm.xlu0 %6713, %v6680
        %v6715 = vpop.permute.xlu0 %6714
        %6718 = vset.pattern.permute.xlu0 0
        %6719 = vperm.xlu0 %6718, %v6681
        %v6720 = vpop.permute.xlu0 %6719
        %6723 = vset.pattern.permute.xlu0 0
        %6724 = vperm.xlu0 %6723, %v6682
        %v6725 = vpop.permute.xlu0 %6724
        %6728 = vset.pattern.permute.xlu0 0
        %6729 = vperm.xlu0 %6728, %v6683
        %v6730 = vpop.permute.xlu0 %6729
        %6733 = vset.pattern.permute.xlu0 0
        %6734 = vperm.xlu0 %6733, %v6684
        %v6735 = vpop.permute.xlu0 %6734
        %6738 = vset.pattern.permute.xlu0 0
        %6739 = vperm.xlu0 %6738, %v6685
        %v6740 = vpop.permute.xlu0 %6739
        %6743 = vset.pattern.permute.xlu0 0
        %6744 = vperm.xlu0 %6743, %v6686
        %v6745 = vpop.permute.xlu0 %6744
        %6748 = vset.pattern.permute.xlu0 0
        %6749 = vperm.xlu0 %6748, %v6687
        %v6750 = vpop.permute.xlu0 %6749
        %6753 = vset.pattern.permute.xlu0 0
        %6754 = vperm.xlu0 %6753, %v6688
        %v6755 = vpop.permute.xlu0 %6754
        %6758 = vset.pattern.permute.xlu0 0
        %6759 = vperm.xlu0 %6758, %v6689
        %v6760 = vpop.permute.xlu0 %6759
        %6763 = vset.pattern.permute.xlu0 0
        %6764 = vperm.xlu0 %6763, %v6690
        %v6765 = vpop.permute.xlu0 %6764
        %6768 = vset.pattern.permute.xlu0 0
        %6769 = vperm.xlu0 %6768, %v6691
        %v6770 = vpop.permute.xlu0 %6769
        %6772 = vmatprep.subr.mxu0 %v6597
        %6773 = vmatpush1.msra.mxu0 %v6596
        %6774 = vmatprep.subr.mxu0 %v6601
        %6775 = vmatpush1.msra.mxu0 %v6600
        %6776 = vmatprep.subr.mxu0 %v6605
        %6777 = vmatpush1.msra.mxu0 %v6604
        %6778 = vmatprep.subr.mxu0 %v6609
        %6779 = vmatpush1.msra.mxu0 %v6608
        %6780 = vmatprep.subr.mxu0 %v6613
        %6781 = vmatpush1.msra.mxu0 %v6612
        %6782 = vmatprep.subr.mxu0 %v6617
        %6783 = vmatpush1.msra.mxu0 %v6616
        %6784 = vmatprep.subr.mxu0 %v6621
        %6785 = vmatpush1.msra.mxu0 %v6620
        %6786 = vmatprep.subr.mxu0 %v6625
        %6787 = vmatpush1.msra.mxu0 %v6624
        %6788 = vmatprep.subr.mxu0 %v6629
        %6789 = vmatpush1.msra.mxu0 %v6628
        %6790 = vmatprep.subr.mxu0 %v6633
        %6791 = vmatpush1.msra.mxu0 %v6632
        %6792 = vmatprep.subr.mxu0 %v6637
        %6793 = vmatpush1.msra.mxu0 %v6636
        %6794 = vmatprep.subr.mxu0 %v6641
        %6795 = vmatpush1.msra.mxu0 %v6640
        %6796 = vmatprep.subr.mxu0 %v6645
        %6797 = vmatpush1.msra.mxu0 %v6644
        %6798 = vmatprep.subr.mxu0 %v6649
        %6799 = vmatpush1.msra.mxu0 %v6648
        %6800 = vmatprep.subr.mxu0 %v6653
        %6801 = vmatpush1.msra.mxu0 %v6652
        %6802 = vmatprep.subr.mxu0 %v6657
        %6803 = vmatpush1.msra.mxu0 %v6656
        %6804 = vmatprep.subr.mxu0 0.0
        %6805 = vmatpush1.msra.mxu0 0.0
        %6806 = vmatprep.subr.mxu0 0.0
        %6807 = vmatpush1.msra.mxu0 0.0
        %6808 = vmatprep.subr.mxu0 0.0
        %6809 = vmatpush1.msra.mxu0 0.0
        %6810 = vmatprep.subr.mxu0 0.0
        %6811 = vmatpush1.msra.mxu0 0.0
        %6812 = vmatprep.subr.mxu0 0.0
        %6813 = vmatpush1.msra.mxu0 0.0
        %6814 = vmatprep.subr.mxu0 0.0
        %6815 = vmatpush1.msra.mxu0 0.0
        %6816 = vmatprep.subr.mxu0 0.0
        %6817 = vmatpush1.msra.mxu0 0.0
        %6818 = vmatprep.subr.mxu0 0.0
        %6819 = vmatpush1.msra.mxu0 0.0
        %6820 = vmatprep.subr.mxu0 0.0
        %6821 = vmatpush1.msra.mxu0 0.0
        %6822 = vmatprep.subr.mxu0 0.0
        %6823 = vmatpush1.msra.mxu0 0.0
        %6824 = vmatprep.subr.mxu0 0.0
        %6825 = vmatpush1.msra.mxu0 0.0
        %6826 = vmatprep.subr.mxu0 0.0
        %6827 = vmatpush1.msra.mxu0 0.0
        %6828 = vmatprep.subr.mxu0 0.0
        %6829 = vmatpush1.msra.mxu0 0.0
        %6830 = vmatprep.subr.mxu0 0.0
        %6831 = vmatpush1.msra.mxu0 0.0
        %6832 = vmatprep.subr.mxu0 0.0
        %6833 = vmatpush1.msra.mxu0 0.0
        %6834 = vmatprep.subr.mxu0 0.0
        %6835 = vmatpush1.msra.mxu0 0.0
        %6836 = vmatprep.mubr.f32.mxu0 0.0
        %6837 = vmatmul.mubr.f32.gmra.mrb[0].mxu0 %v6660
        %v6838 = vpop.f32.mrb[0].mxu0
        %v6839 = vadd.f32 %v6695, %v6838
        %v6840 = vpop.f32.mrb[0].mxu0
        %v6841 = vadd.f32 %v6695, %v6840
        %6842 = vmatprep.mubr.f32.mxu0 0.0
        %6843 = vmatmul.mubr.f32.gmra.mrb[0].mxu0 %v6661
        %v6844 = vpop.f32.mrb[0].mxu0
        %v6845 = vadd.f32 %v6700, %v6844
        %v6846 = vpop.f32.mrb[0].mxu0
        %v6847 = vadd.f32 %v6700, %v6846
        %6848 = vmatprep.mubr.f32.mxu0 0.0
        %6849 = vmatmul.mubr.f32.gmra.mrb[0].mxu0 %v6662
        %v6850 = vpop.f32.mrb[0].mxu0
        %v6851 = vadd.f32 %v6705, %v6850
        %v6852 = vpop.f32.mrb[0].mxu0
        %v6853 = vadd.f32 %v6705, %v6852
        %6854 = vmatprep.mubr.f32.mxu0 0.0
        %6855 = vmatmul.mubr.f32.gmra.mrb[0].mxu0 %v6663
        %v6856 = vpop.f32.mrb[0].mxu0
        %v6857 = vadd.f32 %v6710, %v6856
        %v6858 = vpop.f32.mrb[0].mxu0
        %v6859 = vadd.f32 %v6710, %v6858
        %6860 = vmatprep.mubr.f32.mxu0 0.0
        %6861 = vmatmul.mubr.f32.gmra.mrb[0].mxu0 %v6664
        %v6862 = vpop.f32.mrb[0].mxu0
        %v6863 = vadd.f32 %v6715, %v6862
        %v6864 = vpop.f32.mrb[0].mxu0
        %v6865 = vadd.f32 %v6715, %v6864
        %6866 = vmatprep.mubr.f32.mxu0 0.0
        %6867 = vmatmul.mubr.f32.gmra.mrb[0].mxu0 %v6665
        %v6868 = vpop.f32.mrb[0].mxu0
        %v6869 = vadd.f32 %v6720, %v6868
        %v6870 = vpop.f32.mrb[0].mxu0
        %v6871 = vadd.f32 %v6720, %v6870
        %6872 = vmatprep.mubr.f32.mxu0 0.0
        %6873 = vmatmul.mubr.f32.gmra.mrb[0].mxu0 %v6666
        %v6874 = vpop.f32.mrb[0].mxu0
        %v6875 = vadd.f32 %v6725, %v6874
        %v6876 = vpop.f32.mrb[0].mxu0
        %v6877 = vadd.f32 %v6725, %v6876
        %6878 = vmatprep.mubr.f32.mxu0 0.0
        %6879 = vmatmul.mubr.f32.gmra.mrb[0].mxu0 %v6667
        %v6880 = vpop.f32.mrb[0].mxu0
        %v6881 = vadd.f32 %v6730, %v6880
        %v6882 = vpop.f32.mrb[0].mxu0
        %v6883 = vadd.f32 %v6730, %v6882
        %6884 = vmatprep.mubr.f32.mxu0 0.0
        %6885 = vmatmul.mubr.f32.gmra.mrb[0].mxu0 %v6668
        %v6886 = vpop.f32.mrb[0].mxu0
        %v6887 = vadd.f32 %v6735, %v6886
        %v6888 = vpop.f32.mrb[0].mxu0
        %v6889 = vadd.f32 %v6735, %v6888
        %6890 = vmatprep.mubr.f32.mxu0 0.0
        %6891 = vmatmul.mubr.f32.gmra.mrb[0].mxu0 %v6669
        %v6892 = vpop.f32.mrb[0].mxu0
        %v6893 = vadd.f32 %v6740, %v6892
        %v6894 = vpop.f32.mrb[0].mxu0
        %v6895 = vadd.f32 %v6740, %v6894
        %6896 = vmatprep.mubr.f32.mxu0 0.0
        %6897 = vmatmul.mubr.f32.gmra.mrb[0].mxu0 %v6670
        %v6898 = vpop.f32.mrb[0].mxu0
        %v6899 = vadd.f32 %v6745, %v6898
        %v6900 = vpop.f32.mrb[0].mxu0
        %v6901 = vadd.f32 %v6745, %v6900
        %6902 = vmatprep.mubr.f32.mxu0 0.0
        %6903 = vmatmul.mubr.f32.gmra.mrb[0].mxu0 %v6671
        %v6904 = vpop.f32.mrb[0].mxu0
        %v6905 = vadd.f32 %v6750, %v6904
        %v6906 = vpop.f32.mrb[0].mxu0
        %v6907 = vadd.f32 %v6750, %v6906
        %6908 = vmatprep.mubr.f32.mxu0 0.0
        %6909 = vmatmul.mubr.f32.gmra.mrb[0].mxu0 %v6672
        %v6910 = vpop.f32.mrb[0].mxu0
        %v6911 = vadd.f32 %v6755, %v6910
        %v6912 = vpop.f32.mrb[0].mxu0
        %v6913 = vadd.f32 %v6755, %v6912
        %6914 = vmatprep.mubr.f32.mxu0 0.0
        %6915 = vmatmul.mubr.f32.gmra.mrb[0].mxu0 %v6673
        %v6916 = vpop.f32.mrb[0].mxu0
        %v6917 = vadd.f32 %v6760, %v6916
        %v6918 = vpop.f32.mrb[0].mxu0
        %v6919 = vadd.f32 %v6760, %v6918
        %6920 = vmatprep.mubr.f32.mxu0 0.0
        %6921 = vmatmul.mubr.f32.gmra.mrb[0].mxu0 %v6674
        %v6922 = vpop.f32.mrb[0].mxu0
        %v6923 = vadd.f32 %v6765, %v6922
        %v6924 = vpop.f32.mrb[0].mxu0
        %v6925 = vadd.f32 %v6765, %v6924
        %6926 = vmatprep.mubr.f32.mxu0 0.0
        %6927 = vmatmul.mubr.f32.gmra.mrb[0].mxu0 %v6675
        %v6928 = vpop.f32.mrb[0].mxu0
        %v6929 = vadd.f32 %v6770, %v6928
        %v6930 = vpop.f32.mrb[0].mxu0
        %v6931 = vadd.f32 %v6770, %v6930
        %6932 = vdwg.mxu0
        %6933 = vmatprep.subr.mxu0 %v6599
        %6934 = vmatpush1.msra.mxu0 %v6598
        %6935 = vmatprep.subr.mxu0 %v6603
        %6936 = vmatpush1.msra.mxu0 %v6602
        %6937 = vmatprep.subr.mxu0 %v6607
        %6938 = vmatpush1.msra.mxu0 %v6606
        %6939 = vmatprep.subr.mxu0 %v6611
        %6940 = vmatpush1.msra.mxu0 %v6610
        %6941 = vmatprep.subr.mxu0 %v6615
        %6942 = vmatpush1.msra.mxu0 %v6614
        %6943 = vmatprep.subr.mxu0 %v6619
        %6944 = vmatpush1.msra.mxu0 %v6618
        %6945 = vmatprep.subr.mxu0 %v6623
        %6946 = vmatpush1.msra.mxu0 %v6622
        %6947 = vmatprep.subr.mxu0 %v6627
        %6948 = vmatpush1.msra.mxu0 %v6626
        %6949 = vmatprep.subr.mxu0 %v6631
        %6950 = vmatpush1.msra.mxu0 %v6630
        %6951 = vmatprep.subr.mxu0 %v6635
        %6952 = vmatpush1.msra.mxu0 %v6634
        %6953 = vmatprep.subr.mxu0 %v6639
        %6954 = vmatpush1.msra.mxu0 %v6638
        %6955 = vmatprep.subr.mxu0 %v6643
        %6956 = vmatpush1.msra.mxu0 %v6642
        %6957 = vmatprep.subr.mxu0 %v6647
        %6958 = vmatpush1.msra.mxu0 %v6646
        %6959 = vmatprep.subr.mxu0 %v6651
        %6960 = vmatpush1.msra.mxu0 %v6650
        %6961 = vmatprep.subr.mxu0 %v6655
        %6962 = vmatpush1.msra.mxu0 %v6654
        %6963 = vmatprep.subr.mxu0 %v6659
        %6964 = vmatpush1.msra.mxu0 %v6658
        %6965 = vmatprep.subr.mxu0 0.0
        %6966 = vmatpush1.msra.mxu0 0.0
        %6967 = vmatprep.subr.mxu0 0.0
        %6968 = vmatpush1.msra.mxu0 0.0
        %6969 = vmatprep.subr.mxu0 0.0
        %6970 = vmatpush1.msra.mxu0 0.0
        %6971 = vmatprep.subr.mxu0 0.0
        %6972 = vmatpush1.msra.mxu0 0.0
        %6973 = vmatprep.subr.mxu0 0.0
        %6974 = vmatpush1.msra.mxu0 0.0
        %6975 = vmatprep.subr.mxu0 0.0
        %6976 = vmatpush1.msra.mxu0 0.0
        %6977 = vmatprep.subr.mxu0 0.0
        %6978 = vmatpush1.msra.mxu0 0.0
        %6979 = vmatprep.subr.mxu0 0.0
        %6980 = vmatpush1.msra.mxu0 0.0
        %6981 = vmatprep.subr.mxu0 0.0
        %6982 = vmatpush1.msra.mxu0 0.0
        %6983 = vmatprep.subr.mxu0 0.0
        %6984 = vmatpush1.msra.mxu0 0.0
        %6985 = vmatprep.subr.mxu0 0.0
        %6986 = vmatpush1.msra.mxu0 0.0
        %6987 = vmatprep.subr.mxu0 0.0
        %6988 = vmatpush1.msra.mxu0 0.0
        %6989 = vmatprep.subr.mxu0 0.0
        %6990 = vmatpush1.msra.mxu0 0.0
        %6991 = vmatprep.subr.mxu0 0.0
        %6992 = vmatpush1.msra.mxu0 0.0
        %6993 = vmatprep.subr.mxu0 0.0
        %6994 = vmatpush1.msra.mxu0 0.0
        %6995 = vmatprep.subr.mxu0 0.0
        %6996 = vmatpush1.msra.mxu0 0.0
        %6997 = vmatprep.mubr.f32.mxu0 0.0
        %6998 = vmatmul.mubr.f32.gmra.mrb[0].mxu0 %v6660
        %v6999 = vpop.f32.mrb[0].mxu0
        %v7000 = vadd.f32 %v6695, %v6999
        %v7001 = vpop.f32.mrb[0].mxu0
        %v7002 = vadd.f32 %v6695, %v7001
        %7003 = vmatprep.mubr.f32.mxu0 0.0
        %7004 = vmatmul.mubr.f32.gmra.mrb[0].mxu0 %v6661
        %v7005 = vpop.f32.mrb[0].mxu0
        %v7006 = vadd.f32 %v6700, %v7005
        %v7007 = vpop.f32.mrb[0].mxu0
        %v7008 = vadd.f32 %v6700, %v7007
        %7009 = vmatprep.mubr.f32.mxu0 0.0
        %7010 = vmatmul.mubr.f32.gmra.mrb[0].mxu0 %v6662
        %v7011 = vpop.f32.mrb[0].mxu0
        %v7012 = vadd.f32 %v6705, %v7011
        %v7013 = vpop.f32.mrb[0].mxu0
        %v7014 = vadd.f32 %v6705, %v7013
        %7015 = vmatprep.mubr.f32.mxu0 0.0
        %7016 = vmatmul.mubr.f32.gmra.mrb[0].mxu0 %v6663
        %v7017 = vpop.f32.mrb[0].mxu0
        %v7018 = vadd.f32 %v6710, %v7017
        %v7019 = vpop.f32.mrb[0].mxu0
        %v7020 = vadd.f32 %v6710, %v7019
        %7021 = vmatprep.mubr.f32.mxu0 0.0
        %7022 = vmatmul.mubr.f32.gmra.mrb[0].mxu0 %v6664
        %v7023 = vpop.f32.mrb[0].mxu0
        %v7024 = vadd.f32 %v6715, %v7023
        %v7025 = vpop.f32.mrb[0].mxu0
        %v7026 = vadd.f32 %v6715, %v7025
        %7027 = vmatprep.mubr.f32.mxu0 0.0
        %7028 = vmatmul.mubr.f32.gmra.mrb[0].mxu0 %v6665
        %v7029 = vpop.f32.mrb[0].mxu0
        %v7030 = vadd.f32 %v6720, %v7029
        %v7031 = vpop.f32.mrb[0].mxu0
        %v7032 = vadd.f32 %v6720, %v7031
        %7033 = vmatprep.mubr.f32.mxu0 0.0
        %7034 = vmatmul.mubr.f32.gmra.mrb[0].mxu0 %v6666
        %v7035 = vpop.f32.mrb[0].mxu0
        %v7036 = vadd.f32 %v6725, %v7035
        %v7037 = vpop.f32.mrb[0].mxu0
        %v7038 = vadd.f32 %v6725, %v7037
        %7039 = vmatprep.mubr.f32.mxu0 0.0
        %7040 = vmatmul.mubr.f32.gmra.mrb[0].mxu0 %v6667
        %v7041 = vpop.f32.mrb[0].mxu0
        %v7042 = vadd.f32 %v6730, %v7041
        %v7043 = vpop.f32.mrb[0].mxu0
        %v7044 = vadd.f32 %v6730, %v7043
        %7045 = vmatprep.mubr.f32.mxu0 0.0
        %7046 = vmatmul.mubr.f32.gmra.mrb[0].mxu0 %v6668
        %v7047 = vpop.f32.mrb[0].mxu0
        %v7048 = vadd.f32 %v6735, %v7047
        %v7049 = vpop.f32.mrb[0].mxu0
        %v7050 = vadd.f32 %v6735, %v7049
        %7051 = vmatprep.mubr.f32.mxu0 0.0
        %7052 = vmatmul.mubr.f32.gmra.mrb[0].mxu0 %v6669
        %v7053 = vpop.f32.mrb[0].mxu0
        %v7054 = vadd.f32 %v6740, %v7053
        %v7055 = vpop.f32.mrb[0].mxu0
        %v7056 = vadd.f32 %v6740, %v7055
        %7057 = vmatprep.mubr.f32.mxu0 0.0
        %7058 = vmatmul.mubr.f32.gmra.mrb[0].mxu0 %v6670
        %v7059 = vpop.f32.mrb[0].mxu0
        %v7060 = vadd.f32 %v6745, %v7059
        %v7061 = vpop.f32.mrb[0].mxu0
        %v7062 = vadd.f32 %v6745, %v7061
        %7063 = vmatprep.mubr.f32.mxu0 0.0
        %7064 = vmatmul.mubr.f32.gmra.mrb[0].mxu0 %v6671
        %v7065 = vpop.f32.mrb[0].mxu0
        %v7066 = vadd.f32 %v6750, %v7065
        %v7067 = vpop.f32.mrb[0].mxu0
        %v7068 = vadd.f32 %v6750, %v7067
        %7069 = vmatprep.mubr.f32.mxu0 0.0
        %7070 = vmatmul.mubr.f32.gmra.mrb[0].mxu0 %v6672
        %v7071 = vpop.f32.mrb[0].mxu0
        %v7072 = vadd.f32 %v6755, %v7071
        %v7073 = vpop.f32.mrb[0].mxu0
        %v7074 = vadd.f32 %v6755, %v7073
        %7075 = vmatprep.mubr.f32.mxu0 0.0
        %7076 = vmatmul.mubr.f32.gmra.mrb[0].mxu0 %v6673
        %v7077 = vpop.f32.mrb[0].mxu0
        %v7078 = vadd.f32 %v6760, %v7077
        %v7079 = vpop.f32.mrb[0].mxu0
        %v7080 = vadd.f32 %v6760, %v7079
        %7081 = vmatprep.mubr.f32.mxu0 0.0
        %7082 = vmatmul.mubr.f32.gmra.mrb[0].mxu0 %v6674
        %v7083 = vpop.f32.mrb[0].mxu0
        %v7084 = vadd.f32 %v6765, %v7083
        %v7085 = vpop.f32.mrb[0].mxu0
        %v7086 = vadd.f32 %v6765, %v7085
        %7087 = vmatprep.mubr.f32.mxu0 0.0
        %7088 = vmatmul.mubr.f32.gmra.mrb[0].mxu0 %v6675
        %v7089 = vpop.f32.mrb[0].mxu0
        %v7090 = vadd.f32 %v6770, %v7089
        %v7091 = vpop.f32.mrb[0].mxu0
        %v7092 = vadd.f32 %v6770, %v7091
        %7093 = vdwg.mxu0
        %v7094 = vmax.f32 %v6839, 0.0
        %v7095 = vmax.f32 %v6841, 0.0
        %v7096 = vmax.f32 %v7000, 0.0
        %v7097 = vmax.f32 %v7002, 0.0
        %v7098 = vmax.f32 %v6845, 0.0
        %v7099 = vmax.f32 %v6847, 0.0
        %v7100 = vmax.f32 %v7006, 0.0
        %v7101 = vmax.f32 %v7008, 0.0
        %v7102 = vmax.f32 %v6851, 0.0
        %v7103 = vmax.f32 %v6853, 0.0
        %v7104 = vmax.f32 %v7012, 0.0
        %v7105 = vmax.f32 %v7014, 0.0
        %v7106 = vmax.f32 %v6857, 0.0
        %v7107 = vmax.f32 %v6859, 0.0
        %v7108 = vmax.f32 %v7018, 0.0
        %v7109 = vmax.f32 %v7020, 0.0
        %v7110 = vmax.f32 %v6863, 0.0
        %v7111 = vmax.f32 %v6865, 0.0
        %v7112 = vmax.f32 %v7024, 0.0
        %v7113 = vmax.f32 %v7026, 0.0
        %v7114 = vmax.f32 %v6869, 0.0
        %v7115 = vmax.f32 %v6871, 0.0
        %v7116 = vmax.f32 %v7030, 0.0
        %v7117 = vmax.f32 %v7032, 0.0
        %v7118 = vmax.f32 %v6875, 0.0
        %v7119 = vmax.f32 %v6877, 0.0
        %v7120 = vmax.f32 %v7036, 0.0
        %v7121 = vmax.f32 %v7038, 0.0
        %v7122 = vmax.f32 %v6881, 0.0
        %v7123 = vmax.f32 %v6883, 0.0
        %v7124 = vmax.f32 %v7042, 0.0
        %v7125 = vmax.f32 %v7044, 0.0
        %v7126 = vmax.f32 %v6887, 0.0
        %v7127 = vmax.f32 %v6889, 0.0
        %v7128 = vmax.f32 %v7048, 0.0
        %v7129 = vmax.f32 %v7050, 0.0
        %v7130 = vmax.f32 %v6893, 0.0
        %v7131 = vmax.f32 %v6895, 0.0
        %v7132 = vmax.f32 %v7054, 0.0
        %v7133 = vmax.f32 %v7056, 0.0
        %v7134 = vmax.f32 %v6899, 0.0
        %v7135 = vmax.f32 %v6901, 0.0
        %v7136 = vmax.f32 %v7060, 0.0
        %v7137 = vmax.f32 %v7062, 0.0
        %v7138 = vmax.f32 %v6905, 0.0
        %v7139 = vmax.f32 %v6907, 0.0
        %v7140 = vmax.f32 %v7066, 0.0
        %v7141 = vmax.f32 %v7068, 0.0
        %v7142 = vmax.f32 %v6911, 0.0
        %v7143 = vmax.f32 %v6913, 0.0
        %v7144 = vmax.f32 %v7072, 0.0
        %v7145 = vmax.f32 %v7074, 0.0
        %v7146 = vmax.f32 %v6917, 0.0
        %v7147 = vmax.f32 %v6919, 0.0
        %v7148 = vmax.f32 %v7078, 0.0
        %v7149 = vmax.f32 %v7080, 0.0
        %v7150 = vmax.f32 %v6923, 0.0
        %v7151 = vmax.f32 %v6925, 0.0
        %v7152 = vmax.f32 %v7084, 0.0
        %v7153 = vmax.f32 %v7086, 0.0
        %v7154 = vmax.f32 %v6929, 0.0
        %v7155 = vmax.f32 %v6931, 0.0
        %v7156 = vmax.f32 %v7090, 0.0
        %v7157 = vmax.f32 %v7092, 0.0
        %v7158 = vld [vmem:[%s6] sm:$0xff]
        %v7159 = vld [vmem:[%s6 + $0x8] sm:$0xff]
        %v7160 = vld [vmem:[%s6 + $0x10] sm:$0xff]
        %v7161 = vld [vmem:[%s6 + $0x18] sm:$0xff]
        %v7162 = vld [vmem:[%s6 + $0x20] sm:$0xff]
        %v7163 = vld [vmem:[%s6 + $0x28] sm:$0xff]
        %v7164 = vld [vmem:[%s6 + $0x30] sm:$0xff]
        %v7165 = vld [vmem:[%s6 + $0x38] sm:$0xff]
        %v7166 = vld [vmem:[%s6 + $0x40] sm:$0xff]
        %v7167 = vld [vmem:[%s6 + $0x48] sm:$0xff]
        %v7168 = vld [vmem:[%s6 + $0x50] sm:$0xff]
        %v7169 = vld [vmem:[%s6 + $0x58] sm:$0xff]
        %v7170 = vld [vmem:[%s6 + $0x60] sm:$0xff]
        %v7171 = vld [vmem:[%s6 + $0x68] sm:$0xff]
        %v7172 = vld [vmem:[%s6 + $0x70] sm:$0xff]
        %v7173 = vld [vmem:[%s6 + $0x78] sm:$0xff]
        %7175 = vset.pattern.permute.xlu0 0
        %7176 = vperm.xlu0 %7175, %v7158
        %v7177 = vpop.permute.xlu0 %7176
        %7180 = vset.pattern.permute.xlu0 0
        %7181 = vperm.xlu0 %7180, %v7159
        %v7182 = vpop.permute.xlu0 %7181
        %7185 = vset.pattern.permute.xlu0 0
        %7186 = vperm.xlu0 %7185, %v7160
        %v7187 = vpop.permute.xlu0 %7186
        %7190 = vset.pattern.permute.xlu0 0
        %7191 = vperm.xlu0 %7190, %v7161
        %v7192 = vpop.permute.xlu0 %7191
        %7195 = vset.pattern.permute.xlu0 0
        %7196 = vperm.xlu0 %7195, %v7162
        %v7197 = vpop.permute.xlu0 %7196
        %7200 = vset.pattern.permute.xlu0 0
        %7201 = vperm.xlu0 %7200, %v7163
        %v7202 = vpop.permute.xlu0 %7201
        %7205 = vset.pattern.permute.xlu0 0
        %7206 = vperm.xlu0 %7205, %v7164
        %v7207 = vpop.permute.xlu0 %7206
        %7210 = vset.pattern.permute.xlu0 0
        %7211 = vperm.xlu0 %7210, %v7165
        %v7212 = vpop.permute.xlu0 %7211
        %7215 = vset.pattern.permute.xlu0 0
        %7216 = vperm.xlu0 %7215, %v7166
        %v7217 = vpop.permute.xlu0 %7216
        %7220 = vset.pattern.permute.xlu0 0
        %7221 = vperm.xlu0 %7220, %v7167
        %v7222 = vpop.permute.xlu0 %7221
        %7225 = vset.pattern.permute.xlu0 0
        %7226 = vperm.xlu0 %7225, %v7168
        %v7227 = vpop.permute.xlu0 %7226
        %7230 = vset.pattern.permute.xlu0 0
        %7231 = vperm.xlu0 %7230, %v7169
        %v7232 = vpop.permute.xlu0 %7231
        %7235 = vset.pattern.permute.xlu0 0
        %7236 = vperm.xlu0 %7235, %v7170
        %v7237 = vpop.permute.xlu0 %7236
        %7240 = vset.pattern.permute.xlu0 0
        %7241 = vperm.xlu0 %7240, %v7171
        %v7242 = vpop.permute.xlu0 %7241
        %7245 = vset.pattern.permute.xlu0 0
        %7246 = vperm.xlu0 %7245, %v7172
        %v7247 = vpop.permute.xlu0 %7246
        %7250 = vset.pattern.permute.xlu0 0
        %7251 = vperm.xlu0 %7250, %v7173
        %v7252 = vpop.permute.xlu0 %7251
        %v7254 = vmul.f32 %v7094, %v7177
        %v7255 = vmul.f32 %v7095, %v7177
        %v7256 = vmul.f32 %v7096, %v7177
        %v7257 = vmul.f32 %v7097, %v7177
        %v7258 = vmul.f32 %v7098, %v7182
        %v7259 = vmul.f32 %v7099, %v7182
        %v7260 = vmul.f32 %v7100, %v7182
        %v7261 = vmul.f32 %v7101, %v7182
        %v7262 = vmul.f32 %v7102, %v7187
        %v7263 = vmul.f32 %v7103, %v7187
        %v7264 = vmul.f32 %v7104, %v7187
        %v7265 = vmul.f32 %v7105, %v7187
        %v7266 = vmul.f32 %v7106, %v7192
        %v7267 = vmul.f32 %v7107, %v7192
        %v7268 = vmul.f32 %v7108, %v7192
        %v7269 = vmul.f32 %v7109, %v7192
        %v7270 = vmul.f32 %v7110, %v7197
        %v7271 = vmul.f32 %v7111, %v7197
        %v7272 = vmul.f32 %v7112, %v7197
        %v7273 = vmul.f32 %v7113, %v7197
        %v7274 = vmul.f32 %v7114, %v7202
        %v7275 = vmul.f32 %v7115, %v7202
        %v7276 = vmul.f32 %v7116, %v7202
        %v7277 = vmul.f32 %v7117, %v7202
        %v7278 = vmul.f32 %v7118, %v7207
        %v7279 = vmul.f32 %v7119, %v7207
        %v7280 = vmul.f32 %v7120, %v7207
        %v7281 = vmul.f32 %v7121, %v7207
        %v7282 = vmul.f32 %v7122, %v7212
        %v7283 = vmul.f32 %v7123, %v7212
        %v7284 = vmul.f32 %v7124, %v7212
        %v7285 = vmul.f32 %v7125, %v7212
        %v7286 = vmul.f32 %v7126, %v7217
        %v7287 = vmul.f32 %v7127, %v7217
        %v7288 = vmul.f32 %v7128, %v7217
        %v7289 = vmul.f32 %v7129, %v7217
        %v7290 = vmul.f32 %v7130, %v7222
        %v7291 = vmul.f32 %v7131, %v7222
        %v7292 = vmul.f32 %v7132, %v7222
        %v7293 = vmul.f32 %v7133, %v7222
        %v7294 = vmul.f32 %v7134, %v7227
        %v7295 = vmul.f32 %v7135, %v7227
        %v7296 = vmul.f32 %v7136, %v7227
        %v7297 = vmul.f32 %v7137, %v7227
        %v7298 = vmul.f32 %v7138, %v7232
        %v7299 = vmul.f32 %v7139, %v7232
        %v7300 = vmul.f32 %v7140, %v7232
        %v7301 = vmul.f32 %v7141, %v7232
        %v7302 = vmul.f32 %v7142, %v7237
        %v7303 = vmul.f32 %v7143, %v7237
        %v7304 = vmul.f32 %v7144, %v7237
        %v7305 = vmul.f32 %v7145, %v7237
        %v7306 = vmul.f32 %v7146, %v7242
        %v7307 = vmul.f32 %v7147, %v7242
        %v7308 = vmul.f32 %v7148, %v7242
        %v7309 = vmul.f32 %v7149, %v7242
        %v7310 = vmul.f32 %v7150, %v7247
        %v7311 = vmul.f32 %v7151, %v7247
        %v7312 = vmul.f32 %v7152, %v7247
        %v7313 = vmul.f32 %v7153, %v7247
        %v7314 = vmul.f32 %v7154, %v7252
        %v7315 = vmul.f32 %v7155, %v7252
        %v7316 = vmul.f32 %v7156, %v7252
        %v7317 = vmul.f32 %v7157, %v7252
        %v7318 = vadd.f32 %v7254, %v7258
        %v7319 = vadd.f32 %v7318, %v7262
        %v7320 = vadd.f32 %v7319, %v7266
        %v7321 = vadd.f32 %v7320, %v7270
        %v7322 = vadd.f32 %v7321, %v7274
        %v7323 = vadd.f32 %v7322, %v7278
        %v7324 = vadd.f32 %v7323, %v7282
        %v7325 = vadd.f32 %v7324, %v7286
        %v7326 = vadd.f32 %v7325, %v7290
        %v7327 = vadd.f32 %v7326, %v7294
        %v7328 = vadd.f32 %v7327, %v7298
        %v7329 = vadd.f32 %v7328, %v7302
        %v7330 = vadd.f32 %v7329, %v7306
        %v7331 = vadd.f32 %v7330, %v7310
        %v7332 = vadd.f32 %v7331, %v7314
        %v7333 = vrot.slane %v7332, 4
        %v7334 = vadd.f32 %v7332, %v7333
        %v7335 = vrot.slane %v7334, 2
        %v7336 = vadd.f32 %v7334, %v7335
        %v7337 = vrot.slane %v7336, 1
        %v7338 = vadd.f32 %v7336, %v7337
        %v7339 = vadd.f32 %v7255, %v7259
        %v7340 = vadd.f32 %v7339, %v7263
        %v7341 = vadd.f32 %v7340, %v7267
        %v7342 = vadd.f32 %v7341, %v7271
        %v7343 = vadd.f32 %v7342, %v7275
        %v7344 = vadd.f32 %v7343, %v7279
        %v7345 = vadd.f32 %v7344, %v7283
        %v7346 = vadd.f32 %v7345, %v7287
        %v7347 = vadd.f32 %v7346, %v7291
        %v7348 = vadd.f32 %v7347, %v7295
        %v7349 = vadd.f32 %v7348, %v7299
        %v7350 = vadd.f32 %v7349, %v7303
        %v7351 = vadd.f32 %v7350, %v7307
        %v7352 = vadd.f32 %v7351, %v7311
        %v7353 = vadd.f32 %v7352, %v7315
        %v7354 = vrot.slane %v7353, 4
        %v7355 = vadd.f32 %v7353, %v7354
        %v7356 = vrot.slane %v7355, 2
        %v7357 = vadd.f32 %v7355, %v7356
        %v7358 = vrot.slane %v7357, 1
        %v7359 = vadd.f32 %v7357, %v7358
        %v7360 = vadd.f32 %v7256, %v7260
        %v7361 = vadd.f32 %v7360, %v7264
        %v7362 = vadd.f32 %v7361, %v7268
        %v7363 = vadd.f32 %v7362, %v7272
        %v7364 = vadd.f32 %v7363, %v7276
        %v7365 = vadd.f32 %v7364, %v7280
        %v7366 = vadd.f32 %v7365, %v7284
        %v7367 = vadd.f32 %v7366, %v7288
        %v7368 = vadd.f32 %v7367, %v7292
        %v7369 = vadd.f32 %v7368, %v7296
        %v7370 = vadd.f32 %v7369, %v7300
        %v7371 = vadd.f32 %v7370, %v7304
        %v7372 = vadd.f32 %v7371, %v7308
        %v7373 = vadd.f32 %v7372, %v7312
        %v7374 = vadd.f32 %v7373, %v7316
        %v7375 = vrot.slane %v7374, 4
        %v7376 = vadd.f32 %v7374, %v7375
        %v7377 = vrot.slane %v7376, 2
        %v7378 = vadd.f32 %v7376, %v7377
        %v7379 = vrot.slane %v7378, 1
        %v7380 = vadd.f32 %v7378, %v7379
        %v7381 = vadd.f32 %v7257, %v7261
        %v7382 = vadd.f32 %v7381, %v7265
        %v7383 = vadd.f32 %v7382, %v7269
        %v7384 = vadd.f32 %v7383, %v7273
        %v7385 = vadd.f32 %v7384, %v7277
        %v7386 = vadd.f32 %v7385, %v7281
        %v7387 = vadd.f32 %v7386, %v7285
        %v7388 = vadd.f32 %v7387, %v7289
        %v7389 = vadd.f32 %v7388, %v7293
        %v7390 = vadd.f32 %v7389, %v7297
        %v7391 = vadd.f32 %v7390, %v7301
        %v7392 = vadd.f32 %v7391, %v7305
        %v7393 = vadd.f32 %v7392, %v7309
        %v7394 = vadd.f32 %v7393, %v7313
        %v7395 = vadd.f32 %v7394, %v7317
        %v7396 = vrot.slane %v7395, 4
        %v7397 = vadd.f32 %v7395, %v7396
        %v7398 = vrot.slane %v7397, 2
        %v7399 = vadd.f32 %v7397, %v7398
        %v7400 = vrot.slane %v7399, 1
        %v7401 = vadd.f32 %v7399, %v7400
        %v7402 = vld [vmem:[#allocation5] sm:$0x1]
        %7404 = vset.pattern.permute.xlu0 0
        %7405 = vperm.xlu0 %7404, %v7402
        %v7406 = vpop.permute.xlu0 %7405
        %v7408 = vlaneseq
        %v7409 = vshrl.u32 %v7408, 7
        %v7410 = vsub.s32 0, %v7409
        %v7411 = vrot.slane %v7406, %v7410
        %v7412 = vadd.f32 %v7338, %v7411
        %v7413 = vadd.f32 %v7359, %v7411
        %v7414 = vadd.f32 %v7380, %v7411
        %v7415 = vadd.f32 %v7401, %v7411
        %v7420 = vcombine.low %v7412, %v7413
        %v7421 = vcombine.low %v7414, %v7415
        %v7423 = vunpack.c.l.s4 1966171168
        %v7424 = vunpack.c.0.s8 %v7423
        %v7425 = vlaneseq
        %v7426 = vshrl.u32 %v7425, 7
        %v7427 = vsub.s32 %v7424, %v7426
        %v7428 = vrot.slane %v7420, %v7427
        %v7430 = vunpack.c.l.s4 1966171168
        %v7431 = vunpack.c.0.s8 %v7430
        %v7432 = vlaneseq
        %v7433 = vshrl.u32 %v7432, 7
        %v7434 = vsub.s32 %v7431, %v7433
        %v7435 = vrot.slane %v7421, %v7434
        %v7436 = vcombine.low %v7428, %v7435
        %v7438 = vunpack.c.l.s4 1966171168
        %v7439 = vunpack.c.0.s8 %v7438
        %v7440 = vlaneseq
        %v7441 = vshrl.u32 %v7440, 7
        %v7442 = vsub.s32 %v7439, %v7441
        %v7443 = vrot.slane %v7436, %v7442
        %v7445 = vlaneseq
        %vm7446 = vcmp.ge.s32.totalorder %v7445, 0
        %vm7447 = vcmp.lt.s32.totalorder %v7445, 512
        %vm7448 = vmand %vm7446, %vm7447
        %7449 = vst.msk [vmem:[%s316] sm:$0xf] %vm7448, %v7443
        %s7450 = sand.u32 %s206, 1
        %s7451 = scalar_lea.sflag [#allocation8], %s7450
        %s7452 = sand.u32 %s206, 1
        %s7453 = smul.addr %s7452, 4
        %s7454 = scalar_lea.vmem [#allocation9], %s7453
        // Predicated region
        $region57: #{tpu_custom_call.1} parent=51 // pred_check
          %p7455 = pneg %p216
        $region58: #{tpu_custom_call.1} parent=51 // pred_check_branch
          %7457 = sbr.rel (%p7455) target = $region60
        $region59: #{tpu_custom_call.1} parent=51 // pred_region
          %s7458 = smul.u32 4, %s25
          %s7460 = ssub.s32 64, 64
          %7461 = vsyncadd %s7451, %s7460
          %s7462 = smul.addr %s7458, 16
          %s7463 = scalar_lea.hbm %s8, %s7462
          %s7465 = sshll.u32 %s7454, 4
          %s7466 = int_to_ptr.vmem [resolvable:$true] %s7465
          %7468 = dma.vmem_to_hbm [thread:$0]  %s7466, 64, %s7463, %s7451
        $region60: #{tpu_custom_call.1} parent=51 // pred_fallthru
          _
      $region52: #{tpu_custom_call.1} parent=5 // pred_fallthru
        _
      %p7469 = scmp.le.s32.totalorder 2, %s20
      // Predicated region
      $region61: #{tpu_custom_call.1} parent=5 // pred_check
        %p7470 = pneg %p7469
      $region62: #{tpu_custom_call.1} parent=5 // pred_check_branch
        %7472 = sbr.rel (%p7470) target = $region64
      $region63: #{tpu_custom_call.1} parent=5 // pred_region
        %s7473 = ssub.s32 %s20, 2
        // Predicated region
        $region65: #{tpu_custom_call.1} parent=63 // pred_check
          %p7474 = pneg %p222
        $region66: #{tpu_custom_call.1} parent=63 // pred_check_branch
          %7476 = sbr.rel (%p7474) target = $region68
        $region67: #{tpu_custom_call.1} parent=63 // pred_region
          %s7477 = sand.u32 %s207, 1
          %s7478 = scalar_lea.sflag [#allocation8], %s7477
          %s7479 = sand.u32 %s207, 1
          %s7480 = smul.addr %s7479, 4
          %s7481 = scalar_lea.vmem [#allocation9], %s7480
          %7482 = dma.done %s7478, 64
        $region68: #{tpu_custom_call.1} parent=63 // pred_fallthru
          _
      $region64: #{tpu_custom_call.1} parent=5 // pred_fallthru
        _
    $region6: #{tpu_custom_call.1} parent=1 // loop_footer
      %s24 = sadd.s32 1, %s20
    $region7: #{tpu_custom_call.1} parent=1 // loop_footer_branch
      %19 = sbr.rel target = $region3
    $region8: #{tpu_custom_call.1} parent=1 // loop_exit
      _
    %7483 = vsyncpa [#allocation7], 1
    %s7484 = scalar_lea.sflag [#allocation7], 1
    %7485 = vsyncpa %s7484, 1
    %7486 = vsyncpa [#allocation8], 1
    %s7487 = scalar_lea.sflag [#allocation8], 1
    %7488 = vsyncpa %s7487, 1

</llo_original>
